<compile_context>
chip_gen: v6e
topology: v6e:2x2x1
jax: 0.10.0
libtpu: 0.0.40
codegen_flags: <defaults>
</compile_context>

<pallas_src>
import functools

import jax
import jax.numpy as jnp
import numpy as np
from jax.experimental import pallas as pl
from jax.experimental.pallas import tpu as pltpu

BN_EPS = 1e-5
LRELU_SLOPE = 0.2


# ----------------------------------------------------------------------------
# Fused Pallas kernel
# ----------------------------------------------------------------------------
def _critic_kernel(x_ref,
                   w1_ref, b1_ref, g1_ref, be1_ref,
                   w2_ref, b2_ref, g2_ref, be2_ref,
                   w3_ref, b3_ref, g3_ref, be3_ref,
                   w4_ref, b4_ref,
                   mask_ref, sel_ref,
                   out_ref,
                   sa_ref, sb_ref,
                   *, N, H, W, CH, Hp, Wp, Mp, SLEN):
    inv_count = 1.0 / float(N * H * W)
    mask = mask_ref[...]                       # (1, Mp) f32, 1.0 at valid pixels

    def conv(src_ref, w_ref):
        """3x3 'same' conv = 9 accumulating MXU dots -> (Cout, Mp) f32."""
        acc = None
        for t in range(9):                     # static, unrolled
            off = (t // 3) * Wp + (t % 3)      # tap offset in the flat strip
            part = jnp.dot(w_ref[t], src_ref[:, off:off + Mp],
                           preferred_element_type=jnp.float32)
            acc = part if acc is None else acc + part
        return acc

    def layer(src_ref, dst_ref, w_ref, b_ref, g_ref, be_ref):
        z = conv(src_ref, w_ref) + b_ref[...]                  # bias  (CH, Mp)
        z = jnp.where(z > 0, z, LRELU_SLOPE * z)               # LeakyReLU(0.2)
        zm = z * mask                                          # junk lanes -> 0
        # one-pass BN stats over valid pixels (per channel)
        s = jnp.sum(zm, axis=1, keepdims=True)                 # (CH, 1)
        sq = jnp.sum(zm * zm, axis=1, keepdims=True)           # (CH, 1)
        mean = s * inv_count
        var = sq * inv_count - mean * mean                     # biased variance
        scale = g_ref[...] * jax.lax.rsqrt(var + BN_EPS)       # EUP rsqrt
        shift = be_ref[...] - mean * scale
        # BN apply fused with the bf16 store into the next padded strip;
        # trailing *mask keeps all padding positions exactly zero.
        dst_ref[:, Wp + 1:Wp + 1 + Mp] = (
            (zm * scale + shift) * mask).astype(dst_ref.dtype)

    # Zero only the halo head/tail of the scratch strips; the interior (and all
    # in-range padding) is rewritten by each layer's masked store.
    for buf in (sa_ref, sb_ref):
        buf[:, :Wp + 1] = jnp.zeros((CH, Wp + 1), buf.dtype)
        buf[:, Wp + 1 + Mp:] = jnp.zeros((CH, SLEN - (Wp + 1 + Mp)), buf.dtype)

    layer(x_ref, sa_ref, w1_ref, b1_ref, g1_ref, be1_ref)      # conv1 K=9*Cin
    layer(sa_ref, sb_ref, w2_ref, b2_ref, g2_ref, be2_ref)
    layer(sb_ref, sa_ref, w3_ref, b3_ref, g3_ref, be3_ref)

    # Final Cout=1 conv fused with the per-image spatial mean: sel_ref already
    # carries validity, per-image selection and the 1/(H*W) factor.
    y4 = conv(sa_ref, w4_ref)                                  # (1, Mp) f32
    out_ref[...] = jnp.dot(y4, sel_ref[...],
                           preferred_element_type=jnp.float32) + b4_ref[...]


# ----------------------------------------------------------------------------
# Wrapper
# ----------------------------------------------------------------------------
def basic_critic_forward(x_nchw, params):
    """Fused Pallas forward. Input NCHW float32 (PyTorch convention)."""
    x = x_nchw.astype(jnp.float32)
    N, Cin, H, W = x.shape
    CH = params["w2"].shape[-1]
    Hp, Wp = H + 2, W + 2
    Mp = N * Hp * Wp                                  # extended output count
    SLEN = ((Mp + 2 * Wp + 2 + 127) // 128) * 128     # strip length (tap slack)
    CIN_P = 8                                         # 3 -> 8 channel alignment

    # Input: NCHW -> zero-padded channel-major strip (CIN_P, SLEN), bf16.
    xp = jnp.pad(x, ((0, 0), (0, 0), (1, 1), (1, 1)))            # (N,Cin,Hp,Wp)
    strip = jnp.transpose(xp, (1, 0, 2, 3)).reshape(Cin, Mp)
    strip = jnp.pad(strip, ((0, CIN_P - Cin), (0, SLEN - Mp))).astype(jnp.bfloat16)

    # Weights: (3,3,Ci,Co) HWIO -> per-tap transposed (9, Co, Ci), bf16.
    def tap_w(w, ci_pad=None):
        w9 = jnp.transpose(w, (0, 1, 3, 2)).reshape(9, w.shape[3], w.shape[2])
        if ci_pad is not None:
            w9 = jnp.pad(w9, ((0, 0), (0, 0), (0, ci_pad - w9.shape[2])))
        return w9.astype(jnp.bfloat16)

    def col(v):                                        # (C,) -> (C,1) f32
        return v.reshape(-1, 1).astype(jnp.float32)

    # Trace-time constants: validity mask and per-image mean selector.
    mask_np = np.zeros((N, Hp, Wp), np.float32)
    mask_np[:, :H, :W] = 1.0
    sel_np = np.zeros((N, Hp, Wp, N), np.float32)
    for n in range(N):
        sel_np[n, :H, :W, n] = 1.0 / (H * W)
    mask = jnp.asarray(mask_np.reshape(1, Mp))
    sel = jnp.asarray(sel_np.reshape(Mp, N))

    args = (
        strip,
        tap_w(params["w1"], CIN_P), col(params["b1"]),
        col(params["gamma1"]), col(params["beta1"]),
        tap_w(params["w2"]), col(params["b2"]),
        col(params["gamma2"]), col(params["beta2"]),
        tap_w(params["w3"]), col(params["b3"]),
        col(params["gamma3"]), col(params["beta3"]),
        tap_w(params["w4"]), params["b4"].reshape(1, 1).astype(jnp.float32),
        mask, sel,
    )

    kernel = functools.partial(_critic_kernel, N=N, H=H, W=W, CH=CH,
                               Hp=Hp, Wp=Wp, Mp=Mp, SLEN=SLEN)
    out = pl.pallas_call(
        kernel,
        out_shape=jax.ShapeDtypeStruct((1, N), jnp.float32),
        scratch_shapes=[pltpu.VMEM((CH, SLEN), jnp.bfloat16),    # ping
                        pltpu.VMEM((CH, SLEN), jnp.bfloat16)],   # pong
        compiler_params=pltpu.CompilerParams(vmem_limit_bytes=32 * 1024 * 1024),
    )(*args)
    return out[0]                                      # (N,)


# ----------------------------------------------------------------------------
# Parameters
# ----------------------------------------------------------------------------
def init_params(key, hidden_size):
    ks = jax.random.split(key, 8)
    p = {}
    p["w1"] = 0.1 * jax.random.normal(ks[0], (3, 3, 3, hidden_size), jnp.float32)
    p["b1"] = 0.05 * jax.random.normal(ks[1], (hidden_size,), jnp.float32)
    p["w2"] = 0.1 * jax.random.normal(ks[2], (3, 3, hidden_size, hidden_size), jnp.float32)
    p["b2"] = 0.05 * jax.random.normal(ks[3], (hidden_size,), jnp.float32)
    p["w3"] = 0.1 * jax.random.normal(ks[4], (3, 3, hidden_size, hidden_size), jnp.float32)
    p["b3"] = 0.05 * jax.random.normal(ks[5], (hidden_size,), jnp.float32)
    p["w4"] = 0.1 * jax.random.normal(ks[6], (3, 3, hidden_size, 1), jnp.float32)
    p["b4"] = 0.05 * jax.random.normal(ks[7], (1,), jnp.float32)
    for i in (1, 2, 3):                   # BatchNorm affine defaults (1, 0)
        p[f"gamma{i}"] = jnp.ones((hidden_size,), jnp.float32)
        p[f"beta{i}"] = jnp.zeros((hidden_size,), jnp.float32)
    return p


# ----------------------------------------------------------------------------
# Pure-JAX reference (full f32, HIGHEST precision)
# ----------------------------------------------------------------------------
def _ref_conv(x, w, b):
    y = jax.lax.conv_general_dilated(
        x, w, window_strides=(1, 1), padding="SAME",
        dimension_numbers=("NHWC", "HWIO", "NHWC"),
        precision=jax.lax.Precision.HIGHEST)
    return y + b.reshape(1, 1, 1, -1)


def _ref_bn(x, gamma, beta):
    mean = jnp.mean(x, axis=(0, 1, 2), keepdims=True)
    var = jnp.mean((x - mean) ** 2, axis=(0, 1, 2), keepdims=True)
    return (x - mean) * jax.lax.rsqrt(var + BN_EPS) * gamma.reshape(1, 1, 1, -1) \
        + beta.reshape(1, 1, 1, -1)


def _ref_lrelu(x):
    return jnp.where(x > 0, x, LRELU_SLOPE * x)


def basic_critic_reference(x_nchw, p):
    x = jnp.transpose(x_nchw, (0, 2, 3, 1))
    x = _ref_bn(_ref_lrelu(_ref_conv(x, p["w1"], p["b1"])), p["gamma1"], p["beta1"])
    x = _ref_bn(_ref_lrelu(_ref_conv(x, p["w2"], p["b2"])), p["gamma2"], p["beta2"])
    x = _ref_bn(_ref_lrelu(_ref_conv(x, p["w3"], p["b3"])), p["gamma3"], p["beta3"])
    x = _ref_conv(x, p["w4"], p["b4"])
    return jnp.mean(x.reshape(x.shape[0], -1), axis=1)


# ----------------------------------------------------------------------------
if __name__ == "__main__":
    N, C, H, W = 2, 3, 16, 16
    hidden_size = 32

    key = jax.random.PRNGKey(0)
    k_x, k_p = jax.random.split(key)
    x = jax.random.normal(k_x, (N, C, H, W), jnp.float32)
    params = init_params(k_p, hidden_size)

    fwd = jax.jit(basic_critic_forward)
    out = jax.block_until_ready(fwd(x, params))
    ref = jax.block_until_ready(basic_critic_reference(x, params))

    assert out.shape == (N,)
    # Kernel matmuls are bf16-in / f32-accumulate (native MXU); reference is
    # full f32 HIGHEST, hence the 5e-3 bound.
    np.testing.assert_allclose(np.asarray(out), np.asarray(ref),
                               rtol=5e-3, atol=5e-3)
    print("KERNEL_OK")
</pallas_src>

<mosaic_0001>
module attributes {stable_mosaic.version = 11 : i64} {
  func.func @_critic_kernel(%arg0: memref<8x768xbf16, #tpu.memory_space<vmem>>, %arg1: memref<9x32x8xbf16, #tpu.memory_space<vmem>>, %arg2: memref<32x1xf32, #tpu.memory_space<vmem>>, %arg3: memref<32x1xf32, #tpu.memory_space<vmem>>, %arg4: memref<32x1xf32, #tpu.memory_space<vmem>>, %arg5: memref<9x32x32xbf16, #tpu.memory_space<vmem>>, %arg6: memref<32x1xf32, #tpu.memory_space<vmem>>, %arg7: memref<32x1xf32, #tpu.memory_space<vmem>>, %arg8: memref<32x1xf32, #tpu.memory_space<vmem>>, %arg9: memref<9x32x32xbf16, #tpu.memory_space<vmem>>, %arg10: memref<32x1xf32, #tpu.memory_space<vmem>>, %arg11: memref<32x1xf32, #tpu.memory_space<vmem>>, %arg12: memref<32x1xf32, #tpu.memory_space<vmem>>, %arg13: memref<9x1x32xbf16, #tpu.memory_space<vmem>>, %arg14: memref<1x1xf32, #tpu.memory_space<vmem>>, %arg15: memref<1x648xf32, #tpu.memory_space<vmem>>, %arg16: memref<648x2xf32, #tpu.memory_space<vmem>>, %arg17: memref<1x2xf32, #tpu.memory_space<vmem>>, %arg18: memref<32x768xbf16, #tpu.memory_space<vmem>>, %arg19: memref<32x768xbf16, #tpu.memory_space<vmem>>) attributes {dimension_semantics = [], scalar_prefetch = 0 : i64, scratch_operands = 2 : i64, tpu.core_type = #tpu.core_type<tc>} {
    %c0 = arith.constant 0 : index
    %c0_0 = arith.constant 0 : index
    %0 = vector.load %arg15[%c0, %c0_0] : memref<1x648xf32, #tpu.memory_space<vmem>>, vector<1x648xf32>
    %cst = arith.constant 0.000000e+00 : bf16
    %1 = vector.broadcast %cst : bf16 to vector<32x19xbf16>
    %c0_1 = arith.constant 0 : index
    %c0_2 = arith.constant 0 : index
    %2 = vector.load %arg18[%c0_1, %c0_2] : memref<32x768xbf16, #tpu.memory_space<vmem>>, vector<32x19xbf16>
    tpu.vector_store %arg18[%c0_1, %c0_2], %1 {strides = array<i32>} : memref<32x768xbf16, #tpu.memory_space<vmem>>, vector<32x19xbf16>,
    %cst_3 = arith.constant 0.000000e+00 : bf16
    %3 = vector.broadcast %cst_3 : bf16 to vector<32x101xbf16>
    %c0_4 = arith.constant 0 : index
    %c667 = arith.constant 667 : index
    %4 = vector.load %arg18[%c0_4, %c667] : memref<32x768xbf16, #tpu.memory_space<vmem>>, vector<32x101xbf16>
    tpu.vector_store %arg18[%c0_4, %c667], %3 {strides = array<i32>} : memref<32x768xbf16, #tpu.memory_space<vmem>>, vector<32x101xbf16>,
    %cst_5 = arith.constant 0.000000e+00 : bf16
    %5 = vector.broadcast %cst_5 : bf16 to vector<32x19xbf16>
    %c0_6 = arith.constant 0 : index
    %c0_7 = arith.constant 0 : index
    %6 = vector.load %arg19[%c0_6, %c0_7] : memref<32x768xbf16, #tpu.memory_space<vmem>>, vector<32x19xbf16>
    tpu.vector_store %arg19[%c0_6, %c0_7], %5 {strides = array<i32>} : memref<32x768xbf16, #tpu.memory_space<vmem>>, vector<32x19xbf16>,
    %cst_8 = arith.constant 0.000000e+00 : bf16
    %7 = vector.broadcast %cst_8 : bf16 to vector<32x101xbf16>
    %c0_9 = arith.constant 0 : index
    %c667_10 = arith.constant 667 : index
    %8 = vector.load %arg19[%c0_9, %c667_10] : memref<32x768xbf16, #tpu.memory_space<vmem>>, vector<32x101xbf16>
    tpu.vector_store %arg19[%c0_9, %c667_10], %7 {strides = array<i32>} : memref<32x768xbf16, #tpu.memory_space<vmem>>, vector<32x101xbf16>,
    %c0_11 = arith.constant 0 : index
    %c0_12 = arith.constant 0 : index
    %c0_13 = arith.constant 0 : index
    %9 = vector.load %arg1[%c0_11, %c0_12, %c0_13] : memref<9x32x8xbf16, #tpu.memory_space<vmem>>, vector<1x32x8xbf16>
    %10 = vector.shape_cast %9 : vector<1x32x8xbf16> to vector<32x8xbf16>
    %c0_14 = arith.constant 0 : index
    %c0_15 = arith.constant 0 : index
    %11 = vector.load %arg0[%c0_14, %c0_15] : memref<8x768xbf16, #tpu.memory_space<vmem>>, vector<8x648xbf16>
    %cst_16 = arith.constant dense<0.000000e+00> : vector<32x648xf32>
    %12 = tpu.matmul %10, %11, %cst_16 {dimension_numbers = #tpu.dot_dimension_numbers<[1], [0], [0], [1], [0, 0, 1, 1], [], []>} : vector<32x8xbf16>, vector<8x648xbf16>, vector<32x648xf32> -> vector<32x648xf32>
    %c1 = arith.constant 1 : index
    %c0_17 = arith.constant 0 : index
    %c0_18 = arith.constant 0 : index
    %13 = vector.load %arg1[%c1, %c0_17, %c0_18] : memref<9x32x8xbf16, #tpu.memory_space<vmem>>, vector<1x32x8xbf16>
    %14 = vector.shape_cast %13 : vector<1x32x8xbf16> to vector<32x8xbf16>
    %c0_19 = arith.constant 0 : index
    %c1_20 = arith.constant 1 : index
    %15 = vector.load %arg0[%c0_19, %c1_20] : memref<8x768xbf16, #tpu.memory_space<vmem>>, vector<8x648xbf16>
    %cst_21 = arith.constant dense<0.000000e+00> : vector<32x648xf32>
    %16 = tpu.matmul %14, %15, %cst_21 {dimension_numbers = #tpu.dot_dimension_numbers<[1], [0], [0], [1], [0, 0, 1, 1], [], []>} : vector<32x8xbf16>, vector<8x648xbf16>, vector<32x648xf32> -> vector<32x648xf32>
    %17 = arith.addf %12, %16 : vector<32x648xf32>
    %c2 = arith.constant 2 : index
    %c0_22 = arith.constant 0 : index
    %c0_23 = arith.constant 0 : index
    %18 = vector.load %arg1[%c2, %c0_22, %c0_23] : memref<9x32x8xbf16, #tpu.memory_space<vmem>>, vector<1x32x8xbf16>
    %19 = vector.shape_cast %18 : vector<1x32x8xbf16> to vector<32x8xbf16>
    %c0_24 = arith.constant 0 : index
    %c2_25 = arith.constant 2 : index
    %20 = vector.load %arg0[%c0_24, %c2_25] : memref<8x768xbf16, #tpu.memory_space<vmem>>, vector<8x648xbf16>
    %cst_26 = arith.constant dense<0.000000e+00> : vector<32x648xf32>
    %21 = tpu.matmul %19, %20, %cst_26 {dimension_numbers = #tpu.dot_dimension_numbers<[1], [0], [0], [1], [0, 0, 1, 1], [], []>} : vector<32x8xbf16>, vector<8x648xbf16>, vector<32x648xf32> -> vector<32x648xf32>
    %22 = arith.addf %17, %21 : vector<32x648xf32>
    %c3 = arith.constant 3 : index
    %c0_27 = arith.constant 0 : index
    %c0_28 = arith.constant 0 : index
    %23 = vector.load %arg1[%c3, %c0_27, %c0_28] : memref<9x32x8xbf16, #tpu.memory_space<vmem>>, vector<1x32x8xbf16>
    %24 = vector.shape_cast %23 : vector<1x32x8xbf16> to vector<32x8xbf16>
    %c0_29 = arith.constant 0 : index
    %c18 = arith.constant 18 : index
    %25 = vector.load %arg0[%c0_29, %c18] : memref<8x768xbf16, #tpu.memory_space<vmem>>, vector<8x648xbf16>
    %cst_30 = arith.constant dense<0.000000e+00> : vector<32x648xf32>
    %26 = tpu.matmul %24, %25, %cst_30 {dimension_numbers = #tpu.dot_dimension_numbers<[1], [0], [0], [1], [0, 0, 1, 1], [], []>} : vector<32x8xbf16>, vector<8x648xbf16>, vector<32x648xf32> -> vector<32x648xf32>
    %27 = arith.addf %22, %26 : vector<32x648xf32>
    %c4 = arith.constant 4 : index
    %c0_31 = arith.constant 0 : index
    %c0_32 = arith.constant 0 : index
    %28 = vector.load %arg1[%c4, %c0_31, %c0_32] : memref<9x32x8xbf16, #tpu.memory_space<vmem>>, vector<1x32x8xbf16>
    %29 = vector.shape_cast %28 : vector<1x32x8xbf16> to vector<32x8xbf16>
    %c0_33 = arith.constant 0 : index
    %c19 = arith.constant 19 : index
    %30 = vector.load %arg0[%c0_33, %c19] : memref<8x768xbf16, #tpu.memory_space<vmem>>, vector<8x648xbf16>
    %cst_34 = arith.constant dense<0.000000e+00> : vector<32x648xf32>
    %31 = tpu.matmul %29, %30, %cst_34 {dimension_numbers = #tpu.dot_dimension_numbers<[1], [0], [0], [1], [0, 0, 1, 1], [], []>} : vector<32x8xbf16>, vector<8x648xbf16>, vector<32x648xf32> -> vector<32x648xf32>
    %32 = arith.addf %27, %31 : vector<32x648xf32>
    %c5 = arith.constant 5 : index
    %c0_35 = arith.constant 0 : index
    %c0_36 = arith.constant 0 : index
    %33 = vector.load %arg1[%c5, %c0_35, %c0_36] : memref<9x32x8xbf16, #tpu.memory_space<vmem>>, vector<1x32x8xbf16>
    %34 = vector.shape_cast %33 : vector<1x32x8xbf16> to vector<32x8xbf16>
    %c0_37 = arith.constant 0 : index
    %c20 = arith.constant 20 : index
    %35 = vector.load %arg0[%c0_37, %c20] : memref<8x768xbf16, #tpu.memory_space<vmem>>, vector<8x648xbf16>
    %cst_38 = arith.constant dense<0.000000e+00> : vector<32x648xf32>
    %36 = tpu.matmul %34, %35, %cst_38 {dimension_numbers = #tpu.dot_dimension_numbers<[1], [0], [0], [1], [0, 0, 1, 1], [], []>} : vector<32x8xbf16>, vector<8x648xbf16>, vector<32x648xf32> -> vector<32x648xf32>
    %37 = arith.addf %32, %36 : vector<32x648xf32>
    %c6 = arith.constant 6 : index
    %c0_39 = arith.constant 0 : index
    %c0_40 = arith.constant 0 : index
    %38 = vector.load %arg1[%c6, %c0_39, %c0_40] : memref<9x32x8xbf16, #tpu.memory_space<vmem>>, vector<1x32x8xbf16>
    %39 = vector.shape_cast %38 : vector<1x32x8xbf16> to vector<32x8xbf16>
    %c0_41 = arith.constant 0 : index
    %c36 = arith.constant 36 : index
    %40 = vector.load %arg0[%c0_41, %c36] : memref<8x768xbf16, #tpu.memory_space<vmem>>, vector<8x648xbf16>
    %cst_42 = arith.constant dense<0.000000e+00> : vector<32x648xf32>
    %41 = tpu.matmul %39, %40, %cst_42 {dimension_numbers = #tpu.dot_dimension_numbers<[1], [0], [0], [1], [0, 0, 1, 1], [], []>} : vector<32x8xbf16>, vector<8x648xbf16>, vector<32x648xf32> -> vector<32x648xf32>
    %42 = arith.addf %37, %41 : vector<32x648xf32>
    %c7 = arith.constant 7 : index
    %c0_43 = arith.constant 0 : index
    %c0_44 = arith.constant 0 : index
    %43 = vector.load %arg1[%c7, %c0_43, %c0_44] : memref<9x32x8xbf16, #tpu.memory_space<vmem>>, vector<1x32x8xbf16>
    %44 = vector.shape_cast %43 : vector<1x32x8xbf16> to vector<32x8xbf16>
    %c0_45 = arith.constant 0 : index
    %c37 = arith.constant 37 : index
    %45 = vector.load %arg0[%c0_45, %c37] : memref<8x768xbf16, #tpu.memory_space<vmem>>, vector<8x648xbf16>
    %cst_46 = arith.constant dense<0.000000e+00> : vector<32x648xf32>
    %46 = tpu.matmul %44, %45, %cst_46 {dimension_numbers = #tpu.dot_dimension_numbers<[1], [0], [0], [1], [0, 0, 1, 1], [], []>} : vector<32x8xbf16>, vector<8x648xbf16>, vector<32x648xf32> -> vector<32x648xf32>
    %47 = arith.addf %42, %46 : vector<32x648xf32>
    %c8 = arith.constant 8 : index
    %c0_47 = arith.constant 0 : index
    %c0_48 = arith.constant 0 : index
    %48 = vector.load %arg1[%c8, %c0_47, %c0_48] : memref<9x32x8xbf16, #tpu.memory_space<vmem>>, vector<1x32x8xbf16>
    %49 = vector.shape_cast %48 : vector<1x32x8xbf16> to vector<32x8xbf16>
    %c0_49 = arith.constant 0 : index
    %c38 = arith.constant 38 : index
    %50 = vector.load %arg0[%c0_49, %c38] : memref<8x768xbf16, #tpu.memory_space<vmem>>, vector<8x648xbf16>
    %cst_50 = arith.constant dense<0.000000e+00> : vector<32x648xf32>
    %51 = tpu.matmul %49, %50, %cst_50 {dimension_numbers = #tpu.dot_dimension_numbers<[1], [0], [0], [1], [0, 0, 1, 1], [], []>} : vector<32x8xbf16>, vector<8x648xbf16>, vector<32x648xf32> -> vector<32x648xf32>
    %52 = arith.addf %47, %51 : vector<32x648xf32>
    %c0_51 = arith.constant 0 : index
    %c0_52 = arith.constant 0 : index
    %53 = vector.load %arg2[%c0_51, %c0_52] : memref<32x1xf32, #tpu.memory_space<vmem>>, vector<32x1xf32>
    %54 = vector.broadcast %53 : vector<32x1xf32> to vector<32x648xf32>
    %55 = arith.addf %52, %54 : vector<32x648xf32>
    %cst_53 = arith.constant 0.000000e+00 : f32
    %56 = vector.broadcast %cst_53 : f32 to vector<32x648xf32>
    %57 = arith.cmpf ogt, %55, %56 : vector<32x648xf32>
    %cst_54 = arith.constant 2.000000e-01 : f32
    %58 = vector.broadcast %cst_54 : f32 to vector<32x648xf32>
    %59 = arith.mulf %58, %55 : vector<32x648xf32>
    %60 = arith.select %57, %55, %59 : vector<32x648xi1>, vector<32x648xf32>
    %61 = vector.broadcast %0 : vector<1x648xf32> to vector<32x648xf32>
    %62 = arith.mulf %60, %61 : vector<32x648xf32>
    %cst_55 = arith.constant dense<0.000000e+00> : vector<32xf32>
    %63 = vector.multi_reduction <add>, %62, %cst_55 [1] : vector<32x648xf32> to vector<32xf32>
    %64 = vector.shape_cast %63 : vector<32xf32> to vector<32x1xf32>
    %65 = arith.mulf %62, %62 : vector<32x648xf32>
    %cst_56 = arith.constant dense<0.000000e+00> : vector<32xf32>
    %66 = vector.multi_reduction <add>, %65, %cst_56 [1] : vector<32x648xf32> to vector<32xf32>
    %67 = vector.shape_cast %66 : vector<32xf32> to vector<32x1xf32>
    %cst_57 = arith.constant 0.001953125 : f32
    %68 = vector.broadcast %cst_57 : f32 to vector<32x1xf32>
    %69 = arith.mulf %64, %68 : vector<32x1xf32>
    %cst_58 = arith.constant 0.001953125 : f32
    %70 = vector.broadcast %cst_58 : f32 to vector<32x1xf32>
    %71 = arith.mulf %67, %70 : vector<32x1xf32>
    %72 = arith.mulf %69, %69 : vector<32x1xf32>
    %73 = arith.subf %71, %72 : vector<32x1xf32>
    %c0_59 = arith.constant 0 : index
    %c0_60 = arith.constant 0 : index
    %74 = vector.load %arg3[%c0_59, %c0_60] : memref<32x1xf32, #tpu.memory_space<vmem>>, vector<32x1xf32>
    %cst_61 = arith.constant 9.99999974E-6 : f32
    %75 = vector.broadcast %cst_61 : f32 to vector<32x1xf32>
    %76 = arith.addf %73, %75 : vector<32x1xf32>
    %77 = math.rsqrt %76 : vector<32x1xf32>
    %78 = arith.mulf %74, %77 : vector<32x1xf32>
    %c0_62 = arith.constant 0 : index
    %c0_63 = arith.constant 0 : index
    %79 = vector.load %arg4[%c0_62, %c0_63] : memref<32x1xf32, #tpu.memory_space<vmem>>, vector<32x1xf32>
    %80 = arith.mulf %69, %78 : vector<32x1xf32>
    %81 = arith.subf %79, %80 : vector<32x1xf32>
    %82 = vector.broadcast %78 : vector<32x1xf32> to vector<32x648xf32>
    %83 = arith.mulf %62, %82 : vector<32x648xf32>
    %84 = vector.broadcast %81 : vector<32x1xf32> to vector<32x648xf32>
    %85 = arith.addf %83, %84 : vector<32x648xf32>
    %86 = vector.broadcast %0 : vector<1x648xf32> to vector<32x648xf32>
    %87 = arith.mulf %85, %86 : vector<32x648xf32>
    %88 = arith.truncf %87 : vector<32x648xf32> to vector<32x648xbf16>
    %c0_64 = arith.constant 0 : index
    %c19_65 = arith.constant 19 : index
    %89 = vector.load %arg18[%c0_64, %c19_65] : memref<32x768xbf16, #tpu.memory_space<vmem>>, vector<32x648xbf16>
    tpu.vector_store %arg18[%c0_64, %c19_65], %88 {strides = array<i32>} : memref<32x768xbf16, #tpu.memory_space<vmem>>, vector<32x648xbf16>,
    %c0_66 = arith.constant 0 : index
    %c0_67 = arith.constant 0 : index
    %c0_68 = arith.constant 0 : index
    %90 = vector.load %arg5[%c0_66, %c0_67, %c0_68] : memref<9x32x32xbf16, #tpu.memory_space<vmem>>, vector<1x32x32xbf16>
    %91 = vector.shape_cast %90 : vector<1x32x32xbf16> to vector<32x32xbf16>
    %c0_69 = arith.constant 0 : index
    %c0_70 = arith.constant 0 : index
    %92 = vector.load %arg18[%c0_69, %c0_70] : memref<32x768xbf16, #tpu.memory_space<vmem>>, vector<32x648xbf16>
    %cst_71 = arith.constant dense<0.000000e+00> : vector<32x648xf32>
    %93 = tpu.matmul %91, %92, %cst_71 {dimension_numbers = #tpu.dot_dimension_numbers<[1], [0], [0], [1], [0, 0, 1, 1], [], []>} : vector<32x32xbf16>, vector<32x648xbf16>, vector<32x648xf32> -> vector<32x648xf32>
    %c1_72 = arith.constant 1 : index
    %c0_73 = arith.constant 0 : index
    %c0_74 = arith.constant 0 : index
    %94 = vector.load %arg5[%c1_72, %c0_73, %c0_74] : memref<9x32x32xbf16, #tpu.memory_space<vmem>>, vector<1x32x32xbf16>
    %95 = vector.shape_cast %94 : vector<1x32x32xbf16> to vector<32x32xbf16>
    %c0_75 = arith.constant 0 : index
    %c1_76 = arith.constant 1 : index
    %96 = vector.load %arg18[%c0_75, %c1_76] : memref<32x768xbf16, #tpu.memory_space<vmem>>, vector<32x648xbf16>
    %cst_77 = arith.constant dense<0.000000e+00> : vector<32x648xf32>
    %97 = tpu.matmul %95, %96, %cst_77 {dimension_numbers = #tpu.dot_dimension_numbers<[1], [0], [0], [1], [0, 0, 1, 1], [], []>} : vector<32x32xbf16>, vector<32x648xbf16>, vector<32x648xf32> -> vector<32x648xf32>
    %98 = arith.addf %93, %97 : vector<32x648xf32>
    %c2_78 = arith.constant 2 : index
    %c0_79 = arith.constant 0 : index
    %c0_80 = arith.constant 0 : index
    %99 = vector.load %arg5[%c2_78, %c0_79, %c0_80] : memref<9x32x32xbf16, #tpu.memory_space<vmem>>, vector<1x32x32xbf16>
    %100 = vector.shape_cast %99 : vector<1x32x32xbf16> to vector<32x32xbf16>
    %c0_81 = arith.constant 0 : index
    %c2_82 = arith.constant 2 : index
    %101 = vector.load %arg18[%c0_81, %c2_82] : memref<32x768xbf16, #tpu.memory_space<vmem>>, vector<32x648xbf16>
    %cst_83 = arith.constant dense<0.000000e+00> : vector<32x648xf32>
    %102 = tpu.matmul %100, %101, %cst_83 {dimension_numbers = #tpu.dot_dimension_numbers<[1], [0], [0], [1], [0, 0, 1, 1], [], []>} : vector<32x32xbf16>, vector<32x648xbf16>, vector<32x648xf32> -> vector<32x648xf32>
    %103 = arith.addf %98, %102 : vector<32x648xf32>
    %c3_84 = arith.constant 3 : index
    %c0_85 = arith.constant 0 : index
    %c0_86 = arith.constant 0 : index
    %104 = vector.load %arg5[%c3_84, %c0_85, %c0_86] : memref<9x32x32xbf16, #tpu.memory_space<vmem>>, vector<1x32x32xbf16>
    %105 = vector.shape_cast %104 : vector<1x32x32xbf16> to vector<32x32xbf16>
    %c0_87 = arith.constant 0 : index
    %c18_88 = arith.constant 18 : index
    %106 = vector.load %arg18[%c0_87, %c18_88] : memref<32x768xbf16, #tpu.memory_space<vmem>>, vector<32x648xbf16>
    %cst_89 = arith.constant dense<0.000000e+00> : vector<32x648xf32>
    %107 = tpu.matmul %105, %106, %cst_89 {dimension_numbers = #tpu.dot_dimension_numbers<[1], [0], [0], [1], [0, 0, 1, 1], [], []>} : vector<32x32xbf16>, vector<32x648xbf16>, vector<32x648xf32> -> vector<32x648xf32>
    %108 = arith.addf %103, %107 : vector<32x648xf32>
    %c4_90 = arith.constant 4 : index
    %c0_91 = arith.constant 0 : index
    %c0_92 = arith.constant 0 : index
    %109 = vector.load %arg5[%c4_90, %c0_91, %c0_92] : memref<9x32x32xbf16, #tpu.memory_space<vmem>>, vector<1x32x32xbf16>
    %110 = vector.shape_cast %109 : vector<1x32x32xbf16> to vector<32x32xbf16>
    %c0_93 = arith.constant 0 : index
    %c19_94 = arith.constant 19 : index
    %111 = vector.load %arg18[%c0_93, %c19_94] : memref<32x768xbf16, #tpu.memory_space<vmem>>, vector<32x648xbf16>
    %cst_95 = arith.constant dense<0.000000e+00> : vector<32x648xf32>
    %112 = tpu.matmul %110, %111, %cst_95 {dimension_numbers = #tpu.dot_dimension_numbers<[1], [0], [0], [1], [0, 0, 1, 1], [], []>} : vector<32x32xbf16>, vector<32x648xbf16>, vector<32x648xf32> -> vector<32x648xf32>
    %113 = arith.addf %108, %112 : vector<32x648xf32>
    %c5_96 = arith.constant 5 : index
    %c0_97 = arith.constant 0 : index
    %c0_98 = arith.constant 0 : index
    %114 = vector.load %arg5[%c5_96, %c0_97, %c0_98] : memref<9x32x32xbf16, #tpu.memory_space<vmem>>, vector<1x32x32xbf16>
    %115 = vector.shape_cast %114 : vector<1x32x32xbf16> to vector<32x32xbf16>
    %c0_99 = arith.constant 0 : index
    %c20_100 = arith.constant 20 : index
    %116 = vector.load %arg18[%c0_99, %c20_100] : memref<32x768xbf16, #tpu.memory_space<vmem>>, vector<32x648xbf16>
    %cst_101 = arith.constant dense<0.000000e+00> : vector<32x648xf32>
    %117 = tpu.matmul %115, %116, %cst_101 {dimension_numbers = #tpu.dot_dimension_numbers<[1], [0], [0], [1], [0, 0, 1, 1], [], []>} : vector<32x32xbf16>, vector<32x648xbf16>, vector<32x648xf32> -> vector<32x648xf32>
    %118 = arith.addf %113, %117 : vector<32x648xf32>
    %c6_102 = arith.constant 6 : index
    %c0_103 = arith.constant 0 : index
    %c0_104 = arith.constant 0 : index
    %119 = vector.load %arg5[%c6_102, %c0_103, %c0_104] : memref<9x32x32xbf16, #tpu.memory_space<vmem>>, vector<1x32x32xbf16>
    %120 = vector.shape_cast %119 : vector<1x32x32xbf16> to vector<32x32xbf16>
    %c0_105 = arith.constant 0 : index
    %c36_106 = arith.constant 36 : index
    %121 = vector.load %arg18[%c0_105, %c36_106] : memref<32x768xbf16, #tpu.memory_space<vmem>>, vector<32x648xbf16>
    %cst_107 = arith.constant dense<0.000000e+00> : vector<32x648xf32>
    %122 = tpu.matmul %120, %121, %cst_107 {dimension_numbers = #tpu.dot_dimension_numbers<[1], [0], [0], [1], [0, 0, 1, 1], [], []>} : vector<32x32xbf16>, vector<32x648xbf16>, vector<32x648xf32> -> vector<32x648xf32>
    %123 = arith.addf %118, %122 : vector<32x648xf32>
    %c7_108 = arith.constant 7 : index
    %c0_109 = arith.constant 0 : index
    %c0_110 = arith.constant 0 : index
    %124 = vector.load %arg5[%c7_108, %c0_109, %c0_110] : memref<9x32x32xbf16, #tpu.memory_space<vmem>>, vector<1x32x32xbf16>
    %125 = vector.shape_cast %124 : vector<1x32x32xbf16> to vector<32x32xbf16>
    %c0_111 = arith.constant 0 : index
    %c37_112 = arith.constant 37 : index
    %126 = vector.load %arg18[%c0_111, %c37_112] : memref<32x768xbf16, #tpu.memory_space<vmem>>, vector<32x648xbf16>
    %cst_113 = arith.constant dense<0.000000e+00> : vector<32x648xf32>
    %127 = tpu.matmul %125, %126, %cst_113 {dimension_numbers = #tpu.dot_dimension_numbers<[1], [0], [0], [1], [0, 0, 1, 1], [], []>} : vector<32x32xbf16>, vector<32x648xbf16>, vector<32x648xf32> -> vector<32x648xf32>
    %128 = arith.addf %123, %127 : vector<32x648xf32>
    %c8_114 = arith.constant 8 : index
    %c0_115 = arith.constant 0 : index
    %c0_116 = arith.constant 0 : index
    %129 = vector.load %arg5[%c8_114, %c0_115, %c0_116] : memref<9x32x32xbf16, #tpu.memory_space<vmem>>, vector<1x32x32xbf16>
    %130 = vector.shape_cast %129 : vector<1x32x32xbf16> to vector<32x32xbf16>
    %c0_117 = arith.constant 0 : index
    %c38_118 = arith.constant 38 : index
    %131 = vector.load %arg18[%c0_117, %c38_118] : memref<32x768xbf16, #tpu.memory_space<vmem>>, vector<32x648xbf16>
    %cst_119 = arith.constant dense<0.000000e+00> : vector<32x648xf32>
    %132 = tpu.matmul %130, %131, %cst_119 {dimension_numbers = #tpu.dot_dimension_numbers<[1], [0], [0], [1], [0, 0, 1, 1], [], []>} : vector<32x32xbf16>, vector<32x648xbf16>, vector<32x648xf32> -> vector<32x648xf32>
    %133 = arith.addf %128, %132 : vector<32x648xf32>
    %c0_120 = arith.constant 0 : index
    %c0_121 = arith.constant 0 : index
    %134 = vector.load %arg6[%c0_120, %c0_121] : memref<32x1xf32, #tpu.memory_space<vmem>>, vector<32x1xf32>
    %135 = vector.broadcast %134 : vector<32x1xf32> to vector<32x648xf32>
    %136 = arith.addf %133, %135 : vector<32x648xf32>
    %cst_122 = arith.constant 0.000000e+00 : f32
    %137 = vector.broadcast %cst_122 : f32 to vector<32x648xf32>
    %138 = arith.cmpf ogt, %136, %137 : vector<32x648xf32>
    %cst_123 = arith.constant 2.000000e-01 : f32
    %139 = vector.broadcast %cst_123 : f32 to vector<32x648xf32>
    %140 = arith.mulf %139, %136 : vector<32x648xf32>
    %141 = arith.select %138, %136, %140 : vector<32x648xi1>, vector<32x648xf32>
    %142 = vector.broadcast %0 : vector<1x648xf32> to vector<32x648xf32>
    %143 = arith.mulf %141, %142 : vector<32x648xf32>
    %cst_124 = arith.constant dense<0.000000e+00> : vector<32xf32>
    %144 = vector.multi_reduction <add>, %143, %cst_124 [1] : vector<32x648xf32> to vector<32xf32>
    %145 = vector.shape_cast %144 : vector<32xf32> to vector<32x1xf32>
    %146 = arith.mulf %143, %143 : vector<32x648xf32>
    %cst_125 = arith.constant dense<0.000000e+00> : vector<32xf32>
    %147 = vector.multi_reduction <add>, %146, %cst_125 [1] : vector<32x648xf32> to vector<32xf32>
    %148 = vector.shape_cast %147 : vector<32xf32> to vector<32x1xf32>
    %cst_126 = arith.constant 0.001953125 : f32
    %149 = vector.broadcast %cst_126 : f32 to vector<32x1xf32>
    %150 = arith.mulf %145, %149 : vector<32x1xf32>
    %cst_127 = arith.constant 0.001953125 : f32
    %151 = vector.broadcast %cst_127 : f32 to vector<32x1xf32>
    %152 = arith.mulf %148, %151 : vector<32x1xf32>
    %153 = arith.mulf %150, %150 : vector<32x1xf32>
    %154 = arith.subf %152, %153 : vector<32x1xf32>
    %c0_128 = arith.constant 0 : index
    %c0_129 = arith.constant 0 : index
    %155 = vector.load %arg7[%c0_128, %c0_129] : memref<32x1xf32, #tpu.memory_space<vmem>>, vector<32x1xf32>
    %cst_130 = arith.constant 9.99999974E-6 : f32
    %156 = vector.broadcast %cst_130 : f32 to vector<32x1xf32>
    %157 = arith.addf %154, %156 : vector<32x1xf32>
    %158 = math.rsqrt %157 : vector<32x1xf32>
    %159 = arith.mulf %155, %158 : vector<32x1xf32>
    %c0_131 = arith.constant 0 : index
    %c0_132 = arith.constant 0 : index
    %160 = vector.load %arg8[%c0_131, %c0_132] : memref<32x1xf32, #tpu.memory_space<vmem>>, vector<32x1xf32>
    %161 = arith.mulf %150, %159 : vector<32x1xf32>
    %162 = arith.subf %160, %161 : vector<32x1xf32>
    %163 = vector.broadcast %159 : vector<32x1xf32> to vector<32x648xf32>
    %164 = arith.mulf %143, %163 : vector<32x648xf32>
    %165 = vector.broadcast %162 : vector<32x1xf32> to vector<32x648xf32>
    %166 = arith.addf %164, %165 : vector<32x648xf32>
    %167 = vector.broadcast %0 : vector<1x648xf32> to vector<32x648xf32>
    %168 = arith.mulf %166, %167 : vector<32x648xf32>
    %169 = arith.truncf %168 : vector<32x648xf32> to vector<32x648xbf16>
    %c0_133 = arith.constant 0 : index
    %c19_134 = arith.constant 19 : index
    %170 = vector.load %arg19[%c0_133, %c19_134] : memref<32x768xbf16, #tpu.memory_space<vmem>>, vector<32x648xbf16>
    tpu.vector_store %arg19[%c0_133, %c19_134], %169 {strides = array<i32>} : memref<32x768xbf16, #tpu.memory_space<vmem>>, vector<32x648xbf16>,
    %c0_135 = arith.constant 0 : index
    %c0_136 = arith.constant 0 : index
    %c0_137 = arith.constant 0 : index
    %171 = vector.load %arg9[%c0_135, %c0_136, %c0_137] : memref<9x32x32xbf16, #tpu.memory_space<vmem>>, vector<1x32x32xbf16>
    %172 = vector.shape_cast %171 : vector<1x32x32xbf16> to vector<32x32xbf16>
    %c0_138 = arith.constant 0 : index
    %c0_139 = arith.constant 0 : index
    %173 = vector.load %arg19[%c0_138, %c0_139] : memref<32x768xbf16, #tpu.memory_space<vmem>>, vector<32x648xbf16>
    %cst_140 = arith.constant dense<0.000000e+00> : vector<32x648xf32>
    %174 = tpu.matmul %172, %173, %cst_140 {dimension_numbers = #tpu.dot_dimension_numbers<[1], [0], [0], [1], [0, 0, 1, 1], [], []>} : vector<32x32xbf16>, vector<32x648xbf16>, vector<32x648xf32> -> vector<32x648xf32>
    %c1_141 = arith.constant 1 : index
    %c0_142 = arith.constant 0 : index
    %c0_143 = arith.constant 0 : index
    %175 = vector.load %arg9[%c1_141, %c0_142, %c0_143] : memref<9x32x32xbf16, #tpu.memory_space<vmem>>, vector<1x32x32xbf16>
    %176 = vector.shape_cast %175 : vector<1x32x32xbf16> to vector<32x32xbf16>
    %c0_144 = arith.constant 0 : index
    %c1_145 = arith.constant 1 : index
    %177 = vector.load %arg19[%c0_144, %c1_145] : memref<32x768xbf16, #tpu.memory_space<vmem>>, vector<32x648xbf16>
    %cst_146 = arith.constant dense<0.000000e+00> : vector<32x648xf32>
    %178 = tpu.matmul %176, %177, %cst_146 {dimension_numbers = #tpu.dot_dimension_numbers<[1], [0], [0], [1], [0, 0, 1, 1], [], []>} : vector<32x32xbf16>, vector<32x648xbf16>, vector<32x648xf32> -> vector<32x648xf32>
    %179 = arith.addf %174, %178 : vector<32x648xf32>
    %c2_147 = arith.constant 2 : index
    %c0_148 = arith.constant 0 : index
    %c0_149 = arith.constant 0 : index
    %180 = vector.load %arg9[%c2_147, %c0_148, %c0_149] : memref<9x32x32xbf16, #tpu.memory_space<vmem>>, vector<1x32x32xbf16>
    %181 = vector.shape_cast %180 : vector<1x32x32xbf16> to vector<32x32xbf16>
    %c0_150 = arith.constant 0 : index
    %c2_151 = arith.constant 2 : index
    %182 = vector.load %arg19[%c0_150, %c2_151] : memref<32x768xbf16, #tpu.memory_space<vmem>>, vector<32x648xbf16>
    %cst_152 = arith.constant dense<0.000000e+00> : vector<32x648xf32>
    %183 = tpu.matmul %181, %182, %cst_152 {dimension_numbers = #tpu.dot_dimension_numbers<[1], [0], [0], [1], [0, 0, 1, 1], [], []>} : vector<32x32xbf16>, vector<32x648xbf16>, vector<32x648xf32> -> vector<32x648xf32>
    %184 = arith.addf %179, %183 : vector<32x648xf32>
    %c3_153 = arith.constant 3 : index
    %c0_154 = arith.constant 0 : index
    %c0_155 = arith.constant 0 : index
    %185 = vector.load %arg9[%c3_153, %c0_154, %c0_155] : memref<9x32x32xbf16, #tpu.memory_space<vmem>>, vector<1x32x32xbf16>
    %186 = vector.shape_cast %185 : vector<1x32x32xbf16> to vector<32x32xbf16>
    %c0_156 = arith.constant 0 : index
    %c18_157 = arith.constant 18 : index
    %187 = vector.load %arg19[%c0_156, %c18_157] : memref<32x768xbf16, #tpu.memory_space<vmem>>, vector<32x648xbf16>
    %cst_158 = arith.constant dense<0.000000e+00> : vector<32x648xf32>
    %188 = tpu.matmul %186, %187, %cst_158 {dimension_numbers = #tpu.dot_dimension_numbers<[1], [0], [0], [1], [0, 0, 1, 1], [], []>} : vector<32x32xbf16>, vector<32x648xbf16>, vector<32x648xf32> -> vector<32x648xf32>
    %189 = arith.addf %184, %188 : vector<32x648xf32>
    %c4_159 = arith.constant 4 : index
    %c0_160 = arith.constant 0 : index
    %c0_161 = arith.constant 0 : index
    %190 = vector.load %arg9[%c4_159, %c0_160, %c0_161] : memref<9x32x32xbf16, #tpu.memory_space<vmem>>, vector<1x32x32xbf16>
    %191 = vector.shape_cast %190 : vector<1x32x32xbf16> to vector<32x32xbf16>
    %c0_162 = arith.constant 0 : index
    %c19_163 = arith.constant 19 : index
    %192 = vector.load %arg19[%c0_162, %c19_163] : memref<32x768xbf16, #tpu.memory_space<vmem>>, vector<32x648xbf16>
    %cst_164 = arith.constant dense<0.000000e+00> : vector<32x648xf32>
    %193 = tpu.matmul %191, %192, %cst_164 {dimension_numbers = #tpu.dot_dimension_numbers<[1], [0], [0], [1], [0, 0, 1, 1], [], []>} : vector<32x32xbf16>, vector<32x648xbf16>, vector<32x648xf32> -> vector<32x648xf32>
    %194 = arith.addf %189, %193 : vector<32x648xf32>
    %c5_165 = arith.constant 5 : index
    %c0_166 = arith.constant 0 : index
    %c0_167 = arith.constant 0 : index
    %195 = vector.load %arg9[%c5_165, %c0_166, %c0_167] : memref<9x32x32xbf16, #tpu.memory_space<vmem>>, vector<1x32x32xbf16>
    %196 = vector.shape_cast %195 : vector<1x32x32xbf16> to vector<32x32xbf16>
    %c0_168 = arith.constant 0 : index
    %c20_169 = arith.constant 20 : index
    %197 = vector.load %arg19[%c0_168, %c20_169] : memref<32x768xbf16, #tpu.memory_space<vmem>>, vector<32x648xbf16>
    %cst_170 = arith.constant dense<0.000000e+00> : vector<32x648xf32>
    %198 = tpu.matmul %196, %197, %cst_170 {dimension_numbers = #tpu.dot_dimension_numbers<[1], [0], [0], [1], [0, 0, 1, 1], [], []>} : vector<32x32xbf16>, vector<32x648xbf16>, vector<32x648xf32> -> vector<32x648xf32>
    %199 = arith.addf %194, %198 : vector<32x648xf32>
    %c6_171 = arith.constant 6 : index
    %c0_172 = arith.constant 0 : index
    %c0_173 = arith.constant 0 : index
    %200 = vector.load %arg9[%c6_171, %c0_172, %c0_173] : memref<9x32x32xbf16, #tpu.memory_space<vmem>>, vector<1x32x32xbf16>
    %201 = vector.shape_cast %200 : vector<1x32x32xbf16> to vector<32x32xbf16>
    %c0_174 = arith.constant 0 : index
    %c36_175 = arith.constant 36 : index
    %202 = vector.load %arg19[%c0_174, %c36_175] : memref<32x768xbf16, #tpu.memory_space<vmem>>, vector<32x648xbf16>
    %cst_176 = arith.constant dense<0.000000e+00> : vector<32x648xf32>
    %203 = tpu.matmul %201, %202, %cst_176 {dimension_numbers = #tpu.dot_dimension_numbers<[1], [0], [0], [1], [0, 0, 1, 1], [], []>} : vector<32x32xbf16>, vector<32x648xbf16>, vector<32x648xf32> -> vector<32x648xf32>
    %204 = arith.addf %199, %203 : vector<32x648xf32>
    %c7_177 = arith.constant 7 : index
    %c0_178 = arith.constant 0 : index
    %c0_179 = arith.constant 0 : index
    %205 = vector.load %arg9[%c7_177, %c0_178, %c0_179] : memref<9x32x32xbf16, #tpu.memory_space<vmem>>, vector<1x32x32xbf16>
    %206 = vector.shape_cast %205 : vector<1x32x32xbf16> to vector<32x32xbf16>
    %c0_180 = arith.constant 0 : index
    %c37_181 = arith.constant 37 : index
    %207 = vector.load %arg19[%c0_180, %c37_181] : memref<32x768xbf16, #tpu.memory_space<vmem>>, vector<32x648xbf16>
    %cst_182 = arith.constant dense<0.000000e+00> : vector<32x648xf32>
    %208 = tpu.matmul %206, %207, %cst_182 {dimension_numbers = #tpu.dot_dimension_numbers<[1], [0], [0], [1], [0, 0, 1, 1], [], []>} : vector<32x32xbf16>, vector<32x648xbf16>, vector<32x648xf32> -> vector<32x648xf32>
    %209 = arith.addf %204, %208 : vector<32x648xf32>
    %c8_183 = arith.constant 8 : index
    %c0_184 = arith.constant 0 : index
    %c0_185 = arith.constant 0 : index
    %210 = vector.load %arg9[%c8_183, %c0_184, %c0_185] : memref<9x32x32xbf16, #tpu.memory_space<vmem>>, vector<1x32x32xbf16>
    %211 = vector.shape_cast %210 : vector<1x32x32xbf16> to vector<32x32xbf16>
    %c0_186 = arith.constant 0 : index
    %c38_187 = arith.constant 38 : index
    %212 = vector.load %arg19[%c0_186, %c38_187] : memref<32x768xbf16, #tpu.memory_space<vmem>>, vector<32x648xbf16>
    %cst_188 = arith.constant dense<0.000000e+00> : vector<32x648xf32>
    %213 = tpu.matmul %211, %212, %cst_188 {dimension_numbers = #tpu.dot_dimension_numbers<[1], [0], [0], [1], [0, 0, 1, 1], [], []>} : vector<32x32xbf16>, vector<32x648xbf16>, vector<32x648xf32> -> vector<32x648xf32>
    %214 = arith.addf %209, %213 : vector<32x648xf32>
    %c0_189 = arith.constant 0 : index
    %c0_190 = arith.constant 0 : index
    %215 = vector.load %arg10[%c0_189, %c0_190] : memref<32x1xf32, #tpu.memory_space<vmem>>, vector<32x1xf32>
    %216 = vector.broadcast %215 : vector<32x1xf32> to vector<32x648xf32>
    %217 = arith.addf %214, %216 : vector<32x648xf32>
    %cst_191 = arith.constant 0.000000e+00 : f32
    %218 = vector.broadcast %cst_191 : f32 to vector<32x648xf32>
    %219 = arith.cmpf ogt, %217, %218 : vector<32x648xf32>
    %cst_192 = arith.constant 2.000000e-01 : f32
    %220 = vector.broadcast %cst_192 : f32 to vector<32x648xf32>
    %221 = arith.mulf %220, %217 : vector<32x648xf32>
    %222 = arith.select %219, %217, %221 : vector<32x648xi1>, vector<32x648xf32>
    %223 = vector.broadcast %0 : vector<1x648xf32> to vector<32x648xf32>
    %224 = arith.mulf %222, %223 : vector<32x648xf32>
    %cst_193 = arith.constant dense<0.000000e+00> : vector<32xf32>
    %225 = vector.multi_reduction <add>, %224, %cst_193 [1] : vector<32x648xf32> to vector<32xf32>
    %226 = vector.shape_cast %225 : vector<32xf32> to vector<32x1xf32>
    %227 = arith.mulf %224, %224 : vector<32x648xf32>
    %cst_194 = arith.constant dense<0.000000e+00> : vector<32xf32>
    %228 = vector.multi_reduction <add>, %227, %cst_194 [1] : vector<32x648xf32> to vector<32xf32>
    %229 = vector.shape_cast %228 : vector<32xf32> to vector<32x1xf32>
    %cst_195 = arith.constant 0.001953125 : f32
    %230 = vector.broadcast %cst_195 : f32 to vector<32x1xf32>
    %231 = arith.mulf %226, %230 : vector<32x1xf32>
    %cst_196 = arith.constant 0.001953125 : f32
    %232 = vector.broadcast %cst_196 : f32 to vector<32x1xf32>
    %233 = arith.mulf %229, %232 : vector<32x1xf32>
    %234 = arith.mulf %231, %231 : vector<32x1xf32>
    %235 = arith.subf %233, %234 : vector<32x1xf32>
    %c0_197 = arith.constant 0 : index
    %c0_198 = arith.constant 0 : index
    %236 = vector.load %arg11[%c0_197, %c0_198] : memref<32x1xf32, #tpu.memory_space<vmem>>, vector<32x1xf32>
    %cst_199 = arith.constant 9.99999974E-6 : f32
    %237 = vector.broadcast %cst_199 : f32 to vector<32x1xf32>
    %238 = arith.addf %235, %237 : vector<32x1xf32>
    %239 = math.rsqrt %238 : vector<32x1xf32>
    %240 = arith.mulf %236, %239 : vector<32x1xf32>
    %c0_200 = arith.constant 0 : index
    %c0_201 = arith.constant 0 : index
    %241 = vector.load %arg12[%c0_200, %c0_201] : memref<32x1xf32, #tpu.memory_space<vmem>>, vector<32x1xf32>
    %242 = arith.mulf %231, %240 : vector<32x1xf32>
    %243 = arith.subf %241, %242 : vector<32x1xf32>
    %244 = vector.broadcast %240 : vector<32x1xf32> to vector<32x648xf32>
    %245 = arith.mulf %224, %244 : vector<32x648xf32>
    %246 = vector.broadcast %243 : vector<32x1xf32> to vector<32x648xf32>
    %247 = arith.addf %245, %246 : vector<32x648xf32>
    %248 = vector.broadcast %0 : vector<1x648xf32> to vector<32x648xf32>
    %249 = arith.mulf %247, %248 : vector<32x648xf32>
    %250 = arith.truncf %249 : vector<32x648xf32> to vector<32x648xbf16>
    %c0_202 = arith.constant 0 : index
    %c19_203 = arith.constant 19 : index
    %251 = vector.load %arg18[%c0_202, %c19_203] : memref<32x768xbf16, #tpu.memory_space<vmem>>, vector<32x648xbf16>
    tpu.vector_store %arg18[%c0_202, %c19_203], %250 {strides = array<i32>} : memref<32x768xbf16, #tpu.memory_space<vmem>>, vector<32x648xbf16>,
    %c0_204 = arith.constant 0 : index
    %c0_205 = arith.constant 0 : index
    %c0_206 = arith.constant 0 : index
    %252 = vector.load %arg13[%c0_204, %c0_205, %c0_206] : memref<9x1x32xbf16, #tpu.memory_space<vmem>>, vector<1x1x32xbf16>
    %253 = vector.shape_cast %252 : vector<1x1x32xbf16> to vector<1x32xbf16>
    %c0_207 = arith.constant 0 : index
    %c0_208 = arith.constant 0 : index
    %254 = vector.load %arg18[%c0_207, %c0_208] : memref<32x768xbf16, #tpu.memory_space<vmem>>, vector<32x648xbf16>
    %cst_209 = arith.constant dense<0.000000e+00> : vector<1x648xf32>
    %255 = tpu.matmul %253, %254, %cst_209 {dimension_numbers = #tpu.dot_dimension_numbers<[1], [0], [0], [1], [0, 0, 1, 1], [], []>} : vector<1x32xbf16>, vector<32x648xbf16>, vector<1x648xf32> -> vector<1x648xf32>
    %c1_210 = arith.constant 1 : index
    %c0_211 = arith.constant 0 : index
    %c0_212 = arith.constant 0 : index
    %256 = vector.load %arg13[%c1_210, %c0_211, %c0_212] : memref<9x1x32xbf16, #tpu.memory_space<vmem>>, vector<1x1x32xbf16>
    %257 = vector.shape_cast %256 : vector<1x1x32xbf16> to vector<1x32xbf16>
    %c0_213 = arith.constant 0 : index
    %c1_214 = arith.constant 1 : index
    %258 = vector.load %arg18[%c0_213, %c1_214] : memref<32x768xbf16, #tpu.memory_space<vmem>>, vector<32x648xbf16>
    %cst_215 = arith.constant dense<0.000000e+00> : vector<1x648xf32>
    %259 = tpu.matmul %257, %258, %cst_215 {dimension_numbers = #tpu.dot_dimension_numbers<[1], [0], [0], [1], [0, 0, 1, 1], [], []>} : vector<1x32xbf16>, vector<32x648xbf16>, vector<1x648xf32> -> vector<1x648xf32>
    %260 = arith.addf %255, %259 : vector<1x648xf32>
    %c2_216 = arith.constant 2 : index
    %c0_217 = arith.constant 0 : index
    %c0_218 = arith.constant 0 : index
    %261 = vector.load %arg13[%c2_216, %c0_217, %c0_218] : memref<9x1x32xbf16, #tpu.memory_space<vmem>>, vector<1x1x32xbf16>
    %262 = vector.shape_cast %261 : vector<1x1x32xbf16> to vector<1x32xbf16>
    %c0_219 = arith.constant 0 : index
    %c2_220 = arith.constant 2 : index
    %263 = vector.load %arg18[%c0_219, %c2_220] : memref<32x768xbf16, #tpu.memory_space<vmem>>, vector<32x648xbf16>
    %cst_221 = arith.constant dense<0.000000e+00> : vector<1x648xf32>
    %264 = tpu.matmul %262, %263, %cst_221 {dimension_numbers = #tpu.dot_dimension_numbers<[1], [0], [0], [1], [0, 0, 1, 1], [], []>} : vector<1x32xbf16>, vector<32x648xbf16>, vector<1x648xf32> -> vector<1x648xf32>
    %265 = arith.addf %260, %264 : vector<1x648xf32>
    %c3_222 = arith.constant 3 : index
    %c0_223 = arith.constant 0 : index
    %c0_224 = arith.constant 0 : index
    %266 = vector.load %arg13[%c3_222, %c0_223, %c0_224] : memref<9x1x32xbf16, #tpu.memory_space<vmem>>, vector<1x1x32xbf16>
    %267 = vector.shape_cast %266 : vector<1x1x32xbf16> to vector<1x32xbf16>
    %c0_225 = arith.constant 0 : index
    %c18_226 = arith.constant 18 : index
    %268 = vector.load %arg18[%c0_225, %c18_226] : memref<32x768xbf16, #tpu.memory_space<vmem>>, vector<32x648xbf16>
    %cst_227 = arith.constant dense<0.000000e+00> : vector<1x648xf32>
    %269 = tpu.matmul %267, %268, %cst_227 {dimension_numbers = #tpu.dot_dimension_numbers<[1], [0], [0], [1], [0, 0, 1, 1], [], []>} : vector<1x32xbf16>, vector<32x648xbf16>, vector<1x648xf32> -> vector<1x648xf32>
    %270 = arith.addf %265, %269 : vector<1x648xf32>
    %c4_228 = arith.constant 4 : index
    %c0_229 = arith.constant 0 : index
    %c0_230 = arith.constant 0 : index
    %271 = vector.load %arg13[%c4_228, %c0_229, %c0_230] : memref<9x1x32xbf16, #tpu.memory_space<vmem>>, vector<1x1x32xbf16>
    %272 = vector.shape_cast %271 : vector<1x1x32xbf16> to vector<1x32xbf16>
    %c0_231 = arith.constant 0 : index
    %c19_232 = arith.constant 19 : index
    %273 = vector.load %arg18[%c0_231, %c19_232] : memref<32x768xbf16, #tpu.memory_space<vmem>>, vector<32x648xbf16>
    %cst_233 = arith.constant dense<0.000000e+00> : vector<1x648xf32>
    %274 = tpu.matmul %272, %273, %cst_233 {dimension_numbers = #tpu.dot_dimension_numbers<[1], [0], [0], [1], [0, 0, 1, 1], [], []>} : vector<1x32xbf16>, vector<32x648xbf16>, vector<1x648xf32> -> vector<1x648xf32>
    %275 = arith.addf %270, %274 : vector<1x648xf32>
    %c5_234 = arith.constant 5 : index
    %c0_235 = arith.constant 0 : index
    %c0_236 = arith.constant 0 : index
    %276 = vector.load %arg13[%c5_234, %c0_235, %c0_236] : memref<9x1x32xbf16, #tpu.memory_space<vmem>>, vector<1x1x32xbf16>
    %277 = vector.shape_cast %276 : vector<1x1x32xbf16> to vector<1x32xbf16>
    %c0_237 = arith.constant 0 : index
    %c20_238 = arith.constant 20 : index
    %278 = vector.load %arg18[%c0_237, %c20_238] : memref<32x768xbf16, #tpu.memory_space<vmem>>, vector<32x648xbf16>
    %cst_239 = arith.constant dense<0.000000e+00> : vector<1x648xf32>
    %279 = tpu.matmul %277, %278, %cst_239 {dimension_numbers = #tpu.dot_dimension_numbers<[1], [0], [0], [1], [0, 0, 1, 1], [], []>} : vector<1x32xbf16>, vector<32x648xbf16>, vector<1x648xf32> -> vector<1x648xf32>
    %280 = arith.addf %275, %279 : vector<1x648xf32>
    %c6_240 = arith.constant 6 : index
    %c0_241 = arith.constant 0 : index
    %c0_242 = arith.constant 0 : index
    %281 = vector.load %arg13[%c6_240, %c0_241, %c0_242] : memref<9x1x32xbf16, #tpu.memory_space<vmem>>, vector<1x1x32xbf16>
    %282 = vector.shape_cast %281 : vector<1x1x32xbf16> to vector<1x32xbf16>
    %c0_243 = arith.constant 0 : index
    %c36_244 = arith.constant 36 : index
    %283 = vector.load %arg18[%c0_243, %c36_244] : memref<32x768xbf16, #tpu.memory_space<vmem>>, vector<32x648xbf16>
    %cst_245 = arith.constant dense<0.000000e+00> : vector<1x648xf32>
    %284 = tpu.matmul %282, %283, %cst_245 {dimension_numbers = #tpu.dot_dimension_numbers<[1], [0], [0], [1], [0, 0, 1, 1], [], []>} : vector<1x32xbf16>, vector<32x648xbf16>, vector<1x648xf32> -> vector<1x648xf32>
    %285 = arith.addf %280, %284 : vector<1x648xf32>
    %c7_246 = arith.constant 7 : index
    %c0_247 = arith.constant 0 : index
    %c0_248 = arith.constant 0 : index
    %286 = vector.load %arg13[%c7_246, %c0_247, %c0_248] : memref<9x1x32xbf16, #tpu.memory_space<vmem>>, vector<1x1x32xbf16>
    %287 = vector.shape_cast %286 : vector<1x1x32xbf16> to vector<1x32xbf16>
    %c0_249 = arith.constant 0 : index
    %c37_250 = arith.constant 37 : index
    %288 = vector.load %arg18[%c0_249, %c37_250] : memref<32x768xbf16, #tpu.memory_space<vmem>>, vector<32x648xbf16>
    %cst_251 = arith.constant dense<0.000000e+00> : vector<1x648xf32>
    %289 = tpu.matmul %287, %288, %cst_251 {dimension_numbers = #tpu.dot_dimension_numbers<[1], [0], [0], [1], [0, 0, 1, 1], [], []>} : vector<1x32xbf16>, vector<32x648xbf16>, vector<1x648xf32> -> vector<1x648xf32>
    %290 = arith.addf %285, %289 : vector<1x648xf32>
    %c8_252 = arith.constant 8 : index
    %c0_253 = arith.constant 0 : index
    %c0_254 = arith.constant 0 : index
    %291 = vector.load %arg13[%c8_252, %c0_253, %c0_254] : memref<9x1x32xbf16, #tpu.memory_space<vmem>>, vector<1x1x32xbf16>
    %292 = vector.shape_cast %291 : vector<1x1x32xbf16> to vector<1x32xbf16>
    %c0_255 = arith.constant 0 : index
    %c38_256 = arith.constant 38 : index
    %293 = vector.load %arg18[%c0_255, %c38_256] : memref<32x768xbf16, #tpu.memory_space<vmem>>, vector<32x648xbf16>
    %cst_257 = arith.constant dense<0.000000e+00> : vector<1x648xf32>
    %294 = tpu.matmul %292, %293, %cst_257 {dimension_numbers = #tpu.dot_dimension_numbers<[1], [0], [0], [1], [0, 0, 1, 1], [], []>} : vector<1x32xbf16>, vector<32x648xbf16>, vector<1x648xf32> -> vector<1x648xf32>
    %295 = arith.addf %290, %294 : vector<1x648xf32>
    %c0_258 = arith.constant 0 : index
    %c0_259 = arith.constant 0 : index
    %296 = vector.load %arg16[%c0_258, %c0_259] : memref<648x2xf32, #tpu.memory_space<vmem>>, vector<648x2xf32>
    %cst_260 = arith.constant dense<0.000000e+00> : vector<1x2xf32>
    %297 = tpu.matmul %295, %296, %cst_260 {dimension_numbers = #tpu.dot_dimension_numbers<[1], [0], [0], [1], [0, 0, 1, 1], [], []>} : vector<1x648xf32>, vector<648x2xf32>, vector<1x2xf32> -> vector<1x2xf32>
    %c0_261 = arith.constant 0 : index
    %c0_262 = arith.constant 0 : index
    %298 = vector.load %arg14[%c0_261, %c0_262] : memref<1x1xf32, #tpu.memory_space<vmem>>, vector<1x1xf32>
    %299 = vector.broadcast %298 : vector<1x1xf32> to vector<1x2xf32>
    %300 = arith.addf %297, %299 : vector<1x2xf32>
    %c0_263 = arith.constant 0 : index
    %c0_264 = arith.constant 0 : index
    %301 = vector.load %arg17[%c0_263, %c0_264] : memref<1x2xf32, #tpu.memory_space<vmem>>, vector<1x2xf32>
    tpu.vector_store %arg17[%c0_263, %c0_264], %300 {strides = array<i32>} : memref<1x2xf32, #tpu.memory_space<vmem>>, vector<1x2xf32>,
    return
  }
}

</mosaic_0001>

<llo_original>
// kernel: basic_critic_forward.1
$region0: #{basic_critic_forward.1}
  #allocation0 [shape = 'u32[]', space=smem, size = 0x4, offset = 0x4, fixed_abs, tag = 'smem constant byte address 0x4 - core index']
  #allocation1 [shape = 'u32[144,128]{1,0:T(1,128)}', space=vmem, size = 0x12000, scoped, tag = 'internal scratch']
  #allocation2 [shape = 'bf16[32,768]{1,0:T(8,128)(2,1)}', space=vmem, size = 0xc000, scoped, tag = 'scratch operand']
  #allocation3 [shape = 'bf16[32,768]{1,0:T(8,128)(2,1)}', space=vmem, size = 0xc000, scoped, tag = 'scratch operand']
  #allocation4 [shape = 'f32[1,1]{1,0:T(1,128)S(1)}', space=vmem, size = 0x200, scoped, tag = 'scoped memory for basic_critic_forward.1']
  %s0 = inlined_call_operand.vmem [shape: bf16[8,768], index: 0, kind: input, shape index: {}]
  %s1 = inlined_call_operand.vmem [shape: bf16[9,32,8], index: 1, kind: input, shape index: {}]
  %s2 = inlined_call_operand.vmem [shape: f32[32,1], index: 2, kind: input, shape index: {}]
  %s3 = inlined_call_operand.vmem [shape: f32[32,1], index: 3, kind: input, shape index: {}]
  %s4 = inlined_call_operand.vmem [shape: f32[32,1], index: 4, kind: input, shape index: {}]
  %s5 = inlined_call_operand.vmem [shape: bf16[9,32,32], index: 5, kind: input, shape index: {}]
  %s6 = inlined_call_operand.vmem [shape: f32[32,1], index: 6, kind: input, shape index: {}]
  %s7 = inlined_call_operand.vmem [shape: f32[32,1], index: 7, kind: input, shape index: {}]
  %s8 = inlined_call_operand.vmem [shape: f32[32,1], index: 8, kind: input, shape index: {}]
  %s9 = inlined_call_operand.vmem [shape: bf16[9,32,32], index: 9, kind: input, shape index: {}]
  %s10 = inlined_call_operand.vmem [shape: f32[32,1], index: 10, kind: input, shape index: {}]
  %s11 = inlined_call_operand.vmem [shape: f32[32,1], index: 11, kind: input, shape index: {}]
  %s12 = inlined_call_operand.vmem [shape: f32[32,1], index: 12, kind: input, shape index: {}]
  %s13 = inlined_call_operand.vmem [shape: bf16[9,1,32], index: 13, kind: input, shape index: {}]
  %s14 = inlined_call_operand.<no memory space> [shape: f32[1,1], index: 14, kind: input, shape index: {}]
  %s15 = inlined_call_operand.vmem [shape: f32[1,648], index: 15, kind: input, shape index: {}]
  %s16 = inlined_call_operand.vmem [shape: f32[648,2], index: 16, kind: input, shape index: {}]
  %s17 = inlined_call_operand.hbm [shape: f32[1,2], index: 17, kind: output, shape index: {}]
  %s18 = sld [smem:[#allocation0]]
  $region78: #{basic_critic_forward.1} parent=0
    _
  %s20 = ssub.s32 1, %s18
  %s21 = scalar_select 0, %s20, %s18
  %v22 = vstv %s14
  %23 = vst [vmem:[#allocation4] sm:$0x1] %v22
  $region1: #{basic_critic_forward.1} parent=0
    #allocation5 [shape = 'u8[512]{0}', space=vmem, size = 0x400, scoped, tag = 'output window, operand 0, single buffered']
    #allocation6 [shape = 's32[1]{0}', space=sflag, size = 0x4, scoped, tag = 'scoped memory for basic_critic_forward.1']
    %24 = vsyncpa [#allocation6], 0
    // Predicated region
    $region2: #{basic_critic_forward.1} parent=1 // pred_check
      _
    $region3: #{basic_critic_forward.1} parent=1 // pred_check_branch
      %26 = sbr.rel (0) target = $region5
    $region4: #{basic_critic_forward.1} parent=1 // pred_region
      _
    $region5: #{basic_critic_forward.1} parent=1 // pred_fallthru
      _
    // Predicated region
    $region6: #{basic_critic_forward.1} parent=1 // pred_check
      _
    $region7: #{basic_critic_forward.1} parent=1 // pred_check_branch
      %28 = sbr.rel (0) target = $region9
    $region8: #{basic_critic_forward.1} parent=1 // pred_region
      _
    $region9: #{basic_critic_forward.1} parent=1 // pred_fallthru
      _
    // Predicated region
    $region10: #{basic_critic_forward.1} parent=1 // pred_check
      _
    $region11: #{basic_critic_forward.1} parent=1 // pred_check_branch
      %30 = sbr.rel (0) target = $region13
    $region12: #{basic_critic_forward.1} parent=1 // pred_region
      _
    $region13: #{basic_critic_forward.1} parent=1 // pred_fallthru
      _
    // Predicated region
    $region14: #{basic_critic_forward.1} parent=1 // pred_check
      _
    $region15: #{basic_critic_forward.1} parent=1 // pred_check_branch
      %32 = sbr.rel (0) target = $region17
    $region16: #{basic_critic_forward.1} parent=1 // pred_region
      _
    $region17: #{basic_critic_forward.1} parent=1 // pred_fallthru
      _
    // Predicated region
    $region18: #{basic_critic_forward.1} parent=1 // pred_check
      _
    $region19: #{basic_critic_forward.1} parent=1 // pred_check_branch
      %34 = sbr.rel (0) target = $region21
    $region20: #{basic_critic_forward.1} parent=1 // pred_region
      _
    $region21: #{basic_critic_forward.1} parent=1 // pred_fallthru
      _
    // Predicated region
    $region22: #{basic_critic_forward.1} parent=1 // pred_check
      _
    $region23: #{basic_critic_forward.1} parent=1 // pred_check_branch
      %36 = sbr.rel (0) target = $region25
    $region24: #{basic_critic_forward.1} parent=1 // pred_region
      _
    $region25: #{basic_critic_forward.1} parent=1 // pred_fallthru
      _
    // Predicated region
    $region26: #{basic_critic_forward.1} parent=1 // pred_check
      _
    $region27: #{basic_critic_forward.1} parent=1 // pred_check_branch
      %38 = sbr.rel (0) target = $region29
    $region28: #{basic_critic_forward.1} parent=1 // pred_region
      _
    $region29: #{basic_critic_forward.1} parent=1 // pred_fallthru
      _
    // Predicated region
    $region30: #{basic_critic_forward.1} parent=1 // pred_check
      _
    $region31: #{basic_critic_forward.1} parent=1 // pred_check_branch
      %40 = sbr.rel (0) target = $region33
    $region32: #{basic_critic_forward.1} parent=1 // pred_region
      _
    $region33: #{basic_critic_forward.1} parent=1 // pred_fallthru
      _
    // Predicated region
    $region34: #{basic_critic_forward.1} parent=1 // pred_check
      _
    $region35: #{basic_critic_forward.1} parent=1 // pred_check_branch
      %42 = sbr.rel (0) target = $region37
    $region36: #{basic_critic_forward.1} parent=1 // pred_region
      _
    $region37: #{basic_critic_forward.1} parent=1 // pred_fallthru
      _
    // Predicated region
    $region38: #{basic_critic_forward.1} parent=1 // pred_check
      _
    $region39: #{basic_critic_forward.1} parent=1 // pred_check_branch
      %44 = sbr.rel (0) target = $region41
    $region40: #{basic_critic_forward.1} parent=1 // pred_region
      _
    $region41: #{basic_critic_forward.1} parent=1 // pred_fallthru
      _
    // Predicated region
    $region42: #{basic_critic_forward.1} parent=1 // pred_check
      _
    $region43: #{basic_critic_forward.1} parent=1 // pred_check_branch
      %46 = sbr.rel (0) target = $region45
    $region44: #{basic_critic_forward.1} parent=1 // pred_region
      _
    $region45: #{basic_critic_forward.1} parent=1 // pred_fallthru
      _
    // Predicated region
    $region46: #{basic_critic_forward.1} parent=1 // pred_check
      _
    $region47: #{basic_critic_forward.1} parent=1 // pred_check_branch
      %48 = sbr.rel (0) target = $region49
    $region48: #{basic_critic_forward.1} parent=1 // pred_region
      _
    $region49: #{basic_critic_forward.1} parent=1 // pred_fallthru
      _
    // Predicated region
    $region50: #{basic_critic_forward.1} parent=1 // pred_check
      _
    $region51: #{basic_critic_forward.1} parent=1 // pred_check_branch
      %50 = sbr.rel (0) target = $region53
    $region52: #{basic_critic_forward.1} parent=1 // pred_region
      _
    $region53: #{basic_critic_forward.1} parent=1 // pred_fallthru
      _
    // Predicated region
    $region54: #{basic_critic_forward.1} parent=1 // pred_check
      _
    $region55: #{basic_critic_forward.1} parent=1 // pred_check_branch
      %52 = sbr.rel (0) target = $region57
    $region56: #{basic_critic_forward.1} parent=1 // pred_region
      _
    $region57: #{basic_critic_forward.1} parent=1 // pred_fallthru
      _
    // Predicated region
    $region58: #{basic_critic_forward.1} parent=1 // pred_check
      _
    $region59: #{basic_critic_forward.1} parent=1 // pred_check_branch
      %54 = sbr.rel (0) target = $region61
    $region60: #{basic_critic_forward.1} parent=1 // pred_region
      _
    $region61: #{basic_critic_forward.1} parent=1 // pred_fallthru
      _
    // Predicated region
    $region62: #{basic_critic_forward.1} parent=1 // pred_check
      _
    $region63: #{basic_critic_forward.1} parent=1 // pred_check_branch
      %56 = sbr.rel (0) target = $region65
    $region64: #{basic_critic_forward.1} parent=1 // pred_region
      _
    $region65: #{basic_critic_forward.1} parent=1 // pred_fallthru
      _
    // Predicated region
    $region66: #{basic_critic_forward.1} parent=1 // pred_check
      _
    $region67: #{basic_critic_forward.1} parent=1 // pred_check_branch
      %58 = sbr.rel (0) target = $region69
    $region68: #{basic_critic_forward.1} parent=1 // pred_region
      _
    $region69: #{basic_critic_forward.1} parent=1 // pred_fallthru
      _
    %v60 = vld [vmem:[%s15] sm:$0x3f]
    %vm61 = vcmask 150528
    %62 = vst.msk [vmem:[#allocation2] sm:$0xf] %vm61, 0
    %63 = vst.msk [vmem:[#allocation2 + $0x18] sm:$0xf] %vm61, 0
    %64 = vst.msk [vmem:[#allocation2 + $0x30] sm:$0xf] %vm61, 0
    %65 = vst.msk [vmem:[#allocation2 + $0x48] sm:$0xf] %vm61, 0
    %vm66 = vcmask 1043672
    %67 = vst.msk [vmem:[#allocation2 + $0x14] sm:$0xf] %vm66, 0
    %68 = vst.msk [vmem:[#allocation2 + $0x2c] sm:$0xf] %vm66, 0
    %69 = vst.msk [vmem:[#allocation2 + $0x44] sm:$0xf] %vm66, 0
    %70 = vst.msk [vmem:[#allocation2 + $0x5c] sm:$0xf] %vm66, 0
    %71 = vst.msk [vmem:[#allocation3] sm:$0xf] %vm61, 0
    %72 = vst.msk [vmem:[#allocation3 + $0x18] sm:$0xf] %vm61, 0
    %73 = vst.msk [vmem:[#allocation3 + $0x30] sm:$0xf] %vm61, 0
    %74 = vst.msk [vmem:[#allocation3 + $0x48] sm:$0xf] %vm61, 0
    %75 = vst.msk [vmem:[#allocation3 + $0x14] sm:$0xf] %vm66, 0
    %76 = vst.msk [vmem:[#allocation3 + $0x2c] sm:$0xf] %vm66, 0
    %77 = vst.msk [vmem:[#allocation3 + $0x44] sm:$0xf] %vm66, 0
    %78 = vst.msk [vmem:[#allocation3 + $0x5c] sm:$0xf] %vm66, 0
    %v79 = vld [vmem:[%s1] sm:$0xf]
    %v80 = vld [vmem:[%s1 + $0x4] sm:$0xf]
    %v81 = vld [vmem:[%s1 + $0x8] sm:$0xf]
    %v82 = vld [vmem:[%s1 + $0xc] sm:$0xf]
    %v83 = vld [vmem:[%s0] sm:$0xff]
    %v84 = vld [vmem:[%s0 + $0x8] sm:$0xff]
    %v85 = vld [vmem:[%s0 + $0x10] sm:$0xff]
    %s86 = scalar_lea.vmem %s1, 16
    %v87 = vld [vmem:[%s86] sm:$0xf]
    %v88 = vld [vmem:[%s86 + $0x4] sm:$0xf]
    %v89 = vld [vmem:[%s86 + $0x8] sm:$0xf]
    %v90 = vld [vmem:[%s86 + $0xc] sm:$0xf]
    %v95 = vunpack.c.l.b16 %v87
    %v96 = vunpack.c.l.b16 %v88
    %v97 = vunpack.c.l.b16 %v89
    %v98 = vunpack.c.l.b16 %v90
    %v99 = vpack.c.b16 %v96, %v95
    %v100 = vpack.c.b16 %v98, %v97
    %v104 = vunpack.c.l.b16 %v83
    %v105 = vunpack.c.h.b16 %v83
    %v106 = vunpack.c.l.b16 %v84
    %v107 = vunpack.c.h.b16 %v84
    %v108 = vunpack.c.l.b16 %v85
    %v109 = vunpack.c.h.b16 %v85
    %v110 = vpack.c.b16 %v104, %v104
    %v111 = vpack.c.b16 %v105, %v105
    %v112 = vpack.c.b16 %v106, %v106
    %v113 = vpack.c.b16 %v107, %v107
    %v114 = vpack.c.b16 %v108, %v108
    %v115 = vpack.c.b16 %v109, %v109
    %116 = vrot.lane.b32.xlu0 %v110, 127
    %v117 = vpop.permute.xlu0 %116
    %118 = vrot.lane.b32.xlu0 %v111, 127
    %v119 = vpop.permute.xlu0 %118
    %120 = vrot.lane.b32.xlu0 %v112, 127
    %v121 = vpop.permute.xlu0 %120
    %122 = vrot.lane.b32.xlu0 %v113, 127
    %v123 = vpop.permute.xlu0 %122
    %124 = vrot.lane.b32.xlu0 %v114, 127
    %v125 = vpop.permute.xlu0 %124
    %126 = vrot.lane.b32.xlu0 %v115, 127
    %v127 = vpop.permute.xlu0 %126
    %vm128 = vcmask 1039360
    %v129 = vsel %vm128, %v117, %v119
    %v130 = vsel %vm128, %v119, %v121
    %v131 = vsel %vm128, %v121, %v123
    %v132 = vsel %vm128, %v123, %v125
    %v133 = vsel %vm128, %v125, %v127
    %vm134 = vcmask 64512
    %v136 = vsel %vm134, %v99, 0
    %v139 = vsel %vm134, %v100, 0
    %vm141 = vcmask 1043456
    %v143 = vsel %vm141, %v129, 0
    %v146 = vsel %vm141, %v130, 0
    %v149 = vsel %vm141, %v131, 0
    %v152 = vsel %vm141, %v132, 0
    %v155 = vsel %vm141, %v133, 0
    %v158 = vsel %vm141, %v127, 0
    %160 = vmatprep.subr.bf16.mxu0 0
    %161 = vmatpush1.bf16.msra.mxu0 0
    %162 = vmatprep.subr.bf16.mxu0 0
    %163 = vmatpush1.bf16.msra.mxu0 0
    %164 = vmatprep.subr.bf16.mxu0 0
    %165 = vmatpush1.bf16.msra.mxu0 0
    %166 = vmatprep.subr.bf16.mxu0 0
    %167 = vmatpush1.bf16.msra.mxu0 0
    %168 = vmatprep.subr.bf16.mxu0 0
    %169 = vmatpush1.bf16.msra.mxu0 0
    %170 = vmatprep.subr.bf16.mxu0 0
    %171 = vmatpush1.bf16.msra.mxu0 0
    %172 = vmatprep.subr.bf16.mxu0 0
    %173 = vmatpush1.bf16.msra.mxu0 0
    %174 = vmatprep.subr.bf16.mxu0 %v146
    %175 = vmatpush1.bf16.msra.mxu0 %v143
    %176 = vmatprep.subr.bf16.mxu0 0
    %177 = vmatpush2.bf16.msra.mxu0 0
    %178 = vmatprep.subr.bf16.mxu0 0
    %179 = vmatpush2.bf16.msra.mxu0 0
    %180 = vmatprep.subr.bf16.mxu0 0
    %181 = vmatpush2.bf16.msra.mxu0 0
    %182 = vmatprep.subr.bf16.mxu0 0
    %183 = vmatpush2.bf16.msra.mxu0 0
    %184 = vmatprep.subr.bf16.mxu0 0
    %185 = vmatpush2.bf16.msra.mxu0 0
    %186 = vmatprep.subr.bf16.mxu0 0
    %187 = vmatpush2.bf16.msra.mxu0 0
    %188 = vmatprep.subr.bf16.mxu0 0
    %189 = vmatpush2.bf16.msra.mxu0 0
    %190 = vmatprep.subr.bf16.mxu0 0
    %191 = vmatpush2.bf16.msra.mxu0 0
    %192 = vmatprep.mubr.bf16.mxu0 0
    %193 = vmatmul.mubr.bf16.gmra.mxu0 %v136
    %v194 = vpop.f32.mrf.mxu0
    %v195 = vadd.f32 0.0, %v194
    %v196 = vpop.f32.mrf.mxu0
    %v197 = vadd.f32 0.0, %v196
    %v198 = vpop.f32.mrf.mxu0
    %v199 = vadd.f32 0.0, %v198
    %v200 = vpop.f32.mrf.mxu0
    %v201 = vadd.f32 0.0, %v200
    %202 = vmatprep.mubr.bf16.mxu0 0
    %203 = vmatmul.mubr.bf16.gmra.mxu0 %v139
    %v204 = vpop.f32.mrf.mxu0
    %v205 = vadd.f32 0.0, %v204
    %v206 = vpop.f32.mrf.mxu0
    %v207 = vadd.f32 0.0, %v206
    %v208 = vpop.f32.mrf.mxu0
    %v209 = vadd.f32 0.0, %v208
    %v210 = vpop.f32.mrf.mxu0
    %v211 = vadd.f32 0.0, %v210
    %212 = vdwg.mxu0
    %213 = vmatprep.subr.bf16.mxu0 0
    %214 = vmatpush1.bf16.msra.mxu0 0
    %215 = vmatprep.subr.bf16.mxu0 0
    %216 = vmatpush1.bf16.msra.mxu0 0
    %217 = vmatprep.subr.bf16.mxu0 0
    %218 = vmatpush1.bf16.msra.mxu0 0
    %219 = vmatprep.subr.bf16.mxu0 0
    %220 = vmatpush1.bf16.msra.mxu0 0
    %221 = vmatprep.subr.bf16.mxu0 0
    %222 = vmatpush1.bf16.msra.mxu0 0
    %223 = vmatprep.subr.bf16.mxu0 0
    %224 = vmatpush1.bf16.msra.mxu0 0
    %225 = vmatprep.subr.bf16.mxu0 0
    %226 = vmatpush1.bf16.msra.mxu0 0
    %227 = vmatprep.subr.bf16.mxu0 %v152
    %228 = vmatpush1.bf16.msra.mxu0 %v149
    %229 = vmatprep.subr.bf16.mxu0 0
    %230 = vmatpush2.bf16.msra.mxu0 0
    %231 = vmatprep.subr.bf16.mxu0 0
    %232 = vmatpush2.bf16.msra.mxu0 0
    %233 = vmatprep.subr.bf16.mxu0 0
    %234 = vmatpush2.bf16.msra.mxu0 0
    %235 = vmatprep.subr.bf16.mxu0 0
    %236 = vmatpush2.bf16.msra.mxu0 0
    %237 = vmatprep.subr.bf16.mxu0 0
    %238 = vmatpush2.bf16.msra.mxu0 0
    %239 = vmatprep.subr.bf16.mxu0 0
    %240 = vmatpush2.bf16.msra.mxu0 0
    %241 = vmatprep.subr.bf16.mxu0 0
    %242 = vmatpush2.bf16.msra.mxu0 0
    %243 = vmatprep.subr.bf16.mxu0 0
    %244 = vmatpush2.bf16.msra.mxu0 0
    %245 = vmatprep.mubr.bf16.mxu0 0
    %246 = vmatmul.mubr.bf16.gmra.mxu0 %v136
    %v247 = vpop.f32.mrf.mxu0
    %v248 = vadd.f32 0.0, %v247
    %v249 = vpop.f32.mrf.mxu0
    %v250 = vadd.f32 0.0, %v249
    %v251 = vpop.f32.mrf.mxu0
    %v252 = vadd.f32 0.0, %v251
    %v253 = vpop.f32.mrf.mxu0
    %v254 = vadd.f32 0.0, %v253
    %255 = vmatprep.mubr.bf16.mxu0 0
    %256 = vmatmul.mubr.bf16.gmra.mxu0 %v139
    %v257 = vpop.f32.mrf.mxu0
    %v258 = vadd.f32 0.0, %v257
    %v259 = vpop.f32.mrf.mxu0
    %v260 = vadd.f32 0.0, %v259
    %v261 = vpop.f32.mrf.mxu0
    %v262 = vadd.f32 0.0, %v261
    %v263 = vpop.f32.mrf.mxu0
    %v264 = vadd.f32 0.0, %v263
    %265 = vdwg.mxu0
    %266 = vmatprep.subr.bf16.mxu0 0
    %267 = vmatpush1.bf16.msra.mxu0 0
    %268 = vmatprep.subr.bf16.mxu0 0
    %269 = vmatpush1.bf16.msra.mxu0 0
    %270 = vmatprep.subr.bf16.mxu0 0
    %271 = vmatpush1.bf16.msra.mxu0 0
    %272 = vmatprep.subr.bf16.mxu0 0
    %273 = vmatpush1.bf16.msra.mxu0 0
    %274 = vmatprep.subr.bf16.mxu0 0
    %275 = vmatpush1.bf16.msra.mxu0 0
    %276 = vmatprep.subr.bf16.mxu0 0
    %277 = vmatpush1.bf16.msra.mxu0 0
    %278 = vmatprep.subr.bf16.mxu0 0
    %279 = vmatpush1.bf16.msra.mxu0 0
    %280 = vmatprep.subr.bf16.mxu0 %v158
    %281 = vmatpush1.bf16.msra.mxu0 %v155
    %282 = vmatprep.subr.bf16.mxu0 0
    %283 = vmatpush2.bf16.msra.mxu0 0
    %284 = vmatprep.subr.bf16.mxu0 0
    %285 = vmatpush2.bf16.msra.mxu0 0
    %286 = vmatprep.subr.bf16.mxu0 0
    %287 = vmatpush2.bf16.msra.mxu0 0
    %288 = vmatprep.subr.bf16.mxu0 0
    %289 = vmatpush2.bf16.msra.mxu0 0
    %290 = vmatprep.subr.bf16.mxu0 0
    %291 = vmatpush2.bf16.msra.mxu0 0
    %292 = vmatprep.subr.bf16.mxu0 0
    %293 = vmatpush2.bf16.msra.mxu0 0
    %294 = vmatprep.subr.bf16.mxu0 0
    %295 = vmatpush2.bf16.msra.mxu0 0
    %296 = vmatprep.subr.bf16.mxu0 0
    %297 = vmatpush2.bf16.msra.mxu0 0
    %298 = vmatprep.mubr.bf16.mxu0 0
    %299 = vmatmul.mubr.bf16.gmra.mxu0 %v136
    %v300 = vpop.f32.mrf.mxu0
    %v301 = vadd.f32 0.0, %v300
    %v302 = vpop.f32.mrf.mxu0
    %v303 = vadd.f32 0.0, %v302
    %v304 = vpop.f32.mrf.mxu0
    %v305 = vadd.f32 0.0, %v304
    %v306 = vpop.f32.mrf.mxu0
    %v307 = vadd.f32 0.0, %v306
    %308 = vmatprep.mubr.bf16.mxu0 0
    %309 = vmatmul.mubr.bf16.gmra.mxu0 %v139
    %v310 = vpop.f32.mrf.mxu0
    %v311 = vadd.f32 0.0, %v310
    %v312 = vpop.f32.mrf.mxu0
    %v313 = vadd.f32 0.0, %v312
    %v314 = vpop.f32.mrf.mxu0
    %v315 = vadd.f32 0.0, %v314
    %v316 = vpop.f32.mrf.mxu0
    %v317 = vadd.f32 0.0, %v316
    %318 = vdwg.mxu0
    %v323 = vunpack.c.l.b16 %v79
    %v324 = vunpack.c.l.b16 %v80
    %v325 = vunpack.c.l.b16 %v81
    %v326 = vunpack.c.l.b16 %v82
    %v327 = vpack.c.b16 %v324, %v323
    %v328 = vpack.c.b16 %v326, %v325
    %v330 = vsel %vm134, %v327, 0
    %v333 = vsel %vm134, %v328, 0
    %v336 = vsel %vm141, %v110, 0
    %v339 = vsel %vm141, %v111, 0
    %v342 = vsel %vm141, %v112, 0
    %v345 = vsel %vm141, %v113, 0
    %v348 = vsel %vm141, %v114, 0
    %v351 = vsel %vm141, %v115, 0
    %353 = vmatprep.subr.bf16.mxu0 0
    %354 = vmatpush1.bf16.msra.mxu0 0
    %355 = vmatprep.subr.bf16.mxu0 0
    %356 = vmatpush1.bf16.msra.mxu0 0
    %357 = vmatprep.subr.bf16.mxu0 0
    %358 = vmatpush1.bf16.msra.mxu0 0
    %359 = vmatprep.subr.bf16.mxu0 0
    %360 = vmatpush1.bf16.msra.mxu0 0
    %361 = vmatprep.subr.bf16.mxu0 0
    %362 = vmatpush1.bf16.msra.mxu0 0
    %363 = vmatprep.subr.bf16.mxu0 0
    %364 = vmatpush1.bf16.msra.mxu0 0
    %365 = vmatprep.subr.bf16.mxu0 0
    %366 = vmatpush1.bf16.msra.mxu0 0
    %367 = vmatprep.subr.bf16.mxu0 %v339
    %368 = vmatpush1.bf16.msra.mxu0 %v336
    %369 = vmatprep.subr.bf16.mxu0 0
    %370 = vmatpush2.bf16.msra.mxu0 0
    %371 = vmatprep.subr.bf16.mxu0 0
    %372 = vmatpush2.bf16.msra.mxu0 0
    %373 = vmatprep.subr.bf16.mxu0 0
    %374 = vmatpush2.bf16.msra.mxu0 0
    %375 = vmatprep.subr.bf16.mxu0 0
    %376 = vmatpush2.bf16.msra.mxu0 0
    %377 = vmatprep.subr.bf16.mxu0 0
    %378 = vmatpush2.bf16.msra.mxu0 0
    %379 = vmatprep.subr.bf16.mxu0 0
    %380 = vmatpush2.bf16.msra.mxu0 0
    %381 = vmatprep.subr.bf16.mxu0 0
    %382 = vmatpush2.bf16.msra.mxu0 0
    %383 = vmatprep.subr.bf16.mxu0 0
    %384 = vmatpush2.bf16.msra.mxu0 0
    %385 = vmatprep.mubr.bf16.mxu0 0
    %386 = vmatmul.mubr.bf16.gmra.mxu0 %v330
    %v387 = vpop.f32.mrf.mxu0
    %v388 = vadd.f32 %v195, %v387
    %v389 = vpop.f32.mrf.mxu0
    %v390 = vadd.f32 %v197, %v389
    %v391 = vpop.f32.mrf.mxu0
    %v392 = vadd.f32 %v199, %v391
    %v393 = vpop.f32.mrf.mxu0
    %v394 = vadd.f32 %v201, %v393
    %395 = vmatprep.mubr.bf16.mxu0 0
    %396 = vmatmul.mubr.bf16.gmra.mxu0 %v333
    %v397 = vpop.f32.mrf.mxu0
    %v398 = vadd.f32 %v205, %v397
    %v399 = vpop.f32.mrf.mxu0
    %v400 = vadd.f32 %v207, %v399
    %v401 = vpop.f32.mrf.mxu0
    %v402 = vadd.f32 %v209, %v401
    %v403 = vpop.f32.mrf.mxu0
    %v404 = vadd.f32 %v211, %v403
    %405 = vdwg.mxu0
    %406 = vmatprep.subr.bf16.mxu0 0
    %407 = vmatpush1.bf16.msra.mxu0 0
    %408 = vmatprep.subr.bf16.mxu0 0
    %409 = vmatpush1.bf16.msra.mxu0 0
    %410 = vmatprep.subr.bf16.mxu0 0
    %411 = vmatpush1.bf16.msra.mxu0 0
    %412 = vmatprep.subr.bf16.mxu0 0
    %413 = vmatpush1.bf16.msra.mxu0 0
    %414 = vmatprep.subr.bf16.mxu0 0
    %415 = vmatpush1.bf16.msra.mxu0 0
    %416 = vmatprep.subr.bf16.mxu0 0
    %417 = vmatpush1.bf16.msra.mxu0 0
    %418 = vmatprep.subr.bf16.mxu0 0
    %419 = vmatpush1.bf16.msra.mxu0 0
    %420 = vmatprep.subr.bf16.mxu0 %v345
    %421 = vmatpush1.bf16.msra.mxu0 %v342
    %422 = vmatprep.subr.bf16.mxu0 0
    %423 = vmatpush2.bf16.msra.mxu0 0
    %424 = vmatprep.subr.bf16.mxu0 0
    %425 = vmatpush2.bf16.msra.mxu0 0
    %426 = vmatprep.subr.bf16.mxu0 0
    %427 = vmatpush2.bf16.msra.mxu0 0
    %428 = vmatprep.subr.bf16.mxu0 0
    %429 = vmatpush2.bf16.msra.mxu0 0
    %430 = vmatprep.subr.bf16.mxu0 0
    %431 = vmatpush2.bf16.msra.mxu0 0
    %432 = vmatprep.subr.bf16.mxu0 0
    %433 = vmatpush2.bf16.msra.mxu0 0
    %434 = vmatprep.subr.bf16.mxu0 0
    %435 = vmatpush2.bf16.msra.mxu0 0
    %436 = vmatprep.subr.bf16.mxu0 0
    %437 = vmatpush2.bf16.msra.mxu0 0
    %438 = vmatprep.mubr.bf16.mxu0 0
    %439 = vmatmul.mubr.bf16.gmra.mxu0 %v330
    %v440 = vpop.f32.mrf.mxu0
    %v441 = vadd.f32 %v248, %v440
    %v442 = vpop.f32.mrf.mxu0
    %v443 = vadd.f32 %v250, %v442
    %v444 = vpop.f32.mrf.mxu0
    %v445 = vadd.f32 %v252, %v444
    %v446 = vpop.f32.mrf.mxu0
    %v447 = vadd.f32 %v254, %v446
    %448 = vmatprep.mubr.bf16.mxu0 0
    %449 = vmatmul.mubr.bf16.gmra.mxu0 %v333
    %v450 = vpop.f32.mrf.mxu0
    %v451 = vadd.f32 %v258, %v450
    %v452 = vpop.f32.mrf.mxu0
    %v453 = vadd.f32 %v260, %v452
    %v454 = vpop.f32.mrf.mxu0
    %v455 = vadd.f32 %v262, %v454
    %v456 = vpop.f32.mrf.mxu0
    %v457 = vadd.f32 %v264, %v456
    %458 = vdwg.mxu0
    %459 = vmatprep.subr.bf16.mxu0 0
    %460 = vmatpush1.bf16.msra.mxu0 0
    %461 = vmatprep.subr.bf16.mxu0 0
    %462 = vmatpush1.bf16.msra.mxu0 0
    %463 = vmatprep.subr.bf16.mxu0 0
    %464 = vmatpush1.bf16.msra.mxu0 0
    %465 = vmatprep.subr.bf16.mxu0 0
    %466 = vmatpush1.bf16.msra.mxu0 0
    %467 = vmatprep.subr.bf16.mxu0 0
    %468 = vmatpush1.bf16.msra.mxu0 0
    %469 = vmatprep.subr.bf16.mxu0 0
    %470 = vmatpush1.bf16.msra.mxu0 0
    %471 = vmatprep.subr.bf16.mxu0 0
    %472 = vmatpush1.bf16.msra.mxu0 0
    %473 = vmatprep.subr.bf16.mxu0 %v351
    %474 = vmatpush1.bf16.msra.mxu0 %v348
    %475 = vmatprep.subr.bf16.mxu0 0
    %476 = vmatpush2.bf16.msra.mxu0 0
    %477 = vmatprep.subr.bf16.mxu0 0
    %478 = vmatpush2.bf16.msra.mxu0 0
    %479 = vmatprep.subr.bf16.mxu0 0
    %480 = vmatpush2.bf16.msra.mxu0 0
    %481 = vmatprep.subr.bf16.mxu0 0
    %482 = vmatpush2.bf16.msra.mxu0 0
    %483 = vmatprep.subr.bf16.mxu0 0
    %484 = vmatpush2.bf16.msra.mxu0 0
    %485 = vmatprep.subr.bf16.mxu0 0
    %486 = vmatpush2.bf16.msra.mxu0 0
    %487 = vmatprep.subr.bf16.mxu0 0
    %488 = vmatpush2.bf16.msra.mxu0 0
    %489 = vmatprep.subr.bf16.mxu0 0
    %490 = vmatpush2.bf16.msra.mxu0 0
    %491 = vmatprep.mubr.bf16.mxu0 0
    %492 = vmatmul.mubr.bf16.gmra.mxu0 %v330
    %v493 = vpop.f32.mrf.mxu0
    %v494 = vadd.f32 %v301, %v493
    %v495 = vpop.f32.mrf.mxu0
    %v496 = vadd.f32 %v303, %v495
    %v497 = vpop.f32.mrf.mxu0
    %v498 = vadd.f32 %v305, %v497
    %v499 = vpop.f32.mrf.mxu0
    %v500 = vadd.f32 %v307, %v499
    %501 = vmatprep.mubr.bf16.mxu0 0
    %502 = vmatmul.mubr.bf16.gmra.mxu0 %v333
    %v503 = vpop.f32.mrf.mxu0
    %v504 = vadd.f32 %v311, %v503
    %v505 = vpop.f32.mrf.mxu0
    %v506 = vadd.f32 %v313, %v505
    %v507 = vpop.f32.mrf.mxu0
    %v508 = vadd.f32 %v315, %v507
    %v509 = vpop.f32.mrf.mxu0
    %v510 = vadd.f32 %v317, %v509
    %511 = vdwg.mxu0
    %s512 = scalar_lea.vmem %s1, 32
    %v513 = vld [vmem:[%s512] sm:$0xf]
    %v514 = vld [vmem:[%s512 + $0x4] sm:$0xf]
    %v515 = vld [vmem:[%s512 + $0x8] sm:$0xf]
    %v516 = vld [vmem:[%s512 + $0xc] sm:$0xf]
    %v521 = vunpack.c.l.b16 %v513
    %v522 = vunpack.c.l.b16 %v514
    %v523 = vunpack.c.l.b16 %v515
    %v524 = vunpack.c.l.b16 %v516
    %v525 = vpack.c.b16 %v522, %v521
    %v526 = vpack.c.b16 %v524, %v523
    %527 = vrot.lane.b32.xlu0 %v110, 126
    %v528 = vpop.permute.xlu0 %527
    %529 = vrot.lane.b32.xlu0 %v111, 126
    %v530 = vpop.permute.xlu0 %529
    %531 = vrot.lane.b32.xlu0 %v112, 126
    %v532 = vpop.permute.xlu0 %531
    %533 = vrot.lane.b32.xlu0 %v113, 126
    %v534 = vpop.permute.xlu0 %533
    %535 = vrot.lane.b32.xlu0 %v114, 126
    %v536 = vpop.permute.xlu0 %535
    %537 = vrot.lane.b32.xlu0 %v115, 126
    %v538 = vpop.permute.xlu0 %537
    %vm539 = vcmask 1031168
    %v540 = vsel %vm539, %v528, %v530
    %v541 = vsel %vm539, %v530, %v532
    %v542 = vsel %vm539, %v532, %v534
    %v543 = vsel %vm539, %v534, %v536
    %v544 = vsel %vm539, %v536, %v538
    %v546 = vsel %vm134, %v525, 0
    %v549 = vsel %vm134, %v526, 0
    %v552 = vsel %vm141, %v540, 0
    %v555 = vsel %vm141, %v541, 0
    %v558 = vsel %vm141, %v542, 0
    %v561 = vsel %vm141, %v543, 0
    %v564 = vsel %vm141, %v544, 0
    %v567 = vsel %vm141, %v538, 0
    %569 = vmatprep.subr.bf16.mxu0 0
    %570 = vmatpush1.bf16.msra.mxu0 0
    %571 = vmatprep.subr.bf16.mxu0 0
    %572 = vmatpush1.bf16.msra.mxu0 0
    %573 = vmatprep.subr.bf16.mxu0 0
    %574 = vmatpush1.bf16.msra.mxu0 0
    %575 = vmatprep.subr.bf16.mxu0 0
    %576 = vmatpush1.bf16.msra.mxu0 0
    %577 = vmatprep.subr.bf16.mxu0 0
    %578 = vmatpush1.bf16.msra.mxu0 0
    %579 = vmatprep.subr.bf16.mxu0 0
    %580 = vmatpush1.bf16.msra.mxu0 0
    %581 = vmatprep.subr.bf16.mxu0 0
    %582 = vmatpush1.bf16.msra.mxu0 0
    %583 = vmatprep.subr.bf16.mxu0 %v555
    %584 = vmatpush1.bf16.msra.mxu0 %v552
    %585 = vmatprep.subr.bf16.mxu0 0
    %586 = vmatpush2.bf16.msra.mxu0 0
    %587 = vmatprep.subr.bf16.mxu0 0
    %588 = vmatpush2.bf16.msra.mxu0 0
    %589 = vmatprep.subr.bf16.mxu0 0
    %590 = vmatpush2.bf16.msra.mxu0 0
    %591 = vmatprep.subr.bf16.mxu0 0
    %592 = vmatpush2.bf16.msra.mxu0 0
    %593 = vmatprep.subr.bf16.mxu0 0
    %594 = vmatpush2.bf16.msra.mxu0 0
    %595 = vmatprep.subr.bf16.mxu0 0
    %596 = vmatpush2.bf16.msra.mxu0 0
    %597 = vmatprep.subr.bf16.mxu0 0
    %598 = vmatpush2.bf16.msra.mxu0 0
    %599 = vmatprep.subr.bf16.mxu0 0
    %600 = vmatpush2.bf16.msra.mxu0 0
    %601 = vmatprep.mubr.bf16.mxu0 0
    %602 = vmatmul.mubr.bf16.gmra.mxu0 %v546
    %v603 = vpop.f32.mrf.mxu0
    %v604 = vadd.f32 0.0, %v603
    %v605 = vpop.f32.mrf.mxu0
    %v606 = vadd.f32 0.0, %v605
    %v607 = vpop.f32.mrf.mxu0
    %v608 = vadd.f32 0.0, %v607
    %v609 = vpop.f32.mrf.mxu0
    %v610 = vadd.f32 0.0, %v609
    %611 = vmatprep.mubr.bf16.mxu0 0
    %612 = vmatmul.mubr.bf16.gmra.mxu0 %v549
    %v613 = vpop.f32.mrf.mxu0
    %v614 = vadd.f32 0.0, %v613
    %v615 = vpop.f32.mrf.mxu0
    %v616 = vadd.f32 0.0, %v615
    %v617 = vpop.f32.mrf.mxu0
    %v618 = vadd.f32 0.0, %v617
    %v619 = vpop.f32.mrf.mxu0
    %v620 = vadd.f32 0.0, %v619
    %621 = vdwg.mxu0
    %622 = vmatprep.subr.bf16.mxu0 0
    %623 = vmatpush1.bf16.msra.mxu0 0
    %624 = vmatprep.subr.bf16.mxu0 0
    %625 = vmatpush1.bf16.msra.mxu0 0
    %626 = vmatprep.subr.bf16.mxu0 0
    %627 = vmatpush1.bf16.msra.mxu0 0
    %628 = vmatprep.subr.bf16.mxu0 0
    %629 = vmatpush1.bf16.msra.mxu0 0
    %630 = vmatprep.subr.bf16.mxu0 0
    %631 = vmatpush1.bf16.msra.mxu0 0
    %632 = vmatprep.subr.bf16.mxu0 0
    %633 = vmatpush1.bf16.msra.mxu0 0
    %634 = vmatprep.subr.bf16.mxu0 0
    %635 = vmatpush1.bf16.msra.mxu0 0
    %636 = vmatprep.subr.bf16.mxu0 %v561
    %637 = vmatpush1.bf16.msra.mxu0 %v558
    %638 = vmatprep.subr.bf16.mxu0 0
    %639 = vmatpush2.bf16.msra.mxu0 0
    %640 = vmatprep.subr.bf16.mxu0 0
    %641 = vmatpush2.bf16.msra.mxu0 0
    %642 = vmatprep.subr.bf16.mxu0 0
    %643 = vmatpush2.bf16.msra.mxu0 0
    %644 = vmatprep.subr.bf16.mxu0 0
    %645 = vmatpush2.bf16.msra.mxu0 0
    %646 = vmatprep.subr.bf16.mxu0 0
    %647 = vmatpush2.bf16.msra.mxu0 0
    %648 = vmatprep.subr.bf16.mxu0 0
    %649 = vmatpush2.bf16.msra.mxu0 0
    %650 = vmatprep.subr.bf16.mxu0 0
    %651 = vmatpush2.bf16.msra.mxu0 0
    %652 = vmatprep.subr.bf16.mxu0 0
    %653 = vmatpush2.bf16.msra.mxu0 0
    %654 = vmatprep.mubr.bf16.mxu0 0
    %655 = vmatmul.mubr.bf16.gmra.mxu0 %v546
    %v656 = vpop.f32.mrf.mxu0
    %v657 = vadd.f32 0.0, %v656
    %v658 = vpop.f32.mrf.mxu0
    %v659 = vadd.f32 0.0, %v658
    %v660 = vpop.f32.mrf.mxu0
    %v661 = vadd.f32 0.0, %v660
    %v662 = vpop.f32.mrf.mxu0
    %v663 = vadd.f32 0.0, %v662
    %664 = vmatprep.mubr.bf16.mxu0 0
    %665 = vmatmul.mubr.bf16.gmra.mxu0 %v549
    %v666 = vpop.f32.mrf.mxu0
    %v667 = vadd.f32 0.0, %v666
    %v668 = vpop.f32.mrf.mxu0
    %v669 = vadd.f32 0.0, %v668
    %v670 = vpop.f32.mrf.mxu0
    %v671 = vadd.f32 0.0, %v670
    %v672 = vpop.f32.mrf.mxu0
    %v673 = vadd.f32 0.0, %v672
    %674 = vdwg.mxu0
    %675 = vmatprep.subr.bf16.mxu0 0
    %676 = vmatpush1.bf16.msra.mxu0 0
    %677 = vmatprep.subr.bf16.mxu0 0
    %678 = vmatpush1.bf16.msra.mxu0 0
    %679 = vmatprep.subr.bf16.mxu0 0
    %680 = vmatpush1.bf16.msra.mxu0 0
    %681 = vmatprep.subr.bf16.mxu0 0
    %682 = vmatpush1.bf16.msra.mxu0 0
    %683 = vmatprep.subr.bf16.mxu0 0
    %684 = vmatpush1.bf16.msra.mxu0 0
    %685 = vmatprep.subr.bf16.mxu0 0
    %686 = vmatpush1.bf16.msra.mxu0 0
    %687 = vmatprep.subr.bf16.mxu0 0
    %688 = vmatpush1.bf16.msra.mxu0 0
    %689 = vmatprep.subr.bf16.mxu0 %v567
    %690 = vmatpush1.bf16.msra.mxu0 %v564
    %691 = vmatprep.subr.bf16.mxu0 0
    %692 = vmatpush2.bf16.msra.mxu0 0
    %693 = vmatprep.subr.bf16.mxu0 0
    %694 = vmatpush2.bf16.msra.mxu0 0
    %695 = vmatprep.subr.bf16.mxu0 0
    %696 = vmatpush2.bf16.msra.mxu0 0
    %697 = vmatprep.subr.bf16.mxu0 0
    %698 = vmatpush2.bf16.msra.mxu0 0
    %699 = vmatprep.subr.bf16.mxu0 0
    %700 = vmatpush2.bf16.msra.mxu0 0
    %701 = vmatprep.subr.bf16.mxu0 0
    %702 = vmatpush2.bf16.msra.mxu0 0
    %703 = vmatprep.subr.bf16.mxu0 0
    %704 = vmatpush2.bf16.msra.mxu0 0
    %705 = vmatprep.subr.bf16.mxu0 0
    %706 = vmatpush2.bf16.msra.mxu0 0
    %707 = vmatprep.mubr.bf16.mxu0 0
    %708 = vmatmul.mubr.bf16.gmra.mxu0 %v546
    %v709 = vpop.f32.mrf.mxu0
    %v710 = vadd.f32 0.0, %v709
    %v711 = vpop.f32.mrf.mxu0
    %v712 = vadd.f32 0.0, %v711
    %v713 = vpop.f32.mrf.mxu0
    %v714 = vadd.f32 0.0, %v713
    %v715 = vpop.f32.mrf.mxu0
    %v716 = vadd.f32 0.0, %v715
    %717 = vmatprep.mubr.bf16.mxu0 0
    %718 = vmatmul.mubr.bf16.gmra.mxu0 %v549
    %v719 = vpop.f32.mrf.mxu0
    %v720 = vadd.f32 0.0, %v719
    %v721 = vpop.f32.mrf.mxu0
    %v722 = vadd.f32 0.0, %v721
    %v723 = vpop.f32.mrf.mxu0
    %v724 = vadd.f32 0.0, %v723
    %v725 = vpop.f32.mrf.mxu0
    %v726 = vadd.f32 0.0, %v725
    %727 = vdwg.mxu0
    %v728 = vadd.f32 %v388, %v604
    %v729 = vadd.f32 %v390, %v606
    %v730 = vadd.f32 %v441, %v657
    %v731 = vadd.f32 %v443, %v659
    %v732 = vadd.f32 %v494, %v710
    %v733 = vadd.f32 %v496, %v712
    %v734 = vadd.f32 %v392, %v608
    %v735 = vadd.f32 %v394, %v610
    %v736 = vadd.f32 %v445, %v661
    %v737 = vadd.f32 %v447, %v663
    %v738 = vadd.f32 %v498, %v714
    %v739 = vadd.f32 %v500, %v716
    %v740 = vadd.f32 %v398, %v614
    %v741 = vadd.f32 %v400, %v616
    %v742 = vadd.f32 %v451, %v667
    %v743 = vadd.f32 %v453, %v669
    %v744 = vadd.f32 %v504, %v720
    %v745 = vadd.f32 %v506, %v722
    %v746 = vadd.f32 %v402, %v618
    %v747 = vadd.f32 %v404, %v620
    %v748 = vadd.f32 %v455, %v671
    %v749 = vadd.f32 %v457, %v673
    %v750 = vadd.f32 %v508, %v724
    %v751 = vadd.f32 %v510, %v726
    %s752 = scalar_lea.vmem %s1, 48
    %v753 = vld [vmem:[%s752] sm:$0xf]
    %v754 = vld [vmem:[%s752 + $0x4] sm:$0xf]
    %v755 = vld [vmem:[%s752 + $0x8] sm:$0xf]
    %v756 = vld [vmem:[%s752 + $0xc] sm:$0xf]
    %v761 = vunpack.c.l.b16 %v753
    %v762 = vunpack.c.l.b16 %v754
    %v763 = vunpack.c.l.b16 %v755
    %v764 = vunpack.c.l.b16 %v756
    %v765 = vpack.c.b16 %v762, %v761
    %v766 = vpack.c.b16 %v764, %v763
    %767 = vrot.lane.b32.xlu0 %v110, 110
    %v768 = vpop.permute.xlu0 %767
    %769 = vrot.lane.b32.xlu0 %v111, 110
    %v770 = vpop.permute.xlu0 %769
    %771 = vrot.lane.b32.xlu0 %v112, 110
    %v772 = vpop.permute.xlu0 %771
    %773 = vrot.lane.b32.xlu0 %v113, 110
    %v774 = vpop.permute.xlu0 %773
    %775 = vrot.lane.b32.xlu0 %v114, 110
    %v776 = vpop.permute.xlu0 %775
    %777 = vrot.lane.b32.xlu0 %v115, 110
    %v778 = vpop.permute.xlu0 %777
    %vm779 = vcmask 900096
    %v780 = vsel %vm779, %v768, %v770
    %v781 = vsel %vm779, %v770, %v772
    %v782 = vsel %vm779, %v772, %v774
    %v783 = vsel %vm779, %v774, %v776
    %v784 = vsel %vm779, %v776, %v778
    %v786 = vsel %vm134, %v765, 0
    %v789 = vsel %vm134, %v766, 0
    %v792 = vsel %vm141, %v780, 0
    %v795 = vsel %vm141, %v781, 0
    %v798 = vsel %vm141, %v782, 0
    %v801 = vsel %vm141, %v783, 0
    %v804 = vsel %vm141, %v784, 0
    %v807 = vsel %vm141, %v778, 0
    %809 = vmatprep.subr.bf16.mxu0 0
    %810 = vmatpush1.bf16.msra.mxu0 0
    %811 = vmatprep.subr.bf16.mxu0 0
    %812 = vmatpush1.bf16.msra.mxu0 0
    %813 = vmatprep.subr.bf16.mxu0 0
    %814 = vmatpush1.bf16.msra.mxu0 0
    %815 = vmatprep.subr.bf16.mxu0 0
    %816 = vmatpush1.bf16.msra.mxu0 0
    %817 = vmatprep.subr.bf16.mxu0 0
    %818 = vmatpush1.bf16.msra.mxu0 0
    %819 = vmatprep.subr.bf16.mxu0 0
    %820 = vmatpush1.bf16.msra.mxu0 0
    %821 = vmatprep.subr.bf16.mxu0 0
    %822 = vmatpush1.bf16.msra.mxu0 0
    %823 = vmatprep.subr.bf16.mxu0 %v795
    %824 = vmatpush1.bf16.msra.mxu0 %v792
    %825 = vmatprep.subr.bf16.mxu0 0
    %826 = vmatpush2.bf16.msra.mxu0 0
    %827 = vmatprep.subr.bf16.mxu0 0
    %828 = vmatpush2.bf16.msra.mxu0 0
    %829 = vmatprep.subr.bf16.mxu0 0
    %830 = vmatpush2.bf16.msra.mxu0 0
    %831 = vmatprep.subr.bf16.mxu0 0
    %832 = vmatpush2.bf16.msra.mxu0 0
    %833 = vmatprep.subr.bf16.mxu0 0
    %834 = vmatpush2.bf16.msra.mxu0 0
    %835 = vmatprep.subr.bf16.mxu0 0
    %836 = vmatpush2.bf16.msra.mxu0 0
    %837 = vmatprep.subr.bf16.mxu0 0
    %838 = vmatpush2.bf16.msra.mxu0 0
    %839 = vmatprep.subr.bf16.mxu0 0
    %840 = vmatpush2.bf16.msra.mxu0 0
    %841 = vmatprep.mubr.bf16.mxu0 0
    %842 = vmatmul.mubr.bf16.gmra.mxu0 %v786
    %v843 = vpop.f32.mrf.mxu0
    %v844 = vadd.f32 0.0, %v843
    %v845 = vpop.f32.mrf.mxu0
    %v846 = vadd.f32 0.0, %v845
    %v847 = vpop.f32.mrf.mxu0
    %v848 = vadd.f32 0.0, %v847
    %v849 = vpop.f32.mrf.mxu0
    %v850 = vadd.f32 0.0, %v849
    %851 = vmatprep.mubr.bf16.mxu0 0
    %852 = vmatmul.mubr.bf16.gmra.mxu0 %v789
    %v853 = vpop.f32.mrf.mxu0
    %v854 = vadd.f32 0.0, %v853
    %v855 = vpop.f32.mrf.mxu0
    %v856 = vadd.f32 0.0, %v855
    %v857 = vpop.f32.mrf.mxu0
    %v858 = vadd.f32 0.0, %v857
    %v859 = vpop.f32.mrf.mxu0
    %v860 = vadd.f32 0.0, %v859
    %861 = vdwg.mxu0
    %862 = vmatprep.subr.bf16.mxu0 0
    %863 = vmatpush1.bf16.msra.mxu0 0
    %864 = vmatprep.subr.bf16.mxu0 0
    %865 = vmatpush1.bf16.msra.mxu0 0
    %866 = vmatprep.subr.bf16.mxu0 0
    %867 = vmatpush1.bf16.msra.mxu0 0
    %868 = vmatprep.subr.bf16.mxu0 0
    %869 = vmatpush1.bf16.msra.mxu0 0
    %870 = vmatprep.subr.bf16.mxu0 0
    %871 = vmatpush1.bf16.msra.mxu0 0
    %872 = vmatprep.subr.bf16.mxu0 0
    %873 = vmatpush1.bf16.msra.mxu0 0
    %874 = vmatprep.subr.bf16.mxu0 0
    %875 = vmatpush1.bf16.msra.mxu0 0
    %876 = vmatprep.subr.bf16.mxu0 %v801
    %877 = vmatpush1.bf16.msra.mxu0 %v798
    %878 = vmatprep.subr.bf16.mxu0 0
    %879 = vmatpush2.bf16.msra.mxu0 0
    %880 = vmatprep.subr.bf16.mxu0 0
    %881 = vmatpush2.bf16.msra.mxu0 0
    %882 = vmatprep.subr.bf16.mxu0 0
    %883 = vmatpush2.bf16.msra.mxu0 0
    %884 = vmatprep.subr.bf16.mxu0 0
    %885 = vmatpush2.bf16.msra.mxu0 0
    %886 = vmatprep.subr.bf16.mxu0 0
    %887 = vmatpush2.bf16.msra.mxu0 0
    %888 = vmatprep.subr.bf16.mxu0 0
    %889 = vmatpush2.bf16.msra.mxu0 0
    %890 = vmatprep.subr.bf16.mxu0 0
    %891 = vmatpush2.bf16.msra.mxu0 0
    %892 = vmatprep.subr.bf16.mxu0 0
    %893 = vmatpush2.bf16.msra.mxu0 0
    %894 = vmatprep.mubr.bf16.mxu0 0
    %895 = vmatmul.mubr.bf16.gmra.mxu0 %v786
    %v896 = vpop.f32.mrf.mxu0
    %v897 = vadd.f32 0.0, %v896
    %v898 = vpop.f32.mrf.mxu0
    %v899 = vadd.f32 0.0, %v898
    %v900 = vpop.f32.mrf.mxu0
    %v901 = vadd.f32 0.0, %v900
    %v902 = vpop.f32.mrf.mxu0
    %v903 = vadd.f32 0.0, %v902
    %904 = vmatprep.mubr.bf16.mxu0 0
    %905 = vmatmul.mubr.bf16.gmra.mxu0 %v789
    %v906 = vpop.f32.mrf.mxu0
    %v907 = vadd.f32 0.0, %v906
    %v908 = vpop.f32.mrf.mxu0
    %v909 = vadd.f32 0.0, %v908
    %v910 = vpop.f32.mrf.mxu0
    %v911 = vadd.f32 0.0, %v910
    %v912 = vpop.f32.mrf.mxu0
    %v913 = vadd.f32 0.0, %v912
    %914 = vdwg.mxu0
    %915 = vmatprep.subr.bf16.mxu0 0
    %916 = vmatpush1.bf16.msra.mxu0 0
    %917 = vmatprep.subr.bf16.mxu0 0
    %918 = vmatpush1.bf16.msra.mxu0 0
    %919 = vmatprep.subr.bf16.mxu0 0
    %920 = vmatpush1.bf16.msra.mxu0 0
    %921 = vmatprep.subr.bf16.mxu0 0
    %922 = vmatpush1.bf16.msra.mxu0 0
    %923 = vmatprep.subr.bf16.mxu0 0
    %924 = vmatpush1.bf16.msra.mxu0 0
    %925 = vmatprep.subr.bf16.mxu0 0
    %926 = vmatpush1.bf16.msra.mxu0 0
    %927 = vmatprep.subr.bf16.mxu0 0
    %928 = vmatpush1.bf16.msra.mxu0 0
    %929 = vmatprep.subr.bf16.mxu0 %v807
    %930 = vmatpush1.bf16.msra.mxu0 %v804
    %931 = vmatprep.subr.bf16.mxu0 0
    %932 = vmatpush2.bf16.msra.mxu0 0
    %933 = vmatprep.subr.bf16.mxu0 0
    %934 = vmatpush2.bf16.msra.mxu0 0
    %935 = vmatprep.subr.bf16.mxu0 0
    %936 = vmatpush2.bf16.msra.mxu0 0
    %937 = vmatprep.subr.bf16.mxu0 0
    %938 = vmatpush2.bf16.msra.mxu0 0
    %939 = vmatprep.subr.bf16.mxu0 0
    %940 = vmatpush2.bf16.msra.mxu0 0
    %941 = vmatprep.subr.bf16.mxu0 0
    %942 = vmatpush2.bf16.msra.mxu0 0
    %943 = vmatprep.subr.bf16.mxu0 0
    %944 = vmatpush2.bf16.msra.mxu0 0
    %945 = vmatprep.subr.bf16.mxu0 0
    %946 = vmatpush2.bf16.msra.mxu0 0
    %947 = vmatprep.mubr.bf16.mxu0 0
    %948 = vmatmul.mubr.bf16.gmra.mxu0 %v786
    %v949 = vpop.f32.mrf.mxu0
    %v950 = vadd.f32 0.0, %v949
    %v951 = vpop.f32.mrf.mxu0
    %v952 = vadd.f32 0.0, %v951
    %v953 = vpop.f32.mrf.mxu0
    %v954 = vadd.f32 0.0, %v953
    %v955 = vpop.f32.mrf.mxu0
    %v956 = vadd.f32 0.0, %v955
    %957 = vmatprep.mubr.bf16.mxu0 0
    %958 = vmatmul.mubr.bf16.gmra.mxu0 %v789
    %v959 = vpop.f32.mrf.mxu0
    %v960 = vadd.f32 0.0, %v959
    %v961 = vpop.f32.mrf.mxu0
    %v962 = vadd.f32 0.0, %v961
    %v963 = vpop.f32.mrf.mxu0
    %v964 = vadd.f32 0.0, %v963
    %v965 = vpop.f32.mrf.mxu0
    %v966 = vadd.f32 0.0, %v965
    %967 = vdwg.mxu0
    %v968 = vadd.f32 %v728, %v844
    %v969 = vadd.f32 %v729, %v846
    %v970 = vadd.f32 %v730, %v897
    %v971 = vadd.f32 %v731, %v899
    %v972 = vadd.f32 %v732, %v950
    %v973 = vadd.f32 %v733, %v952
    %v974 = vadd.f32 %v734, %v848
    %v975 = vadd.f32 %v735, %v850
    %v976 = vadd.f32 %v736, %v901
    %v977 = vadd.f32 %v737, %v903
    %v978 = vadd.f32 %v738, %v954
    %v979 = vadd.f32 %v739, %v956
    %v980 = vadd.f32 %v740, %v854
    %v981 = vadd.f32 %v741, %v856
    %v982 = vadd.f32 %v742, %v907
    %v983 = vadd.f32 %v743, %v909
    %v984 = vadd.f32 %v744, %v960
    %v985 = vadd.f32 %v745, %v962
    %v986 = vadd.f32 %v746, %v858
    %v987 = vadd.f32 %v747, %v860
    %v988 = vadd.f32 %v748, %v911
    %v989 = vadd.f32 %v749, %v913
    %v990 = vadd.f32 %v750, %v964
    %v991 = vadd.f32 %v751, %v966
    %s992 = scalar_lea.vmem %s1, 64
    %v993 = vld [vmem:[%s992] sm:$0xf]
    %v994 = vld [vmem:[%s992 + $0x4] sm:$0xf]
    %v995 = vld [vmem:[%s992 + $0x8] sm:$0xf]
    %v996 = vld [vmem:[%s992 + $0xc] sm:$0xf]
    %v1001 = vunpack.c.l.b16 %v993
    %v1002 = vunpack.c.l.b16 %v994
    %v1003 = vunpack.c.l.b16 %v995
    %v1004 = vunpack.c.l.b16 %v996
    %v1005 = vpack.c.b16 %v1002, %v1001
    %v1006 = vpack.c.b16 %v1004, %v1003
    %1007 = vrot.lane.b32.xlu0 %v110, 109
    %v1008 = vpop.permute.xlu0 %1007
    %1009 = vrot.lane.b32.xlu0 %v111, 109
    %v1010 = vpop.permute.xlu0 %1009
    %1011 = vrot.lane.b32.xlu0 %v112, 109
    %v1012 = vpop.permute.xlu0 %1011
    %1013 = vrot.lane.b32.xlu0 %v113, 109
    %v1014 = vpop.permute.xlu0 %1013
    %1015 = vrot.lane.b32.xlu0 %v114, 109
    %v1016 = vpop.permute.xlu0 %1015
    %1017 = vrot.lane.b32.xlu0 %v115, 109
    %v1018 = vpop.permute.xlu0 %1017
    %vm1019 = vcmask 891904
    %v1020 = vsel %vm1019, %v1008, %v1010
    %v1021 = vsel %vm1019, %v1010, %v1012
    %v1022 = vsel %vm1019, %v1012, %v1014
    %v1023 = vsel %vm1019, %v1014, %v1016
    %v1024 = vsel %vm1019, %v1016, %v1018
    %v1026 = vsel %vm134, %v1005, 0
    %v1029 = vsel %vm134, %v1006, 0
    %v1032 = vsel %vm141, %v1020, 0
    %v1035 = vsel %vm141, %v1021, 0
    %v1038 = vsel %vm141, %v1022, 0
    %v1041 = vsel %vm141, %v1023, 0
    %v1044 = vsel %vm141, %v1024, 0
    %v1047 = vsel %vm141, %v1018, 0
    %1049 = vmatprep.subr.bf16.mxu0 0
    %1050 = vmatpush1.bf16.msra.mxu0 0
    %1051 = vmatprep.subr.bf16.mxu0 0
    %1052 = vmatpush1.bf16.msra.mxu0 0
    %1053 = vmatprep.subr.bf16.mxu0 0
    %1054 = vmatpush1.bf16.msra.mxu0 0
    %1055 = vmatprep.subr.bf16.mxu0 0
    %1056 = vmatpush1.bf16.msra.mxu0 0
    %1057 = vmatprep.subr.bf16.mxu0 0
    %1058 = vmatpush1.bf16.msra.mxu0 0
    %1059 = vmatprep.subr.bf16.mxu0 0
    %1060 = vmatpush1.bf16.msra.mxu0 0
    %1061 = vmatprep.subr.bf16.mxu0 0
    %1062 = vmatpush1.bf16.msra.mxu0 0
    %1063 = vmatprep.subr.bf16.mxu0 %v1035
    %1064 = vmatpush1.bf16.msra.mxu0 %v1032
    %1065 = vmatprep.subr.bf16.mxu0 0
    %1066 = vmatpush2.bf16.msra.mxu0 0
    %1067 = vmatprep.subr.bf16.mxu0 0
    %1068 = vmatpush2.bf16.msra.mxu0 0
    %1069 = vmatprep.subr.bf16.mxu0 0
    %1070 = vmatpush2.bf16.msra.mxu0 0
    %1071 = vmatprep.subr.bf16.mxu0 0
    %1072 = vmatpush2.bf16.msra.mxu0 0
    %1073 = vmatprep.subr.bf16.mxu0 0
    %1074 = vmatpush2.bf16.msra.mxu0 0
    %1075 = vmatprep.subr.bf16.mxu0 0
    %1076 = vmatpush2.bf16.msra.mxu0 0
    %1077 = vmatprep.subr.bf16.mxu0 0
    %1078 = vmatpush2.bf16.msra.mxu0 0
    %1079 = vmatprep.subr.bf16.mxu0 0
    %1080 = vmatpush2.bf16.msra.mxu0 0
    %1081 = vmatprep.mubr.bf16.mxu0 0
    %1082 = vmatmul.mubr.bf16.gmra.mxu0 %v1026
    %v1083 = vpop.f32.mrf.mxu0
    %v1084 = vadd.f32 0.0, %v1083
    %v1085 = vpop.f32.mrf.mxu0
    %v1086 = vadd.f32 0.0, %v1085
    %v1087 = vpop.f32.mrf.mxu0
    %v1088 = vadd.f32 0.0, %v1087
    %v1089 = vpop.f32.mrf.mxu0
    %v1090 = vadd.f32 0.0, %v1089
    %1091 = vmatprep.mubr.bf16.mxu0 0
    %1092 = vmatmul.mubr.bf16.gmra.mxu0 %v1029
    %v1093 = vpop.f32.mrf.mxu0
    %v1094 = vadd.f32 0.0, %v1093
    %v1095 = vpop.f32.mrf.mxu0
    %v1096 = vadd.f32 0.0, %v1095
    %v1097 = vpop.f32.mrf.mxu0
    %v1098 = vadd.f32 0.0, %v1097
    %v1099 = vpop.f32.mrf.mxu0
    %v1100 = vadd.f32 0.0, %v1099
    %1101 = vdwg.mxu0
    %1102 = vmatprep.subr.bf16.mxu0 0
    %1103 = vmatpush1.bf16.msra.mxu0 0
    %1104 = vmatprep.subr.bf16.mxu0 0
    %1105 = vmatpush1.bf16.msra.mxu0 0
    %1106 = vmatprep.subr.bf16.mxu0 0
    %1107 = vmatpush1.bf16.msra.mxu0 0
    %1108 = vmatprep.subr.bf16.mxu0 0
    %1109 = vmatpush1.bf16.msra.mxu0 0
    %1110 = vmatprep.subr.bf16.mxu0 0
    %1111 = vmatpush1.bf16.msra.mxu0 0
    %1112 = vmatprep.subr.bf16.mxu0 0
    %1113 = vmatpush1.bf16.msra.mxu0 0
    %1114 = vmatprep.subr.bf16.mxu0 0
    %1115 = vmatpush1.bf16.msra.mxu0 0
    %1116 = vmatprep.subr.bf16.mxu0 %v1041
    %1117 = vmatpush1.bf16.msra.mxu0 %v1038
    %1118 = vmatprep.subr.bf16.mxu0 0
    %1119 = vmatpush2.bf16.msra.mxu0 0
    %1120 = vmatprep.subr.bf16.mxu0 0
    %1121 = vmatpush2.bf16.msra.mxu0 0
    %1122 = vmatprep.subr.bf16.mxu0 0
    %1123 = vmatpush2.bf16.msra.mxu0 0
    %1124 = vmatprep.subr.bf16.mxu0 0
    %1125 = vmatpush2.bf16.msra.mxu0 0
    %1126 = vmatprep.subr.bf16.mxu0 0
    %1127 = vmatpush2.bf16.msra.mxu0 0
    %1128 = vmatprep.subr.bf16.mxu0 0
    %1129 = vmatpush2.bf16.msra.mxu0 0
    %1130 = vmatprep.subr.bf16.mxu0 0
    %1131 = vmatpush2.bf16.msra.mxu0 0
    %1132 = vmatprep.subr.bf16.mxu0 0
    %1133 = vmatpush2.bf16.msra.mxu0 0
    %1134 = vmatprep.mubr.bf16.mxu0 0
    %1135 = vmatmul.mubr.bf16.gmra.mxu0 %v1026
    %v1136 = vpop.f32.mrf.mxu0
    %v1137 = vadd.f32 0.0, %v1136
    %v1138 = vpop.f32.mrf.mxu0
    %v1139 = vadd.f32 0.0, %v1138
    %v1140 = vpop.f32.mrf.mxu0
    %v1141 = vadd.f32 0.0, %v1140
    %v1142 = vpop.f32.mrf.mxu0
    %v1143 = vadd.f32 0.0, %v1142
    %1144 = vmatprep.mubr.bf16.mxu0 0
    %1145 = vmatmul.mubr.bf16.gmra.mxu0 %v1029
    %v1146 = vpop.f32.mrf.mxu0
    %v1147 = vadd.f32 0.0, %v1146
    %v1148 = vpop.f32.mrf.mxu0
    %v1149 = vadd.f32 0.0, %v1148
    %v1150 = vpop.f32.mrf.mxu0
    %v1151 = vadd.f32 0.0, %v1150
    %v1152 = vpop.f32.mrf.mxu0
    %v1153 = vadd.f32 0.0, %v1152
    %1154 = vdwg.mxu0
    %1155 = vmatprep.subr.bf16.mxu0 0
    %1156 = vmatpush1.bf16.msra.mxu0 0
    %1157 = vmatprep.subr.bf16.mxu0 0
    %1158 = vmatpush1.bf16.msra.mxu0 0
    %1159 = vmatprep.subr.bf16.mxu0 0
    %1160 = vmatpush1.bf16.msra.mxu0 0
    %1161 = vmatprep.subr.bf16.mxu0 0
    %1162 = vmatpush1.bf16.msra.mxu0 0
    %1163 = vmatprep.subr.bf16.mxu0 0
    %1164 = vmatpush1.bf16.msra.mxu0 0
    %1165 = vmatprep.subr.bf16.mxu0 0
    %1166 = vmatpush1.bf16.msra.mxu0 0
    %1167 = vmatprep.subr.bf16.mxu0 0
    %1168 = vmatpush1.bf16.msra.mxu0 0
    %1169 = vmatprep.subr.bf16.mxu0 %v1047
    %1170 = vmatpush1.bf16.msra.mxu0 %v1044
    %1171 = vmatprep.subr.bf16.mxu0 0
    %1172 = vmatpush2.bf16.msra.mxu0 0
    %1173 = vmatprep.subr.bf16.mxu0 0
    %1174 = vmatpush2.bf16.msra.mxu0 0
    %1175 = vmatprep.subr.bf16.mxu0 0
    %1176 = vmatpush2.bf16.msra.mxu0 0
    %1177 = vmatprep.subr.bf16.mxu0 0
    %1178 = vmatpush2.bf16.msra.mxu0 0
    %1179 = vmatprep.subr.bf16.mxu0 0
    %1180 = vmatpush2.bf16.msra.mxu0 0
    %1181 = vmatprep.subr.bf16.mxu0 0
    %1182 = vmatpush2.bf16.msra.mxu0 0
    %1183 = vmatprep.subr.bf16.mxu0 0
    %1184 = vmatpush2.bf16.msra.mxu0 0
    %1185 = vmatprep.subr.bf16.mxu0 0
    %1186 = vmatpush2.bf16.msra.mxu0 0
    %1187 = vmatprep.mubr.bf16.mxu0 0
    %1188 = vmatmul.mubr.bf16.gmra.mxu0 %v1026
    %v1189 = vpop.f32.mrf.mxu0
    %v1190 = vadd.f32 0.0, %v1189
    %v1191 = vpop.f32.mrf.mxu0
    %v1192 = vadd.f32 0.0, %v1191
    %v1193 = vpop.f32.mrf.mxu0
    %v1194 = vadd.f32 0.0, %v1193
    %v1195 = vpop.f32.mrf.mxu0
    %v1196 = vadd.f32 0.0, %v1195
    %1197 = vmatprep.mubr.bf16.mxu0 0
    %1198 = vmatmul.mubr.bf16.gmra.mxu0 %v1029
    %v1199 = vpop.f32.mrf.mxu0
    %v1200 = vadd.f32 0.0, %v1199
    %v1201 = vpop.f32.mrf.mxu0
    %v1202 = vadd.f32 0.0, %v1201
    %v1203 = vpop.f32.mrf.mxu0
    %v1204 = vadd.f32 0.0, %v1203
    %v1205 = vpop.f32.mrf.mxu0
    %v1206 = vadd.f32 0.0, %v1205
    %1207 = vdwg.mxu0
    %v1208 = vadd.f32 %v968, %v1084
    %v1209 = vadd.f32 %v969, %v1086
    %v1210 = vadd.f32 %v970, %v1137
    %v1211 = vadd.f32 %v971, %v1139
    %v1212 = vadd.f32 %v972, %v1190
    %v1213 = vadd.f32 %v973, %v1192
    %v1214 = vadd.f32 %v974, %v1088
    %v1215 = vadd.f32 %v975, %v1090
    %v1216 = vadd.f32 %v976, %v1141
    %v1217 = vadd.f32 %v977, %v1143
    %v1218 = vadd.f32 %v978, %v1194
    %v1219 = vadd.f32 %v979, %v1196
    %v1220 = vadd.f32 %v980, %v1094
    %v1221 = vadd.f32 %v981, %v1096
    %v1222 = vadd.f32 %v982, %v1147
    %v1223 = vadd.f32 %v983, %v1149
    %v1224 = vadd.f32 %v984, %v1200
    %v1225 = vadd.f32 %v985, %v1202
    %v1226 = vadd.f32 %v986, %v1098
    %v1227 = vadd.f32 %v987, %v1100
    %v1228 = vadd.f32 %v988, %v1151
    %v1229 = vadd.f32 %v989, %v1153
    %v1230 = vadd.f32 %v990, %v1204
    %v1231 = vadd.f32 %v991, %v1206
    %s1232 = scalar_lea.vmem %s1, 80
    %v1233 = vld [vmem:[%s1232] sm:$0xf]
    %v1234 = vld [vmem:[%s1232 + $0x4] sm:$0xf]
    %v1235 = vld [vmem:[%s1232 + $0x8] sm:$0xf]
    %v1236 = vld [vmem:[%s1232 + $0xc] sm:$0xf]
    %v1241 = vunpack.c.l.b16 %v1233
    %v1242 = vunpack.c.l.b16 %v1234
    %v1243 = vunpack.c.l.b16 %v1235
    %v1244 = vunpack.c.l.b16 %v1236
    %v1245 = vpack.c.b16 %v1242, %v1241
    %v1246 = vpack.c.b16 %v1244, %v1243
    %1247 = vrot.lane.b32.xlu0 %v110, 108
    %v1248 = vpop.permute.xlu0 %1247
    %1249 = vrot.lane.b32.xlu0 %v111, 108
    %v1250 = vpop.permute.xlu0 %1249
    %1251 = vrot.lane.b32.xlu0 %v112, 108
    %v1252 = vpop.permute.xlu0 %1251
    %1253 = vrot.lane.b32.xlu0 %v113, 108
    %v1254 = vpop.permute.xlu0 %1253
    %1255 = vrot.lane.b32.xlu0 %v114, 108
    %v1256 = vpop.permute.xlu0 %1255
    %1257 = vrot.lane.b32.xlu0 %v115, 108
    %v1258 = vpop.permute.xlu0 %1257
    %vm1259 = vcmask 883712
    %v1260 = vsel %vm1259, %v1248, %v1250
    %v1261 = vsel %vm1259, %v1250, %v1252
    %v1262 = vsel %vm1259, %v1252, %v1254
    %v1263 = vsel %vm1259, %v1254, %v1256
    %v1264 = vsel %vm1259, %v1256, %v1258
    %v1266 = vsel %vm134, %v1245, 0
    %v1269 = vsel %vm134, %v1246, 0
    %v1272 = vsel %vm141, %v1260, 0
    %v1275 = vsel %vm141, %v1261, 0
    %v1278 = vsel %vm141, %v1262, 0
    %v1281 = vsel %vm141, %v1263, 0
    %v1284 = vsel %vm141, %v1264, 0
    %v1287 = vsel %vm141, %v1258, 0
    %1289 = vmatprep.subr.bf16.mxu0 0
    %1290 = vmatpush1.bf16.msra.mxu0 0
    %1291 = vmatprep.subr.bf16.mxu0 0
    %1292 = vmatpush1.bf16.msra.mxu0 0
    %1293 = vmatprep.subr.bf16.mxu0 0
    %1294 = vmatpush1.bf16.msra.mxu0 0
    %1295 = vmatprep.subr.bf16.mxu0 0
    %1296 = vmatpush1.bf16.msra.mxu0 0
    %1297 = vmatprep.subr.bf16.mxu0 0
    %1298 = vmatpush1.bf16.msra.mxu0 0
    %1299 = vmatprep.subr.bf16.mxu0 0
    %1300 = vmatpush1.bf16.msra.mxu0 0
    %1301 = vmatprep.subr.bf16.mxu0 0
    %1302 = vmatpush1.bf16.msra.mxu0 0
    %1303 = vmatprep.subr.bf16.mxu0 %v1275
    %1304 = vmatpush1.bf16.msra.mxu0 %v1272
    %1305 = vmatprep.subr.bf16.mxu0 0
    %1306 = vmatpush2.bf16.msra.mxu0 0
    %1307 = vmatprep.subr.bf16.mxu0 0
    %1308 = vmatpush2.bf16.msra.mxu0 0
    %1309 = vmatprep.subr.bf16.mxu0 0
    %1310 = vmatpush2.bf16.msra.mxu0 0
    %1311 = vmatprep.subr.bf16.mxu0 0
    %1312 = vmatpush2.bf16.msra.mxu0 0
    %1313 = vmatprep.subr.bf16.mxu0 0
    %1314 = vmatpush2.bf16.msra.mxu0 0
    %1315 = vmatprep.subr.bf16.mxu0 0
    %1316 = vmatpush2.bf16.msra.mxu0 0
    %1317 = vmatprep.subr.bf16.mxu0 0
    %1318 = vmatpush2.bf16.msra.mxu0 0
    %1319 = vmatprep.subr.bf16.mxu0 0
    %1320 = vmatpush2.bf16.msra.mxu0 0
    %1321 = vmatprep.mubr.bf16.mxu0 0
    %1322 = vmatmul.mubr.bf16.gmra.mxu0 %v1266
    %v1323 = vpop.f32.mrf.mxu0
    %v1324 = vadd.f32 0.0, %v1323
    %v1325 = vpop.f32.mrf.mxu0
    %v1326 = vadd.f32 0.0, %v1325
    %v1327 = vpop.f32.mrf.mxu0
    %v1328 = vadd.f32 0.0, %v1327
    %v1329 = vpop.f32.mrf.mxu0
    %v1330 = vadd.f32 0.0, %v1329
    %1331 = vmatprep.mubr.bf16.mxu0 0
    %1332 = vmatmul.mubr.bf16.gmra.mxu0 %v1269
    %v1333 = vpop.f32.mrf.mxu0
    %v1334 = vadd.f32 0.0, %v1333
    %v1335 = vpop.f32.mrf.mxu0
    %v1336 = vadd.f32 0.0, %v1335
    %v1337 = vpop.f32.mrf.mxu0
    %v1338 = vadd.f32 0.0, %v1337
    %v1339 = vpop.f32.mrf.mxu0
    %v1340 = vadd.f32 0.0, %v1339
    %1341 = vdwg.mxu0
    %1342 = vmatprep.subr.bf16.mxu0 0
    %1343 = vmatpush1.bf16.msra.mxu0 0
    %1344 = vmatprep.subr.bf16.mxu0 0
    %1345 = vmatpush1.bf16.msra.mxu0 0
    %1346 = vmatprep.subr.bf16.mxu0 0
    %1347 = vmatpush1.bf16.msra.mxu0 0
    %1348 = vmatprep.subr.bf16.mxu0 0
    %1349 = vmatpush1.bf16.msra.mxu0 0
    %1350 = vmatprep.subr.bf16.mxu0 0
    %1351 = vmatpush1.bf16.msra.mxu0 0
    %1352 = vmatprep.subr.bf16.mxu0 0
    %1353 = vmatpush1.bf16.msra.mxu0 0
    %1354 = vmatprep.subr.bf16.mxu0 0
    %1355 = vmatpush1.bf16.msra.mxu0 0
    %1356 = vmatprep.subr.bf16.mxu0 %v1281
    %1357 = vmatpush1.bf16.msra.mxu0 %v1278
    %1358 = vmatprep.subr.bf16.mxu0 0
    %1359 = vmatpush2.bf16.msra.mxu0 0
    %1360 = vmatprep.subr.bf16.mxu0 0
    %1361 = vmatpush2.bf16.msra.mxu0 0
    %1362 = vmatprep.subr.bf16.mxu0 0
    %1363 = vmatpush2.bf16.msra.mxu0 0
    %1364 = vmatprep.subr.bf16.mxu0 0
    %1365 = vmatpush2.bf16.msra.mxu0 0
    %1366 = vmatprep.subr.bf16.mxu0 0
    %1367 = vmatpush2.bf16.msra.mxu0 0
    %1368 = vmatprep.subr.bf16.mxu0 0
    %1369 = vmatpush2.bf16.msra.mxu0 0
    %1370 = vmatprep.subr.bf16.mxu0 0
    %1371 = vmatpush2.bf16.msra.mxu0 0
    %1372 = vmatprep.subr.bf16.mxu0 0
    %1373 = vmatpush2.bf16.msra.mxu0 0
    %1374 = vmatprep.mubr.bf16.mxu0 0
    %1375 = vmatmul.mubr.bf16.gmra.mxu0 %v1266
    %v1376 = vpop.f32.mrf.mxu0
    %v1377 = vadd.f32 0.0, %v1376
    %v1378 = vpop.f32.mrf.mxu0
    %v1379 = vadd.f32 0.0, %v1378
    %v1380 = vpop.f32.mrf.mxu0
    %v1381 = vadd.f32 0.0, %v1380
    %v1382 = vpop.f32.mrf.mxu0
    %v1383 = vadd.f32 0.0, %v1382
    %1384 = vmatprep.mubr.bf16.mxu0 0
    %1385 = vmatmul.mubr.bf16.gmra.mxu0 %v1269
    %v1386 = vpop.f32.mrf.mxu0
    %v1387 = vadd.f32 0.0, %v1386
    %v1388 = vpop.f32.mrf.mxu0
    %v1389 = vadd.f32 0.0, %v1388
    %v1390 = vpop.f32.mrf.mxu0
    %v1391 = vadd.f32 0.0, %v1390
    %v1392 = vpop.f32.mrf.mxu0
    %v1393 = vadd.f32 0.0, %v1392
    %1394 = vdwg.mxu0
    %1395 = vmatprep.subr.bf16.mxu0 0
    %1396 = vmatpush1.bf16.msra.mxu0 0
    %1397 = vmatprep.subr.bf16.mxu0 0
    %1398 = vmatpush1.bf16.msra.mxu0 0
    %1399 = vmatprep.subr.bf16.mxu0 0
    %1400 = vmatpush1.bf16.msra.mxu0 0
    %1401 = vmatprep.subr.bf16.mxu0 0
    %1402 = vmatpush1.bf16.msra.mxu0 0
    %1403 = vmatprep.subr.bf16.mxu0 0
    %1404 = vmatpush1.bf16.msra.mxu0 0
    %1405 = vmatprep.subr.bf16.mxu0 0
    %1406 = vmatpush1.bf16.msra.mxu0 0
    %1407 = vmatprep.subr.bf16.mxu0 0
    %1408 = vmatpush1.bf16.msra.mxu0 0
    %1409 = vmatprep.subr.bf16.mxu0 %v1287
    %1410 = vmatpush1.bf16.msra.mxu0 %v1284
    %1411 = vmatprep.subr.bf16.mxu0 0
    %1412 = vmatpush2.bf16.msra.mxu0 0
    %1413 = vmatprep.subr.bf16.mxu0 0
    %1414 = vmatpush2.bf16.msra.mxu0 0
    %1415 = vmatprep.subr.bf16.mxu0 0
    %1416 = vmatpush2.bf16.msra.mxu0 0
    %1417 = vmatprep.subr.bf16.mxu0 0
    %1418 = vmatpush2.bf16.msra.mxu0 0
    %1419 = vmatprep.subr.bf16.mxu0 0
    %1420 = vmatpush2.bf16.msra.mxu0 0
    %1421 = vmatprep.subr.bf16.mxu0 0
    %1422 = vmatpush2.bf16.msra.mxu0 0
    %1423 = vmatprep.subr.bf16.mxu0 0
    %1424 = vmatpush2.bf16.msra.mxu0 0
    %1425 = vmatprep.subr.bf16.mxu0 0
    %1426 = vmatpush2.bf16.msra.mxu0 0
    %1427 = vmatprep.mubr.bf16.mxu0 0
    %1428 = vmatmul.mubr.bf16.gmra.mxu0 %v1266
    %v1429 = vpop.f32.mrf.mxu0
    %v1430 = vadd.f32 0.0, %v1429
    %v1431 = vpop.f32.mrf.mxu0
    %v1432 = vadd.f32 0.0, %v1431
    %v1433 = vpop.f32.mrf.mxu0
    %v1434 = vadd.f32 0.0, %v1433
    %v1435 = vpop.f32.mrf.mxu0
    %v1436 = vadd.f32 0.0, %v1435
    %1437 = vmatprep.mubr.bf16.mxu0 0
    %1438 = vmatmul.mubr.bf16.gmra.mxu0 %v1269
    %v1439 = vpop.f32.mrf.mxu0
    %v1440 = vadd.f32 0.0, %v1439
    %v1441 = vpop.f32.mrf.mxu0
    %v1442 = vadd.f32 0.0, %v1441
    %v1443 = vpop.f32.mrf.mxu0
    %v1444 = vadd.f32 0.0, %v1443
    %v1445 = vpop.f32.mrf.mxu0
    %v1446 = vadd.f32 0.0, %v1445
    %1447 = vdwg.mxu0
    %v1448 = vadd.f32 %v1208, %v1324
    %v1449 = vadd.f32 %v1209, %v1326
    %v1450 = vadd.f32 %v1210, %v1377
    %v1451 = vadd.f32 %v1211, %v1379
    %v1452 = vadd.f32 %v1212, %v1430
    %v1453 = vadd.f32 %v1213, %v1432
    %v1454 = vadd.f32 %v1214, %v1328
    %v1455 = vadd.f32 %v1215, %v1330
    %v1456 = vadd.f32 %v1216, %v1381
    %v1457 = vadd.f32 %v1217, %v1383
    %v1458 = vadd.f32 %v1218, %v1434
    %v1459 = vadd.f32 %v1219, %v1436
    %v1460 = vadd.f32 %v1220, %v1334
    %v1461 = vadd.f32 %v1221, %v1336
    %v1462 = vadd.f32 %v1222, %v1387
    %v1463 = vadd.f32 %v1223, %v1389
    %v1464 = vadd.f32 %v1224, %v1440
    %v1465 = vadd.f32 %v1225, %v1442
    %v1466 = vadd.f32 %v1226, %v1338
    %v1467 = vadd.f32 %v1227, %v1340
    %v1468 = vadd.f32 %v1228, %v1391
    %v1469 = vadd.f32 %v1229, %v1393
    %v1470 = vadd.f32 %v1230, %v1444
    %v1471 = vadd.f32 %v1231, %v1446
    %s1472 = scalar_lea.vmem %s1, 96
    %v1473 = vld [vmem:[%s1472] sm:$0xf]
    %v1474 = vld [vmem:[%s1472 + $0x4] sm:$0xf]
    %v1475 = vld [vmem:[%s1472 + $0x8] sm:$0xf]
    %v1476 = vld [vmem:[%s1472 + $0xc] sm:$0xf]
    %v1481 = vunpack.c.l.b16 %v1473
    %v1482 = vunpack.c.l.b16 %v1474
    %v1483 = vunpack.c.l.b16 %v1475
    %v1484 = vunpack.c.l.b16 %v1476
    %v1485 = vpack.c.b16 %v1482, %v1481
    %v1486 = vpack.c.b16 %v1484, %v1483
    %1487 = vrot.lane.b32.xlu0 %v110, 92
    %v1488 = vpop.permute.xlu0 %1487
    %1489 = vrot.lane.b32.xlu0 %v111, 92
    %v1490 = vpop.permute.xlu0 %1489
    %1491 = vrot.lane.b32.xlu0 %v112, 92
    %v1492 = vpop.permute.xlu0 %1491
    %1493 = vrot.lane.b32.xlu0 %v113, 92
    %v1494 = vpop.permute.xlu0 %1493
    %1495 = vrot.lane.b32.xlu0 %v114, 92
    %v1496 = vpop.permute.xlu0 %1495
    %1497 = vrot.lane.b32.xlu0 %v115, 92
    %v1498 = vpop.permute.xlu0 %1497
    %vm1499 = vcmask 752640
    %v1500 = vsel %vm1499, %v1488, %v1490
    %v1501 = vsel %vm1499, %v1490, %v1492
    %v1502 = vsel %vm1499, %v1492, %v1494
    %v1503 = vsel %vm1499, %v1494, %v1496
    %v1504 = vsel %vm1499, %v1496, %v1498
    %v1506 = vsel %vm134, %v1485, 0
    %v1509 = vsel %vm134, %v1486, 0
    %v1512 = vsel %vm141, %v1500, 0
    %v1515 = vsel %vm141, %v1501, 0
    %v1518 = vsel %vm141, %v1502, 0
    %v1521 = vsel %vm141, %v1503, 0
    %v1524 = vsel %vm141, %v1504, 0
    %v1527 = vsel %vm141, %v1498, 0
    %1529 = vmatprep.subr.bf16.mxu0 0
    %1530 = vmatpush1.bf16.msra.mxu0 0
    %1531 = vmatprep.subr.bf16.mxu0 0
    %1532 = vmatpush1.bf16.msra.mxu0 0
    %1533 = vmatprep.subr.bf16.mxu0 0
    %1534 = vmatpush1.bf16.msra.mxu0 0
    %1535 = vmatprep.subr.bf16.mxu0 0
    %1536 = vmatpush1.bf16.msra.mxu0 0
    %1537 = vmatprep.subr.bf16.mxu0 0
    %1538 = vmatpush1.bf16.msra.mxu0 0
    %1539 = vmatprep.subr.bf16.mxu0 0
    %1540 = vmatpush1.bf16.msra.mxu0 0
    %1541 = vmatprep.subr.bf16.mxu0 0
    %1542 = vmatpush1.bf16.msra.mxu0 0
    %1543 = vmatprep.subr.bf16.mxu0 %v1515
    %1544 = vmatpush1.bf16.msra.mxu0 %v1512
    %1545 = vmatprep.subr.bf16.mxu0 0
    %1546 = vmatpush2.bf16.msra.mxu0 0
    %1547 = vmatprep.subr.bf16.mxu0 0
    %1548 = vmatpush2.bf16.msra.mxu0 0
    %1549 = vmatprep.subr.bf16.mxu0 0
    %1550 = vmatpush2.bf16.msra.mxu0 0
    %1551 = vmatprep.subr.bf16.mxu0 0
    %1552 = vmatpush2.bf16.msra.mxu0 0
    %1553 = vmatprep.subr.bf16.mxu0 0
    %1554 = vmatpush2.bf16.msra.mxu0 0
    %1555 = vmatprep.subr.bf16.mxu0 0
    %1556 = vmatpush2.bf16.msra.mxu0 0
    %1557 = vmatprep.subr.bf16.mxu0 0
    %1558 = vmatpush2.bf16.msra.mxu0 0
    %1559 = vmatprep.subr.bf16.mxu0 0
    %1560 = vmatpush2.bf16.msra.mxu0 0
    %1561 = vmatprep.mubr.bf16.mxu0 0
    %1562 = vmatmul.mubr.bf16.gmra.mxu0 %v1506
    %v1563 = vpop.f32.mrf.mxu0
    %v1564 = vadd.f32 0.0, %v1563
    %v1565 = vpop.f32.mrf.mxu0
    %v1566 = vadd.f32 0.0, %v1565
    %v1567 = vpop.f32.mrf.mxu0
    %v1568 = vadd.f32 0.0, %v1567
    %v1569 = vpop.f32.mrf.mxu0
    %v1570 = vadd.f32 0.0, %v1569
    %1571 = vmatprep.mubr.bf16.mxu0 0
    %1572 = vmatmul.mubr.bf16.gmra.mxu0 %v1509
    %v1573 = vpop.f32.mrf.mxu0
    %v1574 = vadd.f32 0.0, %v1573
    %v1575 = vpop.f32.mrf.mxu0
    %v1576 = vadd.f32 0.0, %v1575
    %v1577 = vpop.f32.mrf.mxu0
    %v1578 = vadd.f32 0.0, %v1577
    %v1579 = vpop.f32.mrf.mxu0
    %v1580 = vadd.f32 0.0, %v1579
    %1581 = vdwg.mxu0
    %1582 = vmatprep.subr.bf16.mxu0 0
    %1583 = vmatpush1.bf16.msra.mxu0 0
    %1584 = vmatprep.subr.bf16.mxu0 0
    %1585 = vmatpush1.bf16.msra.mxu0 0
    %1586 = vmatprep.subr.bf16.mxu0 0
    %1587 = vmatpush1.bf16.msra.mxu0 0
    %1588 = vmatprep.subr.bf16.mxu0 0
    %1589 = vmatpush1.bf16.msra.mxu0 0
    %1590 = vmatprep.subr.bf16.mxu0 0
    %1591 = vmatpush1.bf16.msra.mxu0 0
    %1592 = vmatprep.subr.bf16.mxu0 0
    %1593 = vmatpush1.bf16.msra.mxu0 0
    %1594 = vmatprep.subr.bf16.mxu0 0
    %1595 = vmatpush1.bf16.msra.mxu0 0
    %1596 = vmatprep.subr.bf16.mxu0 %v1521
    %1597 = vmatpush1.bf16.msra.mxu0 %v1518
    %1598 = vmatprep.subr.bf16.mxu0 0
    %1599 = vmatpush2.bf16.msra.mxu0 0
    %1600 = vmatprep.subr.bf16.mxu0 0
    %1601 = vmatpush2.bf16.msra.mxu0 0
    %1602 = vmatprep.subr.bf16.mxu0 0
    %1603 = vmatpush2.bf16.msra.mxu0 0
    %1604 = vmatprep.subr.bf16.mxu0 0
    %1605 = vmatpush2.bf16.msra.mxu0 0
    %1606 = vmatprep.subr.bf16.mxu0 0
    %1607 = vmatpush2.bf16.msra.mxu0 0
    %1608 = vmatprep.subr.bf16.mxu0 0
    %1609 = vmatpush2.bf16.msra.mxu0 0
    %1610 = vmatprep.subr.bf16.mxu0 0
    %1611 = vmatpush2.bf16.msra.mxu0 0
    %1612 = vmatprep.subr.bf16.mxu0 0
    %1613 = vmatpush2.bf16.msra.mxu0 0
    %1614 = vmatprep.mubr.bf16.mxu0 0
    %1615 = vmatmul.mubr.bf16.gmra.mxu0 %v1506
    %v1616 = vpop.f32.mrf.mxu0
    %v1617 = vadd.f32 0.0, %v1616
    %v1618 = vpop.f32.mrf.mxu0
    %v1619 = vadd.f32 0.0, %v1618
    %v1620 = vpop.f32.mrf.mxu0
    %v1621 = vadd.f32 0.0, %v1620
    %v1622 = vpop.f32.mrf.mxu0
    %v1623 = vadd.f32 0.0, %v1622
    %1624 = vmatprep.mubr.bf16.mxu0 0
    %1625 = vmatmul.mubr.bf16.gmra.mxu0 %v1509
    %v1626 = vpop.f32.mrf.mxu0
    %v1627 = vadd.f32 0.0, %v1626
    %v1628 = vpop.f32.mrf.mxu0
    %v1629 = vadd.f32 0.0, %v1628
    %v1630 = vpop.f32.mrf.mxu0
    %v1631 = vadd.f32 0.0, %v1630
    %v1632 = vpop.f32.mrf.mxu0
    %v1633 = vadd.f32 0.0, %v1632
    %1634 = vdwg.mxu0
    %1635 = vmatprep.subr.bf16.mxu0 0
    %1636 = vmatpush1.bf16.msra.mxu0 0
    %1637 = vmatprep.subr.bf16.mxu0 0
    %1638 = vmatpush1.bf16.msra.mxu0 0
    %1639 = vmatprep.subr.bf16.mxu0 0
    %1640 = vmatpush1.bf16.msra.mxu0 0
    %1641 = vmatprep.subr.bf16.mxu0 0
    %1642 = vmatpush1.bf16.msra.mxu0 0
    %1643 = vmatprep.subr.bf16.mxu0 0
    %1644 = vmatpush1.bf16.msra.mxu0 0
    %1645 = vmatprep.subr.bf16.mxu0 0
    %1646 = vmatpush1.bf16.msra.mxu0 0
    %1647 = vmatprep.subr.bf16.mxu0 0
    %1648 = vmatpush1.bf16.msra.mxu0 0
    %1649 = vmatprep.subr.bf16.mxu0 %v1527
    %1650 = vmatpush1.bf16.msra.mxu0 %v1524
    %1651 = vmatprep.subr.bf16.mxu0 0
    %1652 = vmatpush2.bf16.msra.mxu0 0
    %1653 = vmatprep.subr.bf16.mxu0 0
    %1654 = vmatpush2.bf16.msra.mxu0 0
    %1655 = vmatprep.subr.bf16.mxu0 0
    %1656 = vmatpush2.bf16.msra.mxu0 0
    %1657 = vmatprep.subr.bf16.mxu0 0
    %1658 = vmatpush2.bf16.msra.mxu0 0
    %1659 = vmatprep.subr.bf16.mxu0 0
    %1660 = vmatpush2.bf16.msra.mxu0 0
    %1661 = vmatprep.subr.bf16.mxu0 0
    %1662 = vmatpush2.bf16.msra.mxu0 0
    %1663 = vmatprep.subr.bf16.mxu0 0
    %1664 = vmatpush2.bf16.msra.mxu0 0
    %1665 = vmatprep.subr.bf16.mxu0 0
    %1666 = vmatpush2.bf16.msra.mxu0 0
    %1667 = vmatprep.mubr.bf16.mxu0 0
    %1668 = vmatmul.mubr.bf16.gmra.mxu0 %v1506
    %v1669 = vpop.f32.mrf.mxu0
    %v1670 = vadd.f32 0.0, %v1669
    %v1671 = vpop.f32.mrf.mxu0
    %v1672 = vadd.f32 0.0, %v1671
    %v1673 = vpop.f32.mrf.mxu0
    %v1674 = vadd.f32 0.0, %v1673
    %v1675 = vpop.f32.mrf.mxu0
    %v1676 = vadd.f32 0.0, %v1675
    %1677 = vmatprep.mubr.bf16.mxu0 0
    %1678 = vmatmul.mubr.bf16.gmra.mxu0 %v1509
    %v1679 = vpop.f32.mrf.mxu0
    %v1680 = vadd.f32 0.0, %v1679
    %v1681 = vpop.f32.mrf.mxu0
    %v1682 = vadd.f32 0.0, %v1681
    %v1683 = vpop.f32.mrf.mxu0
    %v1684 = vadd.f32 0.0, %v1683
    %v1685 = vpop.f32.mrf.mxu0
    %v1686 = vadd.f32 0.0, %v1685
    %1687 = vdwg.mxu0
    %v1688 = vadd.f32 %v1448, %v1564
    %v1689 = vadd.f32 %v1449, %v1566
    %v1690 = vadd.f32 %v1450, %v1617
    %v1691 = vadd.f32 %v1451, %v1619
    %v1692 = vadd.f32 %v1452, %v1670
    %v1693 = vadd.f32 %v1453, %v1672
    %v1694 = vadd.f32 %v1454, %v1568
    %v1695 = vadd.f32 %v1455, %v1570
    %v1696 = vadd.f32 %v1456, %v1621
    %v1697 = vadd.f32 %v1457, %v1623
    %v1698 = vadd.f32 %v1458, %v1674
    %v1699 = vadd.f32 %v1459, %v1676
    %v1700 = vadd.f32 %v1460, %v1574
    %v1701 = vadd.f32 %v1461, %v1576
    %v1702 = vadd.f32 %v1462, %v1627
    %v1703 = vadd.f32 %v1463, %v1629
    %v1704 = vadd.f32 %v1464, %v1680
    %v1705 = vadd.f32 %v1465, %v1682
    %v1706 = vadd.f32 %v1466, %v1578
    %v1707 = vadd.f32 %v1467, %v1580
    %v1708 = vadd.f32 %v1468, %v1631
    %v1709 = vadd.f32 %v1469, %v1633
    %v1710 = vadd.f32 %v1470, %v1684
    %v1711 = vadd.f32 %v1471, %v1686
    %s1712 = scalar_lea.vmem %s1, 112
    %v1713 = vld [vmem:[%s1712] sm:$0xf]
    %v1714 = vld [vmem:[%s1712 + $0x4] sm:$0xf]
    %v1715 = vld [vmem:[%s1712 + $0x8] sm:$0xf]
    %v1716 = vld [vmem:[%s1712 + $0xc] sm:$0xf]
    %v1721 = vunpack.c.l.b16 %v1713
    %v1722 = vunpack.c.l.b16 %v1714
    %v1723 = vunpack.c.l.b16 %v1715
    %v1724 = vunpack.c.l.b16 %v1716
    %v1725 = vpack.c.b16 %v1722, %v1721
    %v1726 = vpack.c.b16 %v1724, %v1723
    %1727 = vrot.lane.b32.xlu0 %v110, 91
    %v1728 = vpop.permute.xlu0 %1727
    %1729 = vrot.lane.b32.xlu0 %v111, 91
    %v1730 = vpop.permute.xlu0 %1729
    %1731 = vrot.lane.b32.xlu0 %v112, 91
    %v1732 = vpop.permute.xlu0 %1731
    %1733 = vrot.lane.b32.xlu0 %v113, 91
    %v1734 = vpop.permute.xlu0 %1733
    %1735 = vrot.lane.b32.xlu0 %v114, 91
    %v1736 = vpop.permute.xlu0 %1735
    %1737 = vrot.lane.b32.xlu0 %v115, 91
    %v1738 = vpop.permute.xlu0 %1737
    %vm1739 = vcmask 744448
    %v1740 = vsel %vm1739, %v1728, %v1730
    %v1741 = vsel %vm1739, %v1730, %v1732
    %v1742 = vsel %vm1739, %v1732, %v1734
    %v1743 = vsel %vm1739, %v1734, %v1736
    %v1744 = vsel %vm1739, %v1736, %v1738
    %v1746 = vsel %vm134, %v1725, 0
    %v1749 = vsel %vm134, %v1726, 0
    %v1752 = vsel %vm141, %v1740, 0
    %v1755 = vsel %vm141, %v1741, 0
    %v1758 = vsel %vm141, %v1742, 0
    %v1761 = vsel %vm141, %v1743, 0
    %v1764 = vsel %vm141, %v1744, 0
    %v1767 = vsel %vm141, %v1738, 0
    %1769 = vmatprep.subr.bf16.mxu0 0
    %1770 = vmatpush1.bf16.msra.mxu0 0
    %1771 = vmatprep.subr.bf16.mxu0 0
    %1772 = vmatpush1.bf16.msra.mxu0 0
    %1773 = vmatprep.subr.bf16.mxu0 0
    %1774 = vmatpush1.bf16.msra.mxu0 0
    %1775 = vmatprep.subr.bf16.mxu0 0
    %1776 = vmatpush1.bf16.msra.mxu0 0
    %1777 = vmatprep.subr.bf16.mxu0 0
    %1778 = vmatpush1.bf16.msra.mxu0 0
    %1779 = vmatprep.subr.bf16.mxu0 0
    %1780 = vmatpush1.bf16.msra.mxu0 0
    %1781 = vmatprep.subr.bf16.mxu0 0
    %1782 = vmatpush1.bf16.msra.mxu0 0
    %1783 = vmatprep.subr.bf16.mxu0 %v1755
    %1784 = vmatpush1.bf16.msra.mxu0 %v1752
    %1785 = vmatprep.subr.bf16.mxu0 0
    %1786 = vmatpush2.bf16.msra.mxu0 0
    %1787 = vmatprep.subr.bf16.mxu0 0
    %1788 = vmatpush2.bf16.msra.mxu0 0
    %1789 = vmatprep.subr.bf16.mxu0 0
    %1790 = vmatpush2.bf16.msra.mxu0 0
    %1791 = vmatprep.subr.bf16.mxu0 0
    %1792 = vmatpush2.bf16.msra.mxu0 0
    %1793 = vmatprep.subr.bf16.mxu0 0
    %1794 = vmatpush2.bf16.msra.mxu0 0
    %1795 = vmatprep.subr.bf16.mxu0 0
    %1796 = vmatpush2.bf16.msra.mxu0 0
    %1797 = vmatprep.subr.bf16.mxu0 0
    %1798 = vmatpush2.bf16.msra.mxu0 0
    %1799 = vmatprep.subr.bf16.mxu0 0
    %1800 = vmatpush2.bf16.msra.mxu0 0
    %1801 = vmatprep.mubr.bf16.mxu0 0
    %1802 = vmatmul.mubr.bf16.gmra.mxu0 %v1746
    %v1803 = vpop.f32.mrf.mxu0
    %v1804 = vadd.f32 0.0, %v1803
    %v1805 = vpop.f32.mrf.mxu0
    %v1806 = vadd.f32 0.0, %v1805
    %v1807 = vpop.f32.mrf.mxu0
    %v1808 = vadd.f32 0.0, %v1807
    %v1809 = vpop.f32.mrf.mxu0
    %v1810 = vadd.f32 0.0, %v1809
    %1811 = vmatprep.mubr.bf16.mxu0 0
    %1812 = vmatmul.mubr.bf16.gmra.mxu0 %v1749
    %v1813 = vpop.f32.mrf.mxu0
    %v1814 = vadd.f32 0.0, %v1813
    %v1815 = vpop.f32.mrf.mxu0
    %v1816 = vadd.f32 0.0, %v1815
    %v1817 = vpop.f32.mrf.mxu0
    %v1818 = vadd.f32 0.0, %v1817
    %v1819 = vpop.f32.mrf.mxu0
    %v1820 = vadd.f32 0.0, %v1819
    %1821 = vdwg.mxu0
    %1822 = vmatprep.subr.bf16.mxu0 0
    %1823 = vmatpush1.bf16.msra.mxu0 0
    %1824 = vmatprep.subr.bf16.mxu0 0
    %1825 = vmatpush1.bf16.msra.mxu0 0
    %1826 = vmatprep.subr.bf16.mxu0 0
    %1827 = vmatpush1.bf16.msra.mxu0 0
    %1828 = vmatprep.subr.bf16.mxu0 0
    %1829 = vmatpush1.bf16.msra.mxu0 0
    %1830 = vmatprep.subr.bf16.mxu0 0
    %1831 = vmatpush1.bf16.msra.mxu0 0
    %1832 = vmatprep.subr.bf16.mxu0 0
    %1833 = vmatpush1.bf16.msra.mxu0 0
    %1834 = vmatprep.subr.bf16.mxu0 0
    %1835 = vmatpush1.bf16.msra.mxu0 0
    %1836 = vmatprep.subr.bf16.mxu0 %v1761
    %1837 = vmatpush1.bf16.msra.mxu0 %v1758
    %1838 = vmatprep.subr.bf16.mxu0 0
    %1839 = vmatpush2.bf16.msra.mxu0 0
    %1840 = vmatprep.subr.bf16.mxu0 0
    %1841 = vmatpush2.bf16.msra.mxu0 0
    %1842 = vmatprep.subr.bf16.mxu0 0
    %1843 = vmatpush2.bf16.msra.mxu0 0
    %1844 = vmatprep.subr.bf16.mxu0 0
    %1845 = vmatpush2.bf16.msra.mxu0 0
    %1846 = vmatprep.subr.bf16.mxu0 0
    %1847 = vmatpush2.bf16.msra.mxu0 0
    %1848 = vmatprep.subr.bf16.mxu0 0
    %1849 = vmatpush2.bf16.msra.mxu0 0
    %1850 = vmatprep.subr.bf16.mxu0 0
    %1851 = vmatpush2.bf16.msra.mxu0 0
    %1852 = vmatprep.subr.bf16.mxu0 0
    %1853 = vmatpush2.bf16.msra.mxu0 0
    %1854 = vmatprep.mubr.bf16.mxu0 0
    %1855 = vmatmul.mubr.bf16.gmra.mxu0 %v1746
    %v1856 = vpop.f32.mrf.mxu0
    %v1857 = vadd.f32 0.0, %v1856
    %v1858 = vpop.f32.mrf.mxu0
    %v1859 = vadd.f32 0.0, %v1858
    %v1860 = vpop.f32.mrf.mxu0
    %v1861 = vadd.f32 0.0, %v1860
    %v1862 = vpop.f32.mrf.mxu0
    %v1863 = vadd.f32 0.0, %v1862
    %1864 = vmatprep.mubr.bf16.mxu0 0
    %1865 = vmatmul.mubr.bf16.gmra.mxu0 %v1749
    %v1866 = vpop.f32.mrf.mxu0
    %v1867 = vadd.f32 0.0, %v1866
    %v1868 = vpop.f32.mrf.mxu0
    %v1869 = vadd.f32 0.0, %v1868
    %v1870 = vpop.f32.mrf.mxu0
    %v1871 = vadd.f32 0.0, %v1870
    %v1872 = vpop.f32.mrf.mxu0
    %v1873 = vadd.f32 0.0, %v1872
    %1874 = vdwg.mxu0
    %1875 = vmatprep.subr.bf16.mxu0 0
    %1876 = vmatpush1.bf16.msra.mxu0 0
    %1877 = vmatprep.subr.bf16.mxu0 0
    %1878 = vmatpush1.bf16.msra.mxu0 0
    %1879 = vmatprep.subr.bf16.mxu0 0
    %1880 = vmatpush1.bf16.msra.mxu0 0
    %1881 = vmatprep.subr.bf16.mxu0 0
    %1882 = vmatpush1.bf16.msra.mxu0 0
    %1883 = vmatprep.subr.bf16.mxu0 0
    %1884 = vmatpush1.bf16.msra.mxu0 0
    %1885 = vmatprep.subr.bf16.mxu0 0
    %1886 = vmatpush1.bf16.msra.mxu0 0
    %1887 = vmatprep.subr.bf16.mxu0 0
    %1888 = vmatpush1.bf16.msra.mxu0 0
    %1889 = vmatprep.subr.bf16.mxu0 %v1767
    %1890 = vmatpush1.bf16.msra.mxu0 %v1764
    %1891 = vmatprep.subr.bf16.mxu0 0
    %1892 = vmatpush2.bf16.msra.mxu0 0
    %1893 = vmatprep.subr.bf16.mxu0 0
    %1894 = vmatpush2.bf16.msra.mxu0 0
    %1895 = vmatprep.subr.bf16.mxu0 0
    %1896 = vmatpush2.bf16.msra.mxu0 0
    %1897 = vmatprep.subr.bf16.mxu0 0
    %1898 = vmatpush2.bf16.msra.mxu0 0
    %1899 = vmatprep.subr.bf16.mxu0 0
    %1900 = vmatpush2.bf16.msra.mxu0 0
    %1901 = vmatprep.subr.bf16.mxu0 0
    %1902 = vmatpush2.bf16.msra.mxu0 0
    %1903 = vmatprep.subr.bf16.mxu0 0
    %1904 = vmatpush2.bf16.msra.mxu0 0
    %1905 = vmatprep.subr.bf16.mxu0 0
    %1906 = vmatpush2.bf16.msra.mxu0 0
    %1907 = vmatprep.mubr.bf16.mxu0 0
    %1908 = vmatmul.mubr.bf16.gmra.mxu0 %v1746
    %v1909 = vpop.f32.mrf.mxu0
    %v1910 = vadd.f32 0.0, %v1909
    %v1911 = vpop.f32.mrf.mxu0
    %v1912 = vadd.f32 0.0, %v1911
    %v1913 = vpop.f32.mrf.mxu0
    %v1914 = vadd.f32 0.0, %v1913
    %v1915 = vpop.f32.mrf.mxu0
    %v1916 = vadd.f32 0.0, %v1915
    %1917 = vmatprep.mubr.bf16.mxu0 0
    %1918 = vmatmul.mubr.bf16.gmra.mxu0 %v1749
    %v1919 = vpop.f32.mrf.mxu0
    %v1920 = vadd.f32 0.0, %v1919
    %v1921 = vpop.f32.mrf.mxu0
    %v1922 = vadd.f32 0.0, %v1921
    %v1923 = vpop.f32.mrf.mxu0
    %v1924 = vadd.f32 0.0, %v1923
    %v1925 = vpop.f32.mrf.mxu0
    %v1926 = vadd.f32 0.0, %v1925
    %1927 = vdwg.mxu0
    %v1928 = vadd.f32 %v1688, %v1804
    %v1929 = vadd.f32 %v1689, %v1806
    %v1930 = vadd.f32 %v1690, %v1857
    %v1931 = vadd.f32 %v1691, %v1859
    %v1932 = vadd.f32 %v1692, %v1910
    %v1933 = vadd.f32 %v1693, %v1912
    %v1934 = vadd.f32 %v1694, %v1808
    %v1935 = vadd.f32 %v1695, %v1810
    %v1936 = vadd.f32 %v1696, %v1861
    %v1937 = vadd.f32 %v1697, %v1863
    %v1938 = vadd.f32 %v1698, %v1914
    %v1939 = vadd.f32 %v1699, %v1916
    %v1940 = vadd.f32 %v1700, %v1814
    %v1941 = vadd.f32 %v1701, %v1816
    %v1942 = vadd.f32 %v1702, %v1867
    %v1943 = vadd.f32 %v1703, %v1869
    %v1944 = vadd.f32 %v1704, %v1920
    %v1945 = vadd.f32 %v1705, %v1922
    %v1946 = vadd.f32 %v1706, %v1818
    %v1947 = vadd.f32 %v1707, %v1820
    %v1948 = vadd.f32 %v1708, %v1871
    %v1949 = vadd.f32 %v1709, %v1873
    %v1950 = vadd.f32 %v1710, %v1924
    %v1951 = vadd.f32 %v1711, %v1926
    %s1952 = scalar_lea.vmem %s1, 128
    %v1953 = vld [vmem:[%s1952] sm:$0xf]
    %v1954 = vld [vmem:[%s1952 + $0x4] sm:$0xf]
    %v1955 = vld [vmem:[%s1952 + $0x8] sm:$0xf]
    %v1956 = vld [vmem:[%s1952 + $0xc] sm:$0xf]
    %v1961 = vunpack.c.l.b16 %v1953
    %v1962 = vunpack.c.l.b16 %v1954
    %v1963 = vunpack.c.l.b16 %v1955
    %v1964 = vunpack.c.l.b16 %v1956
    %v1965 = vpack.c.b16 %v1962, %v1961
    %v1966 = vpack.c.b16 %v1964, %v1963
    %1967 = vrot.lane.b32.xlu0 %v110, 90
    %v1968 = vpop.permute.xlu0 %1967
    %1969 = vrot.lane.b32.xlu0 %v111, 90
    %v1970 = vpop.permute.xlu0 %1969
    %1971 = vrot.lane.b32.xlu0 %v112, 90
    %v1972 = vpop.permute.xlu0 %1971
    %1973 = vrot.lane.b32.xlu0 %v113, 90
    %v1974 = vpop.permute.xlu0 %1973
    %1975 = vrot.lane.b32.xlu0 %v114, 90
    %v1976 = vpop.permute.xlu0 %1975
    %1977 = vrot.lane.b32.xlu0 %v115, 90
    %v1978 = vpop.permute.xlu0 %1977
    %vm1979 = vcmask 736256
    %v1980 = vsel %vm1979, %v1968, %v1970
    %v1981 = vsel %vm1979, %v1970, %v1972
    %v1982 = vsel %vm1979, %v1972, %v1974
    %v1983 = vsel %vm1979, %v1974, %v1976
    %v1984 = vsel %vm1979, %v1976, %v1978
    %v1986 = vsel %vm134, %v1965, 0
    %v1989 = vsel %vm134, %v1966, 0
    %v1992 = vsel %vm141, %v1980, 0
    %v1995 = vsel %vm141, %v1981, 0
    %v1998 = vsel %vm141, %v1982, 0
    %v2001 = vsel %vm141, %v1983, 0
    %v2004 = vsel %vm141, %v1984, 0
    %v2007 = vsel %vm141, %v1978, 0
    %2009 = vmatprep.subr.bf16.mxu0 0
    %2010 = vmatpush1.bf16.msra.mxu0 0
    %2011 = vmatprep.subr.bf16.mxu0 0
    %2012 = vmatpush1.bf16.msra.mxu0 0
    %2013 = vmatprep.subr.bf16.mxu0 0
    %2014 = vmatpush1.bf16.msra.mxu0 0
    %2015 = vmatprep.subr.bf16.mxu0 0
    %2016 = vmatpush1.bf16.msra.mxu0 0
    %2017 = vmatprep.subr.bf16.mxu0 0
    %2018 = vmatpush1.bf16.msra.mxu0 0
    %2019 = vmatprep.subr.bf16.mxu0 0
    %2020 = vmatpush1.bf16.msra.mxu0 0
    %2021 = vmatprep.subr.bf16.mxu0 0
    %2022 = vmatpush1.bf16.msra.mxu0 0
    %2023 = vmatprep.subr.bf16.mxu0 %v1995
    %2024 = vmatpush1.bf16.msra.mxu0 %v1992
    %2025 = vmatprep.subr.bf16.mxu0 0
    %2026 = vmatpush2.bf16.msra.mxu0 0
    %2027 = vmatprep.subr.bf16.mxu0 0
    %2028 = vmatpush2.bf16.msra.mxu0 0
    %2029 = vmatprep.subr.bf16.mxu0 0
    %2030 = vmatpush2.bf16.msra.mxu0 0
    %2031 = vmatprep.subr.bf16.mxu0 0
    %2032 = vmatpush2.bf16.msra.mxu0 0
    %2033 = vmatprep.subr.bf16.mxu0 0
    %2034 = vmatpush2.bf16.msra.mxu0 0
    %2035 = vmatprep.subr.bf16.mxu0 0
    %2036 = vmatpush2.bf16.msra.mxu0 0
    %2037 = vmatprep.subr.bf16.mxu0 0
    %2038 = vmatpush2.bf16.msra.mxu0 0
    %2039 = vmatprep.subr.bf16.mxu0 0
    %2040 = vmatpush2.bf16.msra.mxu0 0
    %2041 = vmatprep.mubr.bf16.mxu0 0
    %2042 = vmatmul.mubr.bf16.gmra.mxu0 %v1986
    %v2043 = vpop.f32.mrf.mxu0
    %v2044 = vadd.f32 0.0, %v2043
    %v2045 = vpop.f32.mrf.mxu0
    %v2046 = vadd.f32 0.0, %v2045
    %v2047 = vpop.f32.mrf.mxu0
    %v2048 = vadd.f32 0.0, %v2047
    %v2049 = vpop.f32.mrf.mxu0
    %v2050 = vadd.f32 0.0, %v2049
    %2051 = vmatprep.mubr.bf16.mxu0 0
    %2052 = vmatmul.mubr.bf16.gmra.mxu0 %v1989
    %v2053 = vpop.f32.mrf.mxu0
    %v2054 = vadd.f32 0.0, %v2053
    %v2055 = vpop.f32.mrf.mxu0
    %v2056 = vadd.f32 0.0, %v2055
    %v2057 = vpop.f32.mrf.mxu0
    %v2058 = vadd.f32 0.0, %v2057
    %v2059 = vpop.f32.mrf.mxu0
    %v2060 = vadd.f32 0.0, %v2059
    %2061 = vdwg.mxu0
    %2062 = vmatprep.subr.bf16.mxu0 0
    %2063 = vmatpush1.bf16.msra.mxu0 0
    %2064 = vmatprep.subr.bf16.mxu0 0
    %2065 = vmatpush1.bf16.msra.mxu0 0
    %2066 = vmatprep.subr.bf16.mxu0 0
    %2067 = vmatpush1.bf16.msra.mxu0 0
    %2068 = vmatprep.subr.bf16.mxu0 0
    %2069 = vmatpush1.bf16.msra.mxu0 0
    %2070 = vmatprep.subr.bf16.mxu0 0
    %2071 = vmatpush1.bf16.msra.mxu0 0
    %2072 = vmatprep.subr.bf16.mxu0 0
    %2073 = vmatpush1.bf16.msra.mxu0 0
    %2074 = vmatprep.subr.bf16.mxu0 0
    %2075 = vmatpush1.bf16.msra.mxu0 0
    %2076 = vmatprep.subr.bf16.mxu0 %v2001
    %2077 = vmatpush1.bf16.msra.mxu0 %v1998
    %2078 = vmatprep.subr.bf16.mxu0 0
    %2079 = vmatpush2.bf16.msra.mxu0 0
    %2080 = vmatprep.subr.bf16.mxu0 0
    %2081 = vmatpush2.bf16.msra.mxu0 0
    %2082 = vmatprep.subr.bf16.mxu0 0
    %2083 = vmatpush2.bf16.msra.mxu0 0
    %2084 = vmatprep.subr.bf16.mxu0 0
    %2085 = vmatpush2.bf16.msra.mxu0 0
    %2086 = vmatprep.subr.bf16.mxu0 0
    %2087 = vmatpush2.bf16.msra.mxu0 0
    %2088 = vmatprep.subr.bf16.mxu0 0
    %2089 = vmatpush2.bf16.msra.mxu0 0
    %2090 = vmatprep.subr.bf16.mxu0 0
    %2091 = vmatpush2.bf16.msra.mxu0 0
    %2092 = vmatprep.subr.bf16.mxu0 0
    %2093 = vmatpush2.bf16.msra.mxu0 0
    %2094 = vmatprep.mubr.bf16.mxu0 0
    %2095 = vmatmul.mubr.bf16.gmra.mxu0 %v1986
    %v2096 = vpop.f32.mrf.mxu0
    %v2097 = vadd.f32 0.0, %v2096
    %v2098 = vpop.f32.mrf.mxu0
    %v2099 = vadd.f32 0.0, %v2098
    %v2100 = vpop.f32.mrf.mxu0
    %v2101 = vadd.f32 0.0, %v2100
    %v2102 = vpop.f32.mrf.mxu0
    %v2103 = vadd.f32 0.0, %v2102
    %2104 = vmatprep.mubr.bf16.mxu0 0
    %2105 = vmatmul.mubr.bf16.gmra.mxu0 %v1989
    %v2106 = vpop.f32.mrf.mxu0
    %v2107 = vadd.f32 0.0, %v2106
    %v2108 = vpop.f32.mrf.mxu0
    %v2109 = vadd.f32 0.0, %v2108
    %v2110 = vpop.f32.mrf.mxu0
    %v2111 = vadd.f32 0.0, %v2110
    %v2112 = vpop.f32.mrf.mxu0
    %v2113 = vadd.f32 0.0, %v2112
    %2114 = vdwg.mxu0
    %2115 = vmatprep.subr.bf16.mxu0 0
    %2116 = vmatpush1.bf16.msra.mxu0 0
    %2117 = vmatprep.subr.bf16.mxu0 0
    %2118 = vmatpush1.bf16.msra.mxu0 0
    %2119 = vmatprep.subr.bf16.mxu0 0
    %2120 = vmatpush1.bf16.msra.mxu0 0
    %2121 = vmatprep.subr.bf16.mxu0 0
    %2122 = vmatpush1.bf16.msra.mxu0 0
    %2123 = vmatprep.subr.bf16.mxu0 0
    %2124 = vmatpush1.bf16.msra.mxu0 0
    %2125 = vmatprep.subr.bf16.mxu0 0
    %2126 = vmatpush1.bf16.msra.mxu0 0
    %2127 = vmatprep.subr.bf16.mxu0 0
    %2128 = vmatpush1.bf16.msra.mxu0 0
    %2129 = vmatprep.subr.bf16.mxu0 %v2007
    %2130 = vmatpush1.bf16.msra.mxu0 %v2004
    %2131 = vmatprep.subr.bf16.mxu0 0
    %2132 = vmatpush2.bf16.msra.mxu0 0
    %2133 = vmatprep.subr.bf16.mxu0 0
    %2134 = vmatpush2.bf16.msra.mxu0 0
    %2135 = vmatprep.subr.bf16.mxu0 0
    %2136 = vmatpush2.bf16.msra.mxu0 0
    %2137 = vmatprep.subr.bf16.mxu0 0
    %2138 = vmatpush2.bf16.msra.mxu0 0
    %2139 = vmatprep.subr.bf16.mxu0 0
    %2140 = vmatpush2.bf16.msra.mxu0 0
    %2141 = vmatprep.subr.bf16.mxu0 0
    %2142 = vmatpush2.bf16.msra.mxu0 0
    %2143 = vmatprep.subr.bf16.mxu0 0
    %2144 = vmatpush2.bf16.msra.mxu0 0
    %2145 = vmatprep.subr.bf16.mxu0 0
    %2146 = vmatpush2.bf16.msra.mxu0 0
    %2147 = vmatprep.mubr.bf16.mxu0 0
    %2148 = vmatmul.mubr.bf16.gmra.mxu0 %v1986
    %v2149 = vpop.f32.mrf.mxu0
    %v2150 = vadd.f32 0.0, %v2149
    %v2151 = vpop.f32.mrf.mxu0
    %v2152 = vadd.f32 0.0, %v2151
    %v2153 = vpop.f32.mrf.mxu0
    %v2154 = vadd.f32 0.0, %v2153
    %v2155 = vpop.f32.mrf.mxu0
    %v2156 = vadd.f32 0.0, %v2155
    %2157 = vmatprep.mubr.bf16.mxu0 0
    %2158 = vmatmul.mubr.bf16.gmra.mxu0 %v1989
    %v2159 = vpop.f32.mrf.mxu0
    %v2160 = vadd.f32 0.0, %v2159
    %v2161 = vpop.f32.mrf.mxu0
    %v2162 = vadd.f32 0.0, %v2161
    %v2163 = vpop.f32.mrf.mxu0
    %v2164 = vadd.f32 0.0, %v2163
    %v2165 = vpop.f32.mrf.mxu0
    %v2166 = vadd.f32 0.0, %v2165
    %2167 = vdwg.mxu0
    %v2168 = vadd.f32 %v1928, %v2044
    %v2169 = vadd.f32 %v1929, %v2046
    %v2170 = vadd.f32 %v1930, %v2097
    %v2171 = vadd.f32 %v1931, %v2099
    %v2172 = vadd.f32 %v1932, %v2150
    %v2173 = vadd.f32 %v1933, %v2152
    %v2174 = vadd.f32 %v1934, %v2048
    %v2175 = vadd.f32 %v1935, %v2050
    %v2176 = vadd.f32 %v1936, %v2101
    %v2177 = vadd.f32 %v1937, %v2103
    %v2178 = vadd.f32 %v1938, %v2154
    %v2179 = vadd.f32 %v1939, %v2156
    %v2180 = vadd.f32 %v1940, %v2054
    %v2181 = vadd.f32 %v1941, %v2056
    %v2182 = vadd.f32 %v1942, %v2107
    %v2183 = vadd.f32 %v1943, %v2109
    %v2184 = vadd.f32 %v1944, %v2160
    %v2185 = vadd.f32 %v1945, %v2162
    %v2186 = vadd.f32 %v1946, %v2058
    %v2187 = vadd.f32 %v1947, %v2060
    %v2188 = vadd.f32 %v1948, %v2111
    %v2189 = vadd.f32 %v1949, %v2113
    %v2190 = vadd.f32 %v1950, %v2164
    %v2191 = vadd.f32 %v1951, %v2166
    %v2192 = vld [vmem:[%s2] sm:$0xff]
    %v2193 = vld [vmem:[%s2 + $0x8] sm:$0xff]
    %v2194 = vld [vmem:[%s2 + $0x10] sm:$0xff]
    %v2195 = vld [vmem:[%s2 + $0x18] sm:$0xff]
    %2197 = vset.pattern.permute.xlu0 0
    %2198 = vperm.xlu0 %2197, %v2192
    %v2199 = vpop.permute.xlu0 %2198
    %2202 = vset.pattern.permute.xlu0 0
    %2203 = vperm.xlu0 %2202, %v2193
    %v2204 = vpop.permute.xlu0 %2203
    %2207 = vset.pattern.permute.xlu0 0
    %2208 = vperm.xlu0 %2207, %v2194
    %v2209 = vpop.permute.xlu0 %2208
    %2212 = vset.pattern.permute.xlu0 0
    %2213 = vperm.xlu0 %2212, %v2195
    %v2214 = vpop.permute.xlu0 %2213
    %v2216 = vadd.f32 %v2168, %v2199
    %v2217 = vadd.f32 %v2169, %v2199
    %v2218 = vadd.f32 %v2170, %v2199
    %v2219 = vadd.f32 %v2171, %v2199
    %v2220 = vadd.f32 %v2172, %v2199
    %v2221 = vadd.f32 %v2173, %v2199
    %v2222 = vadd.f32 %v2174, %v2204
    %v2223 = vadd.f32 %v2175, %v2204
    %v2224 = vadd.f32 %v2176, %v2204
    %v2225 = vadd.f32 %v2177, %v2204
    %v2226 = vadd.f32 %v2178, %v2204
    %v2227 = vadd.f32 %v2179, %v2204
    %v2228 = vadd.f32 %v2180, %v2209
    %v2229 = vadd.f32 %v2181, %v2209
    %v2230 = vadd.f32 %v2182, %v2209
    %v2231 = vadd.f32 %v2183, %v2209
    %v2232 = vadd.f32 %v2184, %v2209
    %v2233 = vadd.f32 %v2185, %v2209
    %v2234 = vadd.f32 %v2186, %v2214
    %v2235 = vadd.f32 %v2187, %v2214
    %v2236 = vadd.f32 %v2188, %v2214
    %v2237 = vadd.f32 %v2189, %v2214
    %v2238 = vadd.f32 %v2190, %v2214
    %v2239 = vadd.f32 %v2191, %v2214
    %vm2240 = vcmp.gt.f32.partialorder %v2216, 0.0
    %vm2241 = vcmp.gt.f32.partialorder %v2217, 0.0
    %vm2242 = vcmp.gt.f32.partialorder %v2218, 0.0
    %vm2243 = vcmp.gt.f32.partialorder %v2219, 0.0
    %vm2244 = vcmp.gt.f32.partialorder %v2220, 0.0
    %vm2245 = vcmp.gt.f32.partialorder %v2221, 0.0
    %vm2246 = vcmp.gt.f32.partialorder %v2222, 0.0
    %vm2247 = vcmp.gt.f32.partialorder %v2223, 0.0
    %vm2248 = vcmp.gt.f32.partialorder %v2224, 0.0
    %vm2249 = vcmp.gt.f32.partialorder %v2225, 0.0
    %vm2250 = vcmp.gt.f32.partialorder %v2226, 0.0
    %vm2251 = vcmp.gt.f32.partialorder %v2227, 0.0
    %vm2252 = vcmp.gt.f32.partialorder %v2228, 0.0
    %vm2253 = vcmp.gt.f32.partialorder %v2229, 0.0
    %vm2254 = vcmp.gt.f32.partialorder %v2230, 0.0
    %vm2255 = vcmp.gt.f32.partialorder %v2231, 0.0
    %vm2256 = vcmp.gt.f32.partialorder %v2232, 0.0
    %vm2257 = vcmp.gt.f32.partialorder %v2233, 0.0
    %vm2258 = vcmp.gt.f32.partialorder %v2234, 0.0
    %vm2259 = vcmp.gt.f32.partialorder %v2235, 0.0
    %vm2260 = vcmp.gt.f32.partialorder %v2236, 0.0
    %vm2261 = vcmp.gt.f32.partialorder %v2237, 0.0
    %vm2262 = vcmp.gt.f32.partialorder %v2238, 0.0
    %vm2263 = vcmp.gt.f32.partialorder %v2239, 0.0
    %v2264 = vmul.f32 %v2216, 0.2
    %v2265 = vmul.f32 %v2217, 0.2
    %v2266 = vmul.f32 %v2218, 0.2
    %v2267 = vmul.f32 %v2219, 0.2
    %v2268 = vmul.f32 %v2220, 0.2
    %v2269 = vmul.f32 %v2221, 0.2
    %v2270 = vmul.f32 %v2222, 0.2
    %v2271 = vmul.f32 %v2223, 0.2
    %v2272 = vmul.f32 %v2224, 0.2
    %v2273 = vmul.f32 %v2225, 0.2
    %v2274 = vmul.f32 %v2226, 0.2
    %v2275 = vmul.f32 %v2227, 0.2
    %v2276 = vmul.f32 %v2228, 0.2
    %v2277 = vmul.f32 %v2229, 0.2
    %v2278 = vmul.f32 %v2230, 0.2
    %v2279 = vmul.f32 %v2231, 0.2
    %v2280 = vmul.f32 %v2232, 0.2
    %v2281 = vmul.f32 %v2233, 0.2
    %v2282 = vmul.f32 %v2234, 0.2
    %v2283 = vmul.f32 %v2235, 0.2
    %v2284 = vmul.f32 %v2236, 0.2
    %v2285 = vmul.f32 %v2237, 0.2
    %v2286 = vmul.f32 %v2238, 0.2
    %v2287 = vmul.f32 %v2239, 0.2
    %v2288 = vsel %vm2240, %v2216, %v2264
    %v2289 = vsel %vm2241, %v2217, %v2265
    %v2290 = vsel %vm2242, %v2218, %v2266
    %v2291 = vsel %vm2243, %v2219, %v2267
    %v2292 = vsel %vm2244, %v2220, %v2268
    %v2293 = vsel %vm2245, %v2221, %v2269
    %v2294 = vsel %vm2246, %v2222, %v2270
    %v2295 = vsel %vm2247, %v2223, %v2271
    %v2296 = vsel %vm2248, %v2224, %v2272
    %v2297 = vsel %vm2249, %v2225, %v2273
    %v2298 = vsel %vm2250, %v2226, %v2274
    %v2299 = vsel %vm2251, %v2227, %v2275
    %v2300 = vsel %vm2252, %v2228, %v2276
    %v2301 = vsel %vm2253, %v2229, %v2277
    %v2302 = vsel %vm2254, %v2230, %v2278
    %v2303 = vsel %vm2255, %v2231, %v2279
    %v2304 = vsel %vm2256, %v2232, %v2280
    %v2305 = vsel %vm2257, %v2233, %v2281
    %v2306 = vsel %vm2258, %v2234, %v2282
    %v2307 = vsel %vm2259, %v2235, %v2283
    %v2308 = vsel %vm2260, %v2236, %v2284
    %v2309 = vsel %vm2261, %v2237, %v2285
    %v2310 = vsel %vm2262, %v2238, %v2286
    %v2311 = vsel %vm2263, %v2239, %v2287
    %v2313 = vlaneseq
    %v2314 = vshrl.u32 %v2313, 7
    %v2315 = vsub.s32 0, %v2314
    %v2316 = vrot.slane %v60, %v2315
    %v2317 = vlaneseq
    %v2318 = vshrl.u32 %v2317, 7
    %v2319 = vsub.s32 1, %v2318
    %v2320 = vrot.slane %v60, %v2319
    %v2321 = vlaneseq
    %v2322 = vshrl.u32 %v2321, 7
    %v2323 = vsub.s32 2, %v2322
    %v2324 = vrot.slane %v60, %v2323
    %v2325 = vlaneseq
    %v2326 = vshrl.u32 %v2325, 7
    %v2327 = vsub.s32 3, %v2326
    %v2328 = vrot.slane %v60, %v2327
    %v2329 = vlaneseq
    %v2330 = vshrl.u32 %v2329, 7
    %v2331 = vsub.s32 4, %v2330
    %v2332 = vrot.slane %v60, %v2331
    %v2333 = vlaneseq
    %v2334 = vshrl.u32 %v2333, 7
    %v2335 = vsub.s32 5, %v2334
    %v2336 = vrot.slane %v60, %v2335
    %v2343 = vmul.f32 %v2288, %v2316
    %v2344 = vmul.f32 %v2289, %v2320
    %v2345 = vmul.f32 %v2290, %v2324
    %v2346 = vmul.f32 %v2291, %v2328
    %v2347 = vmul.f32 %v2292, %v2332
    %v2348 = vmul.f32 %v2293, %v2336
    %v2349 = vmul.f32 %v2294, %v2316
    %v2350 = vmul.f32 %v2295, %v2320
    %v2351 = vmul.f32 %v2296, %v2324
    %v2352 = vmul.f32 %v2297, %v2328
    %v2353 = vmul.f32 %v2298, %v2332
    %v2354 = vmul.f32 %v2299, %v2336
    %v2355 = vmul.f32 %v2300, %v2316
    %v2356 = vmul.f32 %v2301, %v2320
    %v2357 = vmul.f32 %v2302, %v2324
    %v2358 = vmul.f32 %v2303, %v2328
    %v2359 = vmul.f32 %v2304, %v2332
    %v2360 = vmul.f32 %v2305, %v2336
    %v2361 = vmul.f32 %v2306, %v2316
    %v2362 = vmul.f32 %v2307, %v2320
    %v2363 = vmul.f32 %v2308, %v2324
    %v2364 = vmul.f32 %v2309, %v2328
    %v2365 = vmul.f32 %v2310, %v2332
    %v2366 = vmul.f32 %v2311, %v2336
    %v2367 = vadd.f32 %v2343, %v2344
    %v2368 = vadd.f32 %v2367, %v2345
    %v2369 = vadd.f32 %v2368, %v2346
    %v2370 = vadd.f32 %v2369, %v2347
    %v2371 = vsel %vm134, %v2348, 0.0
    %v2372 = vadd.f32 %v2370, %v2371
    %2373 = vadd.xlane.f32.xlu0 %v2372
    %v2374 = vpop.xlane.xlu0 %2373
    %v2375 = vadd.f32 %v2349, %v2350
    %v2376 = vadd.f32 %v2375, %v2351
    %v2377 = vadd.f32 %v2376, %v2352
    %v2378 = vadd.f32 %v2377, %v2353
    %v2379 = vsel %vm134, %v2354, 0.0
    %v2380 = vadd.f32 %v2378, %v2379
    %2381 = vadd.xlane.f32.xlu0 %v2380
    %v2382 = vpop.xlane.xlu0 %2381
    %v2383 = vadd.f32 %v2355, %v2356
    %v2384 = vadd.f32 %v2383, %v2357
    %v2385 = vadd.f32 %v2384, %v2358
    %v2386 = vadd.f32 %v2385, %v2359
    %v2387 = vsel %vm134, %v2360, 0.0
    %v2388 = vadd.f32 %v2386, %v2387
    %2389 = vadd.xlane.f32.xlu0 %v2388
    %v2390 = vpop.xlane.xlu0 %2389
    %v2391 = vadd.f32 %v2361, %v2362
    %v2392 = vadd.f32 %v2391, %v2363
    %v2393 = vadd.f32 %v2392, %v2364
    %v2394 = vadd.f32 %v2393, %v2365
    %v2395 = vsel %vm134, %v2366, 0.0
    %v2396 = vadd.f32 %v2394, %v2395
    %2397 = vadd.xlane.f32.xlu0 %v2396
    %v2398 = vpop.xlane.xlu0 %2397
    %v2399 = vmul.f32 %v2343, %v2343
    %v2400 = vmul.f32 %v2344, %v2344
    %v2401 = vmul.f32 %v2345, %v2345
    %v2402 = vmul.f32 %v2346, %v2346
    %v2403 = vmul.f32 %v2347, %v2347
    %v2404 = vmul.f32 %v2348, %v2348
    %v2405 = vmul.f32 %v2349, %v2349
    %v2406 = vmul.f32 %v2350, %v2350
    %v2407 = vmul.f32 %v2351, %v2351
    %v2408 = vmul.f32 %v2352, %v2352
    %v2409 = vmul.f32 %v2353, %v2353
    %v2410 = vmul.f32 %v2354, %v2354
    %v2411 = vmul.f32 %v2355, %v2355
    %v2412 = vmul.f32 %v2356, %v2356
    %v2413 = vmul.f32 %v2357, %v2357
    %v2414 = vmul.f32 %v2358, %v2358
    %v2415 = vmul.f32 %v2359, %v2359
    %v2416 = vmul.f32 %v2360, %v2360
    %v2417 = vmul.f32 %v2361, %v2361
    %v2418 = vmul.f32 %v2362, %v2362
    %v2419 = vmul.f32 %v2363, %v2363
    %v2420 = vmul.f32 %v2364, %v2364
    %v2421 = vmul.f32 %v2365, %v2365
    %v2422 = vmul.f32 %v2366, %v2366
    %v2423 = vadd.f32 %v2399, %v2400
    %v2424 = vadd.f32 %v2423, %v2401
    %v2425 = vadd.f32 %v2424, %v2402
    %v2426 = vadd.f32 %v2425, %v2403
    %v2427 = vsel %vm134, %v2404, 0.0
    %v2428 = vadd.f32 %v2426, %v2427
    %2429 = vadd.xlane.f32.xlu0 %v2428
    %v2430 = vpop.xlane.xlu0 %2429
    %v2431 = vadd.f32 %v2405, %v2406
    %v2432 = vadd.f32 %v2431, %v2407
    %v2433 = vadd.f32 %v2432, %v2408
    %v2434 = vadd.f32 %v2433, %v2409
    %v2435 = vsel %vm134, %v2410, 0.0
    %v2436 = vadd.f32 %v2434, %v2435
    %2437 = vadd.xlane.f32.xlu0 %v2436
    %v2438 = vpop.xlane.xlu0 %2437
    %v2439 = vadd.f32 %v2411, %v2412
    %v2440 = vadd.f32 %v2439, %v2413
    %v2441 = vadd.f32 %v2440, %v2414
    %v2442 = vadd.f32 %v2441, %v2415
    %v2443 = vsel %vm134, %v2416, 0.0
    %v2444 = vadd.f32 %v2442, %v2443
    %2445 = vadd.xlane.f32.xlu0 %v2444
    %v2446 = vpop.xlane.xlu0 %2445
    %v2447 = vadd.f32 %v2417, %v2418
    %v2448 = vadd.f32 %v2447, %v2419
    %v2449 = vadd.f32 %v2448, %v2420
    %v2450 = vadd.f32 %v2449, %v2421
    %v2451 = vsel %vm134, %v2422, 0.0
    %v2452 = vadd.f32 %v2450, %v2451
    %2453 = vadd.xlane.f32.xlu0 %v2452
    %v2454 = vpop.xlane.xlu0 %2453
    %v2455 = vmul.f32 %v2374, 0.001953125
    %v2456 = vmul.f32 %v2382, 0.001953125
    %v2457 = vmul.f32 %v2390, 0.001953125
    %v2458 = vmul.f32 %v2398, 0.001953125
    %v2459 = vmul.f32 %v2430, 0.001953125
    %v2460 = vmul.f32 %v2438, 0.001953125
    %v2461 = vmul.f32 %v2446, 0.001953125
    %v2462 = vmul.f32 %v2454, 0.001953125
    %v2463 = vmul.f32 %v2455, %v2455
    %v2464 = vmul.f32 %v2456, %v2456
    %v2465 = vmul.f32 %v2457, %v2457
    %v2466 = vmul.f32 %v2458, %v2458
    %v2467 = vsub.f32 %v2459, %v2463
    %v2468 = vsub.f32 %v2460, %v2464
    %v2469 = vsub.f32 %v2461, %v2465
    %v2470 = vsub.f32 %v2462, %v2466
    %v2471 = vld [vmem:[%s3] sm:$0xff]
    %v2472 = vld [vmem:[%s3 + $0x8] sm:$0xff]
    %v2473 = vld [vmem:[%s3 + $0x10] sm:$0xff]
    %v2474 = vld [vmem:[%s3 + $0x18] sm:$0xff]
    %v2475 = vadd.f32 %v2467, 1e-05
    %v2476 = vadd.f32 %v2468, 1e-05
    %v2477 = vadd.f32 %v2469, 1e-05
    %v2478 = vadd.f32 %v2470, 1e-05
    %v2479 = vrsqrt.pop %v2475
    %v2480 = vrsqrt.pop %v2476
    %v2481 = vrsqrt.pop %v2477
    %v2482 = vrsqrt.pop %v2478
    %v2483 = vmul.f32 %v2471, %v2479
    %v2484 = vmul.f32 %v2472, %v2480
    %v2485 = vmul.f32 %v2473, %v2481
    %v2486 = vmul.f32 %v2474, %v2482
    %v2487 = vld [vmem:[%s4] sm:$0xff]
    %v2488 = vld [vmem:[%s4 + $0x8] sm:$0xff]
    %v2489 = vld [vmem:[%s4 + $0x10] sm:$0xff]
    %v2490 = vld [vmem:[%s4 + $0x18] sm:$0xff]
    %v2491 = vmul.f32 %v2455, %v2483
    %v2492 = vmul.f32 %v2456, %v2484
    %v2493 = vmul.f32 %v2457, %v2485
    %v2494 = vmul.f32 %v2458, %v2486
    %v2495 = vsub.f32 %v2487, %v2491
    %v2496 = vsub.f32 %v2488, %v2492
    %v2497 = vsub.f32 %v2489, %v2493
    %v2498 = vsub.f32 %v2490, %v2494
    %2500 = vset.pattern.permute.xlu0 0
    %2501 = vperm.xlu0 %2500, %v2483
    %v2502 = vpop.permute.xlu0 %2501
    %2505 = vset.pattern.permute.xlu0 0
    %2506 = vperm.xlu0 %2505, %v2484
    %v2507 = vpop.permute.xlu0 %2506
    %2510 = vset.pattern.permute.xlu0 0
    %2511 = vperm.xlu0 %2510, %v2485
    %v2512 = vpop.permute.xlu0 %2511
    %2515 = vset.pattern.permute.xlu0 0
    %2516 = vperm.xlu0 %2515, %v2486
    %v2517 = vpop.permute.xlu0 %2516
    %v2519 = vmul.f32 %v2343, %v2502
    %v2520 = vmul.f32 %v2344, %v2502
    %v2521 = vmul.f32 %v2345, %v2502
    %v2522 = vmul.f32 %v2346, %v2502
    %v2523 = vmul.f32 %v2347, %v2502
    %v2524 = vmul.f32 %v2348, %v2502
    %v2525 = vmul.f32 %v2349, %v2507
    %v2526 = vmul.f32 %v2350, %v2507
    %v2527 = vmul.f32 %v2351, %v2507
    %v2528 = vmul.f32 %v2352, %v2507
    %v2529 = vmul.f32 %v2353, %v2507
    %v2530 = vmul.f32 %v2354, %v2507
    %v2531 = vmul.f32 %v2355, %v2512
    %v2532 = vmul.f32 %v2356, %v2512
    %v2533 = vmul.f32 %v2357, %v2512
    %v2534 = vmul.f32 %v2358, %v2512
    %v2535 = vmul.f32 %v2359, %v2512
    %v2536 = vmul.f32 %v2360, %v2512
    %v2537 = vmul.f32 %v2361, %v2517
    %v2538 = vmul.f32 %v2362, %v2517
    %v2539 = vmul.f32 %v2363, %v2517
    %v2540 = vmul.f32 %v2364, %v2517
    %v2541 = vmul.f32 %v2365, %v2517
    %v2542 = vmul.f32 %v2366, %v2517
    %2544 = vset.pattern.permute.xlu0 0
    %2545 = vperm.xlu0 %2544, %v2495
    %v2546 = vpop.permute.xlu0 %2545
    %2549 = vset.pattern.permute.xlu0 0
    %2550 = vperm.xlu0 %2549, %v2496
    %v2551 = vpop.permute.xlu0 %2550
    %2554 = vset.pattern.permute.xlu0 0
    %2555 = vperm.xlu0 %2554, %v2497
    %v2556 = vpop.permute.xlu0 %2555
    %2559 = vset.pattern.permute.xlu0 0
    %2560 = vperm.xlu0 %2559, %v2498
    %v2561 = vpop.permute.xlu0 %2560
    %v2563 = vadd.f32 %v2519, %v2546
    %v2564 = vadd.f32 %v2520, %v2546
    %v2565 = vadd.f32 %v2521, %v2546
    %v2566 = vadd.f32 %v2522, %v2546
    %v2567 = vadd.f32 %v2523, %v2546
    %v2568 = vadd.f32 %v2524, %v2546
    %v2569 = vadd.f32 %v2525, %v2551
    %v2570 = vadd.f32 %v2526, %v2551
    %v2571 = vadd.f32 %v2527, %v2551
    %v2572 = vadd.f32 %v2528, %v2551
    %v2573 = vadd.f32 %v2529, %v2551
    %v2574 = vadd.f32 %v2530, %v2551
    %v2575 = vadd.f32 %v2531, %v2556
    %v2576 = vadd.f32 %v2532, %v2556
    %v2577 = vadd.f32 %v2533, %v2556
    %v2578 = vadd.f32 %v2534, %v2556
    %v2579 = vadd.f32 %v2535, %v2556
    %v2580 = vadd.f32 %v2536, %v2556
    %v2581 = vadd.f32 %v2537, %v2561
    %v2582 = vadd.f32 %v2538, %v2561
    %v2583 = vadd.f32 %v2539, %v2561
    %v2584 = vadd.f32 %v2540, %v2561
    %v2585 = vadd.f32 %v2541, %v2561
    %v2586 = vadd.f32 %v2542, %v2561
    %v2587 = vmul.f32 %v2563, %v2316
    %v2588 = vmul.f32 %v2564, %v2320
    %v2589 = vmul.f32 %v2565, %v2324
    %v2590 = vmul.f32 %v2566, %v2328
    %v2591 = vmul.f32 %v2567, %v2332
    %v2592 = vmul.f32 %v2568, %v2336
    %v2593 = vmul.f32 %v2569, %v2316
    %v2594 = vmul.f32 %v2570, %v2320
    %v2595 = vmul.f32 %v2571, %v2324
    %v2596 = vmul.f32 %v2572, %v2328
    %v2597 = vmul.f32 %v2573, %v2332
    %v2598 = vmul.f32 %v2574, %v2336
    %v2599 = vmul.f32 %v2575, %v2316
    %v2600 = vmul.f32 %v2576, %v2320
    %v2601 = vmul.f32 %v2577, %v2324
    %v2602 = vmul.f32 %v2578, %v2328
    %v2603 = vmul.f32 %v2579, %v2332
    %v2604 = vmul.f32 %v2580, %v2336
    %v2605 = vmul.f32 %v2581, %v2316
    %v2606 = vmul.f32 %v2582, %v2320
    %v2607 = vmul.f32 %v2583, %v2324
    %v2608 = vmul.f32 %v2584, %v2328
    %v2609 = vmul.f32 %v2585, %v2332
    %v2610 = vmul.f32 %v2586, %v2336
    %v2611 = vpack.c.bf16 %v2593, %v2587
    %v2612 = vpack.c.bf16 %v2594, %v2588
    %v2613 = vpack.c.bf16 %v2595, %v2589
    %v2614 = vpack.c.bf16 %v2596, %v2590
    %v2615 = vpack.c.bf16 %v2597, %v2591
    %v2616 = vpack.c.bf16 %v2598, %v2592
    %v2617 = vpack.c.bf16 %v2605, %v2599
    %v2618 = vpack.c.bf16 %v2606, %v2600
    %v2619 = vpack.c.bf16 %v2607, %v2601
    %v2620 = vpack.c.bf16 %v2608, %v2602
    %v2621 = vpack.c.bf16 %v2609, %v2603
    %v2622 = vpack.c.bf16 %v2610, %v2604
    %v2635 = vunpack.c.l.b16 %v2611
    %v2636 = vunpack.c.l.b16 %v2612
    %v2637 = vunpack.c.l.b16 %v2613
    %v2638 = vunpack.c.l.b16 %v2614
    %v2639 = vunpack.c.l.b16 %v2615
    %v2640 = vunpack.c.l.b16 %v2616
    %v2641 = vunpack.c.h.b16 %v2611
    %v2642 = vunpack.c.h.b16 %v2612
    %v2643 = vunpack.c.h.b16 %v2613
    %v2644 = vunpack.c.h.b16 %v2614
    %v2645 = vunpack.c.h.b16 %v2615
    %v2646 = vunpack.c.h.b16 %v2616
    %v2647 = vunpack.c.l.b16 %v2617
    %v2648 = vunpack.c.l.b16 %v2618
    %v2649 = vunpack.c.l.b16 %v2619
    %v2650 = vunpack.c.l.b16 %v2620
    %v2651 = vunpack.c.l.b16 %v2621
    %v2652 = vunpack.c.l.b16 %v2622
    %v2653 = vunpack.c.h.b16 %v2617
    %v2654 = vunpack.c.h.b16 %v2618
    %v2655 = vunpack.c.h.b16 %v2619
    %v2656 = vunpack.c.h.b16 %v2620
    %v2657 = vunpack.c.h.b16 %v2621
    %v2658 = vunpack.c.h.b16 %v2622
    %v2659 = vpack.c.b16 %v2636, %v2635
    %v2660 = vpack.c.b16 %v2638, %v2637
    %v2661 = vpack.c.b16 %v2640, %v2639
    %v2662 = vpack.c.b16 %v2642, %v2641
    %v2663 = vpack.c.b16 %v2644, %v2643
    %v2664 = vpack.c.b16 %v2646, %v2645
    %v2665 = vpack.c.b16 %v2648, %v2647
    %v2666 = vpack.c.b16 %v2650, %v2649
    %v2667 = vpack.c.b16 %v2652, %v2651
    %v2668 = vpack.c.b16 %v2654, %v2653
    %v2669 = vpack.c.b16 %v2656, %v2655
    %v2670 = vpack.c.b16 %v2658, %v2657
    %2671 = vrot.lane.b32.xlu0 %v2659, 19
    %v2672 = vpop.permute.xlu0 %2671
    %2673 = vrot.lane.b32.xlu0 %v2660, 19
    %v2674 = vpop.permute.xlu0 %2673
    %2675 = vrot.lane.b32.xlu0 %v2661, 19
    %v2676 = vpop.permute.xlu0 %2675
    %2677 = vrot.lane.b32.xlu0 %v2662, 19
    %v2678 = vpop.permute.xlu0 %2677
    %2679 = vrot.lane.b32.xlu0 %v2663, 19
    %v2680 = vpop.permute.xlu0 %2679
    %2681 = vrot.lane.b32.xlu0 %v2664, 19
    %v2682 = vpop.permute.xlu0 %2681
    %2683 = vrot.lane.b32.xlu0 %v2665, 19
    %v2684 = vpop.permute.xlu0 %2683
    %2685 = vrot.lane.b32.xlu0 %v2666, 19
    %v2686 = vpop.permute.xlu0 %2685
    %2687 = vrot.lane.b32.xlu0 %v2667, 19
    %v2688 = vpop.permute.xlu0 %2687
    %2689 = vrot.lane.b32.xlu0 %v2668, 19
    %v2690 = vpop.permute.xlu0 %2689
    %2691 = vrot.lane.b32.xlu0 %v2669, 19
    %v2692 = vpop.permute.xlu0 %2691
    %2693 = vrot.lane.b32.xlu0 %v2670, 19
    %v2694 = vpop.permute.xlu0 %2693
    %v2695 = vrot.slane %v2672, 4
    %v2696 = vrot.slane %v2674, 4
    %v2697 = vrot.slane %v2676, 4
    %v2698 = vrot.slane %v2678, 4
    %v2699 = vrot.slane %v2680, 4
    %v2700 = vrot.slane %v2682, 4
    %v2701 = vrot.slane %v2684, 4
    %v2702 = vrot.slane %v2686, 4
    %v2703 = vrot.slane %v2688, 4
    %v2704 = vrot.slane %v2690, 4
    %v2705 = vrot.slane %v2692, 4
    %v2706 = vrot.slane %v2694, 4
    %vm2707 = vcmask 154624
    %v2708 = vsel %vm2707, %v2695, %v2672
    %vm2709 = vcmask 1043456
    %v2710 = vsel %vm2709, %v2695, %v2696
    %v2711 = vsel %vm2707, %v2710, %v2674
    %v2712 = vsel %vm2709, %v2696, %v2697
    %v2713 = vsel %vm2707, %v2712, %v2676
    %v2714 = vsel %vm2707, %v2698, %v2678
    %v2715 = vsel %vm2709, %v2698, %v2699
    %v2716 = vsel %vm2707, %v2715, %v2680
    %v2717 = vsel %vm2709, %v2699, %v2700
    %v2718 = vsel %vm2707, %v2717, %v2682
    %v2719 = vsel %vm2707, %v2701, %v2684
    %v2720 = vsel %vm2709, %v2701, %v2702
    %v2721 = vsel %vm2707, %v2720, %v2686
    %v2722 = vsel %vm2709, %v2702, %v2703
    %v2723 = vsel %vm2707, %v2722, %v2688
    %v2724 = vsel %vm2707, %v2704, %v2690
    %v2725 = vsel %vm2709, %v2704, %v2705
    %v2726 = vsel %vm2707, %v2725, %v2692
    %v2727 = vsel %vm2709, %v2705, %v2706
    %v2728 = vsel %vm2707, %v2727, %v2694
    %vm2741 = vcmask 1043608
    %vm2742 = vcmask 1047556
    %vm2743 = vmor %vm2742, %vm2741
    %2744 = vst.msk [vmem:[#allocation2] sm:$0xff] %vm2743, %v2708
    %2745 = vst [vmem:[#allocation2 + $0x8] sm:$0xff] %v2711
    %vm2746 = vcmask 220164
    %vm2747 = vmor %vm2746, %vm141
    %2748 = vst.msk [vmem:[#allocation2 + $0x10] sm:$0xff] %vm2747, %v2713
    %2749 = vst.msk [vmem:[#allocation2 + $0x18] sm:$0xff] %vm2743, %v2714
    %2750 = vst [vmem:[#allocation2 + $0x20] sm:$0xff] %v2716
    %2751 = vst.msk [vmem:[#allocation2 + $0x28] sm:$0xff] %vm2747, %v2718
    %2752 = vst.msk [vmem:[#allocation2 + $0x30] sm:$0xff] %vm2743, %v2719
    %2753 = vst [vmem:[#allocation2 + $0x38] sm:$0xff] %v2721
    %2754 = vst.msk [vmem:[#allocation2 + $0x40] sm:$0xff] %vm2747, %v2723
    %2755 = vst.msk [vmem:[#allocation2 + $0x48] sm:$0xff] %vm2743, %v2724
    %2756 = vst [vmem:[#allocation2 + $0x50] sm:$0xff] %v2726
    %2757 = vst.msk [vmem:[#allocation2 + $0x58] sm:$0xff] %vm2747, %v2728
    %v2758 = vld [vmem:[%s5] sm:$0xf]
    %v2759 = vld [vmem:[%s5 + $0x4] sm:$0xf]
    %v2760 = vld [vmem:[%s5 + $0x8] sm:$0xf]
    %v2761 = vld [vmem:[%s5 + $0xc] sm:$0xf]
    %v2762 = vld [vmem:[#allocation2] sm:$0xff]
    %v2763 = vld [vmem:[#allocation2 + $0x8] sm:$0xff]
    %v2764 = vld [vmem:[#allocation2 + $0x10] sm:$0xff]
    %v2765 = vld [vmem:[#allocation2 + $0x18] sm:$0xff]
    %v2766 = vld [vmem:[#allocation2 + $0x20] sm:$0xff]
    %v2767 = vld [vmem:[#allocation2 + $0x28] sm:$0xff]
    %v2768 = vld [vmem:[#allocation2 + $0x30] sm:$0xff]
    %v2769 = vld [vmem:[#allocation2 + $0x38] sm:$0xff]
    %v2770 = vld [vmem:[#allocation2 + $0x40] sm:$0xff]
    %v2771 = vld [vmem:[#allocation2 + $0x48] sm:$0xff]
    %v2772 = vld [vmem:[#allocation2 + $0x50] sm:$0xff]
    %v2773 = vld [vmem:[#allocation2 + $0x58] sm:$0xff]
    %s2774 = scalar_lea.vmem %s5, 16
    %v2775 = vld [vmem:[%s2774] sm:$0xf]
    %v2776 = vld [vmem:[%s2774 + $0x4] sm:$0xf]
    %v2777 = vld [vmem:[%s2774 + $0x8] sm:$0xf]
    %v2778 = vld [vmem:[%s2774 + $0xc] sm:$0xf]
    %v2783 = vunpack.c.l.b16 %v2775
    %v2784 = vunpack.c.l.b16 %v2776
    %v2785 = vunpack.c.l.b16 %v2777
    %v2786 = vunpack.c.l.b16 %v2778
    %v2787 = vpack.c.b16 %v2784, %v2783
    %v2788 = vpack.c.b16 %v2786, %v2785
    %v2801 = vunpack.c.l.b16 %v2762
    %v2802 = vunpack.c.h.b16 %v2762
    %v2803 = vunpack.c.l.b16 %v2763
    %v2804 = vunpack.c.h.b16 %v2763
    %v2805 = vunpack.c.l.b16 %v2764
    %v2806 = vunpack.c.h.b16 %v2764
    %v2807 = vunpack.c.l.b16 %v2765
    %v2808 = vunpack.c.h.b16 %v2765
    %v2809 = vunpack.c.l.b16 %v2766
    %v2810 = vunpack.c.h.b16 %v2766
    %v2811 = vunpack.c.l.b16 %v2767
    %v2812 = vunpack.c.h.b16 %v2767
    %v2813 = vunpack.c.l.b16 %v2768
    %v2814 = vunpack.c.h.b16 %v2768
    %v2815 = vunpack.c.l.b16 %v2769
    %v2816 = vunpack.c.h.b16 %v2769
    %v2817 = vunpack.c.l.b16 %v2770
    %v2818 = vunpack.c.h.b16 %v2770
    %v2819 = vunpack.c.l.b16 %v2771
    %v2820 = vunpack.c.h.b16 %v2771
    %v2821 = vunpack.c.l.b16 %v2772
    %v2822 = vunpack.c.h.b16 %v2772
    %v2823 = vunpack.c.l.b16 %v2773
    %v2824 = vunpack.c.h.b16 %v2773
    %v2825 = vpack.c.b16 %v2807, %v2801
    %v2826 = vpack.c.b16 %v2808, %v2802
    %v2827 = vpack.c.b16 %v2809, %v2803
    %v2828 = vpack.c.b16 %v2810, %v2804
    %v2829 = vpack.c.b16 %v2811, %v2805
    %v2830 = vpack.c.b16 %v2812, %v2806
    %v2831 = vpack.c.b16 %v2819, %v2813
    %v2832 = vpack.c.b16 %v2820, %v2814
    %v2833 = vpack.c.b16 %v2821, %v2815
    %v2834 = vpack.c.b16 %v2822, %v2816
    %v2835 = vpack.c.b16 %v2823, %v2817
    %v2836 = vpack.c.b16 %v2824, %v2818
    %2837 = vrot.lane.b32.xlu0 %v2825, 127
    %v2838 = vpop.permute.xlu0 %2837
    %2839 = vrot.lane.b32.xlu0 %v2826, 127
    %v2840 = vpop.permute.xlu0 %2839
    %2841 = vrot.lane.b32.xlu0 %v2827, 127
    %v2842 = vpop.permute.xlu0 %2841
    %2843 = vrot.lane.b32.xlu0 %v2828, 127
    %v2844 = vpop.permute.xlu0 %2843
    %2845 = vrot.lane.b32.xlu0 %v2829, 127
    %v2846 = vpop.permute.xlu0 %2845
    %2847 = vrot.lane.b32.xlu0 %v2830, 127
    %v2848 = vpop.permute.xlu0 %2847
    %2849 = vrot.lane.b32.xlu0 %v2831, 127
    %v2850 = vpop.permute.xlu0 %2849
    %2851 = vrot.lane.b32.xlu0 %v2832, 127
    %v2852 = vpop.permute.xlu0 %2851
    %2853 = vrot.lane.b32.xlu0 %v2833, 127
    %v2854 = vpop.permute.xlu0 %2853
    %2855 = vrot.lane.b32.xlu0 %v2834, 127
    %v2856 = vpop.permute.xlu0 %2855
    %2857 = vrot.lane.b32.xlu0 %v2835, 127
    %v2858 = vpop.permute.xlu0 %2857
    %2859 = vrot.lane.b32.xlu0 %v2836, 127
    %v2860 = vpop.permute.xlu0 %2859
    %v2861 = vsel %vm128, %v2838, %v2840
    %v2862 = vsel %vm128, %v2840, %v2842
    %v2863 = vsel %vm128, %v2842, %v2844
    %v2864 = vsel %vm128, %v2844, %v2846
    %v2865 = vsel %vm128, %v2846, %v2848
    %v2866 = vsel %vm128, %v2850, %v2852
    %v2867 = vsel %vm128, %v2852, %v2854
    %v2868 = vsel %vm128, %v2854, %v2856
    %v2869 = vsel %vm128, %v2856, %v2858
    %v2870 = vsel %vm128, %v2858, %v2860
    %vm2883 = vcmask 261120
    %v2885 = vsel %vm2883, %v2787, 0
    %v2888 = vsel %vm2883, %v2788, 0
    %2890 = vmatprep.subr.bf16.mxu0 0
    %2891 = vmatpush1.bf16.msra.mxu0 0
    %2892 = vmatprep.subr.bf16.mxu0 0
    %2893 = vmatpush1.bf16.msra.mxu0 0
    %2894 = vmatprep.subr.bf16.mxu0 0
    %2895 = vmatpush1.bf16.msra.mxu0 0
    %2896 = vmatprep.subr.bf16.mxu0 0
    %2897 = vmatpush1.bf16.msra.mxu0 0
    %2898 = vmatprep.subr.bf16.mxu0 0
    %2899 = vmatpush1.bf16.msra.mxu0 0
    %2900 = vmatprep.subr.bf16.mxu0 0
    %2901 = vmatpush1.bf16.msra.mxu0 0
    %2902 = vmatprep.subr.bf16.mxu0 %v2867
    %2903 = vmatpush1.bf16.msra.mxu0 %v2866
    %2904 = vmatprep.subr.bf16.mxu0 %v2862
    %2905 = vmatpush1.bf16.msra.mxu0 %v2861
    %2906 = vmatprep.subr.bf16.mxu0 0
    %2907 = vmatpush2.bf16.msra.mxu0 0
    %2908 = vmatprep.subr.bf16.mxu0 0
    %2909 = vmatpush2.bf16.msra.mxu0 0
    %2910 = vmatprep.subr.bf16.mxu0 0
    %2911 = vmatpush2.bf16.msra.mxu0 0
    %2912 = vmatprep.subr.bf16.mxu0 0
    %2913 = vmatpush2.bf16.msra.mxu0 0
    %2914 = vmatprep.subr.bf16.mxu0 0
    %2915 = vmatpush2.bf16.msra.mxu0 0
    %2916 = vmatprep.subr.bf16.mxu0 0
    %2917 = vmatpush2.bf16.msra.mxu0 0
    %2918 = vmatprep.subr.bf16.mxu0 0
    %2919 = vmatpush2.bf16.msra.mxu0 0
    %2920 = vmatprep.subr.bf16.mxu0 0
    %2921 = vmatpush2.bf16.msra.mxu0 0
    %2922 = vmatprep.mubr.bf16.mxu0 0
    %2923 = vmatmul.mubr.bf16.gmra.mxu0 %v2885
    %v2924 = vpop.f32.mrf.mxu0
    %v2925 = vadd.f32 0.0, %v2924
    %v2926 = vpop.f32.mrf.mxu0
    %v2927 = vadd.f32 0.0, %v2926
    %v2928 = vpop.f32.mrf.mxu0
    %v2929 = vadd.f32 0.0, %v2928
    %v2930 = vpop.f32.mrf.mxu0
    %v2931 = vadd.f32 0.0, %v2930
    %2932 = vmatprep.mubr.bf16.mxu0 0
    %2933 = vmatmul.mubr.bf16.gmra.mxu0 %v2888
    %v2934 = vpop.f32.mrf.mxu0
    %v2935 = vadd.f32 0.0, %v2934
    %v2936 = vpop.f32.mrf.mxu0
    %v2937 = vadd.f32 0.0, %v2936
    %v2938 = vpop.f32.mrf.mxu0
    %v2939 = vadd.f32 0.0, %v2938
    %v2940 = vpop.f32.mrf.mxu0
    %v2941 = vadd.f32 0.0, %v2940
    %2942 = vdwg.mxu0
    %2943 = vmatprep.subr.bf16.mxu0 0
    %2944 = vmatpush1.bf16.msra.mxu0 0
    %2945 = vmatprep.subr.bf16.mxu0 0
    %2946 = vmatpush1.bf16.msra.mxu0 0
    %2947 = vmatprep.subr.bf16.mxu0 0
    %2948 = vmatpush1.bf16.msra.mxu0 0
    %2949 = vmatprep.subr.bf16.mxu0 0
    %2950 = vmatpush1.bf16.msra.mxu0 0
    %2951 = vmatprep.subr.bf16.mxu0 0
    %2952 = vmatpush1.bf16.msra.mxu0 0
    %2953 = vmatprep.subr.bf16.mxu0 0
    %2954 = vmatpush1.bf16.msra.mxu0 0
    %2955 = vmatprep.subr.bf16.mxu0 %v2869
    %2956 = vmatpush1.bf16.msra.mxu0 %v2868
    %2957 = vmatprep.subr.bf16.mxu0 %v2864
    %2958 = vmatpush1.bf16.msra.mxu0 %v2863
    %2959 = vmatprep.subr.bf16.mxu0 0
    %2960 = vmatpush2.bf16.msra.mxu0 0
    %2961 = vmatprep.subr.bf16.mxu0 0
    %2962 = vmatpush2.bf16.msra.mxu0 0
    %2963 = vmatprep.subr.bf16.mxu0 0
    %2964 = vmatpush2.bf16.msra.mxu0 0
    %2965 = vmatprep.subr.bf16.mxu0 0
    %2966 = vmatpush2.bf16.msra.mxu0 0
    %2967 = vmatprep.subr.bf16.mxu0 0
    %2968 = vmatpush2.bf16.msra.mxu0 0
    %2969 = vmatprep.subr.bf16.mxu0 0
    %2970 = vmatpush2.bf16.msra.mxu0 0
    %2971 = vmatprep.subr.bf16.mxu0 0
    %2972 = vmatpush2.bf16.msra.mxu0 0
    %2973 = vmatprep.subr.bf16.mxu0 0
    %2974 = vmatpush2.bf16.msra.mxu0 0
    %2975 = vmatprep.mubr.bf16.mxu0 0
    %2976 = vmatmul.mubr.bf16.gmra.mxu0 %v2885
    %v2977 = vpop.f32.mrf.mxu0
    %v2978 = vadd.f32 0.0, %v2977
    %v2979 = vpop.f32.mrf.mxu0
    %v2980 = vadd.f32 0.0, %v2979
    %v2981 = vpop.f32.mrf.mxu0
    %v2982 = vadd.f32 0.0, %v2981
    %v2983 = vpop.f32.mrf.mxu0
    %v2984 = vadd.f32 0.0, %v2983
    %2985 = vmatprep.mubr.bf16.mxu0 0
    %2986 = vmatmul.mubr.bf16.gmra.mxu0 %v2888
    %v2987 = vpop.f32.mrf.mxu0
    %v2988 = vadd.f32 0.0, %v2987
    %v2989 = vpop.f32.mrf.mxu0
    %v2990 = vadd.f32 0.0, %v2989
    %v2991 = vpop.f32.mrf.mxu0
    %v2992 = vadd.f32 0.0, %v2991
    %v2993 = vpop.f32.mrf.mxu0
    %v2994 = vadd.f32 0.0, %v2993
    %2995 = vdwg.mxu0
    %2996 = vmatprep.subr.bf16.mxu0 0
    %2997 = vmatpush1.bf16.msra.mxu0 0
    %2998 = vmatprep.subr.bf16.mxu0 0
    %2999 = vmatpush1.bf16.msra.mxu0 0
    %3000 = vmatprep.subr.bf16.mxu0 0
    %3001 = vmatpush1.bf16.msra.mxu0 0
    %3002 = vmatprep.subr.bf16.mxu0 0
    %3003 = vmatpush1.bf16.msra.mxu0 0
    %3004 = vmatprep.subr.bf16.mxu0 0
    %3005 = vmatpush1.bf16.msra.mxu0 0
    %3006 = vmatprep.subr.bf16.mxu0 0
    %3007 = vmatpush1.bf16.msra.mxu0 0
    %3008 = vmatprep.subr.bf16.mxu0 %v2860
    %3009 = vmatpush1.bf16.msra.mxu0 %v2870
    %3010 = vmatprep.subr.bf16.mxu0 %v2848
    %3011 = vmatpush1.bf16.msra.mxu0 %v2865
    %3012 = vmatprep.subr.bf16.mxu0 0
    %3013 = vmatpush2.bf16.msra.mxu0 0
    %3014 = vmatprep.subr.bf16.mxu0 0
    %3015 = vmatpush2.bf16.msra.mxu0 0
    %3016 = vmatprep.subr.bf16.mxu0 0
    %3017 = vmatpush2.bf16.msra.mxu0 0
    %3018 = vmatprep.subr.bf16.mxu0 0
    %3019 = vmatpush2.bf16.msra.mxu0 0
    %3020 = vmatprep.subr.bf16.mxu0 0
    %3021 = vmatpush2.bf16.msra.mxu0 0
    %3022 = vmatprep.subr.bf16.mxu0 0
    %3023 = vmatpush2.bf16.msra.mxu0 0
    %3024 = vmatprep.subr.bf16.mxu0 0
    %3025 = vmatpush2.bf16.msra.mxu0 0
    %3026 = vmatprep.subr.bf16.mxu0 0
    %3027 = vmatpush2.bf16.msra.mxu0 0
    %3028 = vmatprep.mubr.bf16.mxu0 0
    %3029 = vmatmul.mubr.bf16.gmra.mxu0 %v2885
    %v3030 = vpop.f32.mrf.mxu0
    %v3031 = vadd.f32 0.0, %v3030
    %v3032 = vpop.f32.mrf.mxu0
    %v3033 = vadd.f32 0.0, %v3032
    %v3034 = vpop.f32.mrf.mxu0
    %v3035 = vadd.f32 0.0, %v3034
    %v3036 = vpop.f32.mrf.mxu0
    %v3037 = vadd.f32 0.0, %v3036
    %3038 = vmatprep.mubr.bf16.mxu0 0
    %3039 = vmatmul.mubr.bf16.gmra.mxu0 %v2888
    %v3040 = vpop.f32.mrf.mxu0
    %v3041 = vadd.f32 0.0, %v3040
    %v3042 = vpop.f32.mrf.mxu0
    %v3043 = vadd.f32 0.0, %v3042
    %v3044 = vpop.f32.mrf.mxu0
    %v3045 = vadd.f32 0.0, %v3044
    %v3046 = vpop.f32.mrf.mxu0
    %v3047 = vadd.f32 0.0, %v3046
    %3048 = vdwg.mxu0
    %v3053 = vunpack.c.l.b16 %v2758
    %v3054 = vunpack.c.l.b16 %v2759
    %v3055 = vunpack.c.l.b16 %v2760
    %v3056 = vunpack.c.l.b16 %v2761
    %v3057 = vpack.c.b16 %v3054, %v3053
    %v3058 = vpack.c.b16 %v3056, %v3055
    %v3072 = vsel %vm2883, %v3057, 0
    %v3075 = vsel %vm2883, %v3058, 0
    %3077 = vmatprep.subr.bf16.mxu0 0
    %3078 = vmatpush1.bf16.msra.mxu0 0
    %3079 = vmatprep.subr.bf16.mxu0 0
    %3080 = vmatpush1.bf16.msra.mxu0 0
    %3081 = vmatprep.subr.bf16.mxu0 0
    %3082 = vmatpush1.bf16.msra.mxu0 0
    %3083 = vmatprep.subr.bf16.mxu0 0
    %3084 = vmatpush1.bf16.msra.mxu0 0
    %3085 = vmatprep.subr.bf16.mxu0 0
    %3086 = vmatpush1.bf16.msra.mxu0 0
    %3087 = vmatprep.subr.bf16.mxu0 0
    %3088 = vmatpush1.bf16.msra.mxu0 0
    %3089 = vmatprep.subr.bf16.mxu0 %v2832
    %3090 = vmatpush1.bf16.msra.mxu0 %v2831
    %3091 = vmatprep.subr.bf16.mxu0 %v2826
    %3092 = vmatpush1.bf16.msra.mxu0 %v2825
    %3093 = vmatprep.subr.bf16.mxu0 0
    %3094 = vmatpush2.bf16.msra.mxu0 0
    %3095 = vmatprep.subr.bf16.mxu0 0
    %3096 = vmatpush2.bf16.msra.mxu0 0
    %3097 = vmatprep.subr.bf16.mxu0 0
    %3098 = vmatpush2.bf16.msra.mxu0 0
    %3099 = vmatprep.subr.bf16.mxu0 0
    %3100 = vmatpush2.bf16.msra.mxu0 0
    %3101 = vmatprep.subr.bf16.mxu0 0
    %3102 = vmatpush2.bf16.msra.mxu0 0
    %3103 = vmatprep.subr.bf16.mxu0 0
    %3104 = vmatpush2.bf16.msra.mxu0 0
    %3105 = vmatprep.subr.bf16.mxu0 0
    %3106 = vmatpush2.bf16.msra.mxu0 0
    %3107 = vmatprep.subr.bf16.mxu0 0
    %3108 = vmatpush2.bf16.msra.mxu0 0
    %3109 = vmatprep.mubr.bf16.mxu0 0
    %3110 = vmatmul.mubr.bf16.gmra.mxu0 %v3072
    %v3111 = vpop.f32.mrf.mxu0
    %v3112 = vadd.f32 %v2925, %v3111
    %v3113 = vpop.f32.mrf.mxu0
    %v3114 = vadd.f32 %v2927, %v3113
    %v3115 = vpop.f32.mrf.mxu0
    %v3116 = vadd.f32 %v2929, %v3115
    %v3117 = vpop.f32.mrf.mxu0
    %v3118 = vadd.f32 %v2931, %v3117
    %3119 = vmatprep.mubr.bf16.mxu0 0
    %3120 = vmatmul.mubr.bf16.gmra.mxu0 %v3075
    %v3121 = vpop.f32.mrf.mxu0
    %v3122 = vadd.f32 %v2935, %v3121
    %v3123 = vpop.f32.mrf.mxu0
    %v3124 = vadd.f32 %v2937, %v3123
    %v3125 = vpop.f32.mrf.mxu0
    %v3126 = vadd.f32 %v2939, %v3125
    %v3127 = vpop.f32.mrf.mxu0
    %v3128 = vadd.f32 %v2941, %v3127
    %3129 = vdwg.mxu0
    %3130 = vmatprep.subr.bf16.mxu0 0
    %3131 = vmatpush1.bf16.msra.mxu0 0
    %3132 = vmatprep.subr.bf16.mxu0 0
    %3133 = vmatpush1.bf16.msra.mxu0 0
    %3134 = vmatprep.subr.bf16.mxu0 0
    %3135 = vmatpush1.bf16.msra.mxu0 0
    %3136 = vmatprep.subr.bf16.mxu0 0
    %3137 = vmatpush1.bf16.msra.mxu0 0
    %3138 = vmatprep.subr.bf16.mxu0 0
    %3139 = vmatpush1.bf16.msra.mxu0 0
    %3140 = vmatprep.subr.bf16.mxu0 0
    %3141 = vmatpush1.bf16.msra.mxu0 0
    %3142 = vmatprep.subr.bf16.mxu0 %v2834
    %3143 = vmatpush1.bf16.msra.mxu0 %v2833
    %3144 = vmatprep.subr.bf16.mxu0 %v2828
    %3145 = vmatpush1.bf16.msra.mxu0 %v2827
    %3146 = vmatprep.subr.bf16.mxu0 0
    %3147 = vmatpush2.bf16.msra.mxu0 0
    %3148 = vmatprep.subr.bf16.mxu0 0
    %3149 = vmatpush2.bf16.msra.mxu0 0
    %3150 = vmatprep.subr.bf16.mxu0 0
    %3151 = vmatpush2.bf16.msra.mxu0 0
    %3152 = vmatprep.subr.bf16.mxu0 0
    %3153 = vmatpush2.bf16.msra.mxu0 0
    %3154 = vmatprep.subr.bf16.mxu0 0
    %3155 = vmatpush2.bf16.msra.mxu0 0
    %3156 = vmatprep.subr.bf16.mxu0 0
    %3157 = vmatpush2.bf16.msra.mxu0 0
    %3158 = vmatprep.subr.bf16.mxu0 0
    %3159 = vmatpush2.bf16.msra.mxu0 0
    %3160 = vmatprep.subr.bf16.mxu0 0
    %3161 = vmatpush2.bf16.msra.mxu0 0
    %3162 = vmatprep.mubr.bf16.mxu0 0
    %3163 = vmatmul.mubr.bf16.gmra.mxu0 %v3072
    %v3164 = vpop.f32.mrf.mxu0
    %v3165 = vadd.f32 %v2978, %v3164
    %v3166 = vpop.f32.mrf.mxu0
    %v3167 = vadd.f32 %v2980, %v3166
    %v3168 = vpop.f32.mrf.mxu0
    %v3169 = vadd.f32 %v2982, %v3168
    %v3170 = vpop.f32.mrf.mxu0
    %v3171 = vadd.f32 %v2984, %v3170
    %3172 = vmatprep.mubr.bf16.mxu0 0
    %3173 = vmatmul.mubr.bf16.gmra.mxu0 %v3075
    %v3174 = vpop.f32.mrf.mxu0
    %v3175 = vadd.f32 %v2988, %v3174
    %v3176 = vpop.f32.mrf.mxu0
    %v3177 = vadd.f32 %v2990, %v3176
    %v3178 = vpop.f32.mrf.mxu0
    %v3179 = vadd.f32 %v2992, %v3178
    %v3180 = vpop.f32.mrf.mxu0
    %v3181 = vadd.f32 %v2994, %v3180
    %3182 = vdwg.mxu0
    %3183 = vmatprep.subr.bf16.mxu0 0
    %3184 = vmatpush1.bf16.msra.mxu0 0
    %3185 = vmatprep.subr.bf16.mxu0 0
    %3186 = vmatpush1.bf16.msra.mxu0 0
    %3187 = vmatprep.subr.bf16.mxu0 0
    %3188 = vmatpush1.bf16.msra.mxu0 0
    %3189 = vmatprep.subr.bf16.mxu0 0
    %3190 = vmatpush1.bf16.msra.mxu0 0
    %3191 = vmatprep.subr.bf16.mxu0 0
    %3192 = vmatpush1.bf16.msra.mxu0 0
    %3193 = vmatprep.subr.bf16.mxu0 0
    %3194 = vmatpush1.bf16.msra.mxu0 0
    %3195 = vmatprep.subr.bf16.mxu0 %v2836
    %3196 = vmatpush1.bf16.msra.mxu0 %v2835
    %3197 = vmatprep.subr.bf16.mxu0 %v2830
    %3198 = vmatpush1.bf16.msra.mxu0 %v2829
    %3199 = vmatprep.subr.bf16.mxu0 0
    %3200 = vmatpush2.bf16.msra.mxu0 0
    %3201 = vmatprep.subr.bf16.mxu0 0
    %3202 = vmatpush2.bf16.msra.mxu0 0
    %3203 = vmatprep.subr.bf16.mxu0 0
    %3204 = vmatpush2.bf16.msra.mxu0 0
    %3205 = vmatprep.subr.bf16.mxu0 0
    %3206 = vmatpush2.bf16.msra.mxu0 0
    %3207 = vmatprep.subr.bf16.mxu0 0
    %3208 = vmatpush2.bf16.msra.mxu0 0
    %3209 = vmatprep.subr.bf16.mxu0 0
    %3210 = vmatpush2.bf16.msra.mxu0 0
    %3211 = vmatprep.subr.bf16.mxu0 0
    %3212 = vmatpush2.bf16.msra.mxu0 0
    %3213 = vmatprep.subr.bf16.mxu0 0
    %3214 = vmatpush2.bf16.msra.mxu0 0
    %3215 = vmatprep.mubr.bf16.mxu0 0
    %3216 = vmatmul.mubr.bf16.gmra.mxu0 %v3072
    %v3217 = vpop.f32.mrf.mxu0
    %v3218 = vadd.f32 %v3031, %v3217
    %v3219 = vpop.f32.mrf.mxu0
    %v3220 = vadd.f32 %v3033, %v3219
    %v3221 = vpop.f32.mrf.mxu0
    %v3222 = vadd.f32 %v3035, %v3221
    %v3223 = vpop.f32.mrf.mxu0
    %v3224 = vadd.f32 %v3037, %v3223
    %3225 = vmatprep.mubr.bf16.mxu0 0
    %3226 = vmatmul.mubr.bf16.gmra.mxu0 %v3075
    %v3227 = vpop.f32.mrf.mxu0
    %v3228 = vadd.f32 %v3041, %v3227
    %v3229 = vpop.f32.mrf.mxu0
    %v3230 = vadd.f32 %v3043, %v3229
    %v3231 = vpop.f32.mrf.mxu0
    %v3232 = vadd.f32 %v3045, %v3231
    %v3233 = vpop.f32.mrf.mxu0
    %v3234 = vadd.f32 %v3047, %v3233
    %3235 = vdwg.mxu0
    %s3236 = scalar_lea.vmem %s5, 32
    %v3237 = vld [vmem:[%s3236] sm:$0xf]
    %v3238 = vld [vmem:[%s3236 + $0x4] sm:$0xf]
    %v3239 = vld [vmem:[%s3236 + $0x8] sm:$0xf]
    %v3240 = vld [vmem:[%s3236 + $0xc] sm:$0xf]
    %v3245 = vunpack.c.l.b16 %v3237
    %v3246 = vunpack.c.l.b16 %v3238
    %v3247 = vunpack.c.l.b16 %v3239
    %v3248 = vunpack.c.l.b16 %v3240
    %v3249 = vpack.c.b16 %v3246, %v3245
    %v3250 = vpack.c.b16 %v3248, %v3247
    %3251 = vrot.lane.b32.xlu0 %v2825, 126
    %v3252 = vpop.permute.xlu0 %3251
    %3253 = vrot.lane.b32.xlu0 %v2826, 126
    %v3254 = vpop.permute.xlu0 %3253
    %3255 = vrot.lane.b32.xlu0 %v2827, 126
    %v3256 = vpop.permute.xlu0 %3255
    %3257 = vrot.lane.b32.xlu0 %v2828, 126
    %v3258 = vpop.permute.xlu0 %3257
    %3259 = vrot.lane.b32.xlu0 %v2829, 126
    %v3260 = vpop.permute.xlu0 %3259
    %3261 = vrot.lane.b32.xlu0 %v2830, 126
    %v3262 = vpop.permute.xlu0 %3261
    %3263 = vrot.lane.b32.xlu0 %v2831, 126
    %v3264 = vpop.permute.xlu0 %3263
    %3265 = vrot.lane.b32.xlu0 %v2832, 126
    %v3266 = vpop.permute.xlu0 %3265
    %3267 = vrot.lane.b32.xlu0 %v2833, 126
    %v3268 = vpop.permute.xlu0 %3267
    %3269 = vrot.lane.b32.xlu0 %v2834, 126
    %v3270 = vpop.permute.xlu0 %3269
    %3271 = vrot.lane.b32.xlu0 %v2835, 126
    %v3272 = vpop.permute.xlu0 %3271
    %3273 = vrot.lane.b32.xlu0 %v2836, 126
    %v3274 = vpop.permute.xlu0 %3273
    %v3275 = vsel %vm539, %v3252, %v3254
    %v3276 = vsel %vm539, %v3254, %v3256
    %v3277 = vsel %vm539, %v3256, %v3258
    %v3278 = vsel %vm539, %v3258, %v3260
    %v3279 = vsel %vm539, %v3260, %v3262
    %v3280 = vsel %vm539, %v3264, %v3266
    %v3281 = vsel %vm539, %v3266, %v3268
    %v3282 = vsel %vm539, %v3268, %v3270
    %v3283 = vsel %vm539, %v3270, %v3272
    %v3284 = vsel %vm539, %v3272, %v3274
    %v3298 = vsel %vm2883, %v3249, 0
    %v3301 = vsel %vm2883, %v3250, 0
    %3303 = vmatprep.subr.bf16.mxu0 0
    %3304 = vmatpush1.bf16.msra.mxu0 0
    %3305 = vmatprep.subr.bf16.mxu0 0
    %3306 = vmatpush1.bf16.msra.mxu0 0
    %3307 = vmatprep.subr.bf16.mxu0 0
    %3308 = vmatpush1.bf16.msra.mxu0 0
    %3309 = vmatprep.subr.bf16.mxu0 0
    %3310 = vmatpush1.bf16.msra.mxu0 0
    %3311 = vmatprep.subr.bf16.mxu0 0
    %3312 = vmatpush1.bf16.msra.mxu0 0
    %3313 = vmatprep.subr.bf16.mxu0 0
    %3314 = vmatpush1.bf16.msra.mxu0 0
    %3315 = vmatprep.subr.bf16.mxu0 %v3281
    %3316 = vmatpush1.bf16.msra.mxu0 %v3280
    %3317 = vmatprep.subr.bf16.mxu0 %v3276
    %3318 = vmatpush1.bf16.msra.mxu0 %v3275
    %3319 = vmatprep.subr.bf16.mxu0 0
    %3320 = vmatpush2.bf16.msra.mxu0 0
    %3321 = vmatprep.subr.bf16.mxu0 0
    %3322 = vmatpush2.bf16.msra.mxu0 0
    %3323 = vmatprep.subr.bf16.mxu0 0
    %3324 = vmatpush2.bf16.msra.mxu0 0
    %3325 = vmatprep.subr.bf16.mxu0 0
    %3326 = vmatpush2.bf16.msra.mxu0 0
    %3327 = vmatprep.subr.bf16.mxu0 0
    %3328 = vmatpush2.bf16.msra.mxu0 0
    %3329 = vmatprep.subr.bf16.mxu0 0
    %3330 = vmatpush2.bf16.msra.mxu0 0
    %3331 = vmatprep.subr.bf16.mxu0 0
    %3332 = vmatpush2.bf16.msra.mxu0 0
    %3333 = vmatprep.subr.bf16.mxu0 0
    %3334 = vmatpush2.bf16.msra.mxu0 0
    %3335 = vmatprep.mubr.bf16.mxu0 0
    %3336 = vmatmul.mubr.bf16.gmra.mxu0 %v3298
    %v3337 = vpop.f32.mrf.mxu0
    %v3338 = vadd.f32 0.0, %v3337
    %v3339 = vpop.f32.mrf.mxu0
    %v3340 = vadd.f32 0.0, %v3339
    %v3341 = vpop.f32.mrf.mxu0
    %v3342 = vadd.f32 0.0, %v3341
    %v3343 = vpop.f32.mrf.mxu0
    %v3344 = vadd.f32 0.0, %v3343
    %3345 = vmatprep.mubr.bf16.mxu0 0
    %3346 = vmatmul.mubr.bf16.gmra.mxu0 %v3301
    %v3347 = vpop.f32.mrf.mxu0
    %v3348 = vadd.f32 0.0, %v3347
    %v3349 = vpop.f32.mrf.mxu0
    %v3350 = vadd.f32 0.0, %v3349
    %v3351 = vpop.f32.mrf.mxu0
    %v3352 = vadd.f32 0.0, %v3351
    %v3353 = vpop.f32.mrf.mxu0
    %v3354 = vadd.f32 0.0, %v3353
    %3355 = vdwg.mxu0
    %3356 = vmatprep.subr.bf16.mxu0 0
    %3357 = vmatpush1.bf16.msra.mxu0 0
    %3358 = vmatprep.subr.bf16.mxu0 0
    %3359 = vmatpush1.bf16.msra.mxu0 0
    %3360 = vmatprep.subr.bf16.mxu0 0
    %3361 = vmatpush1.bf16.msra.mxu0 0
    %3362 = vmatprep.subr.bf16.mxu0 0
    %3363 = vmatpush1.bf16.msra.mxu0 0
    %3364 = vmatprep.subr.bf16.mxu0 0
    %3365 = vmatpush1.bf16.msra.mxu0 0
    %3366 = vmatprep.subr.bf16.mxu0 0
    %3367 = vmatpush1.bf16.msra.mxu0 0
    %3368 = vmatprep.subr.bf16.mxu0 %v3283
    %3369 = vmatpush1.bf16.msra.mxu0 %v3282
    %3370 = vmatprep.subr.bf16.mxu0 %v3278
    %3371 = vmatpush1.bf16.msra.mxu0 %v3277
    %3372 = vmatprep.subr.bf16.mxu0 0
    %3373 = vmatpush2.bf16.msra.mxu0 0
    %3374 = vmatprep.subr.bf16.mxu0 0
    %3375 = vmatpush2.bf16.msra.mxu0 0
    %3376 = vmatprep.subr.bf16.mxu0 0
    %3377 = vmatpush2.bf16.msra.mxu0 0
    %3378 = vmatprep.subr.bf16.mxu0 0
    %3379 = vmatpush2.bf16.msra.mxu0 0
    %3380 = vmatprep.subr.bf16.mxu0 0
    %3381 = vmatpush2.bf16.msra.mxu0 0
    %3382 = vmatprep.subr.bf16.mxu0 0
    %3383 = vmatpush2.bf16.msra.mxu0 0
    %3384 = vmatprep.subr.bf16.mxu0 0
    %3385 = vmatpush2.bf16.msra.mxu0 0
    %3386 = vmatprep.subr.bf16.mxu0 0
    %3387 = vmatpush2.bf16.msra.mxu0 0
    %3388 = vmatprep.mubr.bf16.mxu0 0
    %3389 = vmatmul.mubr.bf16.gmra.mxu0 %v3298
    %v3390 = vpop.f32.mrf.mxu0
    %v3391 = vadd.f32 0.0, %v3390
    %v3392 = vpop.f32.mrf.mxu0
    %v3393 = vadd.f32 0.0, %v3392
    %v3394 = vpop.f32.mrf.mxu0
    %v3395 = vadd.f32 0.0, %v3394
    %v3396 = vpop.f32.mrf.mxu0
    %v3397 = vadd.f32 0.0, %v3396
    %3398 = vmatprep.mubr.bf16.mxu0 0
    %3399 = vmatmul.mubr.bf16.gmra.mxu0 %v3301
    %v3400 = vpop.f32.mrf.mxu0
    %v3401 = vadd.f32 0.0, %v3400
    %v3402 = vpop.f32.mrf.mxu0
    %v3403 = vadd.f32 0.0, %v3402
    %v3404 = vpop.f32.mrf.mxu0
    %v3405 = vadd.f32 0.0, %v3404
    %v3406 = vpop.f32.mrf.mxu0
    %v3407 = vadd.f32 0.0, %v3406
    %3408 = vdwg.mxu0
    %3409 = vmatprep.subr.bf16.mxu0 0
    %3410 = vmatpush1.bf16.msra.mxu0 0
    %3411 = vmatprep.subr.bf16.mxu0 0
    %3412 = vmatpush1.bf16.msra.mxu0 0
    %3413 = vmatprep.subr.bf16.mxu0 0
    %3414 = vmatpush1.bf16.msra.mxu0 0
    %3415 = vmatprep.subr.bf16.mxu0 0
    %3416 = vmatpush1.bf16.msra.mxu0 0
    %3417 = vmatprep.subr.bf16.mxu0 0
    %3418 = vmatpush1.bf16.msra.mxu0 0
    %3419 = vmatprep.subr.bf16.mxu0 0
    %3420 = vmatpush1.bf16.msra.mxu0 0
    %3421 = vmatprep.subr.bf16.mxu0 %v3274
    %3422 = vmatpush1.bf16.msra.mxu0 %v3284
    %3423 = vmatprep.subr.bf16.mxu0 %v3262
    %3424 = vmatpush1.bf16.msra.mxu0 %v3279
    %3425 = vmatprep.subr.bf16.mxu0 0
    %3426 = vmatpush2.bf16.msra.mxu0 0
    %3427 = vmatprep.subr.bf16.mxu0 0
    %3428 = vmatpush2.bf16.msra.mxu0 0
    %3429 = vmatprep.subr.bf16.mxu0 0
    %3430 = vmatpush2.bf16.msra.mxu0 0
    %3431 = vmatprep.subr.bf16.mxu0 0
    %3432 = vmatpush2.bf16.msra.mxu0 0
    %3433 = vmatprep.subr.bf16.mxu0 0
    %3434 = vmatpush2.bf16.msra.mxu0 0
    %3435 = vmatprep.subr.bf16.mxu0 0
    %3436 = vmatpush2.bf16.msra.mxu0 0
    %3437 = vmatprep.subr.bf16.mxu0 0
    %3438 = vmatpush2.bf16.msra.mxu0 0
    %3439 = vmatprep.subr.bf16.mxu0 0
    %3440 = vmatpush2.bf16.msra.mxu0 0
    %3441 = vmatprep.mubr.bf16.mxu0 0
    %3442 = vmatmul.mubr.bf16.gmra.mxu0 %v3298
    %v3443 = vpop.f32.mrf.mxu0
    %v3444 = vadd.f32 0.0, %v3443
    %v3445 = vpop.f32.mrf.mxu0
    %v3446 = vadd.f32 0.0, %v3445
    %v3447 = vpop.f32.mrf.mxu0
    %v3448 = vadd.f32 0.0, %v3447
    %v3449 = vpop.f32.mrf.mxu0
    %v3450 = vadd.f32 0.0, %v3449
    %3451 = vmatprep.mubr.bf16.mxu0 0
    %3452 = vmatmul.mubr.bf16.gmra.mxu0 %v3301
    %v3453 = vpop.f32.mrf.mxu0
    %v3454 = vadd.f32 0.0, %v3453
    %v3455 = vpop.f32.mrf.mxu0
    %v3456 = vadd.f32 0.0, %v3455
    %v3457 = vpop.f32.mrf.mxu0
    %v3458 = vadd.f32 0.0, %v3457
    %v3459 = vpop.f32.mrf.mxu0
    %v3460 = vadd.f32 0.0, %v3459
    %3461 = vdwg.mxu0
    %v3462 = vadd.f32 %v3112, %v3338
    %v3463 = vadd.f32 %v3114, %v3340
    %v3464 = vadd.f32 %v3165, %v3391
    %v3465 = vadd.f32 %v3167, %v3393
    %v3466 = vadd.f32 %v3218, %v3444
    %v3467 = vadd.f32 %v3220, %v3446
    %v3468 = vadd.f32 %v3116, %v3342
    %v3469 = vadd.f32 %v3118, %v3344
    %v3470 = vadd.f32 %v3169, %v3395
    %v3471 = vadd.f32 %v3171, %v3397
    %v3472 = vadd.f32 %v3222, %v3448
    %v3473 = vadd.f32 %v3224, %v3450
    %v3474 = vadd.f32 %v3122, %v3348
    %v3475 = vadd.f32 %v3124, %v3350
    %v3476 = vadd.f32 %v3175, %v3401
    %v3477 = vadd.f32 %v3177, %v3403
    %v3478 = vadd.f32 %v3228, %v3454
    %v3479 = vadd.f32 %v3230, %v3456
    %v3480 = vadd.f32 %v3126, %v3352
    %v3481 = vadd.f32 %v3128, %v3354
    %v3482 = vadd.f32 %v3179, %v3405
    %v3483 = vadd.f32 %v3181, %v3407
    %v3484 = vadd.f32 %v3232, %v3458
    %v3485 = vadd.f32 %v3234, %v3460
    %s3486 = scalar_lea.vmem %s5, 48
    %v3487 = vld [vmem:[%s3486] sm:$0xf]
    %v3488 = vld [vmem:[%s3486 + $0x4] sm:$0xf]
    %v3489 = vld [vmem:[%s3486 + $0x8] sm:$0xf]
    %v3490 = vld [vmem:[%s3486 + $0xc] sm:$0xf]
    %v3495 = vunpack.c.l.b16 %v3487
    %v3496 = vunpack.c.l.b16 %v3488
    %v3497 = vunpack.c.l.b16 %v3489
    %v3498 = vunpack.c.l.b16 %v3490
    %v3499 = vpack.c.b16 %v3496, %v3495
    %v3500 = vpack.c.b16 %v3498, %v3497
    %3501 = vrot.lane.b32.xlu0 %v2825, 110
    %v3502 = vpop.permute.xlu0 %3501
    %3503 = vrot.lane.b32.xlu0 %v2826, 110
    %v3504 = vpop.permute.xlu0 %3503
    %3505 = vrot.lane.b32.xlu0 %v2827, 110
    %v3506 = vpop.permute.xlu0 %3505
    %3507 = vrot.lane.b32.xlu0 %v2828, 110
    %v3508 = vpop.permute.xlu0 %3507
    %3509 = vrot.lane.b32.xlu0 %v2829, 110
    %v3510 = vpop.permute.xlu0 %3509
    %3511 = vrot.lane.b32.xlu0 %v2830, 110
    %v3512 = vpop.permute.xlu0 %3511
    %3513 = vrot.lane.b32.xlu0 %v2831, 110
    %v3514 = vpop.permute.xlu0 %3513
    %3515 = vrot.lane.b32.xlu0 %v2832, 110
    %v3516 = vpop.permute.xlu0 %3515
    %3517 = vrot.lane.b32.xlu0 %v2833, 110
    %v3518 = vpop.permute.xlu0 %3517
    %3519 = vrot.lane.b32.xlu0 %v2834, 110
    %v3520 = vpop.permute.xlu0 %3519
    %3521 = vrot.lane.b32.xlu0 %v2835, 110
    %v3522 = vpop.permute.xlu0 %3521
    %3523 = vrot.lane.b32.xlu0 %v2836, 110
    %v3524 = vpop.permute.xlu0 %3523
    %v3525 = vsel %vm779, %v3502, %v3504
    %v3526 = vsel %vm779, %v3504, %v3506
    %v3527 = vsel %vm779, %v3506, %v3508
    %v3528 = vsel %vm779, %v3508, %v3510
    %v3529 = vsel %vm779, %v3510, %v3512
    %v3530 = vsel %vm779, %v3514, %v3516
    %v3531 = vsel %vm779, %v3516, %v3518
    %v3532 = vsel %vm779, %v3518, %v3520
    %v3533 = vsel %vm779, %v3520, %v3522
    %v3534 = vsel %vm779, %v3522, %v3524
    %v3548 = vsel %vm2883, %v3499, 0
    %v3551 = vsel %vm2883, %v3500, 0
    %3553 = vmatprep.subr.bf16.mxu0 0
    %3554 = vmatpush1.bf16.msra.mxu0 0
    %3555 = vmatprep.subr.bf16.mxu0 0
    %3556 = vmatpush1.bf16.msra.mxu0 0
    %3557 = vmatprep.subr.bf16.mxu0 0
    %3558 = vmatpush1.bf16.msra.mxu0 0
    %3559 = vmatprep.subr.bf16.mxu0 0
    %3560 = vmatpush1.bf16.msra.mxu0 0
    %3561 = vmatprep.subr.bf16.mxu0 0
    %3562 = vmatpush1.bf16.msra.mxu0 0
    %3563 = vmatprep.subr.bf16.mxu0 0
    %3564 = vmatpush1.bf16.msra.mxu0 0
    %3565 = vmatprep.subr.bf16.mxu0 %v3531
    %3566 = vmatpush1.bf16.msra.mxu0 %v3530
    %3567 = vmatprep.subr.bf16.mxu0 %v3526
    %3568 = vmatpush1.bf16.msra.mxu0 %v3525
    %3569 = vmatprep.subr.bf16.mxu0 0
    %3570 = vmatpush2.bf16.msra.mxu0 0
    %3571 = vmatprep.subr.bf16.mxu0 0
    %3572 = vmatpush2.bf16.msra.mxu0 0
    %3573 = vmatprep.subr.bf16.mxu0 0
    %3574 = vmatpush2.bf16.msra.mxu0 0
    %3575 = vmatprep.subr.bf16.mxu0 0
    %3576 = vmatpush2.bf16.msra.mxu0 0
    %3577 = vmatprep.subr.bf16.mxu0 0
    %3578 = vmatpush2.bf16.msra.mxu0 0
    %3579 = vmatprep.subr.bf16.mxu0 0
    %3580 = vmatpush2.bf16.msra.mxu0 0
    %3581 = vmatprep.subr.bf16.mxu0 0
    %3582 = vmatpush2.bf16.msra.mxu0 0
    %3583 = vmatprep.subr.bf16.mxu0 0
    %3584 = vmatpush2.bf16.msra.mxu0 0
    %3585 = vmatprep.mubr.bf16.mxu0 0
    %3586 = vmatmul.mubr.bf16.gmra.mxu0 %v3548
    %v3587 = vpop.f32.mrf.mxu0
    %v3588 = vadd.f32 0.0, %v3587
    %v3589 = vpop.f32.mrf.mxu0
    %v3590 = vadd.f32 0.0, %v3589
    %v3591 = vpop.f32.mrf.mxu0
    %v3592 = vadd.f32 0.0, %v3591
    %v3593 = vpop.f32.mrf.mxu0
    %v3594 = vadd.f32 0.0, %v3593
    %3595 = vmatprep.mubr.bf16.mxu0 0
    %3596 = vmatmul.mubr.bf16.gmra.mxu0 %v3551
    %v3597 = vpop.f32.mrf.mxu0
    %v3598 = vadd.f32 0.0, %v3597
    %v3599 = vpop.f32.mrf.mxu0
    %v3600 = vadd.f32 0.0, %v3599
    %v3601 = vpop.f32.mrf.mxu0
    %v3602 = vadd.f32 0.0, %v3601
    %v3603 = vpop.f32.mrf.mxu0
    %v3604 = vadd.f32 0.0, %v3603
    %3605 = vdwg.mxu0
    %3606 = vmatprep.subr.bf16.mxu0 0
    %3607 = vmatpush1.bf16.msra.mxu0 0
    %3608 = vmatprep.subr.bf16.mxu0 0
    %3609 = vmatpush1.bf16.msra.mxu0 0
    %3610 = vmatprep.subr.bf16.mxu0 0
    %3611 = vmatpush1.bf16.msra.mxu0 0
    %3612 = vmatprep.subr.bf16.mxu0 0
    %3613 = vmatpush1.bf16.msra.mxu0 0
    %3614 = vmatprep.subr.bf16.mxu0 0
    %3615 = vmatpush1.bf16.msra.mxu0 0
    %3616 = vmatprep.subr.bf16.mxu0 0
    %3617 = vmatpush1.bf16.msra.mxu0 0
    %3618 = vmatprep.subr.bf16.mxu0 %v3533
    %3619 = vmatpush1.bf16.msra.mxu0 %v3532
    %3620 = vmatprep.subr.bf16.mxu0 %v3528
    %3621 = vmatpush1.bf16.msra.mxu0 %v3527
    %3622 = vmatprep.subr.bf16.mxu0 0
    %3623 = vmatpush2.bf16.msra.mxu0 0
    %3624 = vmatprep.subr.bf16.mxu0 0
    %3625 = vmatpush2.bf16.msra.mxu0 0
    %3626 = vmatprep.subr.bf16.mxu0 0
    %3627 = vmatpush2.bf16.msra.mxu0 0
    %3628 = vmatprep.subr.bf16.mxu0 0
    %3629 = vmatpush2.bf16.msra.mxu0 0
    %3630 = vmatprep.subr.bf16.mxu0 0
    %3631 = vmatpush2.bf16.msra.mxu0 0
    %3632 = vmatprep.subr.bf16.mxu0 0
    %3633 = vmatpush2.bf16.msra.mxu0 0
    %3634 = vmatprep.subr.bf16.mxu0 0
    %3635 = vmatpush2.bf16.msra.mxu0 0
    %3636 = vmatprep.subr.bf16.mxu0 0
    %3637 = vmatpush2.bf16.msra.mxu0 0
    %3638 = vmatprep.mubr.bf16.mxu0 0
    %3639 = vmatmul.mubr.bf16.gmra.mxu0 %v3548
    %v3640 = vpop.f32.mrf.mxu0
    %v3641 = vadd.f32 0.0, %v3640
    %v3642 = vpop.f32.mrf.mxu0
    %v3643 = vadd.f32 0.0, %v3642
    %v3644 = vpop.f32.mrf.mxu0
    %v3645 = vadd.f32 0.0, %v3644
    %v3646 = vpop.f32.mrf.mxu0
    %v3647 = vadd.f32 0.0, %v3646
    %3648 = vmatprep.mubr.bf16.mxu0 0
    %3649 = vmatmul.mubr.bf16.gmra.mxu0 %v3551
    %v3650 = vpop.f32.mrf.mxu0
    %v3651 = vadd.f32 0.0, %v3650
    %v3652 = vpop.f32.mrf.mxu0
    %v3653 = vadd.f32 0.0, %v3652
    %v3654 = vpop.f32.mrf.mxu0
    %v3655 = vadd.f32 0.0, %v3654
    %v3656 = vpop.f32.mrf.mxu0
    %v3657 = vadd.f32 0.0, %v3656
    %3658 = vdwg.mxu0
    %3659 = vmatprep.subr.bf16.mxu0 0
    %3660 = vmatpush1.bf16.msra.mxu0 0
    %3661 = vmatprep.subr.bf16.mxu0 0
    %3662 = vmatpush1.bf16.msra.mxu0 0
    %3663 = vmatprep.subr.bf16.mxu0 0
    %3664 = vmatpush1.bf16.msra.mxu0 0
    %3665 = vmatprep.subr.bf16.mxu0 0
    %3666 = vmatpush1.bf16.msra.mxu0 0
    %3667 = vmatprep.subr.bf16.mxu0 0
    %3668 = vmatpush1.bf16.msra.mxu0 0
    %3669 = vmatprep.subr.bf16.mxu0 0
    %3670 = vmatpush1.bf16.msra.mxu0 0
    %3671 = vmatprep.subr.bf16.mxu0 %v3524
    %3672 = vmatpush1.bf16.msra.mxu0 %v3534
    %3673 = vmatprep.subr.bf16.mxu0 %v3512
    %3674 = vmatpush1.bf16.msra.mxu0 %v3529
    %3675 = vmatprep.subr.bf16.mxu0 0
    %3676 = vmatpush2.bf16.msra.mxu0 0
    %3677 = vmatprep.subr.bf16.mxu0 0
    %3678 = vmatpush2.bf16.msra.mxu0 0
    %3679 = vmatprep.subr.bf16.mxu0 0
    %3680 = vmatpush2.bf16.msra.mxu0 0
    %3681 = vmatprep.subr.bf16.mxu0 0
    %3682 = vmatpush2.bf16.msra.mxu0 0
    %3683 = vmatprep.subr.bf16.mxu0 0
    %3684 = vmatpush2.bf16.msra.mxu0 0
    %3685 = vmatprep.subr.bf16.mxu0 0
    %3686 = vmatpush2.bf16.msra.mxu0 0
    %3687 = vmatprep.subr.bf16.mxu0 0
    %3688 = vmatpush2.bf16.msra.mxu0 0
    %3689 = vmatprep.subr.bf16.mxu0 0
    %3690 = vmatpush2.bf16.msra.mxu0 0
    %3691 = vmatprep.mubr.bf16.mxu0 0
    %3692 = vmatmul.mubr.bf16.gmra.mxu0 %v3548
    %v3693 = vpop.f32.mrf.mxu0
    %v3694 = vadd.f32 0.0, %v3693
    %v3695 = vpop.f32.mrf.mxu0
    %v3696 = vadd.f32 0.0, %v3695
    %v3697 = vpop.f32.mrf.mxu0
    %v3698 = vadd.f32 0.0, %v3697
    %v3699 = vpop.f32.mrf.mxu0
    %v3700 = vadd.f32 0.0, %v3699
    %3701 = vmatprep.mubr.bf16.mxu0 0
    %3702 = vmatmul.mubr.bf16.gmra.mxu0 %v3551
    %v3703 = vpop.f32.mrf.mxu0
    %v3704 = vadd.f32 0.0, %v3703
    %v3705 = vpop.f32.mrf.mxu0
    %v3706 = vadd.f32 0.0, %v3705
    %v3707 = vpop.f32.mrf.mxu0
    %v3708 = vadd.f32 0.0, %v3707
    %v3709 = vpop.f32.mrf.mxu0
    %v3710 = vadd.f32 0.0, %v3709
    %3711 = vdwg.mxu0
    %v3712 = vadd.f32 %v3462, %v3588
    %v3713 = vadd.f32 %v3463, %v3590
    %v3714 = vadd.f32 %v3464, %v3641
    %v3715 = vadd.f32 %v3465, %v3643
    %v3716 = vadd.f32 %v3466, %v3694
    %v3717 = vadd.f32 %v3467, %v3696
    %v3718 = vadd.f32 %v3468, %v3592
    %v3719 = vadd.f32 %v3469, %v3594
    %v3720 = vadd.f32 %v3470, %v3645
    %v3721 = vadd.f32 %v3471, %v3647
    %v3722 = vadd.f32 %v3472, %v3698
    %v3723 = vadd.f32 %v3473, %v3700
    %v3724 = vadd.f32 %v3474, %v3598
    %v3725 = vadd.f32 %v3475, %v3600
    %v3726 = vadd.f32 %v3476, %v3651
    %v3727 = vadd.f32 %v3477, %v3653
    %v3728 = vadd.f32 %v3478, %v3704
    %v3729 = vadd.f32 %v3479, %v3706
    %v3730 = vadd.f32 %v3480, %v3602
    %v3731 = vadd.f32 %v3481, %v3604
    %v3732 = vadd.f32 %v3482, %v3655
    %v3733 = vadd.f32 %v3483, %v3657
    %v3734 = vadd.f32 %v3484, %v3708
    %v3735 = vadd.f32 %v3485, %v3710
    %s3736 = scalar_lea.vmem %s5, 64
    %v3737 = vld [vmem:[%s3736] sm:$0xf]
    %v3738 = vld [vmem:[%s3736 + $0x4] sm:$0xf]
    %v3739 = vld [vmem:[%s3736 + $0x8] sm:$0xf]
    %v3740 = vld [vmem:[%s3736 + $0xc] sm:$0xf]
    %v3745 = vunpack.c.l.b16 %v3737
    %v3746 = vunpack.c.l.b16 %v3738
    %v3747 = vunpack.c.l.b16 %v3739
    %v3748 = vunpack.c.l.b16 %v3740
    %v3749 = vpack.c.b16 %v3746, %v3745
    %v3750 = vpack.c.b16 %v3748, %v3747
    %3751 = vrot.lane.b32.xlu0 %v2825, 109
    %v3752 = vpop.permute.xlu0 %3751
    %3753 = vrot.lane.b32.xlu0 %v2826, 109
    %v3754 = vpop.permute.xlu0 %3753
    %3755 = vrot.lane.b32.xlu0 %v2827, 109
    %v3756 = vpop.permute.xlu0 %3755
    %3757 = vrot.lane.b32.xlu0 %v2828, 109
    %v3758 = vpop.permute.xlu0 %3757
    %3759 = vrot.lane.b32.xlu0 %v2829, 109
    %v3760 = vpop.permute.xlu0 %3759
    %3761 = vrot.lane.b32.xlu0 %v2830, 109
    %v3762 = vpop.permute.xlu0 %3761
    %3763 = vrot.lane.b32.xlu0 %v2831, 109
    %v3764 = vpop.permute.xlu0 %3763
    %3765 = vrot.lane.b32.xlu0 %v2832, 109
    %v3766 = vpop.permute.xlu0 %3765
    %3767 = vrot.lane.b32.xlu0 %v2833, 109
    %v3768 = vpop.permute.xlu0 %3767
    %3769 = vrot.lane.b32.xlu0 %v2834, 109
    %v3770 = vpop.permute.xlu0 %3769
    %3771 = vrot.lane.b32.xlu0 %v2835, 109
    %v3772 = vpop.permute.xlu0 %3771
    %3773 = vrot.lane.b32.xlu0 %v2836, 109
    %v3774 = vpop.permute.xlu0 %3773
    %v3775 = vsel %vm1019, %v3752, %v3754
    %v3776 = vsel %vm1019, %v3754, %v3756
    %v3777 = vsel %vm1019, %v3756, %v3758
    %v3778 = vsel %vm1019, %v3758, %v3760
    %v3779 = vsel %vm1019, %v3760, %v3762
    %v3780 = vsel %vm1019, %v3764, %v3766
    %v3781 = vsel %vm1019, %v3766, %v3768
    %v3782 = vsel %vm1019, %v3768, %v3770
    %v3783 = vsel %vm1019, %v3770, %v3772
    %v3784 = vsel %vm1019, %v3772, %v3774
    %v3798 = vsel %vm2883, %v3749, 0
    %v3801 = vsel %vm2883, %v3750, 0
    %3803 = vmatprep.subr.bf16.mxu0 0
    %3804 = vmatpush1.bf16.msra.mxu0 0
    %3805 = vmatprep.subr.bf16.mxu0 0
    %3806 = vmatpush1.bf16.msra.mxu0 0
    %3807 = vmatprep.subr.bf16.mxu0 0
    %3808 = vmatpush1.bf16.msra.mxu0 0
    %3809 = vmatprep.subr.bf16.mxu0 0
    %3810 = vmatpush1.bf16.msra.mxu0 0
    %3811 = vmatprep.subr.bf16.mxu0 0
    %3812 = vmatpush1.bf16.msra.mxu0 0
    %3813 = vmatprep.subr.bf16.mxu0 0
    %3814 = vmatpush1.bf16.msra.mxu0 0
    %3815 = vmatprep.subr.bf16.mxu0 %v3781
    %3816 = vmatpush1.bf16.msra.mxu0 %v3780
    %3817 = vmatprep.subr.bf16.mxu0 %v3776
    %3818 = vmatpush1.bf16.msra.mxu0 %v3775
    %3819 = vmatprep.subr.bf16.mxu0 0
    %3820 = vmatpush2.bf16.msra.mxu0 0
    %3821 = vmatprep.subr.bf16.mxu0 0
    %3822 = vmatpush2.bf16.msra.mxu0 0
    %3823 = vmatprep.subr.bf16.mxu0 0
    %3824 = vmatpush2.bf16.msra.mxu0 0
    %3825 = vmatprep.subr.bf16.mxu0 0
    %3826 = vmatpush2.bf16.msra.mxu0 0
    %3827 = vmatprep.subr.bf16.mxu0 0
    %3828 = vmatpush2.bf16.msra.mxu0 0
    %3829 = vmatprep.subr.bf16.mxu0 0
    %3830 = vmatpush2.bf16.msra.mxu0 0
    %3831 = vmatprep.subr.bf16.mxu0 0
    %3832 = vmatpush2.bf16.msra.mxu0 0
    %3833 = vmatprep.subr.bf16.mxu0 0
    %3834 = vmatpush2.bf16.msra.mxu0 0
    %3835 = vmatprep.mubr.bf16.mxu0 0
    %3836 = vmatmul.mubr.bf16.gmra.mxu0 %v3798
    %v3837 = vpop.f32.mrf.mxu0
    %v3838 = vadd.f32 0.0, %v3837
    %v3839 = vpop.f32.mrf.mxu0
    %v3840 = vadd.f32 0.0, %v3839
    %v3841 = vpop.f32.mrf.mxu0
    %v3842 = vadd.f32 0.0, %v3841
    %v3843 = vpop.f32.mrf.mxu0
    %v3844 = vadd.f32 0.0, %v3843
    %3845 = vmatprep.mubr.bf16.mxu0 0
    %3846 = vmatmul.mubr.bf16.gmra.mxu0 %v3801
    %v3847 = vpop.f32.mrf.mxu0
    %v3848 = vadd.f32 0.0, %v3847
    %v3849 = vpop.f32.mrf.mxu0
    %v3850 = vadd.f32 0.0, %v3849
    %v3851 = vpop.f32.mrf.mxu0
    %v3852 = vadd.f32 0.0, %v3851
    %v3853 = vpop.f32.mrf.mxu0
    %v3854 = vadd.f32 0.0, %v3853
    %3855 = vdwg.mxu0
    %3856 = vmatprep.subr.bf16.mxu0 0
    %3857 = vmatpush1.bf16.msra.mxu0 0
    %3858 = vmatprep.subr.bf16.mxu0 0
    %3859 = vmatpush1.bf16.msra.mxu0 0
    %3860 = vmatprep.subr.bf16.mxu0 0
    %3861 = vmatpush1.bf16.msra.mxu0 0
    %3862 = vmatprep.subr.bf16.mxu0 0
    %3863 = vmatpush1.bf16.msra.mxu0 0
    %3864 = vmatprep.subr.bf16.mxu0 0
    %3865 = vmatpush1.bf16.msra.mxu0 0
    %3866 = vmatprep.subr.bf16.mxu0 0
    %3867 = vmatpush1.bf16.msra.mxu0 0
    %3868 = vmatprep.subr.bf16.mxu0 %v3783
    %3869 = vmatpush1.bf16.msra.mxu0 %v3782
    %3870 = vmatprep.subr.bf16.mxu0 %v3778
    %3871 = vmatpush1.bf16.msra.mxu0 %v3777
    %3872 = vmatprep.subr.bf16.mxu0 0
    %3873 = vmatpush2.bf16.msra.mxu0 0
    %3874 = vmatprep.subr.bf16.mxu0 0
    %3875 = vmatpush2.bf16.msra.mxu0 0
    %3876 = vmatprep.subr.bf16.mxu0 0
    %3877 = vmatpush2.bf16.msra.mxu0 0
    %3878 = vmatprep.subr.bf16.mxu0 0
    %3879 = vmatpush2.bf16.msra.mxu0 0
    %3880 = vmatprep.subr.bf16.mxu0 0
    %3881 = vmatpush2.bf16.msra.mxu0 0
    %3882 = vmatprep.subr.bf16.mxu0 0
    %3883 = vmatpush2.bf16.msra.mxu0 0
    %3884 = vmatprep.subr.bf16.mxu0 0
    %3885 = vmatpush2.bf16.msra.mxu0 0
    %3886 = vmatprep.subr.bf16.mxu0 0
    %3887 = vmatpush2.bf16.msra.mxu0 0
    %3888 = vmatprep.mubr.bf16.mxu0 0
    %3889 = vmatmul.mubr.bf16.gmra.mxu0 %v3798
    %v3890 = vpop.f32.mrf.mxu0
    %v3891 = vadd.f32 0.0, %v3890
    %v3892 = vpop.f32.mrf.mxu0
    %v3893 = vadd.f32 0.0, %v3892
    %v3894 = vpop.f32.mrf.mxu0
    %v3895 = vadd.f32 0.0, %v3894
    %v3896 = vpop.f32.mrf.mxu0
    %v3897 = vadd.f32 0.0, %v3896
    %3898 = vmatprep.mubr.bf16.mxu0 0
    %3899 = vmatmul.mubr.bf16.gmra.mxu0 %v3801
    %v3900 = vpop.f32.mrf.mxu0
    %v3901 = vadd.f32 0.0, %v3900
    %v3902 = vpop.f32.mrf.mxu0
    %v3903 = vadd.f32 0.0, %v3902
    %v3904 = vpop.f32.mrf.mxu0
    %v3905 = vadd.f32 0.0, %v3904
    %v3906 = vpop.f32.mrf.mxu0
    %v3907 = vadd.f32 0.0, %v3906
    %3908 = vdwg.mxu0
    %3909 = vmatprep.subr.bf16.mxu0 0
    %3910 = vmatpush1.bf16.msra.mxu0 0
    %3911 = vmatprep.subr.bf16.mxu0 0
    %3912 = vmatpush1.bf16.msra.mxu0 0
    %3913 = vmatprep.subr.bf16.mxu0 0
    %3914 = vmatpush1.bf16.msra.mxu0 0
    %3915 = vmatprep.subr.bf16.mxu0 0
    %3916 = vmatpush1.bf16.msra.mxu0 0
    %3917 = vmatprep.subr.bf16.mxu0 0
    %3918 = vmatpush1.bf16.msra.mxu0 0
    %3919 = vmatprep.subr.bf16.mxu0 0
    %3920 = vmatpush1.bf16.msra.mxu0 0
    %3921 = vmatprep.subr.bf16.mxu0 %v3774
    %3922 = vmatpush1.bf16.msra.mxu0 %v3784
    %3923 = vmatprep.subr.bf16.mxu0 %v3762
    %3924 = vmatpush1.bf16.msra.mxu0 %v3779
    %3925 = vmatprep.subr.bf16.mxu0 0
    %3926 = vmatpush2.bf16.msra.mxu0 0
    %3927 = vmatprep.subr.bf16.mxu0 0
    %3928 = vmatpush2.bf16.msra.mxu0 0
    %3929 = vmatprep.subr.bf16.mxu0 0
    %3930 = vmatpush2.bf16.msra.mxu0 0
    %3931 = vmatprep.subr.bf16.mxu0 0
    %3932 = vmatpush2.bf16.msra.mxu0 0
    %3933 = vmatprep.subr.bf16.mxu0 0
    %3934 = vmatpush2.bf16.msra.mxu0 0
    %3935 = vmatprep.subr.bf16.mxu0 0
    %3936 = vmatpush2.bf16.msra.mxu0 0
    %3937 = vmatprep.subr.bf16.mxu0 0
    %3938 = vmatpush2.bf16.msra.mxu0 0
    %3939 = vmatprep.subr.bf16.mxu0 0
    %3940 = vmatpush2.bf16.msra.mxu0 0
    %3941 = vmatprep.mubr.bf16.mxu0 0
    %3942 = vmatmul.mubr.bf16.gmra.mxu0 %v3798
    %v3943 = vpop.f32.mrf.mxu0
    %v3944 = vadd.f32 0.0, %v3943
    %v3945 = vpop.f32.mrf.mxu0
    %v3946 = vadd.f32 0.0, %v3945
    %v3947 = vpop.f32.mrf.mxu0
    %v3948 = vadd.f32 0.0, %v3947
    %v3949 = vpop.f32.mrf.mxu0
    %v3950 = vadd.f32 0.0, %v3949
    %3951 = vmatprep.mubr.bf16.mxu0 0
    %3952 = vmatmul.mubr.bf16.gmra.mxu0 %v3801
    %v3953 = vpop.f32.mrf.mxu0
    %v3954 = vadd.f32 0.0, %v3953
    %v3955 = vpop.f32.mrf.mxu0
    %v3956 = vadd.f32 0.0, %v3955
    %v3957 = vpop.f32.mrf.mxu0
    %v3958 = vadd.f32 0.0, %v3957
    %v3959 = vpop.f32.mrf.mxu0
    %v3960 = vadd.f32 0.0, %v3959
    %3961 = vdwg.mxu0
    %v3962 = vadd.f32 %v3712, %v3838
    %v3963 = vadd.f32 %v3713, %v3840
    %v3964 = vadd.f32 %v3714, %v3891
    %v3965 = vadd.f32 %v3715, %v3893
    %v3966 = vadd.f32 %v3716, %v3944
    %v3967 = vadd.f32 %v3717, %v3946
    %v3968 = vadd.f32 %v3718, %v3842
    %v3969 = vadd.f32 %v3719, %v3844
    %v3970 = vadd.f32 %v3720, %v3895
    %v3971 = vadd.f32 %v3721, %v3897
    %v3972 = vadd.f32 %v3722, %v3948
    %v3973 = vadd.f32 %v3723, %v3950
    %v3974 = vadd.f32 %v3724, %v3848
    %v3975 = vadd.f32 %v3725, %v3850
    %v3976 = vadd.f32 %v3726, %v3901
    %v3977 = vadd.f32 %v3727, %v3903
    %v3978 = vadd.f32 %v3728, %v3954
    %v3979 = vadd.f32 %v3729, %v3956
    %v3980 = vadd.f32 %v3730, %v3852
    %v3981 = vadd.f32 %v3731, %v3854
    %v3982 = vadd.f32 %v3732, %v3905
    %v3983 = vadd.f32 %v3733, %v3907
    %v3984 = vadd.f32 %v3734, %v3958
    %v3985 = vadd.f32 %v3735, %v3960
    %s3986 = scalar_lea.vmem %s5, 80
    %v3987 = vld [vmem:[%s3986] sm:$0xf]
    %v3988 = vld [vmem:[%s3986 + $0x4] sm:$0xf]
    %v3989 = vld [vmem:[%s3986 + $0x8] sm:$0xf]
    %v3990 = vld [vmem:[%s3986 + $0xc] sm:$0xf]
    %v3995 = vunpack.c.l.b16 %v3987
    %v3996 = vunpack.c.l.b16 %v3988
    %v3997 = vunpack.c.l.b16 %v3989
    %v3998 = vunpack.c.l.b16 %v3990
    %v3999 = vpack.c.b16 %v3996, %v3995
    %v4000 = vpack.c.b16 %v3998, %v3997
    %4001 = vrot.lane.b32.xlu0 %v2825, 108
    %v4002 = vpop.permute.xlu0 %4001
    %4003 = vrot.lane.b32.xlu0 %v2826, 108
    %v4004 = vpop.permute.xlu0 %4003
    %4005 = vrot.lane.b32.xlu0 %v2827, 108
    %v4006 = vpop.permute.xlu0 %4005
    %4007 = vrot.lane.b32.xlu0 %v2828, 108
    %v4008 = vpop.permute.xlu0 %4007
    %4009 = vrot.lane.b32.xlu0 %v2829, 108
    %v4010 = vpop.permute.xlu0 %4009
    %4011 = vrot.lane.b32.xlu0 %v2830, 108
    %v4012 = vpop.permute.xlu0 %4011
    %4013 = vrot.lane.b32.xlu0 %v2831, 108
    %v4014 = vpop.permute.xlu0 %4013
    %4015 = vrot.lane.b32.xlu0 %v2832, 108
    %v4016 = vpop.permute.xlu0 %4015
    %4017 = vrot.lane.b32.xlu0 %v2833, 108
    %v4018 = vpop.permute.xlu0 %4017
    %4019 = vrot.lane.b32.xlu0 %v2834, 108
    %v4020 = vpop.permute.xlu0 %4019
    %4021 = vrot.lane.b32.xlu0 %v2835, 108
    %v4022 = vpop.permute.xlu0 %4021
    %4023 = vrot.lane.b32.xlu0 %v2836, 108
    %v4024 = vpop.permute.xlu0 %4023
    %v4025 = vsel %vm1259, %v4002, %v4004
    %v4026 = vsel %vm1259, %v4004, %v4006
    %v4027 = vsel %vm1259, %v4006, %v4008
    %v4028 = vsel %vm1259, %v4008, %v4010
    %v4029 = vsel %vm1259, %v4010, %v4012
    %v4030 = vsel %vm1259, %v4014, %v4016
    %v4031 = vsel %vm1259, %v4016, %v4018
    %v4032 = vsel %vm1259, %v4018, %v4020
    %v4033 = vsel %vm1259, %v4020, %v4022
    %v4034 = vsel %vm1259, %v4022, %v4024
    %v4048 = vsel %vm2883, %v3999, 0
    %v4051 = vsel %vm2883, %v4000, 0
    %4053 = vmatprep.subr.bf16.mxu0 0
    %4054 = vmatpush1.bf16.msra.mxu0 0
    %4055 = vmatprep.subr.bf16.mxu0 0
    %4056 = vmatpush1.bf16.msra.mxu0 0
    %4057 = vmatprep.subr.bf16.mxu0 0
    %4058 = vmatpush1.bf16.msra.mxu0 0
    %4059 = vmatprep.subr.bf16.mxu0 0
    %4060 = vmatpush1.bf16.msra.mxu0 0
    %4061 = vmatprep.subr.bf16.mxu0 0
    %4062 = vmatpush1.bf16.msra.mxu0 0
    %4063 = vmatprep.subr.bf16.mxu0 0
    %4064 = vmatpush1.bf16.msra.mxu0 0
    %4065 = vmatprep.subr.bf16.mxu0 %v4031
    %4066 = vmatpush1.bf16.msra.mxu0 %v4030
    %4067 = vmatprep.subr.bf16.mxu0 %v4026
    %4068 = vmatpush1.bf16.msra.mxu0 %v4025
    %4069 = vmatprep.subr.bf16.mxu0 0
    %4070 = vmatpush2.bf16.msra.mxu0 0
    %4071 = vmatprep.subr.bf16.mxu0 0
    %4072 = vmatpush2.bf16.msra.mxu0 0
    %4073 = vmatprep.subr.bf16.mxu0 0
    %4074 = vmatpush2.bf16.msra.mxu0 0
    %4075 = vmatprep.subr.bf16.mxu0 0
    %4076 = vmatpush2.bf16.msra.mxu0 0
    %4077 = vmatprep.subr.bf16.mxu0 0
    %4078 = vmatpush2.bf16.msra.mxu0 0
    %4079 = vmatprep.subr.bf16.mxu0 0
    %4080 = vmatpush2.bf16.msra.mxu0 0
    %4081 = vmatprep.subr.bf16.mxu0 0
    %4082 = vmatpush2.bf16.msra.mxu0 0
    %4083 = vmatprep.subr.bf16.mxu0 0
    %4084 = vmatpush2.bf16.msra.mxu0 0
    %4085 = vmatprep.mubr.bf16.mxu0 0
    %4086 = vmatmul.mubr.bf16.gmra.mxu0 %v4048
    %v4087 = vpop.f32.mrf.mxu0
    %v4088 = vadd.f32 0.0, %v4087
    %v4089 = vpop.f32.mrf.mxu0
    %v4090 = vadd.f32 0.0, %v4089
    %v4091 = vpop.f32.mrf.mxu0
    %v4092 = vadd.f32 0.0, %v4091
    %v4093 = vpop.f32.mrf.mxu0
    %v4094 = vadd.f32 0.0, %v4093
    %4095 = vmatprep.mubr.bf16.mxu0 0
    %4096 = vmatmul.mubr.bf16.gmra.mxu0 %v4051
    %v4097 = vpop.f32.mrf.mxu0
    %v4098 = vadd.f32 0.0, %v4097
    %v4099 = vpop.f32.mrf.mxu0
    %v4100 = vadd.f32 0.0, %v4099
    %v4101 = vpop.f32.mrf.mxu0
    %v4102 = vadd.f32 0.0, %v4101
    %v4103 = vpop.f32.mrf.mxu0
    %v4104 = vadd.f32 0.0, %v4103
    %4105 = vdwg.mxu0
    %4106 = vmatprep.subr.bf16.mxu0 0
    %4107 = vmatpush1.bf16.msra.mxu0 0
    %4108 = vmatprep.subr.bf16.mxu0 0
    %4109 = vmatpush1.bf16.msra.mxu0 0
    %4110 = vmatprep.subr.bf16.mxu0 0
    %4111 = vmatpush1.bf16.msra.mxu0 0
    %4112 = vmatprep.subr.bf16.mxu0 0
    %4113 = vmatpush1.bf16.msra.mxu0 0
    %4114 = vmatprep.subr.bf16.mxu0 0
    %4115 = vmatpush1.bf16.msra.mxu0 0
    %4116 = vmatprep.subr.bf16.mxu0 0
    %4117 = vmatpush1.bf16.msra.mxu0 0
    %4118 = vmatprep.subr.bf16.mxu0 %v4033
    %4119 = vmatpush1.bf16.msra.mxu0 %v4032
    %4120 = vmatprep.subr.bf16.mxu0 %v4028
    %4121 = vmatpush1.bf16.msra.mxu0 %v4027
    %4122 = vmatprep.subr.bf16.mxu0 0
    %4123 = vmatpush2.bf16.msra.mxu0 0
    %4124 = vmatprep.subr.bf16.mxu0 0
    %4125 = vmatpush2.bf16.msra.mxu0 0
    %4126 = vmatprep.subr.bf16.mxu0 0
    %4127 = vmatpush2.bf16.msra.mxu0 0
    %4128 = vmatprep.subr.bf16.mxu0 0
    %4129 = vmatpush2.bf16.msra.mxu0 0
    %4130 = vmatprep.subr.bf16.mxu0 0
    %4131 = vmatpush2.bf16.msra.mxu0 0
    %4132 = vmatprep.subr.bf16.mxu0 0
    %4133 = vmatpush2.bf16.msra.mxu0 0
    %4134 = vmatprep.subr.bf16.mxu0 0
    %4135 = vmatpush2.bf16.msra.mxu0 0
    %4136 = vmatprep.subr.bf16.mxu0 0
    %4137 = vmatpush2.bf16.msra.mxu0 0
    %4138 = vmatprep.mubr.bf16.mxu0 0
    %4139 = vmatmul.mubr.bf16.gmra.mxu0 %v4048
    %v4140 = vpop.f32.mrf.mxu0
    %v4141 = vadd.f32 0.0, %v4140
    %v4142 = vpop.f32.mrf.mxu0
    %v4143 = vadd.f32 0.0, %v4142
    %v4144 = vpop.f32.mrf.mxu0
    %v4145 = vadd.f32 0.0, %v4144
    %v4146 = vpop.f32.mrf.mxu0
    %v4147 = vadd.f32 0.0, %v4146
    %4148 = vmatprep.mubr.bf16.mxu0 0
    %4149 = vmatmul.mubr.bf16.gmra.mxu0 %v4051
    %v4150 = vpop.f32.mrf.mxu0
    %v4151 = vadd.f32 0.0, %v4150
    %v4152 = vpop.f32.mrf.mxu0
    %v4153 = vadd.f32 0.0, %v4152
    %v4154 = vpop.f32.mrf.mxu0
    %v4155 = vadd.f32 0.0, %v4154
    %v4156 = vpop.f32.mrf.mxu0
    %v4157 = vadd.f32 0.0, %v4156
    %4158 = vdwg.mxu0
    %4159 = vmatprep.subr.bf16.mxu0 0
    %4160 = vmatpush1.bf16.msra.mxu0 0
    %4161 = vmatprep.subr.bf16.mxu0 0
    %4162 = vmatpush1.bf16.msra.mxu0 0
    %4163 = vmatprep.subr.bf16.mxu0 0
    %4164 = vmatpush1.bf16.msra.mxu0 0
    %4165 = vmatprep.subr.bf16.mxu0 0
    %4166 = vmatpush1.bf16.msra.mxu0 0
    %4167 = vmatprep.subr.bf16.mxu0 0
    %4168 = vmatpush1.bf16.msra.mxu0 0
    %4169 = vmatprep.subr.bf16.mxu0 0
    %4170 = vmatpush1.bf16.msra.mxu0 0
    %4171 = vmatprep.subr.bf16.mxu0 %v4024
    %4172 = vmatpush1.bf16.msra.mxu0 %v4034
    %4173 = vmatprep.subr.bf16.mxu0 %v4012
    %4174 = vmatpush1.bf16.msra.mxu0 %v4029
    %4175 = vmatprep.subr.bf16.mxu0 0
    %4176 = vmatpush2.bf16.msra.mxu0 0
    %4177 = vmatprep.subr.bf16.mxu0 0
    %4178 = vmatpush2.bf16.msra.mxu0 0
    %4179 = vmatprep.subr.bf16.mxu0 0
    %4180 = vmatpush2.bf16.msra.mxu0 0
    %4181 = vmatprep.subr.bf16.mxu0 0
    %4182 = vmatpush2.bf16.msra.mxu0 0
    %4183 = vmatprep.subr.bf16.mxu0 0
    %4184 = vmatpush2.bf16.msra.mxu0 0
    %4185 = vmatprep.subr.bf16.mxu0 0
    %4186 = vmatpush2.bf16.msra.mxu0 0
    %4187 = vmatprep.subr.bf16.mxu0 0
    %4188 = vmatpush2.bf16.msra.mxu0 0
    %4189 = vmatprep.subr.bf16.mxu0 0
    %4190 = vmatpush2.bf16.msra.mxu0 0
    %4191 = vmatprep.mubr.bf16.mxu0 0
    %4192 = vmatmul.mubr.bf16.gmra.mxu0 %v4048
    %v4193 = vpop.f32.mrf.mxu0
    %v4194 = vadd.f32 0.0, %v4193
    %v4195 = vpop.f32.mrf.mxu0
    %v4196 = vadd.f32 0.0, %v4195
    %v4197 = vpop.f32.mrf.mxu0
    %v4198 = vadd.f32 0.0, %v4197
    %v4199 = vpop.f32.mrf.mxu0
    %v4200 = vadd.f32 0.0, %v4199
    %4201 = vmatprep.mubr.bf16.mxu0 0
    %4202 = vmatmul.mubr.bf16.gmra.mxu0 %v4051
    %v4203 = vpop.f32.mrf.mxu0
    %v4204 = vadd.f32 0.0, %v4203
    %v4205 = vpop.f32.mrf.mxu0
    %v4206 = vadd.f32 0.0, %v4205
    %v4207 = vpop.f32.mrf.mxu0
    %v4208 = vadd.f32 0.0, %v4207
    %v4209 = vpop.f32.mrf.mxu0
    %v4210 = vadd.f32 0.0, %v4209
    %4211 = vdwg.mxu0
    %v4212 = vadd.f32 %v3962, %v4088
    %v4213 = vadd.f32 %v3963, %v4090
    %v4214 = vadd.f32 %v3964, %v4141
    %v4215 = vadd.f32 %v3965, %v4143
    %v4216 = vadd.f32 %v3966, %v4194
    %v4217 = vadd.f32 %v3967, %v4196
    %v4218 = vadd.f32 %v3968, %v4092
    %v4219 = vadd.f32 %v3969, %v4094
    %v4220 = vadd.f32 %v3970, %v4145
    %v4221 = vadd.f32 %v3971, %v4147
    %v4222 = vadd.f32 %v3972, %v4198
    %v4223 = vadd.f32 %v3973, %v4200
    %v4224 = vadd.f32 %v3974, %v4098
    %v4225 = vadd.f32 %v3975, %v4100
    %v4226 = vadd.f32 %v3976, %v4151
    %v4227 = vadd.f32 %v3977, %v4153
    %v4228 = vadd.f32 %v3978, %v4204
    %v4229 = vadd.f32 %v3979, %v4206
    %v4230 = vadd.f32 %v3980, %v4102
    %v4231 = vadd.f32 %v3981, %v4104
    %v4232 = vadd.f32 %v3982, %v4155
    %v4233 = vadd.f32 %v3983, %v4157
    %v4234 = vadd.f32 %v3984, %v4208
    %v4235 = vadd.f32 %v3985, %v4210
    %s4236 = scalar_lea.vmem %s5, 96
    %v4237 = vld [vmem:[%s4236] sm:$0xf]
    %v4238 = vld [vmem:[%s4236 + $0x4] sm:$0xf]
    %v4239 = vld [vmem:[%s4236 + $0x8] sm:$0xf]
    %v4240 = vld [vmem:[%s4236 + $0xc] sm:$0xf]
    %v4245 = vunpack.c.l.b16 %v4237
    %v4246 = vunpack.c.l.b16 %v4238
    %v4247 = vunpack.c.l.b16 %v4239
    %v4248 = vunpack.c.l.b16 %v4240
    %v4249 = vpack.c.b16 %v4246, %v4245
    %v4250 = vpack.c.b16 %v4248, %v4247
    %4251 = vrot.lane.b32.xlu0 %v2825, 92
    %v4252 = vpop.permute.xlu0 %4251
    %4253 = vrot.lane.b32.xlu0 %v2826, 92
    %v4254 = vpop.permute.xlu0 %4253
    %4255 = vrot.lane.b32.xlu0 %v2827, 92
    %v4256 = vpop.permute.xlu0 %4255
    %4257 = vrot.lane.b32.xlu0 %v2828, 92
    %v4258 = vpop.permute.xlu0 %4257
    %4259 = vrot.lane.b32.xlu0 %v2829, 92
    %v4260 = vpop.permute.xlu0 %4259
    %4261 = vrot.lane.b32.xlu0 %v2830, 92
    %v4262 = vpop.permute.xlu0 %4261
    %4263 = vrot.lane.b32.xlu0 %v2831, 92
    %v4264 = vpop.permute.xlu0 %4263
    %4265 = vrot.lane.b32.xlu0 %v2832, 92
    %v4266 = vpop.permute.xlu0 %4265
    %4267 = vrot.lane.b32.xlu0 %v2833, 92
    %v4268 = vpop.permute.xlu0 %4267
    %4269 = vrot.lane.b32.xlu0 %v2834, 92
    %v4270 = vpop.permute.xlu0 %4269
    %4271 = vrot.lane.b32.xlu0 %v2835, 92
    %v4272 = vpop.permute.xlu0 %4271
    %4273 = vrot.lane.b32.xlu0 %v2836, 92
    %v4274 = vpop.permute.xlu0 %4273
    %v4275 = vsel %vm1499, %v4252, %v4254
    %v4276 = vsel %vm1499, %v4254, %v4256
    %v4277 = vsel %vm1499, %v4256, %v4258
    %v4278 = vsel %vm1499, %v4258, %v4260
    %v4279 = vsel %vm1499, %v4260, %v4262
    %v4280 = vsel %vm1499, %v4264, %v4266
    %v4281 = vsel %vm1499, %v4266, %v4268
    %v4282 = vsel %vm1499, %v4268, %v4270
    %v4283 = vsel %vm1499, %v4270, %v4272
    %v4284 = vsel %vm1499, %v4272, %v4274
    %v4298 = vsel %vm2883, %v4249, 0
    %v4301 = vsel %vm2883, %v4250, 0
    %4303 = vmatprep.subr.bf16.mxu0 0
    %4304 = vmatpush1.bf16.msra.mxu0 0
    %4305 = vmatprep.subr.bf16.mxu0 0
    %4306 = vmatpush1.bf16.msra.mxu0 0
    %4307 = vmatprep.subr.bf16.mxu0 0
    %4308 = vmatpush1.bf16.msra.mxu0 0
    %4309 = vmatprep.subr.bf16.mxu0 0
    %4310 = vmatpush1.bf16.msra.mxu0 0
    %4311 = vmatprep.subr.bf16.mxu0 0
    %4312 = vmatpush1.bf16.msra.mxu0 0
    %4313 = vmatprep.subr.bf16.mxu0 0
    %4314 = vmatpush1.bf16.msra.mxu0 0
    %4315 = vmatprep.subr.bf16.mxu0 %v4281
    %4316 = vmatpush1.bf16.msra.mxu0 %v4280
    %4317 = vmatprep.subr.bf16.mxu0 %v4276
    %4318 = vmatpush1.bf16.msra.mxu0 %v4275
    %4319 = vmatprep.subr.bf16.mxu0 0
    %4320 = vmatpush2.bf16.msra.mxu0 0
    %4321 = vmatprep.subr.bf16.mxu0 0
    %4322 = vmatpush2.bf16.msra.mxu0 0
    %4323 = vmatprep.subr.bf16.mxu0 0
    %4324 = vmatpush2.bf16.msra.mxu0 0
    %4325 = vmatprep.subr.bf16.mxu0 0
    %4326 = vmatpush2.bf16.msra.mxu0 0
    %4327 = vmatprep.subr.bf16.mxu0 0
    %4328 = vmatpush2.bf16.msra.mxu0 0
    %4329 = vmatprep.subr.bf16.mxu0 0
    %4330 = vmatpush2.bf16.msra.mxu0 0
    %4331 = vmatprep.subr.bf16.mxu0 0
    %4332 = vmatpush2.bf16.msra.mxu0 0
    %4333 = vmatprep.subr.bf16.mxu0 0
    %4334 = vmatpush2.bf16.msra.mxu0 0
    %4335 = vmatprep.mubr.bf16.mxu0 0
    %4336 = vmatmul.mubr.bf16.gmra.mxu0 %v4298
    %v4337 = vpop.f32.mrf.mxu0
    %v4338 = vadd.f32 0.0, %v4337
    %v4339 = vpop.f32.mrf.mxu0
    %v4340 = vadd.f32 0.0, %v4339
    %v4341 = vpop.f32.mrf.mxu0
    %v4342 = vadd.f32 0.0, %v4341
    %v4343 = vpop.f32.mrf.mxu0
    %v4344 = vadd.f32 0.0, %v4343
    %4345 = vmatprep.mubr.bf16.mxu0 0
    %4346 = vmatmul.mubr.bf16.gmra.mxu0 %v4301
    %v4347 = vpop.f32.mrf.mxu0
    %v4348 = vadd.f32 0.0, %v4347
    %v4349 = vpop.f32.mrf.mxu0
    %v4350 = vadd.f32 0.0, %v4349
    %v4351 = vpop.f32.mrf.mxu0
    %v4352 = vadd.f32 0.0, %v4351
    %v4353 = vpop.f32.mrf.mxu0
    %v4354 = vadd.f32 0.0, %v4353
    %4355 = vdwg.mxu0
    %4356 = vmatprep.subr.bf16.mxu0 0
    %4357 = vmatpush1.bf16.msra.mxu0 0
    %4358 = vmatprep.subr.bf16.mxu0 0
    %4359 = vmatpush1.bf16.msra.mxu0 0
    %4360 = vmatprep.subr.bf16.mxu0 0
    %4361 = vmatpush1.bf16.msra.mxu0 0
    %4362 = vmatprep.subr.bf16.mxu0 0
    %4363 = vmatpush1.bf16.msra.mxu0 0
    %4364 = vmatprep.subr.bf16.mxu0 0
    %4365 = vmatpush1.bf16.msra.mxu0 0
    %4366 = vmatprep.subr.bf16.mxu0 0
    %4367 = vmatpush1.bf16.msra.mxu0 0
    %4368 = vmatprep.subr.bf16.mxu0 %v4283
    %4369 = vmatpush1.bf16.msra.mxu0 %v4282
    %4370 = vmatprep.subr.bf16.mxu0 %v4278
    %4371 = vmatpush1.bf16.msra.mxu0 %v4277
    %4372 = vmatprep.subr.bf16.mxu0 0
    %4373 = vmatpush2.bf16.msra.mxu0 0
    %4374 = vmatprep.subr.bf16.mxu0 0
    %4375 = vmatpush2.bf16.msra.mxu0 0
    %4376 = vmatprep.subr.bf16.mxu0 0
    %4377 = vmatpush2.bf16.msra.mxu0 0
    %4378 = vmatprep.subr.bf16.mxu0 0
    %4379 = vmatpush2.bf16.msra.mxu0 0
    %4380 = vmatprep.subr.bf16.mxu0 0
    %4381 = vmatpush2.bf16.msra.mxu0 0
    %4382 = vmatprep.subr.bf16.mxu0 0
    %4383 = vmatpush2.bf16.msra.mxu0 0
    %4384 = vmatprep.subr.bf16.mxu0 0
    %4385 = vmatpush2.bf16.msra.mxu0 0
    %4386 = vmatprep.subr.bf16.mxu0 0
    %4387 = vmatpush2.bf16.msra.mxu0 0
    %4388 = vmatprep.mubr.bf16.mxu0 0
    %4389 = vmatmul.mubr.bf16.gmra.mxu0 %v4298
    %v4390 = vpop.f32.mrf.mxu0
    %v4391 = vadd.f32 0.0, %v4390
    %v4392 = vpop.f32.mrf.mxu0
    %v4393 = vadd.f32 0.0, %v4392
    %v4394 = vpop.f32.mrf.mxu0
    %v4395 = vadd.f32 0.0, %v4394
    %v4396 = vpop.f32.mrf.mxu0
    %v4397 = vadd.f32 0.0, %v4396
    %4398 = vmatprep.mubr.bf16.mxu0 0
    %4399 = vmatmul.mubr.bf16.gmra.mxu0 %v4301
    %v4400 = vpop.f32.mrf.mxu0
    %v4401 = vadd.f32 0.0, %v4400
    %v4402 = vpop.f32.mrf.mxu0
    %v4403 = vadd.f32 0.0, %v4402
    %v4404 = vpop.f32.mrf.mxu0
    %v4405 = vadd.f32 0.0, %v4404
    %v4406 = vpop.f32.mrf.mxu0
    %v4407 = vadd.f32 0.0, %v4406
    %4408 = vdwg.mxu0
    %4409 = vmatprep.subr.bf16.mxu0 0
    %4410 = vmatpush1.bf16.msra.mxu0 0
    %4411 = vmatprep.subr.bf16.mxu0 0
    %4412 = vmatpush1.bf16.msra.mxu0 0
    %4413 = vmatprep.subr.bf16.mxu0 0
    %4414 = vmatpush1.bf16.msra.mxu0 0
    %4415 = vmatprep.subr.bf16.mxu0 0
    %4416 = vmatpush1.bf16.msra.mxu0 0
    %4417 = vmatprep.subr.bf16.mxu0 0
    %4418 = vmatpush1.bf16.msra.mxu0 0
    %4419 = vmatprep.subr.bf16.mxu0 0
    %4420 = vmatpush1.bf16.msra.mxu0 0
    %4421 = vmatprep.subr.bf16.mxu0 %v4274
    %4422 = vmatpush1.bf16.msra.mxu0 %v4284
    %4423 = vmatprep.subr.bf16.mxu0 %v4262
    %4424 = vmatpush1.bf16.msra.mxu0 %v4279
    %4425 = vmatprep.subr.bf16.mxu0 0
    %4426 = vmatpush2.bf16.msra.mxu0 0
    %4427 = vmatprep.subr.bf16.mxu0 0
    %4428 = vmatpush2.bf16.msra.mxu0 0
    %4429 = vmatprep.subr.bf16.mxu0 0
    %4430 = vmatpush2.bf16.msra.mxu0 0
    %4431 = vmatprep.subr.bf16.mxu0 0
    %4432 = vmatpush2.bf16.msra.mxu0 0
    %4433 = vmatprep.subr.bf16.mxu0 0
    %4434 = vmatpush2.bf16.msra.mxu0 0
    %4435 = vmatprep.subr.bf16.mxu0 0
    %4436 = vmatpush2.bf16.msra.mxu0 0
    %4437 = vmatprep.subr.bf16.mxu0 0
    %4438 = vmatpush2.bf16.msra.mxu0 0
    %4439 = vmatprep.subr.bf16.mxu0 0
    %4440 = vmatpush2.bf16.msra.mxu0 0
    %4441 = vmatprep.mubr.bf16.mxu0 0
    %4442 = vmatmul.mubr.bf16.gmra.mxu0 %v4298
    %v4443 = vpop.f32.mrf.mxu0
    %v4444 = vadd.f32 0.0, %v4443
    %v4445 = vpop.f32.mrf.mxu0
    %v4446 = vadd.f32 0.0, %v4445
    %v4447 = vpop.f32.mrf.mxu0
    %v4448 = vadd.f32 0.0, %v4447
    %v4449 = vpop.f32.mrf.mxu0
    %v4450 = vadd.f32 0.0, %v4449
    %4451 = vmatprep.mubr.bf16.mxu0 0
    %4452 = vmatmul.mubr.bf16.gmra.mxu0 %v4301
    %v4453 = vpop.f32.mrf.mxu0
    %v4454 = vadd.f32 0.0, %v4453
    %v4455 = vpop.f32.mrf.mxu0
    %v4456 = vadd.f32 0.0, %v4455
    %v4457 = vpop.f32.mrf.mxu0
    %v4458 = vadd.f32 0.0, %v4457
    %v4459 = vpop.f32.mrf.mxu0
    %v4460 = vadd.f32 0.0, %v4459
    %4461 = vdwg.mxu0
    %v4462 = vadd.f32 %v4212, %v4338
    %v4463 = vadd.f32 %v4213, %v4340
    %v4464 = vadd.f32 %v4214, %v4391
    %v4465 = vadd.f32 %v4215, %v4393
    %v4466 = vadd.f32 %v4216, %v4444
    %v4467 = vadd.f32 %v4217, %v4446
    %v4468 = vadd.f32 %v4218, %v4342
    %v4469 = vadd.f32 %v4219, %v4344
    %v4470 = vadd.f32 %v4220, %v4395
    %v4471 = vadd.f32 %v4221, %v4397
    %v4472 = vadd.f32 %v4222, %v4448
    %v4473 = vadd.f32 %v4223, %v4450
    %v4474 = vadd.f32 %v4224, %v4348
    %v4475 = vadd.f32 %v4225, %v4350
    %v4476 = vadd.f32 %v4226, %v4401
    %v4477 = vadd.f32 %v4227, %v4403
    %v4478 = vadd.f32 %v4228, %v4454
    %v4479 = vadd.f32 %v4229, %v4456
    %v4480 = vadd.f32 %v4230, %v4352
    %v4481 = vadd.f32 %v4231, %v4354
    %v4482 = vadd.f32 %v4232, %v4405
    %v4483 = vadd.f32 %v4233, %v4407
    %v4484 = vadd.f32 %v4234, %v4458
    %v4485 = vadd.f32 %v4235, %v4460
    %s4486 = scalar_lea.vmem %s5, 112
    %v4487 = vld [vmem:[%s4486] sm:$0xf]
    %v4488 = vld [vmem:[%s4486 + $0x4] sm:$0xf]
    %v4489 = vld [vmem:[%s4486 + $0x8] sm:$0xf]
    %v4490 = vld [vmem:[%s4486 + $0xc] sm:$0xf]
    %v4495 = vunpack.c.l.b16 %v4487
    %v4496 = vunpack.c.l.b16 %v4488
    %v4497 = vunpack.c.l.b16 %v4489
    %v4498 = vunpack.c.l.b16 %v4490
    %v4499 = vpack.c.b16 %v4496, %v4495
    %v4500 = vpack.c.b16 %v4498, %v4497
    %4501 = vrot.lane.b32.xlu0 %v2825, 91
    %v4502 = vpop.permute.xlu0 %4501
    %4503 = vrot.lane.b32.xlu0 %v2826, 91
    %v4504 = vpop.permute.xlu0 %4503
    %4505 = vrot.lane.b32.xlu0 %v2827, 91
    %v4506 = vpop.permute.xlu0 %4505
    %4507 = vrot.lane.b32.xlu0 %v2828, 91
    %v4508 = vpop.permute.xlu0 %4507
    %4509 = vrot.lane.b32.xlu0 %v2829, 91
    %v4510 = vpop.permute.xlu0 %4509
    %4511 = vrot.lane.b32.xlu0 %v2830, 91
    %v4512 = vpop.permute.xlu0 %4511
    %4513 = vrot.lane.b32.xlu0 %v2831, 91
    %v4514 = vpop.permute.xlu0 %4513
    %4515 = vrot.lane.b32.xlu0 %v2832, 91
    %v4516 = vpop.permute.xlu0 %4515
    %4517 = vrot.lane.b32.xlu0 %v2833, 91
    %v4518 = vpop.permute.xlu0 %4517
    %4519 = vrot.lane.b32.xlu0 %v2834, 91
    %v4520 = vpop.permute.xlu0 %4519
    %4521 = vrot.lane.b32.xlu0 %v2835, 91
    %v4522 = vpop.permute.xlu0 %4521
    %4523 = vrot.lane.b32.xlu0 %v2836, 91
    %v4524 = vpop.permute.xlu0 %4523
    %v4525 = vsel %vm1739, %v4502, %v4504
    %v4526 = vsel %vm1739, %v4504, %v4506
    %v4527 = vsel %vm1739, %v4506, %v4508
    %v4528 = vsel %vm1739, %v4508, %v4510
    %v4529 = vsel %vm1739, %v4510, %v4512
    %v4530 = vsel %vm1739, %v4514, %v4516
    %v4531 = vsel %vm1739, %v4516, %v4518
    %v4532 = vsel %vm1739, %v4518, %v4520
    %v4533 = vsel %vm1739, %v4520, %v4522
    %v4534 = vsel %vm1739, %v4522, %v4524
    %v4548 = vsel %vm2883, %v4499, 0
    %v4551 = vsel %vm2883, %v4500, 0
    %4553 = vmatprep.subr.bf16.mxu0 0
    %4554 = vmatpush1.bf16.msra.mxu0 0
    %4555 = vmatprep.subr.bf16.mxu0 0
    %4556 = vmatpush1.bf16.msra.mxu0 0
    %4557 = vmatprep.subr.bf16.mxu0 0
    %4558 = vmatpush1.bf16.msra.mxu0 0
    %4559 = vmatprep.subr.bf16.mxu0 0
    %4560 = vmatpush1.bf16.msra.mxu0 0
    %4561 = vmatprep.subr.bf16.mxu0 0
    %4562 = vmatpush1.bf16.msra.mxu0 0
    %4563 = vmatprep.subr.bf16.mxu0 0
    %4564 = vmatpush1.bf16.msra.mxu0 0
    %4565 = vmatprep.subr.bf16.mxu0 %v4531
    %4566 = vmatpush1.bf16.msra.mxu0 %v4530
    %4567 = vmatprep.subr.bf16.mxu0 %v4526
    %4568 = vmatpush1.bf16.msra.mxu0 %v4525
    %4569 = vmatprep.subr.bf16.mxu0 0
    %4570 = vmatpush2.bf16.msra.mxu0 0
    %4571 = vmatprep.subr.bf16.mxu0 0
    %4572 = vmatpush2.bf16.msra.mxu0 0
    %4573 = vmatprep.subr.bf16.mxu0 0
    %4574 = vmatpush2.bf16.msra.mxu0 0
    %4575 = vmatprep.subr.bf16.mxu0 0
    %4576 = vmatpush2.bf16.msra.mxu0 0
    %4577 = vmatprep.subr.bf16.mxu0 0
    %4578 = vmatpush2.bf16.msra.mxu0 0
    %4579 = vmatprep.subr.bf16.mxu0 0
    %4580 = vmatpush2.bf16.msra.mxu0 0
    %4581 = vmatprep.subr.bf16.mxu0 0
    %4582 = vmatpush2.bf16.msra.mxu0 0
    %4583 = vmatprep.subr.bf16.mxu0 0
    %4584 = vmatpush2.bf16.msra.mxu0 0
    %4585 = vmatprep.mubr.bf16.mxu0 0
    %4586 = vmatmul.mubr.bf16.gmra.mxu0 %v4548
    %v4587 = vpop.f32.mrf.mxu0
    %v4588 = vadd.f32 0.0, %v4587
    %v4589 = vpop.f32.mrf.mxu0
    %v4590 = vadd.f32 0.0, %v4589
    %v4591 = vpop.f32.mrf.mxu0
    %v4592 = vadd.f32 0.0, %v4591
    %v4593 = vpop.f32.mrf.mxu0
    %v4594 = vadd.f32 0.0, %v4593
    %4595 = vmatprep.mubr.bf16.mxu0 0
    %4596 = vmatmul.mubr.bf16.gmra.mxu0 %v4551
    %v4597 = vpop.f32.mrf.mxu0
    %v4598 = vadd.f32 0.0, %v4597
    %v4599 = vpop.f32.mrf.mxu0
    %v4600 = vadd.f32 0.0, %v4599
    %v4601 = vpop.f32.mrf.mxu0
    %v4602 = vadd.f32 0.0, %v4601
    %v4603 = vpop.f32.mrf.mxu0
    %v4604 = vadd.f32 0.0, %v4603
    %4605 = vdwg.mxu0
    %4606 = vmatprep.subr.bf16.mxu0 0
    %4607 = vmatpush1.bf16.msra.mxu0 0
    %4608 = vmatprep.subr.bf16.mxu0 0
    %4609 = vmatpush1.bf16.msra.mxu0 0
    %4610 = vmatprep.subr.bf16.mxu0 0
    %4611 = vmatpush1.bf16.msra.mxu0 0
    %4612 = vmatprep.subr.bf16.mxu0 0
    %4613 = vmatpush1.bf16.msra.mxu0 0
    %4614 = vmatprep.subr.bf16.mxu0 0
    %4615 = vmatpush1.bf16.msra.mxu0 0
    %4616 = vmatprep.subr.bf16.mxu0 0
    %4617 = vmatpush1.bf16.msra.mxu0 0
    %4618 = vmatprep.subr.bf16.mxu0 %v4533
    %4619 = vmatpush1.bf16.msra.mxu0 %v4532
    %4620 = vmatprep.subr.bf16.mxu0 %v4528
    %4621 = vmatpush1.bf16.msra.mxu0 %v4527
    %4622 = vmatprep.subr.bf16.mxu0 0
    %4623 = vmatpush2.bf16.msra.mxu0 0
    %4624 = vmatprep.subr.bf16.mxu0 0
    %4625 = vmatpush2.bf16.msra.mxu0 0
    %4626 = vmatprep.subr.bf16.mxu0 0
    %4627 = vmatpush2.bf16.msra.mxu0 0
    %4628 = vmatprep.subr.bf16.mxu0 0
    %4629 = vmatpush2.bf16.msra.mxu0 0
    %4630 = vmatprep.subr.bf16.mxu0 0
    %4631 = vmatpush2.bf16.msra.mxu0 0
    %4632 = vmatprep.subr.bf16.mxu0 0
    %4633 = vmatpush2.bf16.msra.mxu0 0
    %4634 = vmatprep.subr.bf16.mxu0 0
    %4635 = vmatpush2.bf16.msra.mxu0 0
    %4636 = vmatprep.subr.bf16.mxu0 0
    %4637 = vmatpush2.bf16.msra.mxu0 0
    %4638 = vmatprep.mubr.bf16.mxu0 0
    %4639 = vmatmul.mubr.bf16.gmra.mxu0 %v4548
    %v4640 = vpop.f32.mrf.mxu0
    %v4641 = vadd.f32 0.0, %v4640
    %v4642 = vpop.f32.mrf.mxu0
    %v4643 = vadd.f32 0.0, %v4642
    %v4644 = vpop.f32.mrf.mxu0
    %v4645 = vadd.f32 0.0, %v4644
    %v4646 = vpop.f32.mrf.mxu0
    %v4647 = vadd.f32 0.0, %v4646
    %4648 = vmatprep.mubr.bf16.mxu0 0
    %4649 = vmatmul.mubr.bf16.gmra.mxu0 %v4551
    %v4650 = vpop.f32.mrf.mxu0
    %v4651 = vadd.f32 0.0, %v4650
    %v4652 = vpop.f32.mrf.mxu0
    %v4653 = vadd.f32 0.0, %v4652
    %v4654 = vpop.f32.mrf.mxu0
    %v4655 = vadd.f32 0.0, %v4654
    %v4656 = vpop.f32.mrf.mxu0
    %v4657 = vadd.f32 0.0, %v4656
    %4658 = vdwg.mxu0
    %4659 = vmatprep.subr.bf16.mxu0 0
    %4660 = vmatpush1.bf16.msra.mxu0 0
    %4661 = vmatprep.subr.bf16.mxu0 0
    %4662 = vmatpush1.bf16.msra.mxu0 0
    %4663 = vmatprep.subr.bf16.mxu0 0
    %4664 = vmatpush1.bf16.msra.mxu0 0
    %4665 = vmatprep.subr.bf16.mxu0 0
    %4666 = vmatpush1.bf16.msra.mxu0 0
    %4667 = vmatprep.subr.bf16.mxu0 0
    %4668 = vmatpush1.bf16.msra.mxu0 0
    %4669 = vmatprep.subr.bf16.mxu0 0
    %4670 = vmatpush1.bf16.msra.mxu0 0
    %4671 = vmatprep.subr.bf16.mxu0 %v4524
    %4672 = vmatpush1.bf16.msra.mxu0 %v4534
    %4673 = vmatprep.subr.bf16.mxu0 %v4512
    %4674 = vmatpush1.bf16.msra.mxu0 %v4529
    %4675 = vmatprep.subr.bf16.mxu0 0
    %4676 = vmatpush2.bf16.msra.mxu0 0
    %4677 = vmatprep.subr.bf16.mxu0 0
    %4678 = vmatpush2.bf16.msra.mxu0 0
    %4679 = vmatprep.subr.bf16.mxu0 0
    %4680 = vmatpush2.bf16.msra.mxu0 0
    %4681 = vmatprep.subr.bf16.mxu0 0
    %4682 = vmatpush2.bf16.msra.mxu0 0
    %4683 = vmatprep.subr.bf16.mxu0 0
    %4684 = vmatpush2.bf16.msra.mxu0 0
    %4685 = vmatprep.subr.bf16.mxu0 0
    %4686 = vmatpush2.bf16.msra.mxu0 0
    %4687 = vmatprep.subr.bf16.mxu0 0
    %4688 = vmatpush2.bf16.msra.mxu0 0
    %4689 = vmatprep.subr.bf16.mxu0 0
    %4690 = vmatpush2.bf16.msra.mxu0 0
    %4691 = vmatprep.mubr.bf16.mxu0 0
    %4692 = vmatmul.mubr.bf16.gmra.mxu0 %v4548
    %v4693 = vpop.f32.mrf.mxu0
    %v4694 = vadd.f32 0.0, %v4693
    %v4695 = vpop.f32.mrf.mxu0
    %v4696 = vadd.f32 0.0, %v4695
    %v4697 = vpop.f32.mrf.mxu0
    %v4698 = vadd.f32 0.0, %v4697
    %v4699 = vpop.f32.mrf.mxu0
    %v4700 = vadd.f32 0.0, %v4699
    %4701 = vmatprep.mubr.bf16.mxu0 0
    %4702 = vmatmul.mubr.bf16.gmra.mxu0 %v4551
    %v4703 = vpop.f32.mrf.mxu0
    %v4704 = vadd.f32 0.0, %v4703
    %v4705 = vpop.f32.mrf.mxu0
    %v4706 = vadd.f32 0.0, %v4705
    %v4707 = vpop.f32.mrf.mxu0
    %v4708 = vadd.f32 0.0, %v4707
    %v4709 = vpop.f32.mrf.mxu0
    %v4710 = vadd.f32 0.0, %v4709
    %4711 = vdwg.mxu0
    %v4712 = vadd.f32 %v4462, %v4588
    %v4713 = vadd.f32 %v4463, %v4590
    %v4714 = vadd.f32 %v4464, %v4641
    %v4715 = vadd.f32 %v4465, %v4643
    %v4716 = vadd.f32 %v4466, %v4694
    %v4717 = vadd.f32 %v4467, %v4696
    %v4718 = vadd.f32 %v4468, %v4592
    %v4719 = vadd.f32 %v4469, %v4594
    %v4720 = vadd.f32 %v4470, %v4645
    %v4721 = vadd.f32 %v4471, %v4647
    %v4722 = vadd.f32 %v4472, %v4698
    %v4723 = vadd.f32 %v4473, %v4700
    %v4724 = vadd.f32 %v4474, %v4598
    %v4725 = vadd.f32 %v4475, %v4600
    %v4726 = vadd.f32 %v4476, %v4651
    %v4727 = vadd.f32 %v4477, %v4653
    %v4728 = vadd.f32 %v4478, %v4704
    %v4729 = vadd.f32 %v4479, %v4706
    %v4730 = vadd.f32 %v4480, %v4602
    %v4731 = vadd.f32 %v4481, %v4604
    %v4732 = vadd.f32 %v4482, %v4655
    %v4733 = vadd.f32 %v4483, %v4657
    %v4734 = vadd.f32 %v4484, %v4708
    %v4735 = vadd.f32 %v4485, %v4710
    %s4736 = scalar_lea.vmem %s5, 128
    %v4737 = vld [vmem:[%s4736] sm:$0xf]
    %v4738 = vld [vmem:[%s4736 + $0x4] sm:$0xf]
    %v4739 = vld [vmem:[%s4736 + $0x8] sm:$0xf]
    %v4740 = vld [vmem:[%s4736 + $0xc] sm:$0xf]
    %v4745 = vunpack.c.l.b16 %v4737
    %v4746 = vunpack.c.l.b16 %v4738
    %v4747 = vunpack.c.l.b16 %v4739
    %v4748 = vunpack.c.l.b16 %v4740
    %v4749 = vpack.c.b16 %v4746, %v4745
    %v4750 = vpack.c.b16 %v4748, %v4747
    %4751 = vrot.lane.b32.xlu0 %v2825, 90
    %v4752 = vpop.permute.xlu0 %4751
    %4753 = vrot.lane.b32.xlu0 %v2826, 90
    %v4754 = vpop.permute.xlu0 %4753
    %4755 = vrot.lane.b32.xlu0 %v2827, 90
    %v4756 = vpop.permute.xlu0 %4755
    %4757 = vrot.lane.b32.xlu0 %v2828, 90
    %v4758 = vpop.permute.xlu0 %4757
    %4759 = vrot.lane.b32.xlu0 %v2829, 90
    %v4760 = vpop.permute.xlu0 %4759
    %4761 = vrot.lane.b32.xlu0 %v2830, 90
    %v4762 = vpop.permute.xlu0 %4761
    %4763 = vrot.lane.b32.xlu0 %v2831, 90
    %v4764 = vpop.permute.xlu0 %4763
    %4765 = vrot.lane.b32.xlu0 %v2832, 90
    %v4766 = vpop.permute.xlu0 %4765
    %4767 = vrot.lane.b32.xlu0 %v2833, 90
    %v4768 = vpop.permute.xlu0 %4767
    %4769 = vrot.lane.b32.xlu0 %v2834, 90
    %v4770 = vpop.permute.xlu0 %4769
    %4771 = vrot.lane.b32.xlu0 %v2835, 90
    %v4772 = vpop.permute.xlu0 %4771
    %4773 = vrot.lane.b32.xlu0 %v2836, 90
    %v4774 = vpop.permute.xlu0 %4773
    %v4775 = vsel %vm1979, %v4752, %v4754
    %v4776 = vsel %vm1979, %v4754, %v4756
    %v4777 = vsel %vm1979, %v4756, %v4758
    %v4778 = vsel %vm1979, %v4758, %v4760
    %v4779 = vsel %vm1979, %v4760, %v4762
    %v4780 = vsel %vm1979, %v4764, %v4766
    %v4781 = vsel %vm1979, %v4766, %v4768
    %v4782 = vsel %vm1979, %v4768, %v4770
    %v4783 = vsel %vm1979, %v4770, %v4772
    %v4784 = vsel %vm1979, %v4772, %v4774
    %v4798 = vsel %vm2883, %v4749, 0
    %v4801 = vsel %vm2883, %v4750, 0
    %4803 = vmatprep.subr.bf16.mxu0 0
    %4804 = vmatpush1.bf16.msra.mxu0 0
    %4805 = vmatprep.subr.bf16.mxu0 0
    %4806 = vmatpush1.bf16.msra.mxu0 0
    %4807 = vmatprep.subr.bf16.mxu0 0
    %4808 = vmatpush1.bf16.msra.mxu0 0
    %4809 = vmatprep.subr.bf16.mxu0 0
    %4810 = vmatpush1.bf16.msra.mxu0 0
    %4811 = vmatprep.subr.bf16.mxu0 0
    %4812 = vmatpush1.bf16.msra.mxu0 0
    %4813 = vmatprep.subr.bf16.mxu0 0
    %4814 = vmatpush1.bf16.msra.mxu0 0
    %4815 = vmatprep.subr.bf16.mxu0 %v4781
    %4816 = vmatpush1.bf16.msra.mxu0 %v4780
    %4817 = vmatprep.subr.bf16.mxu0 %v4776
    %4818 = vmatpush1.bf16.msra.mxu0 %v4775
    %4819 = vmatprep.subr.bf16.mxu0 0
    %4820 = vmatpush2.bf16.msra.mxu0 0
    %4821 = vmatprep.subr.bf16.mxu0 0
    %4822 = vmatpush2.bf16.msra.mxu0 0
    %4823 = vmatprep.subr.bf16.mxu0 0
    %4824 = vmatpush2.bf16.msra.mxu0 0
    %4825 = vmatprep.subr.bf16.mxu0 0
    %4826 = vmatpush2.bf16.msra.mxu0 0
    %4827 = vmatprep.subr.bf16.mxu0 0
    %4828 = vmatpush2.bf16.msra.mxu0 0
    %4829 = vmatprep.subr.bf16.mxu0 0
    %4830 = vmatpush2.bf16.msra.mxu0 0
    %4831 = vmatprep.subr.bf16.mxu0 0
    %4832 = vmatpush2.bf16.msra.mxu0 0
    %4833 = vmatprep.subr.bf16.mxu0 0
    %4834 = vmatpush2.bf16.msra.mxu0 0
    %4835 = vmatprep.mubr.bf16.mxu0 0
    %4836 = vmatmul.mubr.bf16.gmra.mxu0 %v4798
    %v4837 = vpop.f32.mrf.mxu0
    %v4838 = vadd.f32 0.0, %v4837
    %v4839 = vpop.f32.mrf.mxu0
    %v4840 = vadd.f32 0.0, %v4839
    %v4841 = vpop.f32.mrf.mxu0
    %v4842 = vadd.f32 0.0, %v4841
    %v4843 = vpop.f32.mrf.mxu0
    %v4844 = vadd.f32 0.0, %v4843
    %4845 = vmatprep.mubr.bf16.mxu0 0
    %4846 = vmatmul.mubr.bf16.gmra.mxu0 %v4801
    %v4847 = vpop.f32.mrf.mxu0
    %v4848 = vadd.f32 0.0, %v4847
    %v4849 = vpop.f32.mrf.mxu0
    %v4850 = vadd.f32 0.0, %v4849
    %v4851 = vpop.f32.mrf.mxu0
    %v4852 = vadd.f32 0.0, %v4851
    %v4853 = vpop.f32.mrf.mxu0
    %v4854 = vadd.f32 0.0, %v4853
    %4855 = vdwg.mxu0
    %4856 = vmatprep.subr.bf16.mxu0 0
    %4857 = vmatpush1.bf16.msra.mxu0 0
    %4858 = vmatprep.subr.bf16.mxu0 0
    %4859 = vmatpush1.bf16.msra.mxu0 0
    %4860 = vmatprep.subr.bf16.mxu0 0
    %4861 = vmatpush1.bf16.msra.mxu0 0
    %4862 = vmatprep.subr.bf16.mxu0 0
    %4863 = vmatpush1.bf16.msra.mxu0 0
    %4864 = vmatprep.subr.bf16.mxu0 0
    %4865 = vmatpush1.bf16.msra.mxu0 0
    %4866 = vmatprep.subr.bf16.mxu0 0
    %4867 = vmatpush1.bf16.msra.mxu0 0
    %4868 = vmatprep.subr.bf16.mxu0 %v4783
    %4869 = vmatpush1.bf16.msra.mxu0 %v4782
    %4870 = vmatprep.subr.bf16.mxu0 %v4778
    %4871 = vmatpush1.bf16.msra.mxu0 %v4777
    %4872 = vmatprep.subr.bf16.mxu0 0
    %4873 = vmatpush2.bf16.msra.mxu0 0
    %4874 = vmatprep.subr.bf16.mxu0 0
    %4875 = vmatpush2.bf16.msra.mxu0 0
    %4876 = vmatprep.subr.bf16.mxu0 0
    %4877 = vmatpush2.bf16.msra.mxu0 0
    %4878 = vmatprep.subr.bf16.mxu0 0
    %4879 = vmatpush2.bf16.msra.mxu0 0
    %4880 = vmatprep.subr.bf16.mxu0 0
    %4881 = vmatpush2.bf16.msra.mxu0 0
    %4882 = vmatprep.subr.bf16.mxu0 0
    %4883 = vmatpush2.bf16.msra.mxu0 0
    %4884 = vmatprep.subr.bf16.mxu0 0
    %4885 = vmatpush2.bf16.msra.mxu0 0
    %4886 = vmatprep.subr.bf16.mxu0 0
    %4887 = vmatpush2.bf16.msra.mxu0 0
    %4888 = vmatprep.mubr.bf16.mxu0 0
    %4889 = vmatmul.mubr.bf16.gmra.mxu0 %v4798
    %v4890 = vpop.f32.mrf.mxu0
    %v4891 = vadd.f32 0.0, %v4890
    %v4892 = vpop.f32.mrf.mxu0
    %v4893 = vadd.f32 0.0, %v4892
    %v4894 = vpop.f32.mrf.mxu0
    %v4895 = vadd.f32 0.0, %v4894
    %v4896 = vpop.f32.mrf.mxu0
    %v4897 = vadd.f32 0.0, %v4896
    %4898 = vmatprep.mubr.bf16.mxu0 0
    %4899 = vmatmul.mubr.bf16.gmra.mxu0 %v4801
    %v4900 = vpop.f32.mrf.mxu0
    %v4901 = vadd.f32 0.0, %v4900
    %v4902 = vpop.f32.mrf.mxu0
    %v4903 = vadd.f32 0.0, %v4902
    %v4904 = vpop.f32.mrf.mxu0
    %v4905 = vadd.f32 0.0, %v4904
    %v4906 = vpop.f32.mrf.mxu0
    %v4907 = vadd.f32 0.0, %v4906
    %4908 = vdwg.mxu0
    %4909 = vmatprep.subr.bf16.mxu0 0
    %4910 = vmatpush1.bf16.msra.mxu0 0
    %4911 = vmatprep.subr.bf16.mxu0 0
    %4912 = vmatpush1.bf16.msra.mxu0 0
    %4913 = vmatprep.subr.bf16.mxu0 0
    %4914 = vmatpush1.bf16.msra.mxu0 0
    %4915 = vmatprep.subr.bf16.mxu0 0
    %4916 = vmatpush1.bf16.msra.mxu0 0
    %4917 = vmatprep.subr.bf16.mxu0 0
    %4918 = vmatpush1.bf16.msra.mxu0 0
    %4919 = vmatprep.subr.bf16.mxu0 0
    %4920 = vmatpush1.bf16.msra.mxu0 0
    %4921 = vmatprep.subr.bf16.mxu0 %v4774
    %4922 = vmatpush1.bf16.msra.mxu0 %v4784
    %4923 = vmatprep.subr.bf16.mxu0 %v4762
    %4924 = vmatpush1.bf16.msra.mxu0 %v4779
    %4925 = vmatprep.subr.bf16.mxu0 0
    %4926 = vmatpush2.bf16.msra.mxu0 0
    %4927 = vmatprep.subr.bf16.mxu0 0
    %4928 = vmatpush2.bf16.msra.mxu0 0
    %4929 = vmatprep.subr.bf16.mxu0 0
    %4930 = vmatpush2.bf16.msra.mxu0 0
    %4931 = vmatprep.subr.bf16.mxu0 0
    %4932 = vmatpush2.bf16.msra.mxu0 0
    %4933 = vmatprep.subr.bf16.mxu0 0
    %4934 = vmatpush2.bf16.msra.mxu0 0
    %4935 = vmatprep.subr.bf16.mxu0 0
    %4936 = vmatpush2.bf16.msra.mxu0 0
    %4937 = vmatprep.subr.bf16.mxu0 0
    %4938 = vmatpush2.bf16.msra.mxu0 0
    %4939 = vmatprep.subr.bf16.mxu0 0
    %4940 = vmatpush2.bf16.msra.mxu0 0
    %4941 = vmatprep.mubr.bf16.mxu0 0
    %4942 = vmatmul.mubr.bf16.gmra.mxu0 %v4798
    %v4943 = vpop.f32.mrf.mxu0
    %v4944 = vadd.f32 0.0, %v4943
    %v4945 = vpop.f32.mrf.mxu0
    %v4946 = vadd.f32 0.0, %v4945
    %v4947 = vpop.f32.mrf.mxu0
    %v4948 = vadd.f32 0.0, %v4947
    %v4949 = vpop.f32.mrf.mxu0
    %v4950 = vadd.f32 0.0, %v4949
    %4951 = vmatprep.mubr.bf16.mxu0 0
    %4952 = vmatmul.mubr.bf16.gmra.mxu0 %v4801
    %v4953 = vpop.f32.mrf.mxu0
    %v4954 = vadd.f32 0.0, %v4953
    %v4955 = vpop.f32.mrf.mxu0
    %v4956 = vadd.f32 0.0, %v4955
    %v4957 = vpop.f32.mrf.mxu0
    %v4958 = vadd.f32 0.0, %v4957
    %v4959 = vpop.f32.mrf.mxu0
    %v4960 = vadd.f32 0.0, %v4959
    %4961 = vdwg.mxu0
    %v4962 = vadd.f32 %v4712, %v4838
    %v4963 = vadd.f32 %v4713, %v4840
    %v4964 = vadd.f32 %v4714, %v4891
    %v4965 = vadd.f32 %v4715, %v4893
    %v4966 = vadd.f32 %v4716, %v4944
    %v4967 = vadd.f32 %v4717, %v4946
    %v4968 = vadd.f32 %v4718, %v4842
    %v4969 = vadd.f32 %v4719, %v4844
    %v4970 = vadd.f32 %v4720, %v4895
    %v4971 = vadd.f32 %v4721, %v4897
    %v4972 = vadd.f32 %v4722, %v4948
    %v4973 = vadd.f32 %v4723, %v4950
    %v4974 = vadd.f32 %v4724, %v4848
    %v4975 = vadd.f32 %v4725, %v4850
    %v4976 = vadd.f32 %v4726, %v4901
    %v4977 = vadd.f32 %v4727, %v4903
    %v4978 = vadd.f32 %v4728, %v4954
    %v4979 = vadd.f32 %v4729, %v4956
    %v4980 = vadd.f32 %v4730, %v4852
    %v4981 = vadd.f32 %v4731, %v4854
    %v4982 = vadd.f32 %v4732, %v4905
    %v4983 = vadd.f32 %v4733, %v4907
    %v4984 = vadd.f32 %v4734, %v4958
    %v4985 = vadd.f32 %v4735, %v4960
    %v4986 = vld [vmem:[%s6] sm:$0xff]
    %v4987 = vld [vmem:[%s6 + $0x8] sm:$0xff]
    %v4988 = vld [vmem:[%s6 + $0x10] sm:$0xff]
    %v4989 = vld [vmem:[%s6 + $0x18] sm:$0xff]
    %4991 = vset.pattern.permute.xlu0 0
    %4992 = vperm.xlu0 %4991, %v4986
    %v4993 = vpop.permute.xlu0 %4992
    %4996 = vset.pattern.permute.xlu0 0
    %4997 = vperm.xlu0 %4996, %v4987
    %v4998 = vpop.permute.xlu0 %4997
    %5001 = vset.pattern.permute.xlu0 0
    %5002 = vperm.xlu0 %5001, %v4988
    %v5003 = vpop.permute.xlu0 %5002
    %5006 = vset.pattern.permute.xlu0 0
    %5007 = vperm.xlu0 %5006, %v4989
    %v5008 = vpop.permute.xlu0 %5007
    %v5010 = vadd.f32 %v4962, %v4993
    %v5011 = vadd.f32 %v4963, %v4993
    %v5012 = vadd.f32 %v4964, %v4993
    %v5013 = vadd.f32 %v4965, %v4993
    %v5014 = vadd.f32 %v4966, %v4993
    %v5015 = vadd.f32 %v4967, %v4993
    %v5016 = vadd.f32 %v4968, %v4998
    %v5017 = vadd.f32 %v4969, %v4998
    %v5018 = vadd.f32 %v4970, %v4998
    %v5019 = vadd.f32 %v4971, %v4998
    %v5020 = vadd.f32 %v4972, %v4998
    %v5021 = vadd.f32 %v4973, %v4998
    %v5022 = vadd.f32 %v4974, %v5003
    %v5023 = vadd.f32 %v4975, %v5003
    %v5024 = vadd.f32 %v4976, %v5003
    %v5025 = vadd.f32 %v4977, %v5003
    %v5026 = vadd.f32 %v4978, %v5003
    %v5027 = vadd.f32 %v4979, %v5003
    %v5028 = vadd.f32 %v4980, %v5008
    %v5029 = vadd.f32 %v4981, %v5008
    %v5030 = vadd.f32 %v4982, %v5008
    %v5031 = vadd.f32 %v4983, %v5008
    %v5032 = vadd.f32 %v4984, %v5008
    %v5033 = vadd.f32 %v4985, %v5008
    %vm5034 = vcmp.gt.f32.partialorder %v5010, 0.0
    %vm5035 = vcmp.gt.f32.partialorder %v5011, 0.0
    %vm5036 = vcmp.gt.f32.partialorder %v5012, 0.0
    %vm5037 = vcmp.gt.f32.partialorder %v5013, 0.0
    %vm5038 = vcmp.gt.f32.partialorder %v5014, 0.0
    %vm5039 = vcmp.gt.f32.partialorder %v5015, 0.0
    %vm5040 = vcmp.gt.f32.partialorder %v5016, 0.0
    %vm5041 = vcmp.gt.f32.partialorder %v5017, 0.0
    %vm5042 = vcmp.gt.f32.partialorder %v5018, 0.0
    %vm5043 = vcmp.gt.f32.partialorder %v5019, 0.0
    %vm5044 = vcmp.gt.f32.partialorder %v5020, 0.0
    %vm5045 = vcmp.gt.f32.partialorder %v5021, 0.0
    %vm5046 = vcmp.gt.f32.partialorder %v5022, 0.0
    %vm5047 = vcmp.gt.f32.partialorder %v5023, 0.0
    %vm5048 = vcmp.gt.f32.partialorder %v5024, 0.0
    %vm5049 = vcmp.gt.f32.partialorder %v5025, 0.0
    %vm5050 = vcmp.gt.f32.partialorder %v5026, 0.0
    %vm5051 = vcmp.gt.f32.partialorder %v5027, 0.0
    %vm5052 = vcmp.gt.f32.partialorder %v5028, 0.0
    %vm5053 = vcmp.gt.f32.partialorder %v5029, 0.0
    %vm5054 = vcmp.gt.f32.partialorder %v5030, 0.0
    %vm5055 = vcmp.gt.f32.partialorder %v5031, 0.0
    %vm5056 = vcmp.gt.f32.partialorder %v5032, 0.0
    %vm5057 = vcmp.gt.f32.partialorder %v5033, 0.0
    %v5058 = vmul.f32 %v5010, 0.2
    %v5059 = vmul.f32 %v5011, 0.2
    %v5060 = vmul.f32 %v5012, 0.2
    %v5061 = vmul.f32 %v5013, 0.2
    %v5062 = vmul.f32 %v5014, 0.2
    %v5063 = vmul.f32 %v5015, 0.2
    %v5064 = vmul.f32 %v5016, 0.2
    %v5065 = vmul.f32 %v5017, 0.2
    %v5066 = vmul.f32 %v5018, 0.2
    %v5067 = vmul.f32 %v5019, 0.2
    %v5068 = vmul.f32 %v5020, 0.2
    %v5069 = vmul.f32 %v5021, 0.2
    %v5070 = vmul.f32 %v5022, 0.2
    %v5071 = vmul.f32 %v5023, 0.2
    %v5072 = vmul.f32 %v5024, 0.2
    %v5073 = vmul.f32 %v5025, 0.2
    %v5074 = vmul.f32 %v5026, 0.2
    %v5075 = vmul.f32 %v5027, 0.2
    %v5076 = vmul.f32 %v5028, 0.2
    %v5077 = vmul.f32 %v5029, 0.2
    %v5078 = vmul.f32 %v5030, 0.2
    %v5079 = vmul.f32 %v5031, 0.2
    %v5080 = vmul.f32 %v5032, 0.2
    %v5081 = vmul.f32 %v5033, 0.2
    %v5082 = vsel %vm5034, %v5010, %v5058
    %v5083 = vsel %vm5035, %v5011, %v5059
    %v5084 = vsel %vm5036, %v5012, %v5060
    %v5085 = vsel %vm5037, %v5013, %v5061
    %v5086 = vsel %vm5038, %v5014, %v5062
    %v5087 = vsel %vm5039, %v5015, %v5063
    %v5088 = vsel %vm5040, %v5016, %v5064
    %v5089 = vsel %vm5041, %v5017, %v5065
    %v5090 = vsel %vm5042, %v5018, %v5066
    %v5091 = vsel %vm5043, %v5019, %v5067
    %v5092 = vsel %vm5044, %v5020, %v5068
    %v5093 = vsel %vm5045, %v5021, %v5069
    %v5094 = vsel %vm5046, %v5022, %v5070
    %v5095 = vsel %vm5047, %v5023, %v5071
    %v5096 = vsel %vm5048, %v5024, %v5072
    %v5097 = vsel %vm5049, %v5025, %v5073
    %v5098 = vsel %vm5050, %v5026, %v5074
    %v5099 = vsel %vm5051, %v5027, %v5075
    %v5100 = vsel %vm5052, %v5028, %v5076
    %v5101 = vsel %vm5053, %v5029, %v5077
    %v5102 = vsel %vm5054, %v5030, %v5078
    %v5103 = vsel %vm5055, %v5031, %v5079
    %v5104 = vsel %vm5056, %v5032, %v5080
    %v5105 = vsel %vm5057, %v5033, %v5081
    %v5106 = vmul.f32 %v5082, %v2316
    %v5107 = vmul.f32 %v5083, %v2320
    %v5108 = vmul.f32 %v5084, %v2324
    %v5109 = vmul.f32 %v5085, %v2328
    %v5110 = vmul.f32 %v5086, %v2332
    %v5111 = vmul.f32 %v5087, %v2336
    %v5112 = vmul.f32 %v5088, %v2316
    %v5113 = vmul.f32 %v5089, %v2320
    %v5114 = vmul.f32 %v5090, %v2324
    %v5115 = vmul.f32 %v5091, %v2328
    %v5116 = vmul.f32 %v5092, %v2332
    %v5117 = vmul.f32 %v5093, %v2336
    %v5118 = vmul.f32 %v5094, %v2316
    %v5119 = vmul.f32 %v5095, %v2320
    %v5120 = vmul.f32 %v5096, %v2324
    %v5121 = vmul.f32 %v5097, %v2328
    %v5122 = vmul.f32 %v5098, %v2332
    %v5123 = vmul.f32 %v5099, %v2336
    %v5124 = vmul.f32 %v5100, %v2316
    %v5125 = vmul.f32 %v5101, %v2320
    %v5126 = vmul.f32 %v5102, %v2324
    %v5127 = vmul.f32 %v5103, %v2328
    %v5128 = vmul.f32 %v5104, %v2332
    %v5129 = vmul.f32 %v5105, %v2336
    %v5130 = vadd.f32 %v5106, %v5107
    %v5131 = vadd.f32 %v5130, %v5108
    %v5132 = vadd.f32 %v5131, %v5109
    %v5133 = vadd.f32 %v5132, %v5110
    %v5134 = vsel %vm134, %v5111, 0.0
    %v5135 = vadd.f32 %v5133, %v5134
    %5136 = vadd.xlane.f32.xlu0 %v5135
    %v5137 = vpop.xlane.xlu0 %5136
    %v5138 = vadd.f32 %v5112, %v5113
    %v5139 = vadd.f32 %v5138, %v5114
    %v5140 = vadd.f32 %v5139, %v5115
    %v5141 = vadd.f32 %v5140, %v5116
    %v5142 = vsel %vm134, %v5117, 0.0
    %v5143 = vadd.f32 %v5141, %v5142
    %5144 = vadd.xlane.f32.xlu0 %v5143
    %v5145 = vpop.xlane.xlu0 %5144
    %v5146 = vadd.f32 %v5118, %v5119
    %v5147 = vadd.f32 %v5146, %v5120
    %v5148 = vadd.f32 %v5147, %v5121
    %v5149 = vadd.f32 %v5148, %v5122
    %v5150 = vsel %vm134, %v5123, 0.0
    %v5151 = vadd.f32 %v5149, %v5150
    %5152 = vadd.xlane.f32.xlu0 %v5151
    %v5153 = vpop.xlane.xlu0 %5152
    %v5154 = vadd.f32 %v5124, %v5125
    %v5155 = vadd.f32 %v5154, %v5126
    %v5156 = vadd.f32 %v5155, %v5127
    %v5157 = vadd.f32 %v5156, %v5128
    %v5158 = vsel %vm134, %v5129, 0.0
    %v5159 = vadd.f32 %v5157, %v5158
    %5160 = vadd.xlane.f32.xlu0 %v5159
    %v5161 = vpop.xlane.xlu0 %5160
    %v5162 = vmul.f32 %v5106, %v5106
    %v5163 = vmul.f32 %v5107, %v5107
    %v5164 = vmul.f32 %v5108, %v5108
    %v5165 = vmul.f32 %v5109, %v5109
    %v5166 = vmul.f32 %v5110, %v5110
    %v5167 = vmul.f32 %v5111, %v5111
    %v5168 = vmul.f32 %v5112, %v5112
    %v5169 = vmul.f32 %v5113, %v5113
    %v5170 = vmul.f32 %v5114, %v5114
    %v5171 = vmul.f32 %v5115, %v5115
    %v5172 = vmul.f32 %v5116, %v5116
    %v5173 = vmul.f32 %v5117, %v5117
    %v5174 = vmul.f32 %v5118, %v5118
    %v5175 = vmul.f32 %v5119, %v5119
    %v5176 = vmul.f32 %v5120, %v5120
    %v5177 = vmul.f32 %v5121, %v5121
    %v5178 = vmul.f32 %v5122, %v5122
    %v5179 = vmul.f32 %v5123, %v5123
    %v5180 = vmul.f32 %v5124, %v5124
    %v5181 = vmul.f32 %v5125, %v5125
    %v5182 = vmul.f32 %v5126, %v5126
    %v5183 = vmul.f32 %v5127, %v5127
    %v5184 = vmul.f32 %v5128, %v5128
    %v5185 = vmul.f32 %v5129, %v5129
    %v5186 = vadd.f32 %v5162, %v5163
    %v5187 = vadd.f32 %v5186, %v5164
    %v5188 = vadd.f32 %v5187, %v5165
    %v5189 = vadd.f32 %v5188, %v5166
    %v5190 = vsel %vm134, %v5167, 0.0
    %v5191 = vadd.f32 %v5189, %v5190
    %5192 = vadd.xlane.f32.xlu0 %v5191
    %v5193 = vpop.xlane.xlu0 %5192
    %v5194 = vadd.f32 %v5168, %v5169
    %v5195 = vadd.f32 %v5194, %v5170
    %v5196 = vadd.f32 %v5195, %v5171
    %v5197 = vadd.f32 %v5196, %v5172
    %v5198 = vsel %vm134, %v5173, 0.0
    %v5199 = vadd.f32 %v5197, %v5198
    %5200 = vadd.xlane.f32.xlu0 %v5199
    %v5201 = vpop.xlane.xlu0 %5200
    %v5202 = vadd.f32 %v5174, %v5175
    %v5203 = vadd.f32 %v5202, %v5176
    %v5204 = vadd.f32 %v5203, %v5177
    %v5205 = vadd.f32 %v5204, %v5178
    %v5206 = vsel %vm134, %v5179, 0.0
    %v5207 = vadd.f32 %v5205, %v5206
    %5208 = vadd.xlane.f32.xlu0 %v5207
    %v5209 = vpop.xlane.xlu0 %5208
    %v5210 = vadd.f32 %v5180, %v5181
    %v5211 = vadd.f32 %v5210, %v5182
    %v5212 = vadd.f32 %v5211, %v5183
    %v5213 = vadd.f32 %v5212, %v5184
    %v5214 = vsel %vm134, %v5185, 0.0
    %v5215 = vadd.f32 %v5213, %v5214
    %5216 = vadd.xlane.f32.xlu0 %v5215
    %v5217 = vpop.xlane.xlu0 %5216
    %v5218 = vmul.f32 %v5137, 0.001953125
    %v5219 = vmul.f32 %v5145, 0.001953125
    %v5220 = vmul.f32 %v5153, 0.001953125
    %v5221 = vmul.f32 %v5161, 0.001953125
    %v5222 = vmul.f32 %v5193, 0.001953125
    %v5223 = vmul.f32 %v5201, 0.001953125
    %v5224 = vmul.f32 %v5209, 0.001953125
    %v5225 = vmul.f32 %v5217, 0.001953125
    %v5226 = vmul.f32 %v5218, %v5218
    %v5227 = vmul.f32 %v5219, %v5219
    %v5228 = vmul.f32 %v5220, %v5220
    %v5229 = vmul.f32 %v5221, %v5221
    %v5230 = vsub.f32 %v5222, %v5226
    %v5231 = vsub.f32 %v5223, %v5227
    %v5232 = vsub.f32 %v5224, %v5228
    %v5233 = vsub.f32 %v5225, %v5229
    %v5234 = vld [vmem:[%s7] sm:$0xff]
    %v5235 = vld [vmem:[%s7 + $0x8] sm:$0xff]
    %v5236 = vld [vmem:[%s7 + $0x10] sm:$0xff]
    %v5237 = vld [vmem:[%s7 + $0x18] sm:$0xff]
    %v5238 = vadd.f32 %v5230, 1e-05
    %v5239 = vadd.f32 %v5231, 1e-05
    %v5240 = vadd.f32 %v5232, 1e-05
    %v5241 = vadd.f32 %v5233, 1e-05
    %v5242 = vrsqrt.pop %v5238
    %v5243 = vrsqrt.pop %v5239
    %v5244 = vrsqrt.pop %v5240
    %v5245 = vrsqrt.pop %v5241
    %v5246 = vmul.f32 %v5234, %v5242
    %v5247 = vmul.f32 %v5235, %v5243
    %v5248 = vmul.f32 %v5236, %v5244
    %v5249 = vmul.f32 %v5237, %v5245
    %v5250 = vld [vmem:[%s8] sm:$0xff]
    %v5251 = vld [vmem:[%s8 + $0x8] sm:$0xff]
    %v5252 = vld [vmem:[%s8 + $0x10] sm:$0xff]
    %v5253 = vld [vmem:[%s8 + $0x18] sm:$0xff]
    %v5254 = vmul.f32 %v5218, %v5246
    %v5255 = vmul.f32 %v5219, %v5247
    %v5256 = vmul.f32 %v5220, %v5248
    %v5257 = vmul.f32 %v5221, %v5249
    %v5258 = vsub.f32 %v5250, %v5254
    %v5259 = vsub.f32 %v5251, %v5255
    %v5260 = vsub.f32 %v5252, %v5256
    %v5261 = vsub.f32 %v5253, %v5257
    %5263 = vset.pattern.permute.xlu0 0
    %5264 = vperm.xlu0 %5263, %v5246
    %v5265 = vpop.permute.xlu0 %5264
    %5268 = vset.pattern.permute.xlu0 0
    %5269 = vperm.xlu0 %5268, %v5247
    %v5270 = vpop.permute.xlu0 %5269
    %5273 = vset.pattern.permute.xlu0 0
    %5274 = vperm.xlu0 %5273, %v5248
    %v5275 = vpop.permute.xlu0 %5274
    %5278 = vset.pattern.permute.xlu0 0
    %5279 = vperm.xlu0 %5278, %v5249
    %v5280 = vpop.permute.xlu0 %5279
    %v5282 = vmul.f32 %v5106, %v5265
    %v5283 = vmul.f32 %v5107, %v5265
    %v5284 = vmul.f32 %v5108, %v5265
    %v5285 = vmul.f32 %v5109, %v5265
    %v5286 = vmul.f32 %v5110, %v5265
    %v5287 = vmul.f32 %v5111, %v5265
    %v5288 = vmul.f32 %v5112, %v5270
    %v5289 = vmul.f32 %v5113, %v5270
    %v5290 = vmul.f32 %v5114, %v5270
    %v5291 = vmul.f32 %v5115, %v5270
    %v5292 = vmul.f32 %v5116, %v5270
    %v5293 = vmul.f32 %v5117, %v5270
    %v5294 = vmul.f32 %v5118, %v5275
    %v5295 = vmul.f32 %v5119, %v5275
    %v5296 = vmul.f32 %v5120, %v5275
    %v5297 = vmul.f32 %v5121, %v5275
    %v5298 = vmul.f32 %v5122, %v5275
    %v5299 = vmul.f32 %v5123, %v5275
    %v5300 = vmul.f32 %v5124, %v5280
    %v5301 = vmul.f32 %v5125, %v5280
    %v5302 = vmul.f32 %v5126, %v5280
    %v5303 = vmul.f32 %v5127, %v5280
    %v5304 = vmul.f32 %v5128, %v5280
    %v5305 = vmul.f32 %v5129, %v5280
    %5307 = vset.pattern.permute.xlu0 0
    %5308 = vperm.xlu0 %5307, %v5258
    %v5309 = vpop.permute.xlu0 %5308
    %5312 = vset.pattern.permute.xlu0 0
    %5313 = vperm.xlu0 %5312, %v5259
    %v5314 = vpop.permute.xlu0 %5313
    %5317 = vset.pattern.permute.xlu0 0
    %5318 = vperm.xlu0 %5317, %v5260
    %v5319 = vpop.permute.xlu0 %5318
    %5322 = vset.pattern.permute.xlu0 0
    %5323 = vperm.xlu0 %5322, %v5261
    %v5324 = vpop.permute.xlu0 %5323
    %v5326 = vadd.f32 %v5282, %v5309
    %v5327 = vadd.f32 %v5283, %v5309
    %v5328 = vadd.f32 %v5284, %v5309
    %v5329 = vadd.f32 %v5285, %v5309
    %v5330 = vadd.f32 %v5286, %v5309
    %v5331 = vadd.f32 %v5287, %v5309
    %v5332 = vadd.f32 %v5288, %v5314
    %v5333 = vadd.f32 %v5289, %v5314
    %v5334 = vadd.f32 %v5290, %v5314
    %v5335 = vadd.f32 %v5291, %v5314
    %v5336 = vadd.f32 %v5292, %v5314
    %v5337 = vadd.f32 %v5293, %v5314
    %v5338 = vadd.f32 %v5294, %v5319
    %v5339 = vadd.f32 %v5295, %v5319
    %v5340 = vadd.f32 %v5296, %v5319
    %v5341 = vadd.f32 %v5297, %v5319
    %v5342 = vadd.f32 %v5298, %v5319
    %v5343 = vadd.f32 %v5299, %v5319
    %v5344 = vadd.f32 %v5300, %v5324
    %v5345 = vadd.f32 %v5301, %v5324
    %v5346 = vadd.f32 %v5302, %v5324
    %v5347 = vadd.f32 %v5303, %v5324
    %v5348 = vadd.f32 %v5304, %v5324
    %v5349 = vadd.f32 %v5305, %v5324
    %v5350 = vmul.f32 %v5326, %v2316
    %v5351 = vmul.f32 %v5327, %v2320
    %v5352 = vmul.f32 %v5328, %v2324
    %v5353 = vmul.f32 %v5329, %v2328
    %v5354 = vmul.f32 %v5330, %v2332
    %v5355 = vmul.f32 %v5331, %v2336
    %v5356 = vmul.f32 %v5332, %v2316
    %v5357 = vmul.f32 %v5333, %v2320
    %v5358 = vmul.f32 %v5334, %v2324
    %v5359 = vmul.f32 %v5335, %v2328
    %v5360 = vmul.f32 %v5336, %v2332
    %v5361 = vmul.f32 %v5337, %v2336
    %v5362 = vmul.f32 %v5338, %v2316
    %v5363 = vmul.f32 %v5339, %v2320
    %v5364 = vmul.f32 %v5340, %v2324
    %v5365 = vmul.f32 %v5341, %v2328
    %v5366 = vmul.f32 %v5342, %v2332
    %v5367 = vmul.f32 %v5343, %v2336
    %v5368 = vmul.f32 %v5344, %v2316
    %v5369 = vmul.f32 %v5345, %v2320
    %v5370 = vmul.f32 %v5346, %v2324
    %v5371 = vmul.f32 %v5347, %v2328
    %v5372 = vmul.f32 %v5348, %v2332
    %v5373 = vmul.f32 %v5349, %v2336
    %v5374 = vpack.c.bf16 %v5356, %v5350
    %v5375 = vpack.c.bf16 %v5357, %v5351
    %v5376 = vpack.c.bf16 %v5358, %v5352
    %v5377 = vpack.c.bf16 %v5359, %v5353
    %v5378 = vpack.c.bf16 %v5360, %v5354
    %v5379 = vpack.c.bf16 %v5361, %v5355
    %v5380 = vpack.c.bf16 %v5368, %v5362
    %v5381 = vpack.c.bf16 %v5369, %v5363
    %v5382 = vpack.c.bf16 %v5370, %v5364
    %v5383 = vpack.c.bf16 %v5371, %v5365
    %v5384 = vpack.c.bf16 %v5372, %v5366
    %v5385 = vpack.c.bf16 %v5373, %v5367
    %v5398 = vunpack.c.l.b16 %v5374
    %v5399 = vunpack.c.l.b16 %v5375
    %v5400 = vunpack.c.l.b16 %v5376
    %v5401 = vunpack.c.l.b16 %v5377
    %v5402 = vunpack.c.l.b16 %v5378
    %v5403 = vunpack.c.l.b16 %v5379
    %v5404 = vunpack.c.h.b16 %v5374
    %v5405 = vunpack.c.h.b16 %v5375
    %v5406 = vunpack.c.h.b16 %v5376
    %v5407 = vunpack.c.h.b16 %v5377
    %v5408 = vunpack.c.h.b16 %v5378
    %v5409 = vunpack.c.h.b16 %v5379
    %v5410 = vunpack.c.l.b16 %v5380
    %v5411 = vunpack.c.l.b16 %v5381
    %v5412 = vunpack.c.l.b16 %v5382
    %v5413 = vunpack.c.l.b16 %v5383
    %v5414 = vunpack.c.l.b16 %v5384
    %v5415 = vunpack.c.l.b16 %v5385
    %v5416 = vunpack.c.h.b16 %v5380
    %v5417 = vunpack.c.h.b16 %v5381
    %v5418 = vunpack.c.h.b16 %v5382
    %v5419 = vunpack.c.h.b16 %v5383
    %v5420 = vunpack.c.h.b16 %v5384
    %v5421 = vunpack.c.h.b16 %v5385
    %v5422 = vpack.c.b16 %v5399, %v5398
    %v5423 = vpack.c.b16 %v5401, %v5400
    %v5424 = vpack.c.b16 %v5403, %v5402
    %v5425 = vpack.c.b16 %v5405, %v5404
    %v5426 = vpack.c.b16 %v5407, %v5406
    %v5427 = vpack.c.b16 %v5409, %v5408
    %v5428 = vpack.c.b16 %v5411, %v5410
    %v5429 = vpack.c.b16 %v5413, %v5412
    %v5430 = vpack.c.b16 %v5415, %v5414
    %v5431 = vpack.c.b16 %v5417, %v5416
    %v5432 = vpack.c.b16 %v5419, %v5418
    %v5433 = vpack.c.b16 %v5421, %v5420
    %5434 = vrot.lane.b32.xlu0 %v5422, 19
    %v5435 = vpop.permute.xlu0 %5434
    %5436 = vrot.lane.b32.xlu0 %v5423, 19
    %v5437 = vpop.permute.xlu0 %5436
    %5438 = vrot.lane.b32.xlu0 %v5424, 19
    %v5439 = vpop.permute.xlu0 %5438
    %5440 = vrot.lane.b32.xlu0 %v5425, 19
    %v5441 = vpop.permute.xlu0 %5440
    %5442 = vrot.lane.b32.xlu0 %v5426, 19
    %v5443 = vpop.permute.xlu0 %5442
    %5444 = vrot.lane.b32.xlu0 %v5427, 19
    %v5445 = vpop.permute.xlu0 %5444
    %5446 = vrot.lane.b32.xlu0 %v5428, 19
    %v5447 = vpop.permute.xlu0 %5446
    %5448 = vrot.lane.b32.xlu0 %v5429, 19
    %v5449 = vpop.permute.xlu0 %5448
    %5450 = vrot.lane.b32.xlu0 %v5430, 19
    %v5451 = vpop.permute.xlu0 %5450
    %5452 = vrot.lane.b32.xlu0 %v5431, 19
    %v5453 = vpop.permute.xlu0 %5452
    %5454 = vrot.lane.b32.xlu0 %v5432, 19
    %v5455 = vpop.permute.xlu0 %5454
    %5456 = vrot.lane.b32.xlu0 %v5433, 19
    %v5457 = vpop.permute.xlu0 %5456
    %v5458 = vrot.slane %v5435, 4
    %v5459 = vrot.slane %v5437, 4
    %v5460 = vrot.slane %v5439, 4
    %v5461 = vrot.slane %v5441, 4
    %v5462 = vrot.slane %v5443, 4
    %v5463 = vrot.slane %v5445, 4
    %v5464 = vrot.slane %v5447, 4
    %v5465 = vrot.slane %v5449, 4
    %v5466 = vrot.slane %v5451, 4
    %v5467 = vrot.slane %v5453, 4
    %v5468 = vrot.slane %v5455, 4
    %v5469 = vrot.slane %v5457, 4
    %v5470 = vsel %vm2707, %v5458, %v5435
    %v5471 = vsel %vm2709, %v5458, %v5459
    %v5472 = vsel %vm2707, %v5471, %v5437
    %v5473 = vsel %vm2709, %v5459, %v5460
    %v5474 = vsel %vm2707, %v5473, %v5439
    %v5475 = vsel %vm2707, %v5461, %v5441
    %v5476 = vsel %vm2709, %v5461, %v5462
    %v5477 = vsel %vm2707, %v5476, %v5443
    %v5478 = vsel %vm2709, %v5462, %v5463
    %v5479 = vsel %vm2707, %v5478, %v5445
    %v5480 = vsel %vm2707, %v5464, %v5447
    %v5481 = vsel %vm2709, %v5464, %v5465
    %v5482 = vsel %vm2707, %v5481, %v5449
    %v5483 = vsel %vm2709, %v5465, %v5466
    %v5484 = vsel %vm2707, %v5483, %v5451
    %v5485 = vsel %vm2707, %v5467, %v5453
    %v5486 = vsel %vm2709, %v5467, %v5468
    %v5487 = vsel %vm2707, %v5486, %v5455
    %v5488 = vsel %vm2709, %v5468, %v5469
    %v5489 = vsel %vm2707, %v5488, %v5457
    %5502 = vst.msk [vmem:[#allocation3] sm:$0xff] %vm2743, %v5470
    %5503 = vst [vmem:[#allocation3 + $0x8] sm:$0xff] %v5472
    %5504 = vst.msk [vmem:[#allocation3 + $0x10] sm:$0xff] %vm2747, %v5474
    %5505 = vst.msk [vmem:[#allocation3 + $0x18] sm:$0xff] %vm2743, %v5475
    %5506 = vst [vmem:[#allocation3 + $0x20] sm:$0xff] %v5477
    %5507 = vst.msk [vmem:[#allocation3 + $0x28] sm:$0xff] %vm2747, %v5479
    %5508 = vst.msk [vmem:[#allocation3 + $0x30] sm:$0xff] %vm2743, %v5480
    %5509 = vst [vmem:[#allocation3 + $0x38] sm:$0xff] %v5482
    %5510 = vst.msk [vmem:[#allocation3 + $0x40] sm:$0xff] %vm2747, %v5484
    %5511 = vst.msk [vmem:[#allocation3 + $0x48] sm:$0xff] %vm2743, %v5485
    %5512 = vst [vmem:[#allocation3 + $0x50] sm:$0xff] %v5487
    %5513 = vst.msk [vmem:[#allocation3 + $0x58] sm:$0xff] %vm2747, %v5489
    %v5514 = vld [vmem:[%s9] sm:$0xf]
    %v5515 = vld [vmem:[%s9 + $0x4] sm:$0xf]
    %v5516 = vld [vmem:[%s9 + $0x8] sm:$0xf]
    %v5517 = vld [vmem:[%s9 + $0xc] sm:$0xf]
    %v5518 = vld [vmem:[#allocation3] sm:$0xff]
    %v5519 = vld [vmem:[#allocation3 + $0x8] sm:$0xff]
    %v5520 = vld [vmem:[#allocation3 + $0x10] sm:$0xff]
    %v5521 = vld [vmem:[#allocation3 + $0x18] sm:$0xff]
    %v5522 = vld [vmem:[#allocation3 + $0x20] sm:$0xff]
    %v5523 = vld [vmem:[#allocation3 + $0x28] sm:$0xff]
    %v5524 = vld [vmem:[#allocation3 + $0x30] sm:$0xff]
    %v5525 = vld [vmem:[#allocation3 + $0x38] sm:$0xff]
    %v5526 = vld [vmem:[#allocation3 + $0x40] sm:$0xff]
    %v5527 = vld [vmem:[#allocation3 + $0x48] sm:$0xff]
    %v5528 = vld [vmem:[#allocation3 + $0x50] sm:$0xff]
    %v5529 = vld [vmem:[#allocation3 + $0x58] sm:$0xff]
    %s5530 = scalar_lea.vmem %s9, 16
    %v5531 = vld [vmem:[%s5530] sm:$0xf]
    %v5532 = vld [vmem:[%s5530 + $0x4] sm:$0xf]
    %v5533 = vld [vmem:[%s5530 + $0x8] sm:$0xf]
    %v5534 = vld [vmem:[%s5530 + $0xc] sm:$0xf]
    %v5539 = vunpack.c.l.b16 %v5531
    %v5540 = vunpack.c.l.b16 %v5532
    %v5541 = vunpack.c.l.b16 %v5533
    %v5542 = vunpack.c.l.b16 %v5534
    %v5543 = vpack.c.b16 %v5540, %v5539
    %v5544 = vpack.c.b16 %v5542, %v5541
    %v5557 = vunpack.c.l.b16 %v5518
    %v5558 = vunpack.c.h.b16 %v5518
    %v5559 = vunpack.c.l.b16 %v5519
    %v5560 = vunpack.c.h.b16 %v5519
    %v5561 = vunpack.c.l.b16 %v5520
    %v5562 = vunpack.c.h.b16 %v5520
    %v5563 = vunpack.c.l.b16 %v5521
    %v5564 = vunpack.c.h.b16 %v5521
    %v5565 = vunpack.c.l.b16 %v5522
    %v5566 = vunpack.c.h.b16 %v5522
    %v5567 = vunpack.c.l.b16 %v5523
    %v5568 = vunpack.c.h.b16 %v5523
    %v5569 = vunpack.c.l.b16 %v5524
    %v5570 = vunpack.c.h.b16 %v5524
    %v5571 = vunpack.c.l.b16 %v5525
    %v5572 = vunpack.c.h.b16 %v5525
    %v5573 = vunpack.c.l.b16 %v5526
    %v5574 = vunpack.c.h.b16 %v5526
    %v5575 = vunpack.c.l.b16 %v5527
    %v5576 = vunpack.c.h.b16 %v5527
    %v5577 = vunpack.c.l.b16 %v5528
    %v5578 = vunpack.c.h.b16 %v5528
    %v5579 = vunpack.c.l.b16 %v5529
    %v5580 = vunpack.c.h.b16 %v5529
    %v5581 = vpack.c.b16 %v5563, %v5557
    %v5582 = vpack.c.b16 %v5564, %v5558
    %v5583 = vpack.c.b16 %v5565, %v5559
    %v5584 = vpack.c.b16 %v5566, %v5560
    %v5585 = vpack.c.b16 %v5567, %v5561
    %v5586 = vpack.c.b16 %v5568, %v5562
    %v5587 = vpack.c.b16 %v5575, %v5569
    %v5588 = vpack.c.b16 %v5576, %v5570
    %v5589 = vpack.c.b16 %v5577, %v5571
    %v5590 = vpack.c.b16 %v5578, %v5572
    %v5591 = vpack.c.b16 %v5579, %v5573
    %v5592 = vpack.c.b16 %v5580, %v5574
    %5593 = vrot.lane.b32.xlu0 %v5581, 127
    %v5594 = vpop.permute.xlu0 %5593
    %5595 = vrot.lane.b32.xlu0 %v5582, 127
    %v5596 = vpop.permute.xlu0 %5595
    %5597 = vrot.lane.b32.xlu0 %v5583, 127
    %v5598 = vpop.permute.xlu0 %5597
    %5599 = vrot.lane.b32.xlu0 %v5584, 127
    %v5600 = vpop.permute.xlu0 %5599
    %5601 = vrot.lane.b32.xlu0 %v5585, 127
    %v5602 = vpop.permute.xlu0 %5601
    %5603 = vrot.lane.b32.xlu0 %v5586, 127
    %v5604 = vpop.permute.xlu0 %5603
    %5605 = vrot.lane.b32.xlu0 %v5587, 127
    %v5606 = vpop.permute.xlu0 %5605
    %5607 = vrot.lane.b32.xlu0 %v5588, 127
    %v5608 = vpop.permute.xlu0 %5607
    %5609 = vrot.lane.b32.xlu0 %v5589, 127
    %v5610 = vpop.permute.xlu0 %5609
    %5611 = vrot.lane.b32.xlu0 %v5590, 127
    %v5612 = vpop.permute.xlu0 %5611
    %5613 = vrot.lane.b32.xlu0 %v5591, 127
    %v5614 = vpop.permute.xlu0 %5613
    %5615 = vrot.lane.b32.xlu0 %v5592, 127
    %v5616 = vpop.permute.xlu0 %5615
    %v5617 = vsel %vm128, %v5594, %v5596
    %v5618 = vsel %vm128, %v5596, %v5598
    %v5619 = vsel %vm128, %v5598, %v5600
    %v5620 = vsel %vm128, %v5600, %v5602
    %v5621 = vsel %vm128, %v5602, %v5604
    %v5622 = vsel %vm128, %v5606, %v5608
    %v5623 = vsel %vm128, %v5608, %v5610
    %v5624 = vsel %vm128, %v5610, %v5612
    %v5625 = vsel %vm128, %v5612, %v5614
    %v5626 = vsel %vm128, %v5614, %v5616
    %v5640 = vsel %vm2883, %v5543, 0
    %v5643 = vsel %vm2883, %v5544, 0
    %5645 = vmatprep.subr.bf16.mxu0 0
    %5646 = vmatpush1.bf16.msra.mxu0 0
    %5647 = vmatprep.subr.bf16.mxu0 0
    %5648 = vmatpush1.bf16.msra.mxu0 0
    %5649 = vmatprep.subr.bf16.mxu0 0
    %5650 = vmatpush1.bf16.msra.mxu0 0
    %5651 = vmatprep.subr.bf16.mxu0 0
    %5652 = vmatpush1.bf16.msra.mxu0 0
    %5653 = vmatprep.subr.bf16.mxu0 0
    %5654 = vmatpush1.bf16.msra.mxu0 0
    %5655 = vmatprep.subr.bf16.mxu0 0
    %5656 = vmatpush1.bf16.msra.mxu0 0
    %5657 = vmatprep.subr.bf16.mxu0 %v5623
    %5658 = vmatpush1.bf16.msra.mxu0 %v5622
    %5659 = vmatprep.subr.bf16.mxu0 %v5618
    %5660 = vmatpush1.bf16.msra.mxu0 %v5617
    %5661 = vmatprep.subr.bf16.mxu0 0
    %5662 = vmatpush2.bf16.msra.mxu0 0
    %5663 = vmatprep.subr.bf16.mxu0 0
    %5664 = vmatpush2.bf16.msra.mxu0 0
    %5665 = vmatprep.subr.bf16.mxu0 0
    %5666 = vmatpush2.bf16.msra.mxu0 0
    %5667 = vmatprep.subr.bf16.mxu0 0
    %5668 = vmatpush2.bf16.msra.mxu0 0
    %5669 = vmatprep.subr.bf16.mxu0 0
    %5670 = vmatpush2.bf16.msra.mxu0 0
    %5671 = vmatprep.subr.bf16.mxu0 0
    %5672 = vmatpush2.bf16.msra.mxu0 0
    %5673 = vmatprep.subr.bf16.mxu0 0
    %5674 = vmatpush2.bf16.msra.mxu0 0
    %5675 = vmatprep.subr.bf16.mxu0 0
    %5676 = vmatpush2.bf16.msra.mxu0 0
    %5677 = vmatprep.mubr.bf16.mxu0 0
    %5678 = vmatmul.mubr.bf16.gmra.mxu0 %v5640
    %v5679 = vpop.f32.mrf.mxu0
    %v5680 = vadd.f32 0.0, %v5679
    %v5681 = vpop.f32.mrf.mxu0
    %v5682 = vadd.f32 0.0, %v5681
    %v5683 = vpop.f32.mrf.mxu0
    %v5684 = vadd.f32 0.0, %v5683
    %v5685 = vpop.f32.mrf.mxu0
    %v5686 = vadd.f32 0.0, %v5685
    %5687 = vmatprep.mubr.bf16.mxu0 0
    %5688 = vmatmul.mubr.bf16.gmra.mxu0 %v5643
    %v5689 = vpop.f32.mrf.mxu0
    %v5690 = vadd.f32 0.0, %v5689
    %v5691 = vpop.f32.mrf.mxu0
    %v5692 = vadd.f32 0.0, %v5691
    %v5693 = vpop.f32.mrf.mxu0
    %v5694 = vadd.f32 0.0, %v5693
    %v5695 = vpop.f32.mrf.mxu0
    %v5696 = vadd.f32 0.0, %v5695
    %5697 = vdwg.mxu0
    %5698 = vmatprep.subr.bf16.mxu0 0
    %5699 = vmatpush1.bf16.msra.mxu0 0
    %5700 = vmatprep.subr.bf16.mxu0 0
    %5701 = vmatpush1.bf16.msra.mxu0 0
    %5702 = vmatprep.subr.bf16.mxu0 0
    %5703 = vmatpush1.bf16.msra.mxu0 0
    %5704 = vmatprep.subr.bf16.mxu0 0
    %5705 = vmatpush1.bf16.msra.mxu0 0
    %5706 = vmatprep.subr.bf16.mxu0 0
    %5707 = vmatpush1.bf16.msra.mxu0 0
    %5708 = vmatprep.subr.bf16.mxu0 0
    %5709 = vmatpush1.bf16.msra.mxu0 0
    %5710 = vmatprep.subr.bf16.mxu0 %v5625
    %5711 = vmatpush1.bf16.msra.mxu0 %v5624
    %5712 = vmatprep.subr.bf16.mxu0 %v5620
    %5713 = vmatpush1.bf16.msra.mxu0 %v5619
    %5714 = vmatprep.subr.bf16.mxu0 0
    %5715 = vmatpush2.bf16.msra.mxu0 0
    %5716 = vmatprep.subr.bf16.mxu0 0
    %5717 = vmatpush2.bf16.msra.mxu0 0
    %5718 = vmatprep.subr.bf16.mxu0 0
    %5719 = vmatpush2.bf16.msra.mxu0 0
    %5720 = vmatprep.subr.bf16.mxu0 0
    %5721 = vmatpush2.bf16.msra.mxu0 0
    %5722 = vmatprep.subr.bf16.mxu0 0
    %5723 = vmatpush2.bf16.msra.mxu0 0
    %5724 = vmatprep.subr.bf16.mxu0 0
    %5725 = vmatpush2.bf16.msra.mxu0 0
    %5726 = vmatprep.subr.bf16.mxu0 0
    %5727 = vmatpush2.bf16.msra.mxu0 0
    %5728 = vmatprep.subr.bf16.mxu0 0
    %5729 = vmatpush2.bf16.msra.mxu0 0
    %5730 = vmatprep.mubr.bf16.mxu0 0
    %5731 = vmatmul.mubr.bf16.gmra.mxu0 %v5640
    %v5732 = vpop.f32.mrf.mxu0
    %v5733 = vadd.f32 0.0, %v5732
    %v5734 = vpop.f32.mrf.mxu0
    %v5735 = vadd.f32 0.0, %v5734
    %v5736 = vpop.f32.mrf.mxu0
    %v5737 = vadd.f32 0.0, %v5736
    %v5738 = vpop.f32.mrf.mxu0
    %v5739 = vadd.f32 0.0, %v5738
    %5740 = vmatprep.mubr.bf16.mxu0 0
    %5741 = vmatmul.mubr.bf16.gmra.mxu0 %v5643
    %v5742 = vpop.f32.mrf.mxu0
    %v5743 = vadd.f32 0.0, %v5742
    %v5744 = vpop.f32.mrf.mxu0
    %v5745 = vadd.f32 0.0, %v5744
    %v5746 = vpop.f32.mrf.mxu0
    %v5747 = vadd.f32 0.0, %v5746
    %v5748 = vpop.f32.mrf.mxu0
    %v5749 = vadd.f32 0.0, %v5748
    %5750 = vdwg.mxu0
    %5751 = vmatprep.subr.bf16.mxu0 0
    %5752 = vmatpush1.bf16.msra.mxu0 0
    %5753 = vmatprep.subr.bf16.mxu0 0
    %5754 = vmatpush1.bf16.msra.mxu0 0
    %5755 = vmatprep.subr.bf16.mxu0 0
    %5756 = vmatpush1.bf16.msra.mxu0 0
    %5757 = vmatprep.subr.bf16.mxu0 0
    %5758 = vmatpush1.bf16.msra.mxu0 0
    %5759 = vmatprep.subr.bf16.mxu0 0
    %5760 = vmatpush1.bf16.msra.mxu0 0
    %5761 = vmatprep.subr.bf16.mxu0 0
    %5762 = vmatpush1.bf16.msra.mxu0 0
    %5763 = vmatprep.subr.bf16.mxu0 %v5616
    %5764 = vmatpush1.bf16.msra.mxu0 %v5626
    %5765 = vmatprep.subr.bf16.mxu0 %v5604
    %5766 = vmatpush1.bf16.msra.mxu0 %v5621
    %5767 = vmatprep.subr.bf16.mxu0 0
    %5768 = vmatpush2.bf16.msra.mxu0 0
    %5769 = vmatprep.subr.bf16.mxu0 0
    %5770 = vmatpush2.bf16.msra.mxu0 0
    %5771 = vmatprep.subr.bf16.mxu0 0
    %5772 = vmatpush2.bf16.msra.mxu0 0
    %5773 = vmatprep.subr.bf16.mxu0 0
    %5774 = vmatpush2.bf16.msra.mxu0 0
    %5775 = vmatprep.subr.bf16.mxu0 0
    %5776 = vmatpush2.bf16.msra.mxu0 0
    %5777 = vmatprep.subr.bf16.mxu0 0
    %5778 = vmatpush2.bf16.msra.mxu0 0
    %5779 = vmatprep.subr.bf16.mxu0 0
    %5780 = vmatpush2.bf16.msra.mxu0 0
    %5781 = vmatprep.subr.bf16.mxu0 0
    %5782 = vmatpush2.bf16.msra.mxu0 0
    %5783 = vmatprep.mubr.bf16.mxu0 0
    %5784 = vmatmul.mubr.bf16.gmra.mxu0 %v5640
    %v5785 = vpop.f32.mrf.mxu0
    %v5786 = vadd.f32 0.0, %v5785
    %v5787 = vpop.f32.mrf.mxu0
    %v5788 = vadd.f32 0.0, %v5787
    %v5789 = vpop.f32.mrf.mxu0
    %v5790 = vadd.f32 0.0, %v5789
    %v5791 = vpop.f32.mrf.mxu0
    %v5792 = vadd.f32 0.0, %v5791
    %5793 = vmatprep.mubr.bf16.mxu0 0
    %5794 = vmatmul.mubr.bf16.gmra.mxu0 %v5643
    %v5795 = vpop.f32.mrf.mxu0
    %v5796 = vadd.f32 0.0, %v5795
    %v5797 = vpop.f32.mrf.mxu0
    %v5798 = vadd.f32 0.0, %v5797
    %v5799 = vpop.f32.mrf.mxu0
    %v5800 = vadd.f32 0.0, %v5799
    %v5801 = vpop.f32.mrf.mxu0
    %v5802 = vadd.f32 0.0, %v5801
    %5803 = vdwg.mxu0
    %v5808 = vunpack.c.l.b16 %v5514
    %v5809 = vunpack.c.l.b16 %v5515
    %v5810 = vunpack.c.l.b16 %v5516
    %v5811 = vunpack.c.l.b16 %v5517
    %v5812 = vpack.c.b16 %v5809, %v5808
    %v5813 = vpack.c.b16 %v5811, %v5810
    %v5827 = vsel %vm2883, %v5812, 0
    %v5830 = vsel %vm2883, %v5813, 0
    %5832 = vmatprep.subr.bf16.mxu0 0
    %5833 = vmatpush1.bf16.msra.mxu0 0
    %5834 = vmatprep.subr.bf16.mxu0 0
    %5835 = vmatpush1.bf16.msra.mxu0 0
    %5836 = vmatprep.subr.bf16.mxu0 0
    %5837 = vmatpush1.bf16.msra.mxu0 0
    %5838 = vmatprep.subr.bf16.mxu0 0
    %5839 = vmatpush1.bf16.msra.mxu0 0
    %5840 = vmatprep.subr.bf16.mxu0 0
    %5841 = vmatpush1.bf16.msra.mxu0 0
    %5842 = vmatprep.subr.bf16.mxu0 0
    %5843 = vmatpush1.bf16.msra.mxu0 0
    %5844 = vmatprep.subr.bf16.mxu0 %v5588
    %5845 = vmatpush1.bf16.msra.mxu0 %v5587
    %5846 = vmatprep.subr.bf16.mxu0 %v5582
    %5847 = vmatpush1.bf16.msra.mxu0 %v5581
    %5848 = vmatprep.subr.bf16.mxu0 0
    %5849 = vmatpush2.bf16.msra.mxu0 0
    %5850 = vmatprep.subr.bf16.mxu0 0
    %5851 = vmatpush2.bf16.msra.mxu0 0
    %5852 = vmatprep.subr.bf16.mxu0 0
    %5853 = vmatpush2.bf16.msra.mxu0 0
    %5854 = vmatprep.subr.bf16.mxu0 0
    %5855 = vmatpush2.bf16.msra.mxu0 0
    %5856 = vmatprep.subr.bf16.mxu0 0
    %5857 = vmatpush2.bf16.msra.mxu0 0
    %5858 = vmatprep.subr.bf16.mxu0 0
    %5859 = vmatpush2.bf16.msra.mxu0 0
    %5860 = vmatprep.subr.bf16.mxu0 0
    %5861 = vmatpush2.bf16.msra.mxu0 0
    %5862 = vmatprep.subr.bf16.mxu0 0
    %5863 = vmatpush2.bf16.msra.mxu0 0
    %5864 = vmatprep.mubr.bf16.mxu0 0
    %5865 = vmatmul.mubr.bf16.gmra.mxu0 %v5827
    %v5866 = vpop.f32.mrf.mxu0
    %v5867 = vadd.f32 %v5680, %v5866
    %v5868 = vpop.f32.mrf.mxu0
    %v5869 = vadd.f32 %v5682, %v5868
    %v5870 = vpop.f32.mrf.mxu0
    %v5871 = vadd.f32 %v5684, %v5870
    %v5872 = vpop.f32.mrf.mxu0
    %v5873 = vadd.f32 %v5686, %v5872
    %5874 = vmatprep.mubr.bf16.mxu0 0
    %5875 = vmatmul.mubr.bf16.gmra.mxu0 %v5830
    %v5876 = vpop.f32.mrf.mxu0
    %v5877 = vadd.f32 %v5690, %v5876
    %v5878 = vpop.f32.mrf.mxu0
    %v5879 = vadd.f32 %v5692, %v5878
    %v5880 = vpop.f32.mrf.mxu0
    %v5881 = vadd.f32 %v5694, %v5880
    %v5882 = vpop.f32.mrf.mxu0
    %v5883 = vadd.f32 %v5696, %v5882
    %5884 = vdwg.mxu0
    %5885 = vmatprep.subr.bf16.mxu0 0
    %5886 = vmatpush1.bf16.msra.mxu0 0
    %5887 = vmatprep.subr.bf16.mxu0 0
    %5888 = vmatpush1.bf16.msra.mxu0 0
    %5889 = vmatprep.subr.bf16.mxu0 0
    %5890 = vmatpush1.bf16.msra.mxu0 0
    %5891 = vmatprep.subr.bf16.mxu0 0
    %5892 = vmatpush1.bf16.msra.mxu0 0
    %5893 = vmatprep.subr.bf16.mxu0 0
    %5894 = vmatpush1.bf16.msra.mxu0 0
    %5895 = vmatprep.subr.bf16.mxu0 0
    %5896 = vmatpush1.bf16.msra.mxu0 0
    %5897 = vmatprep.subr.bf16.mxu0 %v5590
    %5898 = vmatpush1.bf16.msra.mxu0 %v5589
    %5899 = vmatprep.subr.bf16.mxu0 %v5584
    %5900 = vmatpush1.bf16.msra.mxu0 %v5583
    %5901 = vmatprep.subr.bf16.mxu0 0
    %5902 = vmatpush2.bf16.msra.mxu0 0
    %5903 = vmatprep.subr.bf16.mxu0 0
    %5904 = vmatpush2.bf16.msra.mxu0 0
    %5905 = vmatprep.subr.bf16.mxu0 0
    %5906 = vmatpush2.bf16.msra.mxu0 0
    %5907 = vmatprep.subr.bf16.mxu0 0
    %5908 = vmatpush2.bf16.msra.mxu0 0
    %5909 = vmatprep.subr.bf16.mxu0 0
    %5910 = vmatpush2.bf16.msra.mxu0 0
    %5911 = vmatprep.subr.bf16.mxu0 0
    %5912 = vmatpush2.bf16.msra.mxu0 0
    %5913 = vmatprep.subr.bf16.mxu0 0
    %5914 = vmatpush2.bf16.msra.mxu0 0
    %5915 = vmatprep.subr.bf16.mxu0 0
    %5916 = vmatpush2.bf16.msra.mxu0 0
    %5917 = vmatprep.mubr.bf16.mxu0 0
    %5918 = vmatmul.mubr.bf16.gmra.mxu0 %v5827
    %v5919 = vpop.f32.mrf.mxu0
    %v5920 = vadd.f32 %v5733, %v5919
    %v5921 = vpop.f32.mrf.mxu0
    %v5922 = vadd.f32 %v5735, %v5921
    %v5923 = vpop.f32.mrf.mxu0
    %v5924 = vadd.f32 %v5737, %v5923
    %v5925 = vpop.f32.mrf.mxu0
    %v5926 = vadd.f32 %v5739, %v5925
    %5927 = vmatprep.mubr.bf16.mxu0 0
    %5928 = vmatmul.mubr.bf16.gmra.mxu0 %v5830
    %v5929 = vpop.f32.mrf.mxu0
    %v5930 = vadd.f32 %v5743, %v5929
    %v5931 = vpop.f32.mrf.mxu0
    %v5932 = vadd.f32 %v5745, %v5931
    %v5933 = vpop.f32.mrf.mxu0
    %v5934 = vadd.f32 %v5747, %v5933
    %v5935 = vpop.f32.mrf.mxu0
    %v5936 = vadd.f32 %v5749, %v5935
    %5937 = vdwg.mxu0
    %5938 = vmatprep.subr.bf16.mxu0 0
    %5939 = vmatpush1.bf16.msra.mxu0 0
    %5940 = vmatprep.subr.bf16.mxu0 0
    %5941 = vmatpush1.bf16.msra.mxu0 0
    %5942 = vmatprep.subr.bf16.mxu0 0
    %5943 = vmatpush1.bf16.msra.mxu0 0
    %5944 = vmatprep.subr.bf16.mxu0 0
    %5945 = vmatpush1.bf16.msra.mxu0 0
    %5946 = vmatprep.subr.bf16.mxu0 0
    %5947 = vmatpush1.bf16.msra.mxu0 0
    %5948 = vmatprep.subr.bf16.mxu0 0
    %5949 = vmatpush1.bf16.msra.mxu0 0
    %5950 = vmatprep.subr.bf16.mxu0 %v5592
    %5951 = vmatpush1.bf16.msra.mxu0 %v5591
    %5952 = vmatprep.subr.bf16.mxu0 %v5586
    %5953 = vmatpush1.bf16.msra.mxu0 %v5585
    %5954 = vmatprep.subr.bf16.mxu0 0
    %5955 = vmatpush2.bf16.msra.mxu0 0
    %5956 = vmatprep.subr.bf16.mxu0 0
    %5957 = vmatpush2.bf16.msra.mxu0 0
    %5958 = vmatprep.subr.bf16.mxu0 0
    %5959 = vmatpush2.bf16.msra.mxu0 0
    %5960 = vmatprep.subr.bf16.mxu0 0
    %5961 = vmatpush2.bf16.msra.mxu0 0
    %5962 = vmatprep.subr.bf16.mxu0 0
    %5963 = vmatpush2.bf16.msra.mxu0 0
    %5964 = vmatprep.subr.bf16.mxu0 0
    %5965 = vmatpush2.bf16.msra.mxu0 0
    %5966 = vmatprep.subr.bf16.mxu0 0
    %5967 = vmatpush2.bf16.msra.mxu0 0
    %5968 = vmatprep.subr.bf16.mxu0 0
    %5969 = vmatpush2.bf16.msra.mxu0 0
    %5970 = vmatprep.mubr.bf16.mxu0 0
    %5971 = vmatmul.mubr.bf16.gmra.mxu0 %v5827
    %v5972 = vpop.f32.mrf.mxu0
    %v5973 = vadd.f32 %v5786, %v5972
    %v5974 = vpop.f32.mrf.mxu0
    %v5975 = vadd.f32 %v5788, %v5974
    %v5976 = vpop.f32.mrf.mxu0
    %v5977 = vadd.f32 %v5790, %v5976
    %v5978 = vpop.f32.mrf.mxu0
    %v5979 = vadd.f32 %v5792, %v5978
    %5980 = vmatprep.mubr.bf16.mxu0 0
    %5981 = vmatmul.mubr.bf16.gmra.mxu0 %v5830
    %v5982 = vpop.f32.mrf.mxu0
    %v5983 = vadd.f32 %v5796, %v5982
    %v5984 = vpop.f32.mrf.mxu0
    %v5985 = vadd.f32 %v5798, %v5984
    %v5986 = vpop.f32.mrf.mxu0
    %v5987 = vadd.f32 %v5800, %v5986
    %v5988 = vpop.f32.mrf.mxu0
    %v5989 = vadd.f32 %v5802, %v5988
    %5990 = vdwg.mxu0
    %s5991 = scalar_lea.vmem %s9, 32
    %v5992 = vld [vmem:[%s5991] sm:$0xf]
    %v5993 = vld [vmem:[%s5991 + $0x4] sm:$0xf]
    %v5994 = vld [vmem:[%s5991 + $0x8] sm:$0xf]
    %v5995 = vld [vmem:[%s5991 + $0xc] sm:$0xf]
    %v6000 = vunpack.c.l.b16 %v5992
    %v6001 = vunpack.c.l.b16 %v5993
    %v6002 = vunpack.c.l.b16 %v5994
    %v6003 = vunpack.c.l.b16 %v5995
    %v6004 = vpack.c.b16 %v6001, %v6000
    %v6005 = vpack.c.b16 %v6003, %v6002
    %6006 = vrot.lane.b32.xlu0 %v5581, 126
    %v6007 = vpop.permute.xlu0 %6006
    %6008 = vrot.lane.b32.xlu0 %v5582, 126
    %v6009 = vpop.permute.xlu0 %6008
    %6010 = vrot.lane.b32.xlu0 %v5583, 126
    %v6011 = vpop.permute.xlu0 %6010
    %6012 = vrot.lane.b32.xlu0 %v5584, 126
    %v6013 = vpop.permute.xlu0 %6012
    %6014 = vrot.lane.b32.xlu0 %v5585, 126
    %v6015 = vpop.permute.xlu0 %6014
    %6016 = vrot.lane.b32.xlu0 %v5586, 126
    %v6017 = vpop.permute.xlu0 %6016
    %6018 = vrot.lane.b32.xlu0 %v5587, 126
    %v6019 = vpop.permute.xlu0 %6018
    %6020 = vrot.lane.b32.xlu0 %v5588, 126
    %v6021 = vpop.permute.xlu0 %6020
    %6022 = vrot.lane.b32.xlu0 %v5589, 126
    %v6023 = vpop.permute.xlu0 %6022
    %6024 = vrot.lane.b32.xlu0 %v5590, 126
    %v6025 = vpop.permute.xlu0 %6024
    %6026 = vrot.lane.b32.xlu0 %v5591, 126
    %v6027 = vpop.permute.xlu0 %6026
    %6028 = vrot.lane.b32.xlu0 %v5592, 126
    %v6029 = vpop.permute.xlu0 %6028
    %v6030 = vsel %vm539, %v6007, %v6009
    %v6031 = vsel %vm539, %v6009, %v6011
    %v6032 = vsel %vm539, %v6011, %v6013
    %v6033 = vsel %vm539, %v6013, %v6015
    %v6034 = vsel %vm539, %v6015, %v6017
    %v6035 = vsel %vm539, %v6019, %v6021
    %v6036 = vsel %vm539, %v6021, %v6023
    %v6037 = vsel %vm539, %v6023, %v6025
    %v6038 = vsel %vm539, %v6025, %v6027
    %v6039 = vsel %vm539, %v6027, %v6029
    %v6053 = vsel %vm2883, %v6004, 0
    %v6056 = vsel %vm2883, %v6005, 0
    %6058 = vmatprep.subr.bf16.mxu0 0
    %6059 = vmatpush1.bf16.msra.mxu0 0
    %6060 = vmatprep.subr.bf16.mxu0 0
    %6061 = vmatpush1.bf16.msra.mxu0 0
    %6062 = vmatprep.subr.bf16.mxu0 0
    %6063 = vmatpush1.bf16.msra.mxu0 0
    %6064 = vmatprep.subr.bf16.mxu0 0
    %6065 = vmatpush1.bf16.msra.mxu0 0
    %6066 = vmatprep.subr.bf16.mxu0 0
    %6067 = vmatpush1.bf16.msra.mxu0 0
    %6068 = vmatprep.subr.bf16.mxu0 0
    %6069 = vmatpush1.bf16.msra.mxu0 0
    %6070 = vmatprep.subr.bf16.mxu0 %v6036
    %6071 = vmatpush1.bf16.msra.mxu0 %v6035
    %6072 = vmatprep.subr.bf16.mxu0 %v6031
    %6073 = vmatpush1.bf16.msra.mxu0 %v6030
    %6074 = vmatprep.subr.bf16.mxu0 0
    %6075 = vmatpush2.bf16.msra.mxu0 0
    %6076 = vmatprep.subr.bf16.mxu0 0
    %6077 = vmatpush2.bf16.msra.mxu0 0
    %6078 = vmatprep.subr.bf16.mxu0 0
    %6079 = vmatpush2.bf16.msra.mxu0 0
    %6080 = vmatprep.subr.bf16.mxu0 0
    %6081 = vmatpush2.bf16.msra.mxu0 0
    %6082 = vmatprep.subr.bf16.mxu0 0
    %6083 = vmatpush2.bf16.msra.mxu0 0
    %6084 = vmatprep.subr.bf16.mxu0 0
    %6085 = vmatpush2.bf16.msra.mxu0 0
    %6086 = vmatprep.subr.bf16.mxu0 0
    %6087 = vmatpush2.bf16.msra.mxu0 0
    %6088 = vmatprep.subr.bf16.mxu0 0
    %6089 = vmatpush2.bf16.msra.mxu0 0
    %6090 = vmatprep.mubr.bf16.mxu0 0
    %6091 = vmatmul.mubr.bf16.gmra.mxu0 %v6053
    %v6092 = vpop.f32.mrf.mxu0
    %v6093 = vadd.f32 0.0, %v6092
    %v6094 = vpop.f32.mrf.mxu0
    %v6095 = vadd.f32 0.0, %v6094
    %v6096 = vpop.f32.mrf.mxu0
    %v6097 = vadd.f32 0.0, %v6096
    %v6098 = vpop.f32.mrf.mxu0
    %v6099 = vadd.f32 0.0, %v6098
    %6100 = vmatprep.mubr.bf16.mxu0 0
    %6101 = vmatmul.mubr.bf16.gmra.mxu0 %v6056
    %v6102 = vpop.f32.mrf.mxu0
    %v6103 = vadd.f32 0.0, %v6102
    %v6104 = vpop.f32.mrf.mxu0
    %v6105 = vadd.f32 0.0, %v6104
    %v6106 = vpop.f32.mrf.mxu0
    %v6107 = vadd.f32 0.0, %v6106
    %v6108 = vpop.f32.mrf.mxu0
    %v6109 = vadd.f32 0.0, %v6108
    %6110 = vdwg.mxu0
    %6111 = vmatprep.subr.bf16.mxu0 0
    %6112 = vmatpush1.bf16.msra.mxu0 0
    %6113 = vmatprep.subr.bf16.mxu0 0
    %6114 = vmatpush1.bf16.msra.mxu0 0
    %6115 = vmatprep.subr.bf16.mxu0 0
    %6116 = vmatpush1.bf16.msra.mxu0 0
    %6117 = vmatprep.subr.bf16.mxu0 0
    %6118 = vmatpush1.bf16.msra.mxu0 0
    %6119 = vmatprep.subr.bf16.mxu0 0
    %6120 = vmatpush1.bf16.msra.mxu0 0
    %6121 = vmatprep.subr.bf16.mxu0 0
    %6122 = vmatpush1.bf16.msra.mxu0 0
    %6123 = vmatprep.subr.bf16.mxu0 %v6038
    %6124 = vmatpush1.bf16.msra.mxu0 %v6037
    %6125 = vmatprep.subr.bf16.mxu0 %v6033
    %6126 = vmatpush1.bf16.msra.mxu0 %v6032
    %6127 = vmatprep.subr.bf16.mxu0 0
    %6128 = vmatpush2.bf16.msra.mxu0 0
    %6129 = vmatprep.subr.bf16.mxu0 0
    %6130 = vmatpush2.bf16.msra.mxu0 0
    %6131 = vmatprep.subr.bf16.mxu0 0
    %6132 = vmatpush2.bf16.msra.mxu0 0
    %6133 = vmatprep.subr.bf16.mxu0 0
    %6134 = vmatpush2.bf16.msra.mxu0 0
    %6135 = vmatprep.subr.bf16.mxu0 0
    %6136 = vmatpush2.bf16.msra.mxu0 0
    %6137 = vmatprep.subr.bf16.mxu0 0
    %6138 = vmatpush2.bf16.msra.mxu0 0
    %6139 = vmatprep.subr.bf16.mxu0 0
    %6140 = vmatpush2.bf16.msra.mxu0 0
    %6141 = vmatprep.subr.bf16.mxu0 0
    %6142 = vmatpush2.bf16.msra.mxu0 0
    %6143 = vmatprep.mubr.bf16.mxu0 0
    %6144 = vmatmul.mubr.bf16.gmra.mxu0 %v6053
    %v6145 = vpop.f32.mrf.mxu0
    %v6146 = vadd.f32 0.0, %v6145
    %v6147 = vpop.f32.mrf.mxu0
    %v6148 = vadd.f32 0.0, %v6147
    %v6149 = vpop.f32.mrf.mxu0
    %v6150 = vadd.f32 0.0, %v6149
    %v6151 = vpop.f32.mrf.mxu0
    %v6152 = vadd.f32 0.0, %v6151
    %6153 = vmatprep.mubr.bf16.mxu0 0
    %6154 = vmatmul.mubr.bf16.gmra.mxu0 %v6056
    %v6155 = vpop.f32.mrf.mxu0
    %v6156 = vadd.f32 0.0, %v6155
    %v6157 = vpop.f32.mrf.mxu0
    %v6158 = vadd.f32 0.0, %v6157
    %v6159 = vpop.f32.mrf.mxu0
    %v6160 = vadd.f32 0.0, %v6159
    %v6161 = vpop.f32.mrf.mxu0
    %v6162 = vadd.f32 0.0, %v6161
    %6163 = vdwg.mxu0
    %6164 = vmatprep.subr.bf16.mxu0 0
    %6165 = vmatpush1.bf16.msra.mxu0 0
    %6166 = vmatprep.subr.bf16.mxu0 0
    %6167 = vmatpush1.bf16.msra.mxu0 0
    %6168 = vmatprep.subr.bf16.mxu0 0
    %6169 = vmatpush1.bf16.msra.mxu0 0
    %6170 = vmatprep.subr.bf16.mxu0 0
    %6171 = vmatpush1.bf16.msra.mxu0 0
    %6172 = vmatprep.subr.bf16.mxu0 0
    %6173 = vmatpush1.bf16.msra.mxu0 0
    %6174 = vmatprep.subr.bf16.mxu0 0
    %6175 = vmatpush1.bf16.msra.mxu0 0
    %6176 = vmatprep.subr.bf16.mxu0 %v6029
    %6177 = vmatpush1.bf16.msra.mxu0 %v6039
    %6178 = vmatprep.subr.bf16.mxu0 %v6017
    %6179 = vmatpush1.bf16.msra.mxu0 %v6034
    %6180 = vmatprep.subr.bf16.mxu0 0
    %6181 = vmatpush2.bf16.msra.mxu0 0
    %6182 = vmatprep.subr.bf16.mxu0 0
    %6183 = vmatpush2.bf16.msra.mxu0 0
    %6184 = vmatprep.subr.bf16.mxu0 0
    %6185 = vmatpush2.bf16.msra.mxu0 0
    %6186 = vmatprep.subr.bf16.mxu0 0
    %6187 = vmatpush2.bf16.msra.mxu0 0
    %6188 = vmatprep.subr.bf16.mxu0 0
    %6189 = vmatpush2.bf16.msra.mxu0 0
    %6190 = vmatprep.subr.bf16.mxu0 0
    %6191 = vmatpush2.bf16.msra.mxu0 0
    %6192 = vmatprep.subr.bf16.mxu0 0
    %6193 = vmatpush2.bf16.msra.mxu0 0
    %6194 = vmatprep.subr.bf16.mxu0 0
    %6195 = vmatpush2.bf16.msra.mxu0 0
    %6196 = vmatprep.mubr.bf16.mxu0 0
    %6197 = vmatmul.mubr.bf16.gmra.mxu0 %v6053
    %v6198 = vpop.f32.mrf.mxu0
    %v6199 = vadd.f32 0.0, %v6198
    %v6200 = vpop.f32.mrf.mxu0
    %v6201 = vadd.f32 0.0, %v6200
    %v6202 = vpop.f32.mrf.mxu0
    %v6203 = vadd.f32 0.0, %v6202
    %v6204 = vpop.f32.mrf.mxu0
    %v6205 = vadd.f32 0.0, %v6204
    %6206 = vmatprep.mubr.bf16.mxu0 0
    %6207 = vmatmul.mubr.bf16.gmra.mxu0 %v6056
    %v6208 = vpop.f32.mrf.mxu0
    %v6209 = vadd.f32 0.0, %v6208
    %v6210 = vpop.f32.mrf.mxu0
    %v6211 = vadd.f32 0.0, %v6210
    %v6212 = vpop.f32.mrf.mxu0
    %v6213 = vadd.f32 0.0, %v6212
    %v6214 = vpop.f32.mrf.mxu0
    %v6215 = vadd.f32 0.0, %v6214
    %6216 = vdwg.mxu0
    %v6217 = vadd.f32 %v5867, %v6093
    %v6218 = vadd.f32 %v5869, %v6095
    %v6219 = vadd.f32 %v5920, %v6146
    %v6220 = vadd.f32 %v5922, %v6148
    %v6221 = vadd.f32 %v5973, %v6199
    %v6222 = vadd.f32 %v5975, %v6201
    %v6223 = vadd.f32 %v5871, %v6097
    %v6224 = vadd.f32 %v5873, %v6099
    %v6225 = vadd.f32 %v5924, %v6150
    %v6226 = vadd.f32 %v5926, %v6152
    %v6227 = vadd.f32 %v5977, %v6203
    %v6228 = vadd.f32 %v5979, %v6205
    %v6229 = vadd.f32 %v5877, %v6103
    %v6230 = vadd.f32 %v5879, %v6105
    %v6231 = vadd.f32 %v5930, %v6156
    %v6232 = vadd.f32 %v5932, %v6158
    %v6233 = vadd.f32 %v5983, %v6209
    %v6234 = vadd.f32 %v5985, %v6211
    %v6235 = vadd.f32 %v5881, %v6107
    %v6236 = vadd.f32 %v5883, %v6109
    %v6237 = vadd.f32 %v5934, %v6160
    %v6238 = vadd.f32 %v5936, %v6162
    %v6239 = vadd.f32 %v5987, %v6213
    %v6240 = vadd.f32 %v5989, %v6215
    %s6241 = scalar_lea.vmem %s9, 48
    %v6242 = vld [vmem:[%s6241] sm:$0xf]
    %v6243 = vld [vmem:[%s6241 + $0x4] sm:$0xf]
    %v6244 = vld [vmem:[%s6241 + $0x8] sm:$0xf]
    %v6245 = vld [vmem:[%s6241 + $0xc] sm:$0xf]
    %v6250 = vunpack.c.l.b16 %v6242
    %v6251 = vunpack.c.l.b16 %v6243
    %v6252 = vunpack.c.l.b16 %v6244
    %v6253 = vunpack.c.l.b16 %v6245
    %v6254 = vpack.c.b16 %v6251, %v6250
    %v6255 = vpack.c.b16 %v6253, %v6252
    %6256 = vrot.lane.b32.xlu0 %v5581, 110
    %v6257 = vpop.permute.xlu0 %6256
    %6258 = vrot.lane.b32.xlu0 %v5582, 110
    %v6259 = vpop.permute.xlu0 %6258
    %6260 = vrot.lane.b32.xlu0 %v5583, 110
    %v6261 = vpop.permute.xlu0 %6260
    %6262 = vrot.lane.b32.xlu0 %v5584, 110
    %v6263 = vpop.permute.xlu0 %6262
    %6264 = vrot.lane.b32.xlu0 %v5585, 110
    %v6265 = vpop.permute.xlu0 %6264
    %6266 = vrot.lane.b32.xlu0 %v5586, 110
    %v6267 = vpop.permute.xlu0 %6266
    %6268 = vrot.lane.b32.xlu0 %v5587, 110
    %v6269 = vpop.permute.xlu0 %6268
    %6270 = vrot.lane.b32.xlu0 %v5588, 110
    %v6271 = vpop.permute.xlu0 %6270
    %6272 = vrot.lane.b32.xlu0 %v5589, 110
    %v6273 = vpop.permute.xlu0 %6272
    %6274 = vrot.lane.b32.xlu0 %v5590, 110
    %v6275 = vpop.permute.xlu0 %6274
    %6276 = vrot.lane.b32.xlu0 %v5591, 110
    %v6277 = vpop.permute.xlu0 %6276
    %6278 = vrot.lane.b32.xlu0 %v5592, 110
    %v6279 = vpop.permute.xlu0 %6278
    %v6280 = vsel %vm779, %v6257, %v6259
    %v6281 = vsel %vm779, %v6259, %v6261
    %v6282 = vsel %vm779, %v6261, %v6263
    %v6283 = vsel %vm779, %v6263, %v6265
    %v6284 = vsel %vm779, %v6265, %v6267
    %v6285 = vsel %vm779, %v6269, %v6271
    %v6286 = vsel %vm779, %v6271, %v6273
    %v6287 = vsel %vm779, %v6273, %v6275
    %v6288 = vsel %vm779, %v6275, %v6277
    %v6289 = vsel %vm779, %v6277, %v6279
    %v6303 = vsel %vm2883, %v6254, 0
    %v6306 = vsel %vm2883, %v6255, 0
    %6308 = vmatprep.subr.bf16.mxu0 0
    %6309 = vmatpush1.bf16.msra.mxu0 0
    %6310 = vmatprep.subr.bf16.mxu0 0
    %6311 = vmatpush1.bf16.msra.mxu0 0
    %6312 = vmatprep.subr.bf16.mxu0 0
    %6313 = vmatpush1.bf16.msra.mxu0 0
    %6314 = vmatprep.subr.bf16.mxu0 0
    %6315 = vmatpush1.bf16.msra.mxu0 0
    %6316 = vmatprep.subr.bf16.mxu0 0
    %6317 = vmatpush1.bf16.msra.mxu0 0
    %6318 = vmatprep.subr.bf16.mxu0 0
    %6319 = vmatpush1.bf16.msra.mxu0 0
    %6320 = vmatprep.subr.bf16.mxu0 %v6286
    %6321 = vmatpush1.bf16.msra.mxu0 %v6285
    %6322 = vmatprep.subr.bf16.mxu0 %v6281
    %6323 = vmatpush1.bf16.msra.mxu0 %v6280
    %6324 = vmatprep.subr.bf16.mxu0 0
    %6325 = vmatpush2.bf16.msra.mxu0 0
    %6326 = vmatprep.subr.bf16.mxu0 0
    %6327 = vmatpush2.bf16.msra.mxu0 0
    %6328 = vmatprep.subr.bf16.mxu0 0
    %6329 = vmatpush2.bf16.msra.mxu0 0
    %6330 = vmatprep.subr.bf16.mxu0 0
    %6331 = vmatpush2.bf16.msra.mxu0 0
    %6332 = vmatprep.subr.bf16.mxu0 0
    %6333 = vmatpush2.bf16.msra.mxu0 0
    %6334 = vmatprep.subr.bf16.mxu0 0
    %6335 = vmatpush2.bf16.msra.mxu0 0
    %6336 = vmatprep.subr.bf16.mxu0 0
    %6337 = vmatpush2.bf16.msra.mxu0 0
    %6338 = vmatprep.subr.bf16.mxu0 0
    %6339 = vmatpush2.bf16.msra.mxu0 0
    %6340 = vmatprep.mubr.bf16.mxu0 0
    %6341 = vmatmul.mubr.bf16.gmra.mxu0 %v6303
    %v6342 = vpop.f32.mrf.mxu0
    %v6343 = vadd.f32 0.0, %v6342
    %v6344 = vpop.f32.mrf.mxu0
    %v6345 = vadd.f32 0.0, %v6344
    %v6346 = vpop.f32.mrf.mxu0
    %v6347 = vadd.f32 0.0, %v6346
    %v6348 = vpop.f32.mrf.mxu0
    %v6349 = vadd.f32 0.0, %v6348
    %6350 = vmatprep.mubr.bf16.mxu0 0
    %6351 = vmatmul.mubr.bf16.gmra.mxu0 %v6306
    %v6352 = vpop.f32.mrf.mxu0
    %v6353 = vadd.f32 0.0, %v6352
    %v6354 = vpop.f32.mrf.mxu0
    %v6355 = vadd.f32 0.0, %v6354
    %v6356 = vpop.f32.mrf.mxu0
    %v6357 = vadd.f32 0.0, %v6356
    %v6358 = vpop.f32.mrf.mxu0
    %v6359 = vadd.f32 0.0, %v6358
    %6360 = vdwg.mxu0
    %6361 = vmatprep.subr.bf16.mxu0 0
    %6362 = vmatpush1.bf16.msra.mxu0 0
    %6363 = vmatprep.subr.bf16.mxu0 0
    %6364 = vmatpush1.bf16.msra.mxu0 0
    %6365 = vmatprep.subr.bf16.mxu0 0
    %6366 = vmatpush1.bf16.msra.mxu0 0
    %6367 = vmatprep.subr.bf16.mxu0 0
    %6368 = vmatpush1.bf16.msra.mxu0 0
    %6369 = vmatprep.subr.bf16.mxu0 0
    %6370 = vmatpush1.bf16.msra.mxu0 0
    %6371 = vmatprep.subr.bf16.mxu0 0
    %6372 = vmatpush1.bf16.msra.mxu0 0
    %6373 = vmatprep.subr.bf16.mxu0 %v6288
    %6374 = vmatpush1.bf16.msra.mxu0 %v6287
    %6375 = vmatprep.subr.bf16.mxu0 %v6283
    %6376 = vmatpush1.bf16.msra.mxu0 %v6282
    %6377 = vmatprep.subr.bf16.mxu0 0
    %6378 = vmatpush2.bf16.msra.mxu0 0
    %6379 = vmatprep.subr.bf16.mxu0 0
    %6380 = vmatpush2.bf16.msra.mxu0 0
    %6381 = vmatprep.subr.bf16.mxu0 0
    %6382 = vmatpush2.bf16.msra.mxu0 0
    %6383 = vmatprep.subr.bf16.mxu0 0
    %6384 = vmatpush2.bf16.msra.mxu0 0
    %6385 = vmatprep.subr.bf16.mxu0 0
    %6386 = vmatpush2.bf16.msra.mxu0 0
    %6387 = vmatprep.subr.bf16.mxu0 0
    %6388 = vmatpush2.bf16.msra.mxu0 0
    %6389 = vmatprep.subr.bf16.mxu0 0
    %6390 = vmatpush2.bf16.msra.mxu0 0
    %6391 = vmatprep.subr.bf16.mxu0 0
    %6392 = vmatpush2.bf16.msra.mxu0 0
    %6393 = vmatprep.mubr.bf16.mxu0 0
    %6394 = vmatmul.mubr.bf16.gmra.mxu0 %v6303
    %v6395 = vpop.f32.mrf.mxu0
    %v6396 = vadd.f32 0.0, %v6395
    %v6397 = vpop.f32.mrf.mxu0
    %v6398 = vadd.f32 0.0, %v6397
    %v6399 = vpop.f32.mrf.mxu0
    %v6400 = vadd.f32 0.0, %v6399
    %v6401 = vpop.f32.mrf.mxu0
    %v6402 = vadd.f32 0.0, %v6401
    %6403 = vmatprep.mubr.bf16.mxu0 0
    %6404 = vmatmul.mubr.bf16.gmra.mxu0 %v6306
    %v6405 = vpop.f32.mrf.mxu0
    %v6406 = vadd.f32 0.0, %v6405
    %v6407 = vpop.f32.mrf.mxu0
    %v6408 = vadd.f32 0.0, %v6407
    %v6409 = vpop.f32.mrf.mxu0
    %v6410 = vadd.f32 0.0, %v6409
    %v6411 = vpop.f32.mrf.mxu0
    %v6412 = vadd.f32 0.0, %v6411
    %6413 = vdwg.mxu0
    %6414 = vmatprep.subr.bf16.mxu0 0
    %6415 = vmatpush1.bf16.msra.mxu0 0
    %6416 = vmatprep.subr.bf16.mxu0 0
    %6417 = vmatpush1.bf16.msra.mxu0 0
    %6418 = vmatprep.subr.bf16.mxu0 0
    %6419 = vmatpush1.bf16.msra.mxu0 0
    %6420 = vmatprep.subr.bf16.mxu0 0
    %6421 = vmatpush1.bf16.msra.mxu0 0
    %6422 = vmatprep.subr.bf16.mxu0 0
    %6423 = vmatpush1.bf16.msra.mxu0 0
    %6424 = vmatprep.subr.bf16.mxu0 0
    %6425 = vmatpush1.bf16.msra.mxu0 0
    %6426 = vmatprep.subr.bf16.mxu0 %v6279
    %6427 = vmatpush1.bf16.msra.mxu0 %v6289
    %6428 = vmatprep.subr.bf16.mxu0 %v6267
    %6429 = vmatpush1.bf16.msra.mxu0 %v6284
    %6430 = vmatprep.subr.bf16.mxu0 0
    %6431 = vmatpush2.bf16.msra.mxu0 0
    %6432 = vmatprep.subr.bf16.mxu0 0
    %6433 = vmatpush2.bf16.msra.mxu0 0
    %6434 = vmatprep.subr.bf16.mxu0 0
    %6435 = vmatpush2.bf16.msra.mxu0 0
    %6436 = vmatprep.subr.bf16.mxu0 0
    %6437 = vmatpush2.bf16.msra.mxu0 0
    %6438 = vmatprep.subr.bf16.mxu0 0
    %6439 = vmatpush2.bf16.msra.mxu0 0
    %6440 = vmatprep.subr.bf16.mxu0 0
    %6441 = vmatpush2.bf16.msra.mxu0 0
    %6442 = vmatprep.subr.bf16.mxu0 0
    %6443 = vmatpush2.bf16.msra.mxu0 0
    %6444 = vmatprep.subr.bf16.mxu0 0
    %6445 = vmatpush2.bf16.msra.mxu0 0
    %6446 = vmatprep.mubr.bf16.mxu0 0
    %6447 = vmatmul.mubr.bf16.gmra.mxu0 %v6303
    %v6448 = vpop.f32.mrf.mxu0
    %v6449 = vadd.f32 0.0, %v6448
    %v6450 = vpop.f32.mrf.mxu0
    %v6451 = vadd.f32 0.0, %v6450
    %v6452 = vpop.f32.mrf.mxu0
    %v6453 = vadd.f32 0.0, %v6452
    %v6454 = vpop.f32.mrf.mxu0
    %v6455 = vadd.f32 0.0, %v6454
    %6456 = vmatprep.mubr.bf16.mxu0 0
    %6457 = vmatmul.mubr.bf16.gmra.mxu0 %v6306
    %v6458 = vpop.f32.mrf.mxu0
    %v6459 = vadd.f32 0.0, %v6458
    %v6460 = vpop.f32.mrf.mxu0
    %v6461 = vadd.f32 0.0, %v6460
    %v6462 = vpop.f32.mrf.mxu0
    %v6463 = vadd.f32 0.0, %v6462
    %v6464 = vpop.f32.mrf.mxu0
    %v6465 = vadd.f32 0.0, %v6464
    %6466 = vdwg.mxu0
    %v6467 = vadd.f32 %v6217, %v6343
    %v6468 = vadd.f32 %v6218, %v6345
    %v6469 = vadd.f32 %v6219, %v6396
    %v6470 = vadd.f32 %v6220, %v6398
    %v6471 = vadd.f32 %v6221, %v6449
    %v6472 = vadd.f32 %v6222, %v6451
    %v6473 = vadd.f32 %v6223, %v6347
    %v6474 = vadd.f32 %v6224, %v6349
    %v6475 = vadd.f32 %v6225, %v6400
    %v6476 = vadd.f32 %v6226, %v6402
    %v6477 = vadd.f32 %v6227, %v6453
    %v6478 = vadd.f32 %v6228, %v6455
    %v6479 = vadd.f32 %v6229, %v6353
    %v6480 = vadd.f32 %v6230, %v6355
    %v6481 = vadd.f32 %v6231, %v6406
    %v6482 = vadd.f32 %v6232, %v6408
    %v6483 = vadd.f32 %v6233, %v6459
    %v6484 = vadd.f32 %v6234, %v6461
    %v6485 = vadd.f32 %v6235, %v6357
    %v6486 = vadd.f32 %v6236, %v6359
    %v6487 = vadd.f32 %v6237, %v6410
    %v6488 = vadd.f32 %v6238, %v6412
    %v6489 = vadd.f32 %v6239, %v6463
    %v6490 = vadd.f32 %v6240, %v6465
    %s6491 = scalar_lea.vmem %s9, 64
    %v6492 = vld [vmem:[%s6491] sm:$0xf]
    %v6493 = vld [vmem:[%s6491 + $0x4] sm:$0xf]
    %v6494 = vld [vmem:[%s6491 + $0x8] sm:$0xf]
    %v6495 = vld [vmem:[%s6491 + $0xc] sm:$0xf]
    %v6500 = vunpack.c.l.b16 %v6492
    %v6501 = vunpack.c.l.b16 %v6493
    %v6502 = vunpack.c.l.b16 %v6494
    %v6503 = vunpack.c.l.b16 %v6495
    %v6504 = vpack.c.b16 %v6501, %v6500
    %v6505 = vpack.c.b16 %v6503, %v6502
    %6506 = vrot.lane.b32.xlu0 %v5581, 109
    %v6507 = vpop.permute.xlu0 %6506
    %6508 = vrot.lane.b32.xlu0 %v5582, 109
    %v6509 = vpop.permute.xlu0 %6508
    %6510 = vrot.lane.b32.xlu0 %v5583, 109
    %v6511 = vpop.permute.xlu0 %6510
    %6512 = vrot.lane.b32.xlu0 %v5584, 109
    %v6513 = vpop.permute.xlu0 %6512
    %6514 = vrot.lane.b32.xlu0 %v5585, 109
    %v6515 = vpop.permute.xlu0 %6514
    %6516 = vrot.lane.b32.xlu0 %v5586, 109
    %v6517 = vpop.permute.xlu0 %6516
    %6518 = vrot.lane.b32.xlu0 %v5587, 109
    %v6519 = vpop.permute.xlu0 %6518
    %6520 = vrot.lane.b32.xlu0 %v5588, 109
    %v6521 = vpop.permute.xlu0 %6520
    %6522 = vrot.lane.b32.xlu0 %v5589, 109
    %v6523 = vpop.permute.xlu0 %6522
    %6524 = vrot.lane.b32.xlu0 %v5590, 109
    %v6525 = vpop.permute.xlu0 %6524
    %6526 = vrot.lane.b32.xlu0 %v5591, 109
    %v6527 = vpop.permute.xlu0 %6526
    %6528 = vrot.lane.b32.xlu0 %v5592, 109
    %v6529 = vpop.permute.xlu0 %6528
    %v6530 = vsel %vm1019, %v6507, %v6509
    %v6531 = vsel %vm1019, %v6509, %v6511
    %v6532 = vsel %vm1019, %v6511, %v6513
    %v6533 = vsel %vm1019, %v6513, %v6515
    %v6534 = vsel %vm1019, %v6515, %v6517
    %v6535 = vsel %vm1019, %v6519, %v6521
    %v6536 = vsel %vm1019, %v6521, %v6523
    %v6537 = vsel %vm1019, %v6523, %v6525
    %v6538 = vsel %vm1019, %v6525, %v6527
    %v6539 = vsel %vm1019, %v6527, %v6529
    %v6553 = vsel %vm2883, %v6504, 0
    %v6556 = vsel %vm2883, %v6505, 0
    %6558 = vmatprep.subr.bf16.mxu0 0
    %6559 = vmatpush1.bf16.msra.mxu0 0
    %6560 = vmatprep.subr.bf16.mxu0 0
    %6561 = vmatpush1.bf16.msra.mxu0 0
    %6562 = vmatprep.subr.bf16.mxu0 0
    %6563 = vmatpush1.bf16.msra.mxu0 0
    %6564 = vmatprep.subr.bf16.mxu0 0
    %6565 = vmatpush1.bf16.msra.mxu0 0
    %6566 = vmatprep.subr.bf16.mxu0 0
    %6567 = vmatpush1.bf16.msra.mxu0 0
    %6568 = vmatprep.subr.bf16.mxu0 0
    %6569 = vmatpush1.bf16.msra.mxu0 0
    %6570 = vmatprep.subr.bf16.mxu0 %v6536
    %6571 = vmatpush1.bf16.msra.mxu0 %v6535
    %6572 = vmatprep.subr.bf16.mxu0 %v6531
    %6573 = vmatpush1.bf16.msra.mxu0 %v6530
    %6574 = vmatprep.subr.bf16.mxu0 0
    %6575 = vmatpush2.bf16.msra.mxu0 0
    %6576 = vmatprep.subr.bf16.mxu0 0
    %6577 = vmatpush2.bf16.msra.mxu0 0
    %6578 = vmatprep.subr.bf16.mxu0 0
    %6579 = vmatpush2.bf16.msra.mxu0 0
    %6580 = vmatprep.subr.bf16.mxu0 0
    %6581 = vmatpush2.bf16.msra.mxu0 0
    %6582 = vmatprep.subr.bf16.mxu0 0
    %6583 = vmatpush2.bf16.msra.mxu0 0
    %6584 = vmatprep.subr.bf16.mxu0 0
    %6585 = vmatpush2.bf16.msra.mxu0 0
    %6586 = vmatprep.subr.bf16.mxu0 0
    %6587 = vmatpush2.bf16.msra.mxu0 0
    %6588 = vmatprep.subr.bf16.mxu0 0
    %6589 = vmatpush2.bf16.msra.mxu0 0
    %6590 = vmatprep.mubr.bf16.mxu0 0
    %6591 = vmatmul.mubr.bf16.gmra.mxu0 %v6553
    %v6592 = vpop.f32.mrf.mxu0
    %v6593 = vadd.f32 0.0, %v6592
    %v6594 = vpop.f32.mrf.mxu0
    %v6595 = vadd.f32 0.0, %v6594
    %v6596 = vpop.f32.mrf.mxu0
    %v6597 = vadd.f32 0.0, %v6596
    %v6598 = vpop.f32.mrf.mxu0
    %v6599 = vadd.f32 0.0, %v6598
    %6600 = vmatprep.mubr.bf16.mxu0 0
    %6601 = vmatmul.mubr.bf16.gmra.mxu0 %v6556
    %v6602 = vpop.f32.mrf.mxu0
    %v6603 = vadd.f32 0.0, %v6602
    %v6604 = vpop.f32.mrf.mxu0
    %v6605 = vadd.f32 0.0, %v6604
    %v6606 = vpop.f32.mrf.mxu0
    %v6607 = vadd.f32 0.0, %v6606
    %v6608 = vpop.f32.mrf.mxu0
    %v6609 = vadd.f32 0.0, %v6608
    %6610 = vdwg.mxu0
    %6611 = vmatprep.subr.bf16.mxu0 0
    %6612 = vmatpush1.bf16.msra.mxu0 0
    %6613 = vmatprep.subr.bf16.mxu0 0
    %6614 = vmatpush1.bf16.msra.mxu0 0
    %6615 = vmatprep.subr.bf16.mxu0 0
    %6616 = vmatpush1.bf16.msra.mxu0 0
    %6617 = vmatprep.subr.bf16.mxu0 0
    %6618 = vmatpush1.bf16.msra.mxu0 0
    %6619 = vmatprep.subr.bf16.mxu0 0
    %6620 = vmatpush1.bf16.msra.mxu0 0
    %6621 = vmatprep.subr.bf16.mxu0 0
    %6622 = vmatpush1.bf16.msra.mxu0 0
    %6623 = vmatprep.subr.bf16.mxu0 %v6538
    %6624 = vmatpush1.bf16.msra.mxu0 %v6537
    %6625 = vmatprep.subr.bf16.mxu0 %v6533
    %6626 = vmatpush1.bf16.msra.mxu0 %v6532
    %6627 = vmatprep.subr.bf16.mxu0 0
    %6628 = vmatpush2.bf16.msra.mxu0 0
    %6629 = vmatprep.subr.bf16.mxu0 0
    %6630 = vmatpush2.bf16.msra.mxu0 0
    %6631 = vmatprep.subr.bf16.mxu0 0
    %6632 = vmatpush2.bf16.msra.mxu0 0
    %6633 = vmatprep.subr.bf16.mxu0 0
    %6634 = vmatpush2.bf16.msra.mxu0 0
    %6635 = vmatprep.subr.bf16.mxu0 0
    %6636 = vmatpush2.bf16.msra.mxu0 0
    %6637 = vmatprep.subr.bf16.mxu0 0
    %6638 = vmatpush2.bf16.msra.mxu0 0
    %6639 = vmatprep.subr.bf16.mxu0 0
    %6640 = vmatpush2.bf16.msra.mxu0 0
    %6641 = vmatprep.subr.bf16.mxu0 0
    %6642 = vmatpush2.bf16.msra.mxu0 0
    %6643 = vmatprep.mubr.bf16.mxu0 0
    %6644 = vmatmul.mubr.bf16.gmra.mxu0 %v6553
    %v6645 = vpop.f32.mrf.mxu0
    %v6646 = vadd.f32 0.0, %v6645
    %v6647 = vpop.f32.mrf.mxu0
    %v6648 = vadd.f32 0.0, %v6647
    %v6649 = vpop.f32.mrf.mxu0
    %v6650 = vadd.f32 0.0, %v6649
    %v6651 = vpop.f32.mrf.mxu0
    %v6652 = vadd.f32 0.0, %v6651
    %6653 = vmatprep.mubr.bf16.mxu0 0
    %6654 = vmatmul.mubr.bf16.gmra.mxu0 %v6556
    %v6655 = vpop.f32.mrf.mxu0
    %v6656 = vadd.f32 0.0, %v6655
    %v6657 = vpop.f32.mrf.mxu0
    %v6658 = vadd.f32 0.0, %v6657
    %v6659 = vpop.f32.mrf.mxu0
    %v6660 = vadd.f32 0.0, %v6659
    %v6661 = vpop.f32.mrf.mxu0
    %v6662 = vadd.f32 0.0, %v6661
    %6663 = vdwg.mxu0
    %6664 = vmatprep.subr.bf16.mxu0 0
    %6665 = vmatpush1.bf16.msra.mxu0 0
    %6666 = vmatprep.subr.bf16.mxu0 0
    %6667 = vmatpush1.bf16.msra.mxu0 0
    %6668 = vmatprep.subr.bf16.mxu0 0
    %6669 = vmatpush1.bf16.msra.mxu0 0
    %6670 = vmatprep.subr.bf16.mxu0 0
    %6671 = vmatpush1.bf16.msra.mxu0 0
    %6672 = vmatprep.subr.bf16.mxu0 0
    %6673 = vmatpush1.bf16.msra.mxu0 0
    %6674 = vmatprep.subr.bf16.mxu0 0
    %6675 = vmatpush1.bf16.msra.mxu0 0
    %6676 = vmatprep.subr.bf16.mxu0 %v6529
    %6677 = vmatpush1.bf16.msra.mxu0 %v6539
    %6678 = vmatprep.subr.bf16.mxu0 %v6517
    %6679 = vmatpush1.bf16.msra.mxu0 %v6534
    %6680 = vmatprep.subr.bf16.mxu0 0
    %6681 = vmatpush2.bf16.msra.mxu0 0
    %6682 = vmatprep.subr.bf16.mxu0 0
    %6683 = vmatpush2.bf16.msra.mxu0 0
    %6684 = vmatprep.subr.bf16.mxu0 0
    %6685 = vmatpush2.bf16.msra.mxu0 0
    %6686 = vmatprep.subr.bf16.mxu0 0
    %6687 = vmatpush2.bf16.msra.mxu0 0
    %6688 = vmatprep.subr.bf16.mxu0 0
    %6689 = vmatpush2.bf16.msra.mxu0 0
    %6690 = vmatprep.subr.bf16.mxu0 0
    %6691 = vmatpush2.bf16.msra.mxu0 0
    %6692 = vmatprep.subr.bf16.mxu0 0
    %6693 = vmatpush2.bf16.msra.mxu0 0
    %6694 = vmatprep.subr.bf16.mxu0 0
    %6695 = vmatpush2.bf16.msra.mxu0 0
    %6696 = vmatprep.mubr.bf16.mxu0 0
    %6697 = vmatmul.mubr.bf16.gmra.mxu0 %v6553
    %v6698 = vpop.f32.mrf.mxu0
    %v6699 = vadd.f32 0.0, %v6698
    %v6700 = vpop.f32.mrf.mxu0
    %v6701 = vadd.f32 0.0, %v6700
    %v6702 = vpop.f32.mrf.mxu0
    %v6703 = vadd.f32 0.0, %v6702
    %v6704 = vpop.f32.mrf.mxu0
    %v6705 = vadd.f32 0.0, %v6704
    %6706 = vmatprep.mubr.bf16.mxu0 0
    %6707 = vmatmul.mubr.bf16.gmra.mxu0 %v6556
    %v6708 = vpop.f32.mrf.mxu0
    %v6709 = vadd.f32 0.0, %v6708
    %v6710 = vpop.f32.mrf.mxu0
    %v6711 = vadd.f32 0.0, %v6710
    %v6712 = vpop.f32.mrf.mxu0
    %v6713 = vadd.f32 0.0, %v6712
    %v6714 = vpop.f32.mrf.mxu0
    %v6715 = vadd.f32 0.0, %v6714
    %6716 = vdwg.mxu0
    %v6717 = vadd.f32 %v6467, %v6593
    %v6718 = vadd.f32 %v6468, %v6595
    %v6719 = vadd.f32 %v6469, %v6646
    %v6720 = vadd.f32 %v6470, %v6648
    %v6721 = vadd.f32 %v6471, %v6699
    %v6722 = vadd.f32 %v6472, %v6701
    %v6723 = vadd.f32 %v6473, %v6597
    %v6724 = vadd.f32 %v6474, %v6599
    %v6725 = vadd.f32 %v6475, %v6650
    %v6726 = vadd.f32 %v6476, %v6652
    %v6727 = vadd.f32 %v6477, %v6703
    %v6728 = vadd.f32 %v6478, %v6705
    %v6729 = vadd.f32 %v6479, %v6603
    %v6730 = vadd.f32 %v6480, %v6605
    %v6731 = vadd.f32 %v6481, %v6656
    %v6732 = vadd.f32 %v6482, %v6658
    %v6733 = vadd.f32 %v6483, %v6709
    %v6734 = vadd.f32 %v6484, %v6711
    %v6735 = vadd.f32 %v6485, %v6607
    %v6736 = vadd.f32 %v6486, %v6609
    %v6737 = vadd.f32 %v6487, %v6660
    %v6738 = vadd.f32 %v6488, %v6662
    %v6739 = vadd.f32 %v6489, %v6713
    %v6740 = vadd.f32 %v6490, %v6715
    %s6741 = scalar_lea.vmem %s9, 80
    %v6742 = vld [vmem:[%s6741] sm:$0xf]
    %v6743 = vld [vmem:[%s6741 + $0x4] sm:$0xf]
    %v6744 = vld [vmem:[%s6741 + $0x8] sm:$0xf]
    %v6745 = vld [vmem:[%s6741 + $0xc] sm:$0xf]
    %v6750 = vunpack.c.l.b16 %v6742
    %v6751 = vunpack.c.l.b16 %v6743
    %v6752 = vunpack.c.l.b16 %v6744
    %v6753 = vunpack.c.l.b16 %v6745
    %v6754 = vpack.c.b16 %v6751, %v6750
    %v6755 = vpack.c.b16 %v6753, %v6752
    %6756 = vrot.lane.b32.xlu0 %v5581, 108
    %v6757 = vpop.permute.xlu0 %6756
    %6758 = vrot.lane.b32.xlu0 %v5582, 108
    %v6759 = vpop.permute.xlu0 %6758
    %6760 = vrot.lane.b32.xlu0 %v5583, 108
    %v6761 = vpop.permute.xlu0 %6760
    %6762 = vrot.lane.b32.xlu0 %v5584, 108
    %v6763 = vpop.permute.xlu0 %6762
    %6764 = vrot.lane.b32.xlu0 %v5585, 108
    %v6765 = vpop.permute.xlu0 %6764
    %6766 = vrot.lane.b32.xlu0 %v5586, 108
    %v6767 = vpop.permute.xlu0 %6766
    %6768 = vrot.lane.b32.xlu0 %v5587, 108
    %v6769 = vpop.permute.xlu0 %6768
    %6770 = vrot.lane.b32.xlu0 %v5588, 108
    %v6771 = vpop.permute.xlu0 %6770
    %6772 = vrot.lane.b32.xlu0 %v5589, 108
    %v6773 = vpop.permute.xlu0 %6772
    %6774 = vrot.lane.b32.xlu0 %v5590, 108
    %v6775 = vpop.permute.xlu0 %6774
    %6776 = vrot.lane.b32.xlu0 %v5591, 108
    %v6777 = vpop.permute.xlu0 %6776
    %6778 = vrot.lane.b32.xlu0 %v5592, 108
    %v6779 = vpop.permute.xlu0 %6778
    %v6780 = vsel %vm1259, %v6757, %v6759
    %v6781 = vsel %vm1259, %v6759, %v6761
    %v6782 = vsel %vm1259, %v6761, %v6763
    %v6783 = vsel %vm1259, %v6763, %v6765
    %v6784 = vsel %vm1259, %v6765, %v6767
    %v6785 = vsel %vm1259, %v6769, %v6771
    %v6786 = vsel %vm1259, %v6771, %v6773
    %v6787 = vsel %vm1259, %v6773, %v6775
    %v6788 = vsel %vm1259, %v6775, %v6777
    %v6789 = vsel %vm1259, %v6777, %v6779
    %v6803 = vsel %vm2883, %v6754, 0
    %v6806 = vsel %vm2883, %v6755, 0
    %6808 = vmatprep.subr.bf16.mxu0 0
    %6809 = vmatpush1.bf16.msra.mxu0 0
    %6810 = vmatprep.subr.bf16.mxu0 0
    %6811 = vmatpush1.bf16.msra.mxu0 0
    %6812 = vmatprep.subr.bf16.mxu0 0
    %6813 = vmatpush1.bf16.msra.mxu0 0
    %6814 = vmatprep.subr.bf16.mxu0 0
    %6815 = vmatpush1.bf16.msra.mxu0 0
    %6816 = vmatprep.subr.bf16.mxu0 0
    %6817 = vmatpush1.bf16.msra.mxu0 0
    %6818 = vmatprep.subr.bf16.mxu0 0
    %6819 = vmatpush1.bf16.msra.mxu0 0
    %6820 = vmatprep.subr.bf16.mxu0 %v6786
    %6821 = vmatpush1.bf16.msra.mxu0 %v6785
    %6822 = vmatprep.subr.bf16.mxu0 %v6781
    %6823 = vmatpush1.bf16.msra.mxu0 %v6780
    %6824 = vmatprep.subr.bf16.mxu0 0
    %6825 = vmatpush2.bf16.msra.mxu0 0
    %6826 = vmatprep.subr.bf16.mxu0 0
    %6827 = vmatpush2.bf16.msra.mxu0 0
    %6828 = vmatprep.subr.bf16.mxu0 0
    %6829 = vmatpush2.bf16.msra.mxu0 0
    %6830 = vmatprep.subr.bf16.mxu0 0
    %6831 = vmatpush2.bf16.msra.mxu0 0
    %6832 = vmatprep.subr.bf16.mxu0 0
    %6833 = vmatpush2.bf16.msra.mxu0 0
    %6834 = vmatprep.subr.bf16.mxu0 0
    %6835 = vmatpush2.bf16.msra.mxu0 0
    %6836 = vmatprep.subr.bf16.mxu0 0
    %6837 = vmatpush2.bf16.msra.mxu0 0
    %6838 = vmatprep.subr.bf16.mxu0 0
    %6839 = vmatpush2.bf16.msra.mxu0 0
    %6840 = vmatprep.mubr.bf16.mxu0 0
    %6841 = vmatmul.mubr.bf16.gmra.mxu0 %v6803
    %v6842 = vpop.f32.mrf.mxu0
    %v6843 = vadd.f32 0.0, %v6842
    %v6844 = vpop.f32.mrf.mxu0
    %v6845 = vadd.f32 0.0, %v6844
    %v6846 = vpop.f32.mrf.mxu0
    %v6847 = vadd.f32 0.0, %v6846
    %v6848 = vpop.f32.mrf.mxu0
    %v6849 = vadd.f32 0.0, %v6848
    %6850 = vmatprep.mubr.bf16.mxu0 0
    %6851 = vmatmul.mubr.bf16.gmra.mxu0 %v6806
    %v6852 = vpop.f32.mrf.mxu0
    %v6853 = vadd.f32 0.0, %v6852
    %v6854 = vpop.f32.mrf.mxu0
    %v6855 = vadd.f32 0.0, %v6854
    %v6856 = vpop.f32.mrf.mxu0
    %v6857 = vadd.f32 0.0, %v6856
    %v6858 = vpop.f32.mrf.mxu0
    %v6859 = vadd.f32 0.0, %v6858
    %6860 = vdwg.mxu0
    %6861 = vmatprep.subr.bf16.mxu0 0
    %6862 = vmatpush1.bf16.msra.mxu0 0
    %6863 = vmatprep.subr.bf16.mxu0 0
    %6864 = vmatpush1.bf16.msra.mxu0 0
    %6865 = vmatprep.subr.bf16.mxu0 0
    %6866 = vmatpush1.bf16.msra.mxu0 0
    %6867 = vmatprep.subr.bf16.mxu0 0
    %6868 = vmatpush1.bf16.msra.mxu0 0
    %6869 = vmatprep.subr.bf16.mxu0 0
    %6870 = vmatpush1.bf16.msra.mxu0 0
    %6871 = vmatprep.subr.bf16.mxu0 0
    %6872 = vmatpush1.bf16.msra.mxu0 0
    %6873 = vmatprep.subr.bf16.mxu0 %v6788
    %6874 = vmatpush1.bf16.msra.mxu0 %v6787
    %6875 = vmatprep.subr.bf16.mxu0 %v6783
    %6876 = vmatpush1.bf16.msra.mxu0 %v6782
    %6877 = vmatprep.subr.bf16.mxu0 0
    %6878 = vmatpush2.bf16.msra.mxu0 0
    %6879 = vmatprep.subr.bf16.mxu0 0
    %6880 = vmatpush2.bf16.msra.mxu0 0
    %6881 = vmatprep.subr.bf16.mxu0 0
    %6882 = vmatpush2.bf16.msra.mxu0 0
    %6883 = vmatprep.subr.bf16.mxu0 0
    %6884 = vmatpush2.bf16.msra.mxu0 0
    %6885 = vmatprep.subr.bf16.mxu0 0
    %6886 = vmatpush2.bf16.msra.mxu0 0
    %6887 = vmatprep.subr.bf16.mxu0 0
    %6888 = vmatpush2.bf16.msra.mxu0 0
    %6889 = vmatprep.subr.bf16.mxu0 0
    %6890 = vmatpush2.bf16.msra.mxu0 0
    %6891 = vmatprep.subr.bf16.mxu0 0
    %6892 = vmatpush2.bf16.msra.mxu0 0
    %6893 = vmatprep.mubr.bf16.mxu0 0
    %6894 = vmatmul.mubr.bf16.gmra.mxu0 %v6803
    %v6895 = vpop.f32.mrf.mxu0
    %v6896 = vadd.f32 0.0, %v6895
    %v6897 = vpop.f32.mrf.mxu0
    %v6898 = vadd.f32 0.0, %v6897
    %v6899 = vpop.f32.mrf.mxu0
    %v6900 = vadd.f32 0.0, %v6899
    %v6901 = vpop.f32.mrf.mxu0
    %v6902 = vadd.f32 0.0, %v6901
    %6903 = vmatprep.mubr.bf16.mxu0 0
    %6904 = vmatmul.mubr.bf16.gmra.mxu0 %v6806
    %v6905 = vpop.f32.mrf.mxu0
    %v6906 = vadd.f32 0.0, %v6905
    %v6907 = vpop.f32.mrf.mxu0
    %v6908 = vadd.f32 0.0, %v6907
    %v6909 = vpop.f32.mrf.mxu0
    %v6910 = vadd.f32 0.0, %v6909
    %v6911 = vpop.f32.mrf.mxu0
    %v6912 = vadd.f32 0.0, %v6911
    %6913 = vdwg.mxu0
    %6914 = vmatprep.subr.bf16.mxu0 0
    %6915 = vmatpush1.bf16.msra.mxu0 0
    %6916 = vmatprep.subr.bf16.mxu0 0
    %6917 = vmatpush1.bf16.msra.mxu0 0
    %6918 = vmatprep.subr.bf16.mxu0 0
    %6919 = vmatpush1.bf16.msra.mxu0 0
    %6920 = vmatprep.subr.bf16.mxu0 0
    %6921 = vmatpush1.bf16.msra.mxu0 0
    %6922 = vmatprep.subr.bf16.mxu0 0
    %6923 = vmatpush1.bf16.msra.mxu0 0
    %6924 = vmatprep.subr.bf16.mxu0 0
    %6925 = vmatpush1.bf16.msra.mxu0 0
    %6926 = vmatprep.subr.bf16.mxu0 %v6779
    %6927 = vmatpush1.bf16.msra.mxu0 %v6789
    %6928 = vmatprep.subr.bf16.mxu0 %v6767
    %6929 = vmatpush1.bf16.msra.mxu0 %v6784
    %6930 = vmatprep.subr.bf16.mxu0 0
    %6931 = vmatpush2.bf16.msra.mxu0 0
    %6932 = vmatprep.subr.bf16.mxu0 0
    %6933 = vmatpush2.bf16.msra.mxu0 0
    %6934 = vmatprep.subr.bf16.mxu0 0
    %6935 = vmatpush2.bf16.msra.mxu0 0
    %6936 = vmatprep.subr.bf16.mxu0 0
    %6937 = vmatpush2.bf16.msra.mxu0 0
    %6938 = vmatprep.subr.bf16.mxu0 0
    %6939 = vmatpush2.bf16.msra.mxu0 0
    %6940 = vmatprep.subr.bf16.mxu0 0
    %6941 = vmatpush2.bf16.msra.mxu0 0
    %6942 = vmatprep.subr.bf16.mxu0 0
    %6943 = vmatpush2.bf16.msra.mxu0 0
    %6944 = vmatprep.subr.bf16.mxu0 0
    %6945 = vmatpush2.bf16.msra.mxu0 0
    %6946 = vmatprep.mubr.bf16.mxu0 0
    %6947 = vmatmul.mubr.bf16.gmra.mxu0 %v6803
    %v6948 = vpop.f32.mrf.mxu0
    %v6949 = vadd.f32 0.0, %v6948
    %v6950 = vpop.f32.mrf.mxu0
    %v6951 = vadd.f32 0.0, %v6950
    %v6952 = vpop.f32.mrf.mxu0
    %v6953 = vadd.f32 0.0, %v6952
    %v6954 = vpop.f32.mrf.mxu0
    %v6955 = vadd.f32 0.0, %v6954
    %6956 = vmatprep.mubr.bf16.mxu0 0
    %6957 = vmatmul.mubr.bf16.gmra.mxu0 %v6806
    %v6958 = vpop.f32.mrf.mxu0
    %v6959 = vadd.f32 0.0, %v6958
    %v6960 = vpop.f32.mrf.mxu0
    %v6961 = vadd.f32 0.0, %v6960
    %v6962 = vpop.f32.mrf.mxu0
    %v6963 = vadd.f32 0.0, %v6962
    %v6964 = vpop.f32.mrf.mxu0
    %v6965 = vadd.f32 0.0, %v6964
    %6966 = vdwg.mxu0
    %v6967 = vadd.f32 %v6717, %v6843
    %v6968 = vadd.f32 %v6718, %v6845
    %v6969 = vadd.f32 %v6719, %v6896
    %v6970 = vadd.f32 %v6720, %v6898
    %v6971 = vadd.f32 %v6721, %v6949
    %v6972 = vadd.f32 %v6722, %v6951
    %v6973 = vadd.f32 %v6723, %v6847
    %v6974 = vadd.f32 %v6724, %v6849
    %v6975 = vadd.f32 %v6725, %v6900
    %v6976 = vadd.f32 %v6726, %v6902
    %v6977 = vadd.f32 %v6727, %v6953
    %v6978 = vadd.f32 %v6728, %v6955
    %v6979 = vadd.f32 %v6729, %v6853
    %v6980 = vadd.f32 %v6730, %v6855
    %v6981 = vadd.f32 %v6731, %v6906
    %v6982 = vadd.f32 %v6732, %v6908
    %v6983 = vadd.f32 %v6733, %v6959
    %v6984 = vadd.f32 %v6734, %v6961
    %v6985 = vadd.f32 %v6735, %v6857
    %v6986 = vadd.f32 %v6736, %v6859
    %v6987 = vadd.f32 %v6737, %v6910
    %v6988 = vadd.f32 %v6738, %v6912
    %v6989 = vadd.f32 %v6739, %v6963
    %v6990 = vadd.f32 %v6740, %v6965
    %s6991 = scalar_lea.vmem %s9, 96
    %v6992 = vld [vmem:[%s6991] sm:$0xf]
    %v6993 = vld [vmem:[%s6991 + $0x4] sm:$0xf]
    %v6994 = vld [vmem:[%s6991 + $0x8] sm:$0xf]
    %v6995 = vld [vmem:[%s6991 + $0xc] sm:$0xf]
    %v7000 = vunpack.c.l.b16 %v6992
    %v7001 = vunpack.c.l.b16 %v6993
    %v7002 = vunpack.c.l.b16 %v6994
    %v7003 = vunpack.c.l.b16 %v6995
    %v7004 = vpack.c.b16 %v7001, %v7000
    %v7005 = vpack.c.b16 %v7003, %v7002
    %7006 = vrot.lane.b32.xlu0 %v5581, 92
    %v7007 = vpop.permute.xlu0 %7006
    %7008 = vrot.lane.b32.xlu0 %v5582, 92
    %v7009 = vpop.permute.xlu0 %7008
    %7010 = vrot.lane.b32.xlu0 %v5583, 92
    %v7011 = vpop.permute.xlu0 %7010
    %7012 = vrot.lane.b32.xlu0 %v5584, 92
    %v7013 = vpop.permute.xlu0 %7012
    %7014 = vrot.lane.b32.xlu0 %v5585, 92
    %v7015 = vpop.permute.xlu0 %7014
    %7016 = vrot.lane.b32.xlu0 %v5586, 92
    %v7017 = vpop.permute.xlu0 %7016
    %7018 = vrot.lane.b32.xlu0 %v5587, 92
    %v7019 = vpop.permute.xlu0 %7018
    %7020 = vrot.lane.b32.xlu0 %v5588, 92
    %v7021 = vpop.permute.xlu0 %7020
    %7022 = vrot.lane.b32.xlu0 %v5589, 92
    %v7023 = vpop.permute.xlu0 %7022
    %7024 = vrot.lane.b32.xlu0 %v5590, 92
    %v7025 = vpop.permute.xlu0 %7024
    %7026 = vrot.lane.b32.xlu0 %v5591, 92
    %v7027 = vpop.permute.xlu0 %7026
    %7028 = vrot.lane.b32.xlu0 %v5592, 92
    %v7029 = vpop.permute.xlu0 %7028
    %v7030 = vsel %vm1499, %v7007, %v7009
    %v7031 = vsel %vm1499, %v7009, %v7011
    %v7032 = vsel %vm1499, %v7011, %v7013
    %v7033 = vsel %vm1499, %v7013, %v7015
    %v7034 = vsel %vm1499, %v7015, %v7017
    %v7035 = vsel %vm1499, %v7019, %v7021
    %v7036 = vsel %vm1499, %v7021, %v7023
    %v7037 = vsel %vm1499, %v7023, %v7025
    %v7038 = vsel %vm1499, %v7025, %v7027
    %v7039 = vsel %vm1499, %v7027, %v7029
    %v7053 = vsel %vm2883, %v7004, 0
    %v7056 = vsel %vm2883, %v7005, 0
    %7058 = vmatprep.subr.bf16.mxu0 0
    %7059 = vmatpush1.bf16.msra.mxu0 0
    %7060 = vmatprep.subr.bf16.mxu0 0
    %7061 = vmatpush1.bf16.msra.mxu0 0
    %7062 = vmatprep.subr.bf16.mxu0 0
    %7063 = vmatpush1.bf16.msra.mxu0 0
    %7064 = vmatprep.subr.bf16.mxu0 0
    %7065 = vmatpush1.bf16.msra.mxu0 0
    %7066 = vmatprep.subr.bf16.mxu0 0
    %7067 = vmatpush1.bf16.msra.mxu0 0
    %7068 = vmatprep.subr.bf16.mxu0 0
    %7069 = vmatpush1.bf16.msra.mxu0 0
    %7070 = vmatprep.subr.bf16.mxu0 %v7036
    %7071 = vmatpush1.bf16.msra.mxu0 %v7035
    %7072 = vmatprep.subr.bf16.mxu0 %v7031
    %7073 = vmatpush1.bf16.msra.mxu0 %v7030
    %7074 = vmatprep.subr.bf16.mxu0 0
    %7075 = vmatpush2.bf16.msra.mxu0 0
    %7076 = vmatprep.subr.bf16.mxu0 0
    %7077 = vmatpush2.bf16.msra.mxu0 0
    %7078 = vmatprep.subr.bf16.mxu0 0
    %7079 = vmatpush2.bf16.msra.mxu0 0
    %7080 = vmatprep.subr.bf16.mxu0 0
    %7081 = vmatpush2.bf16.msra.mxu0 0
    %7082 = vmatprep.subr.bf16.mxu0 0
    %7083 = vmatpush2.bf16.msra.mxu0 0
    %7084 = vmatprep.subr.bf16.mxu0 0
    %7085 = vmatpush2.bf16.msra.mxu0 0
    %7086 = vmatprep.subr.bf16.mxu0 0
    %7087 = vmatpush2.bf16.msra.mxu0 0
    %7088 = vmatprep.subr.bf16.mxu0 0
    %7089 = vmatpush2.bf16.msra.mxu0 0
    %7090 = vmatprep.mubr.bf16.mxu0 0
    %7091 = vmatmul.mubr.bf16.gmra.mxu0 %v7053
    %v7092 = vpop.f32.mrf.mxu0
    %v7093 = vadd.f32 0.0, %v7092
    %v7094 = vpop.f32.mrf.mxu0
    %v7095 = vadd.f32 0.0, %v7094
    %v7096 = vpop.f32.mrf.mxu0
    %v7097 = vadd.f32 0.0, %v7096
    %v7098 = vpop.f32.mrf.mxu0
    %v7099 = vadd.f32 0.0, %v7098
    %7100 = vmatprep.mubr.bf16.mxu0 0
    %7101 = vmatmul.mubr.bf16.gmra.mxu0 %v7056
    %v7102 = vpop.f32.mrf.mxu0
    %v7103 = vadd.f32 0.0, %v7102
    %v7104 = vpop.f32.mrf.mxu0
    %v7105 = vadd.f32 0.0, %v7104
    %v7106 = vpop.f32.mrf.mxu0
    %v7107 = vadd.f32 0.0, %v7106
    %v7108 = vpop.f32.mrf.mxu0
    %v7109 = vadd.f32 0.0, %v7108
    %7110 = vdwg.mxu0
    %7111 = vmatprep.subr.bf16.mxu0 0
    %7112 = vmatpush1.bf16.msra.mxu0 0
    %7113 = vmatprep.subr.bf16.mxu0 0
    %7114 = vmatpush1.bf16.msra.mxu0 0
    %7115 = vmatprep.subr.bf16.mxu0 0
    %7116 = vmatpush1.bf16.msra.mxu0 0
    %7117 = vmatprep.subr.bf16.mxu0 0
    %7118 = vmatpush1.bf16.msra.mxu0 0
    %7119 = vmatprep.subr.bf16.mxu0 0
    %7120 = vmatpush1.bf16.msra.mxu0 0
    %7121 = vmatprep.subr.bf16.mxu0 0
    %7122 = vmatpush1.bf16.msra.mxu0 0
    %7123 = vmatprep.subr.bf16.mxu0 %v7038
    %7124 = vmatpush1.bf16.msra.mxu0 %v7037
    %7125 = vmatprep.subr.bf16.mxu0 %v7033
    %7126 = vmatpush1.bf16.msra.mxu0 %v7032
    %7127 = vmatprep.subr.bf16.mxu0 0
    %7128 = vmatpush2.bf16.msra.mxu0 0
    %7129 = vmatprep.subr.bf16.mxu0 0
    %7130 = vmatpush2.bf16.msra.mxu0 0
    %7131 = vmatprep.subr.bf16.mxu0 0
    %7132 = vmatpush2.bf16.msra.mxu0 0
    %7133 = vmatprep.subr.bf16.mxu0 0
    %7134 = vmatpush2.bf16.msra.mxu0 0
    %7135 = vmatprep.subr.bf16.mxu0 0
    %7136 = vmatpush2.bf16.msra.mxu0 0
    %7137 = vmatprep.subr.bf16.mxu0 0
    %7138 = vmatpush2.bf16.msra.mxu0 0
    %7139 = vmatprep.subr.bf16.mxu0 0
    %7140 = vmatpush2.bf16.msra.mxu0 0
    %7141 = vmatprep.subr.bf16.mxu0 0
    %7142 = vmatpush2.bf16.msra.mxu0 0
    %7143 = vmatprep.mubr.bf16.mxu0 0
    %7144 = vmatmul.mubr.bf16.gmra.mxu0 %v7053
    %v7145 = vpop.f32.mrf.mxu0
    %v7146 = vadd.f32 0.0, %v7145
    %v7147 = vpop.f32.mrf.mxu0
    %v7148 = vadd.f32 0.0, %v7147
    %v7149 = vpop.f32.mrf.mxu0
    %v7150 = vadd.f32 0.0, %v7149
    %v7151 = vpop.f32.mrf.mxu0
    %v7152 = vadd.f32 0.0, %v7151
    %7153 = vmatprep.mubr.bf16.mxu0 0
    %7154 = vmatmul.mubr.bf16.gmra.mxu0 %v7056
    %v7155 = vpop.f32.mrf.mxu0
    %v7156 = vadd.f32 0.0, %v7155
    %v7157 = vpop.f32.mrf.mxu0
    %v7158 = vadd.f32 0.0, %v7157
    %v7159 = vpop.f32.mrf.mxu0
    %v7160 = vadd.f32 0.0, %v7159
    %v7161 = vpop.f32.mrf.mxu0
    %v7162 = vadd.f32 0.0, %v7161
    %7163 = vdwg.mxu0
    %7164 = vmatprep.subr.bf16.mxu0 0
    %7165 = vmatpush1.bf16.msra.mxu0 0
    %7166 = vmatprep.subr.bf16.mxu0 0
    %7167 = vmatpush1.bf16.msra.mxu0 0
    %7168 = vmatprep.subr.bf16.mxu0 0
    %7169 = vmatpush1.bf16.msra.mxu0 0
    %7170 = vmatprep.subr.bf16.mxu0 0
    %7171 = vmatpush1.bf16.msra.mxu0 0
    %7172 = vmatprep.subr.bf16.mxu0 0
    %7173 = vmatpush1.bf16.msra.mxu0 0
    %7174 = vmatprep.subr.bf16.mxu0 0
    %7175 = vmatpush1.bf16.msra.mxu0 0
    %7176 = vmatprep.subr.bf16.mxu0 %v7029
    %7177 = vmatpush1.bf16.msra.mxu0 %v7039
    %7178 = vmatprep.subr.bf16.mxu0 %v7017
    %7179 = vmatpush1.bf16.msra.mxu0 %v7034
    %7180 = vmatprep.subr.bf16.mxu0 0
    %7181 = vmatpush2.bf16.msra.mxu0 0
    %7182 = vmatprep.subr.bf16.mxu0 0
    %7183 = vmatpush2.bf16.msra.mxu0 0
    %7184 = vmatprep.subr.bf16.mxu0 0
    %7185 = vmatpush2.bf16.msra.mxu0 0
    %7186 = vmatprep.subr.bf16.mxu0 0
    %7187 = vmatpush2.bf16.msra.mxu0 0
    %7188 = vmatprep.subr.bf16.mxu0 0
    %7189 = vmatpush2.bf16.msra.mxu0 0
    %7190 = vmatprep.subr.bf16.mxu0 0
    %7191 = vmatpush2.bf16.msra.mxu0 0
    %7192 = vmatprep.subr.bf16.mxu0 0
    %7193 = vmatpush2.bf16.msra.mxu0 0
    %7194 = vmatprep.subr.bf16.mxu0 0
    %7195 = vmatpush2.bf16.msra.mxu0 0
    %7196 = vmatprep.mubr.bf16.mxu0 0
    %7197 = vmatmul.mubr.bf16.gmra.mxu0 %v7053
    %v7198 = vpop.f32.mrf.mxu0
    %v7199 = vadd.f32 0.0, %v7198
    %v7200 = vpop.f32.mrf.mxu0
    %v7201 = vadd.f32 0.0, %v7200
    %v7202 = vpop.f32.mrf.mxu0
    %v7203 = vadd.f32 0.0, %v7202
    %v7204 = vpop.f32.mrf.mxu0
    %v7205 = vadd.f32 0.0, %v7204
    %7206 = vmatprep.mubr.bf16.mxu0 0
    %7207 = vmatmul.mubr.bf16.gmra.mxu0 %v7056
    %v7208 = vpop.f32.mrf.mxu0
    %v7209 = vadd.f32 0.0, %v7208
    %v7210 = vpop.f32.mrf.mxu0
    %v7211 = vadd.f32 0.0, %v7210
    %v7212 = vpop.f32.mrf.mxu0
    %v7213 = vadd.f32 0.0, %v7212
    %v7214 = vpop.f32.mrf.mxu0
    %v7215 = vadd.f32 0.0, %v7214
    %7216 = vdwg.mxu0
    %v7217 = vadd.f32 %v6967, %v7093
    %v7218 = vadd.f32 %v6968, %v7095
    %v7219 = vadd.f32 %v6969, %v7146
    %v7220 = vadd.f32 %v6970, %v7148
    %v7221 = vadd.f32 %v6971, %v7199
    %v7222 = vadd.f32 %v6972, %v7201
    %v7223 = vadd.f32 %v6973, %v7097
    %v7224 = vadd.f32 %v6974, %v7099
    %v7225 = vadd.f32 %v6975, %v7150
    %v7226 = vadd.f32 %v6976, %v7152
    %v7227 = vadd.f32 %v6977, %v7203
    %v7228 = vadd.f32 %v6978, %v7205
    %v7229 = vadd.f32 %v6979, %v7103
    %v7230 = vadd.f32 %v6980, %v7105
    %v7231 = vadd.f32 %v6981, %v7156
    %v7232 = vadd.f32 %v6982, %v7158
    %v7233 = vadd.f32 %v6983, %v7209
    %v7234 = vadd.f32 %v6984, %v7211
    %v7235 = vadd.f32 %v6985, %v7107
    %v7236 = vadd.f32 %v6986, %v7109
    %v7237 = vadd.f32 %v6987, %v7160
    %v7238 = vadd.f32 %v6988, %v7162
    %v7239 = vadd.f32 %v6989, %v7213
    %v7240 = vadd.f32 %v6990, %v7215
    %s7241 = scalar_lea.vmem %s9, 112
    %v7242 = vld [vmem:[%s7241] sm:$0xf]
    %v7243 = vld [vmem:[%s7241 + $0x4] sm:$0xf]
    %v7244 = vld [vmem:[%s7241 + $0x8] sm:$0xf]
    %v7245 = vld [vmem:[%s7241 + $0xc] sm:$0xf]
    %v7250 = vunpack.c.l.b16 %v7242
    %v7251 = vunpack.c.l.b16 %v7243
    %v7252 = vunpack.c.l.b16 %v7244
    %v7253 = vunpack.c.l.b16 %v7245
    %v7254 = vpack.c.b16 %v7251, %v7250
    %v7255 = vpack.c.b16 %v7253, %v7252
    %7256 = vrot.lane.b32.xlu0 %v5581, 91
    %v7257 = vpop.permute.xlu0 %7256
    %7258 = vrot.lane.b32.xlu0 %v5582, 91
    %v7259 = vpop.permute.xlu0 %7258
    %7260 = vrot.lane.b32.xlu0 %v5583, 91
    %v7261 = vpop.permute.xlu0 %7260
    %7262 = vrot.lane.b32.xlu0 %v5584, 91
    %v7263 = vpop.permute.xlu0 %7262
    %7264 = vrot.lane.b32.xlu0 %v5585, 91
    %v7265 = vpop.permute.xlu0 %7264
    %7266 = vrot.lane.b32.xlu0 %v5586, 91
    %v7267 = vpop.permute.xlu0 %7266
    %7268 = vrot.lane.b32.xlu0 %v5587, 91
    %v7269 = vpop.permute.xlu0 %7268
    %7270 = vrot.lane.b32.xlu0 %v5588, 91
    %v7271 = vpop.permute.xlu0 %7270
    %7272 = vrot.lane.b32.xlu0 %v5589, 91
    %v7273 = vpop.permute.xlu0 %7272
    %7274 = vrot.lane.b32.xlu0 %v5590, 91
    %v7275 = vpop.permute.xlu0 %7274
    %7276 = vrot.lane.b32.xlu0 %v5591, 91
    %v7277 = vpop.permute.xlu0 %7276
    %7278 = vrot.lane.b32.xlu0 %v5592, 91
    %v7279 = vpop.permute.xlu0 %7278
    %v7280 = vsel %vm1739, %v7257, %v7259
    %v7281 = vsel %vm1739, %v7259, %v7261
    %v7282 = vsel %vm1739, %v7261, %v7263
    %v7283 = vsel %vm1739, %v7263, %v7265
    %v7284 = vsel %vm1739, %v7265, %v7267
    %v7285 = vsel %vm1739, %v7269, %v7271
    %v7286 = vsel %vm1739, %v7271, %v7273
    %v7287 = vsel %vm1739, %v7273, %v7275
    %v7288 = vsel %vm1739, %v7275, %v7277
    %v7289 = vsel %vm1739, %v7277, %v7279
    %v7303 = vsel %vm2883, %v7254, 0
    %v7306 = vsel %vm2883, %v7255, 0
    %7308 = vmatprep.subr.bf16.mxu0 0
    %7309 = vmatpush1.bf16.msra.mxu0 0
    %7310 = vmatprep.subr.bf16.mxu0 0
    %7311 = vmatpush1.bf16.msra.mxu0 0
    %7312 = vmatprep.subr.bf16.mxu0 0
    %7313 = vmatpush1.bf16.msra.mxu0 0
    %7314 = vmatprep.subr.bf16.mxu0 0
    %7315 = vmatpush1.bf16.msra.mxu0 0
    %7316 = vmatprep.subr.bf16.mxu0 0
    %7317 = vmatpush1.bf16.msra.mxu0 0
    %7318 = vmatprep.subr.bf16.mxu0 0
    %7319 = vmatpush1.bf16.msra.mxu0 0
    %7320 = vmatprep.subr.bf16.mxu0 %v7286
    %7321 = vmatpush1.bf16.msra.mxu0 %v7285
    %7322 = vmatprep.subr.bf16.mxu0 %v7281
    %7323 = vmatpush1.bf16.msra.mxu0 %v7280
    %7324 = vmatprep.subr.bf16.mxu0 0
    %7325 = vmatpush2.bf16.msra.mxu0 0
    %7326 = vmatprep.subr.bf16.mxu0 0
    %7327 = vmatpush2.bf16.msra.mxu0 0
    %7328 = vmatprep.subr.bf16.mxu0 0
    %7329 = vmatpush2.bf16.msra.mxu0 0
    %7330 = vmatprep.subr.bf16.mxu0 0
    %7331 = vmatpush2.bf16.msra.mxu0 0
    %7332 = vmatprep.subr.bf16.mxu0 0
    %7333 = vmatpush2.bf16.msra.mxu0 0
    %7334 = vmatprep.subr.bf16.mxu0 0
    %7335 = vmatpush2.bf16.msra.mxu0 0
    %7336 = vmatprep.subr.bf16.mxu0 0
    %7337 = vmatpush2.bf16.msra.mxu0 0
    %7338 = vmatprep.subr.bf16.mxu0 0
    %7339 = vmatpush2.bf16.msra.mxu0 0
    %7340 = vmatprep.mubr.bf16.mxu0 0
    %7341 = vmatmul.mubr.bf16.gmra.mxu0 %v7303
    %v7342 = vpop.f32.mrf.mxu0
    %v7343 = vadd.f32 0.0, %v7342
    %v7344 = vpop.f32.mrf.mxu0
    %v7345 = vadd.f32 0.0, %v7344
    %v7346 = vpop.f32.mrf.mxu0
    %v7347 = vadd.f32 0.0, %v7346
    %v7348 = vpop.f32.mrf.mxu0
    %v7349 = vadd.f32 0.0, %v7348
    %7350 = vmatprep.mubr.bf16.mxu0 0
    %7351 = vmatmul.mubr.bf16.gmra.mxu0 %v7306
    %v7352 = vpop.f32.mrf.mxu0
    %v7353 = vadd.f32 0.0, %v7352
    %v7354 = vpop.f32.mrf.mxu0
    %v7355 = vadd.f32 0.0, %v7354
    %v7356 = vpop.f32.mrf.mxu0
    %v7357 = vadd.f32 0.0, %v7356
    %v7358 = vpop.f32.mrf.mxu0
    %v7359 = vadd.f32 0.0, %v7358
    %7360 = vdwg.mxu0
    %7361 = vmatprep.subr.bf16.mxu0 0
    %7362 = vmatpush1.bf16.msra.mxu0 0
    %7363 = vmatprep.subr.bf16.mxu0 0
    %7364 = vmatpush1.bf16.msra.mxu0 0
    %7365 = vmatprep.subr.bf16.mxu0 0
    %7366 = vmatpush1.bf16.msra.mxu0 0
    %7367 = vmatprep.subr.bf16.mxu0 0
    %7368 = vmatpush1.bf16.msra.mxu0 0
    %7369 = vmatprep.subr.bf16.mxu0 0
    %7370 = vmatpush1.bf16.msra.mxu0 0
    %7371 = vmatprep.subr.bf16.mxu0 0
    %7372 = vmatpush1.bf16.msra.mxu0 0
    %7373 = vmatprep.subr.bf16.mxu0 %v7288
    %7374 = vmatpush1.bf16.msra.mxu0 %v7287
    %7375 = vmatprep.subr.bf16.mxu0 %v7283
    %7376 = vmatpush1.bf16.msra.mxu0 %v7282
    %7377 = vmatprep.subr.bf16.mxu0 0
    %7378 = vmatpush2.bf16.msra.mxu0 0
    %7379 = vmatprep.subr.bf16.mxu0 0
    %7380 = vmatpush2.bf16.msra.mxu0 0
    %7381 = vmatprep.subr.bf16.mxu0 0
    %7382 = vmatpush2.bf16.msra.mxu0 0
    %7383 = vmatprep.subr.bf16.mxu0 0
    %7384 = vmatpush2.bf16.msra.mxu0 0
    %7385 = vmatprep.subr.bf16.mxu0 0
    %7386 = vmatpush2.bf16.msra.mxu0 0
    %7387 = vmatprep.subr.bf16.mxu0 0
    %7388 = vmatpush2.bf16.msra.mxu0 0
    %7389 = vmatprep.subr.bf16.mxu0 0
    %7390 = vmatpush2.bf16.msra.mxu0 0
    %7391 = vmatprep.subr.bf16.mxu0 0
    %7392 = vmatpush2.bf16.msra.mxu0 0
    %7393 = vmatprep.mubr.bf16.mxu0 0
    %7394 = vmatmul.mubr.bf16.gmra.mxu0 %v7303
    %v7395 = vpop.f32.mrf.mxu0
    %v7396 = vadd.f32 0.0, %v7395
    %v7397 = vpop.f32.mrf.mxu0
    %v7398 = vadd.f32 0.0, %v7397
    %v7399 = vpop.f32.mrf.mxu0
    %v7400 = vadd.f32 0.0, %v7399
    %v7401 = vpop.f32.mrf.mxu0
    %v7402 = vadd.f32 0.0, %v7401
    %7403 = vmatprep.mubr.bf16.mxu0 0
    %7404 = vmatmul.mubr.bf16.gmra.mxu0 %v7306
    %v7405 = vpop.f32.mrf.mxu0
    %v7406 = vadd.f32 0.0, %v7405
    %v7407 = vpop.f32.mrf.mxu0
    %v7408 = vadd.f32 0.0, %v7407
    %v7409 = vpop.f32.mrf.mxu0
    %v7410 = vadd.f32 0.0, %v7409
    %v7411 = vpop.f32.mrf.mxu0
    %v7412 = vadd.f32 0.0, %v7411
    %7413 = vdwg.mxu0
    %7414 = vmatprep.subr.bf16.mxu0 0
    %7415 = vmatpush1.bf16.msra.mxu0 0
    %7416 = vmatprep.subr.bf16.mxu0 0
    %7417 = vmatpush1.bf16.msra.mxu0 0
    %7418 = vmatprep.subr.bf16.mxu0 0
    %7419 = vmatpush1.bf16.msra.mxu0 0
    %7420 = vmatprep.subr.bf16.mxu0 0
    %7421 = vmatpush1.bf16.msra.mxu0 0
    %7422 = vmatprep.subr.bf16.mxu0 0
    %7423 = vmatpush1.bf16.msra.mxu0 0
    %7424 = vmatprep.subr.bf16.mxu0 0
    %7425 = vmatpush1.bf16.msra.mxu0 0
    %7426 = vmatprep.subr.bf16.mxu0 %v7279
    %7427 = vmatpush1.bf16.msra.mxu0 %v7289
    %7428 = vmatprep.subr.bf16.mxu0 %v7267
    %7429 = vmatpush1.bf16.msra.mxu0 %v7284
    %7430 = vmatprep.subr.bf16.mxu0 0
    %7431 = vmatpush2.bf16.msra.mxu0 0
    %7432 = vmatprep.subr.bf16.mxu0 0
    %7433 = vmatpush2.bf16.msra.mxu0 0
    %7434 = vmatprep.subr.bf16.mxu0 0
    %7435 = vmatpush2.bf16.msra.mxu0 0
    %7436 = vmatprep.subr.bf16.mxu0 0
    %7437 = vmatpush2.bf16.msra.mxu0 0
    %7438 = vmatprep.subr.bf16.mxu0 0
    %7439 = vmatpush2.bf16.msra.mxu0 0
    %7440 = vmatprep.subr.bf16.mxu0 0
    %7441 = vmatpush2.bf16.msra.mxu0 0
    %7442 = vmatprep.subr.bf16.mxu0 0
    %7443 = vmatpush2.bf16.msra.mxu0 0
    %7444 = vmatprep.subr.bf16.mxu0 0
    %7445 = vmatpush2.bf16.msra.mxu0 0
    %7446 = vmatprep.mubr.bf16.mxu0 0
    %7447 = vmatmul.mubr.bf16.gmra.mxu0 %v7303
    %v7448 = vpop.f32.mrf.mxu0
    %v7449 = vadd.f32 0.0, %v7448
    %v7450 = vpop.f32.mrf.mxu0
    %v7451 = vadd.f32 0.0, %v7450
    %v7452 = vpop.f32.mrf.mxu0
    %v7453 = vadd.f32 0.0, %v7452
    %v7454 = vpop.f32.mrf.mxu0
    %v7455 = vadd.f32 0.0, %v7454
    %7456 = vmatprep.mubr.bf16.mxu0 0
    %7457 = vmatmul.mubr.bf16.gmra.mxu0 %v7306
    %v7458 = vpop.f32.mrf.mxu0
    %v7459 = vadd.f32 0.0, %v7458
    %v7460 = vpop.f32.mrf.mxu0
    %v7461 = vadd.f32 0.0, %v7460
    %v7462 = vpop.f32.mrf.mxu0
    %v7463 = vadd.f32 0.0, %v7462
    %v7464 = vpop.f32.mrf.mxu0
    %v7465 = vadd.f32 0.0, %v7464
    %7466 = vdwg.mxu0
    %v7467 = vadd.f32 %v7217, %v7343
    %v7468 = vadd.f32 %v7218, %v7345
    %v7469 = vadd.f32 %v7219, %v7396
    %v7470 = vadd.f32 %v7220, %v7398
    %v7471 = vadd.f32 %v7221, %v7449
    %v7472 = vadd.f32 %v7222, %v7451
    %v7473 = vadd.f32 %v7223, %v7347
    %v7474 = vadd.f32 %v7224, %v7349
    %v7475 = vadd.f32 %v7225, %v7400
    %v7476 = vadd.f32 %v7226, %v7402
    %v7477 = vadd.f32 %v7227, %v7453
    %v7478 = vadd.f32 %v7228, %v7455
    %v7479 = vadd.f32 %v7229, %v7353
    %v7480 = vadd.f32 %v7230, %v7355
    %v7481 = vadd.f32 %v7231, %v7406
    %v7482 = vadd.f32 %v7232, %v7408
    %v7483 = vadd.f32 %v7233, %v7459
    %v7484 = vadd.f32 %v7234, %v7461
    %v7485 = vadd.f32 %v7235, %v7357
    %v7486 = vadd.f32 %v7236, %v7359
    %v7487 = vadd.f32 %v7237, %v7410
    %v7488 = vadd.f32 %v7238, %v7412
    %v7489 = vadd.f32 %v7239, %v7463
    %v7490 = vadd.f32 %v7240, %v7465
    %s7491 = scalar_lea.vmem %s9, 128
    %v7492 = vld [vmem:[%s7491] sm:$0xf]
    %v7493 = vld [vmem:[%s7491 + $0x4] sm:$0xf]
    %v7494 = vld [vmem:[%s7491 + $0x8] sm:$0xf]
    %v7495 = vld [vmem:[%s7491 + $0xc] sm:$0xf]
    %v7500 = vunpack.c.l.b16 %v7492
    %v7501 = vunpack.c.l.b16 %v7493
    %v7502 = vunpack.c.l.b16 %v7494
    %v7503 = vunpack.c.l.b16 %v7495
    %v7504 = vpack.c.b16 %v7501, %v7500
    %v7505 = vpack.c.b16 %v7503, %v7502
    %7506 = vrot.lane.b32.xlu0 %v5581, 90
    %v7507 = vpop.permute.xlu0 %7506
    %7508 = vrot.lane.b32.xlu0 %v5582, 90
    %v7509 = vpop.permute.xlu0 %7508
    %7510 = vrot.lane.b32.xlu0 %v5583, 90
    %v7511 = vpop.permute.xlu0 %7510
    %7512 = vrot.lane.b32.xlu0 %v5584, 90
    %v7513 = vpop.permute.xlu0 %7512
    %7514 = vrot.lane.b32.xlu0 %v5585, 90
    %v7515 = vpop.permute.xlu0 %7514
    %7516 = vrot.lane.b32.xlu0 %v5586, 90
    %v7517 = vpop.permute.xlu0 %7516
    %7518 = vrot.lane.b32.xlu0 %v5587, 90
    %v7519 = vpop.permute.xlu0 %7518
    %7520 = vrot.lane.b32.xlu0 %v5588, 90
    %v7521 = vpop.permute.xlu0 %7520
    %7522 = vrot.lane.b32.xlu0 %v5589, 90
    %v7523 = vpop.permute.xlu0 %7522
    %7524 = vrot.lane.b32.xlu0 %v5590, 90
    %v7525 = vpop.permute.xlu0 %7524
    %7526 = vrot.lane.b32.xlu0 %v5591, 90
    %v7527 = vpop.permute.xlu0 %7526
    %7528 = vrot.lane.b32.xlu0 %v5592, 90
    %v7529 = vpop.permute.xlu0 %7528
    %v7530 = vsel %vm1979, %v7507, %v7509
    %v7531 = vsel %vm1979, %v7509, %v7511
    %v7532 = vsel %vm1979, %v7511, %v7513
    %v7533 = vsel %vm1979, %v7513, %v7515
    %v7534 = vsel %vm1979, %v7515, %v7517
    %v7535 = vsel %vm1979, %v7519, %v7521
    %v7536 = vsel %vm1979, %v7521, %v7523
    %v7537 = vsel %vm1979, %v7523, %v7525
    %v7538 = vsel %vm1979, %v7525, %v7527
    %v7539 = vsel %vm1979, %v7527, %v7529
    %v7553 = vsel %vm2883, %v7504, 0
    %v7556 = vsel %vm2883, %v7505, 0
    %7558 = vmatprep.subr.bf16.mxu0 0
    %7559 = vmatpush1.bf16.msra.mxu0 0
    %7560 = vmatprep.subr.bf16.mxu0 0
    %7561 = vmatpush1.bf16.msra.mxu0 0
    %7562 = vmatprep.subr.bf16.mxu0 0
    %7563 = vmatpush1.bf16.msra.mxu0 0
    %7564 = vmatprep.subr.bf16.mxu0 0
    %7565 = vmatpush1.bf16.msra.mxu0 0
    %7566 = vmatprep.subr.bf16.mxu0 0
    %7567 = vmatpush1.bf16.msra.mxu0 0
    %7568 = vmatprep.subr.bf16.mxu0 0
    %7569 = vmatpush1.bf16.msra.mxu0 0
    %7570 = vmatprep.subr.bf16.mxu0 %v7536
    %7571 = vmatpush1.bf16.msra.mxu0 %v7535
    %7572 = vmatprep.subr.bf16.mxu0 %v7531
    %7573 = vmatpush1.bf16.msra.mxu0 %v7530
    %7574 = vmatprep.subr.bf16.mxu0 0
    %7575 = vmatpush2.bf16.msra.mxu0 0
    %7576 = vmatprep.subr.bf16.mxu0 0
    %7577 = vmatpush2.bf16.msra.mxu0 0
    %7578 = vmatprep.subr.bf16.mxu0 0
    %7579 = vmatpush2.bf16.msra.mxu0 0
    %7580 = vmatprep.subr.bf16.mxu0 0
    %7581 = vmatpush2.bf16.msra.mxu0 0
    %7582 = vmatprep.subr.bf16.mxu0 0
    %7583 = vmatpush2.bf16.msra.mxu0 0
    %7584 = vmatprep.subr.bf16.mxu0 0
    %7585 = vmatpush2.bf16.msra.mxu0 0
    %7586 = vmatprep.subr.bf16.mxu0 0
    %7587 = vmatpush2.bf16.msra.mxu0 0
    %7588 = vmatprep.subr.bf16.mxu0 0
    %7589 = vmatpush2.bf16.msra.mxu0 0
    %7590 = vmatprep.mubr.bf16.mxu0 0
    %7591 = vmatmul.mubr.bf16.gmra.mxu0 %v7553
    %v7592 = vpop.f32.mrf.mxu0
    %v7593 = vadd.f32 0.0, %v7592
    %v7594 = vpop.f32.mrf.mxu0
    %v7595 = vadd.f32 0.0, %v7594
    %v7596 = vpop.f32.mrf.mxu0
    %v7597 = vadd.f32 0.0, %v7596
    %v7598 = vpop.f32.mrf.mxu0
    %v7599 = vadd.f32 0.0, %v7598
    %7600 = vmatprep.mubr.bf16.mxu0 0
    %7601 = vmatmul.mubr.bf16.gmra.mxu0 %v7556
    %v7602 = vpop.f32.mrf.mxu0
    %v7603 = vadd.f32 0.0, %v7602
    %v7604 = vpop.f32.mrf.mxu0
    %v7605 = vadd.f32 0.0, %v7604
    %v7606 = vpop.f32.mrf.mxu0
    %v7607 = vadd.f32 0.0, %v7606
    %v7608 = vpop.f32.mrf.mxu0
    %v7609 = vadd.f32 0.0, %v7608
    %7610 = vdwg.mxu0
    %7611 = vmatprep.subr.bf16.mxu0 0
    %7612 = vmatpush1.bf16.msra.mxu0 0
    %7613 = vmatprep.subr.bf16.mxu0 0
    %7614 = vmatpush1.bf16.msra.mxu0 0
    %7615 = vmatprep.subr.bf16.mxu0 0
    %7616 = vmatpush1.bf16.msra.mxu0 0
    %7617 = vmatprep.subr.bf16.mxu0 0
    %7618 = vmatpush1.bf16.msra.mxu0 0
    %7619 = vmatprep.subr.bf16.mxu0 0
    %7620 = vmatpush1.bf16.msra.mxu0 0
    %7621 = vmatprep.subr.bf16.mxu0 0
    %7622 = vmatpush1.bf16.msra.mxu0 0
    %7623 = vmatprep.subr.bf16.mxu0 %v7538
    %7624 = vmatpush1.bf16.msra.mxu0 %v7537
    %7625 = vmatprep.subr.bf16.mxu0 %v7533
    %7626 = vmatpush1.bf16.msra.mxu0 %v7532
    %7627 = vmatprep.subr.bf16.mxu0 0
    %7628 = vmatpush2.bf16.msra.mxu0 0
    %7629 = vmatprep.subr.bf16.mxu0 0
    %7630 = vmatpush2.bf16.msra.mxu0 0
    %7631 = vmatprep.subr.bf16.mxu0 0
    %7632 = vmatpush2.bf16.msra.mxu0 0
    %7633 = vmatprep.subr.bf16.mxu0 0
    %7634 = vmatpush2.bf16.msra.mxu0 0
    %7635 = vmatprep.subr.bf16.mxu0 0
    %7636 = vmatpush2.bf16.msra.mxu0 0
    %7637 = vmatprep.subr.bf16.mxu0 0
    %7638 = vmatpush2.bf16.msra.mxu0 0
    %7639 = vmatprep.subr.bf16.mxu0 0
    %7640 = vmatpush2.bf16.msra.mxu0 0
    %7641 = vmatprep.subr.bf16.mxu0 0
    %7642 = vmatpush2.bf16.msra.mxu0 0
    %7643 = vmatprep.mubr.bf16.mxu0 0
    %7644 = vmatmul.mubr.bf16.gmra.mxu0 %v7553
    %v7645 = vpop.f32.mrf.mxu0
    %v7646 = vadd.f32 0.0, %v7645
    %v7647 = vpop.f32.mrf.mxu0
    %v7648 = vadd.f32 0.0, %v7647
    %v7649 = vpop.f32.mrf.mxu0
    %v7650 = vadd.f32 0.0, %v7649
    %v7651 = vpop.f32.mrf.mxu0
    %v7652 = vadd.f32 0.0, %v7651
    %7653 = vmatprep.mubr.bf16.mxu0 0
    %7654 = vmatmul.mubr.bf16.gmra.mxu0 %v7556
    %v7655 = vpop.f32.mrf.mxu0
    %v7656 = vadd.f32 0.0, %v7655
    %v7657 = vpop.f32.mrf.mxu0
    %v7658 = vadd.f32 0.0, %v7657
    %v7659 = vpop.f32.mrf.mxu0
    %v7660 = vadd.f32 0.0, %v7659
    %v7661 = vpop.f32.mrf.mxu0
    %v7662 = vadd.f32 0.0, %v7661
    %7663 = vdwg.mxu0
    %7664 = vmatprep.subr.bf16.mxu0 0
    %7665 = vmatpush1.bf16.msra.mxu0 0
    %7666 = vmatprep.subr.bf16.mxu0 0
    %7667 = vmatpush1.bf16.msra.mxu0 0
    %7668 = vmatprep.subr.bf16.mxu0 0
    %7669 = vmatpush1.bf16.msra.mxu0 0
    %7670 = vmatprep.subr.bf16.mxu0 0
    %7671 = vmatpush1.bf16.msra.mxu0 0
    %7672 = vmatprep.subr.bf16.mxu0 0
    %7673 = vmatpush1.bf16.msra.mxu0 0
    %7674 = vmatprep.subr.bf16.mxu0 0
    %7675 = vmatpush1.bf16.msra.mxu0 0
    %7676 = vmatprep.subr.bf16.mxu0 %v7529
    %7677 = vmatpush1.bf16.msra.mxu0 %v7539
    %7678 = vmatprep.subr.bf16.mxu0 %v7517
    %7679 = vmatpush1.bf16.msra.mxu0 %v7534
    %7680 = vmatprep.subr.bf16.mxu0 0
    %7681 = vmatpush2.bf16.msra.mxu0 0
    %7682 = vmatprep.subr.bf16.mxu0 0
    %7683 = vmatpush2.bf16.msra.mxu0 0
    %7684 = vmatprep.subr.bf16.mxu0 0
    %7685 = vmatpush2.bf16.msra.mxu0 0
    %7686 = vmatprep.subr.bf16.mxu0 0
    %7687 = vmatpush2.bf16.msra.mxu0 0
    %7688 = vmatprep.subr.bf16.mxu0 0
    %7689 = vmatpush2.bf16.msra.mxu0 0
    %7690 = vmatprep.subr.bf16.mxu0 0
    %7691 = vmatpush2.bf16.msra.mxu0 0
    %7692 = vmatprep.subr.bf16.mxu0 0
    %7693 = vmatpush2.bf16.msra.mxu0 0
    %7694 = vmatprep.subr.bf16.mxu0 0
    %7695 = vmatpush2.bf16.msra.mxu0 0
    %7696 = vmatprep.mubr.bf16.mxu0 0
    %7697 = vmatmul.mubr.bf16.gmra.mxu0 %v7553
    %v7698 = vpop.f32.mrf.mxu0
    %v7699 = vadd.f32 0.0, %v7698
    %v7700 = vpop.f32.mrf.mxu0
    %v7701 = vadd.f32 0.0, %v7700
    %v7702 = vpop.f32.mrf.mxu0
    %v7703 = vadd.f32 0.0, %v7702
    %v7704 = vpop.f32.mrf.mxu0
    %v7705 = vadd.f32 0.0, %v7704
    %7706 = vmatprep.mubr.bf16.mxu0 0
    %7707 = vmatmul.mubr.bf16.gmra.mxu0 %v7556
    %v7708 = vpop.f32.mrf.mxu0
    %v7709 = vadd.f32 0.0, %v7708
    %v7710 = vpop.f32.mrf.mxu0
    %v7711 = vadd.f32 0.0, %v7710
    %v7712 = vpop.f32.mrf.mxu0
    %v7713 = vadd.f32 0.0, %v7712
    %v7714 = vpop.f32.mrf.mxu0
    %v7715 = vadd.f32 0.0, %v7714
    %7716 = vdwg.mxu0
    %v7717 = vadd.f32 %v7467, %v7593
    %v7718 = vadd.f32 %v7468, %v7595
    %v7719 = vadd.f32 %v7469, %v7646
    %v7720 = vadd.f32 %v7470, %v7648
    %v7721 = vadd.f32 %v7471, %v7699
    %v7722 = vadd.f32 %v7472, %v7701
    %v7723 = vadd.f32 %v7473, %v7597
    %v7724 = vadd.f32 %v7474, %v7599
    %v7725 = vadd.f32 %v7475, %v7650
    %v7726 = vadd.f32 %v7476, %v7652
    %v7727 = vadd.f32 %v7477, %v7703
    %v7728 = vadd.f32 %v7478, %v7705
    %v7729 = vadd.f32 %v7479, %v7603
    %v7730 = vadd.f32 %v7480, %v7605
    %v7731 = vadd.f32 %v7481, %v7656
    %v7732 = vadd.f32 %v7482, %v7658
    %v7733 = vadd.f32 %v7483, %v7709
    %v7734 = vadd.f32 %v7484, %v7711
    %v7735 = vadd.f32 %v7485, %v7607
    %v7736 = vadd.f32 %v7486, %v7609
    %v7737 = vadd.f32 %v7487, %v7660
    %v7738 = vadd.f32 %v7488, %v7662
    %v7739 = vadd.f32 %v7489, %v7713
    %v7740 = vadd.f32 %v7490, %v7715
    %v7741 = vld [vmem:[%s10] sm:$0xff]
    %v7742 = vld [vmem:[%s10 + $0x8] sm:$0xff]
    %v7743 = vld [vmem:[%s10 + $0x10] sm:$0xff]
    %v7744 = vld [vmem:[%s10 + $0x18] sm:$0xff]
    %7746 = vset.pattern.permute.xlu0 0
    %7747 = vperm.xlu0 %7746, %v7741
    %v7748 = vpop.permute.xlu0 %7747
    %7751 = vset.pattern.permute.xlu0 0
    %7752 = vperm.xlu0 %7751, %v7742
    %v7753 = vpop.permute.xlu0 %7752
    %7756 = vset.pattern.permute.xlu0 0
    %7757 = vperm.xlu0 %7756, %v7743
    %v7758 = vpop.permute.xlu0 %7757
    %7761 = vset.pattern.permute.xlu0 0
    %7762 = vperm.xlu0 %7761, %v7744
    %v7763 = vpop.permute.xlu0 %7762
    %v7765 = vadd.f32 %v7717, %v7748
    %v7766 = vadd.f32 %v7718, %v7748
    %v7767 = vadd.f32 %v7719, %v7748
    %v7768 = vadd.f32 %v7720, %v7748
    %v7769 = vadd.f32 %v7721, %v7748
    %v7770 = vadd.f32 %v7722, %v7748
    %v7771 = vadd.f32 %v7723, %v7753
    %v7772 = vadd.f32 %v7724, %v7753
    %v7773 = vadd.f32 %v7725, %v7753
    %v7774 = vadd.f32 %v7726, %v7753
    %v7775 = vadd.f32 %v7727, %v7753
    %v7776 = vadd.f32 %v7728, %v7753
    %v7777 = vadd.f32 %v7729, %v7758
    %v7778 = vadd.f32 %v7730, %v7758
    %v7779 = vadd.f32 %v7731, %v7758
    %v7780 = vadd.f32 %v7732, %v7758
    %v7781 = vadd.f32 %v7733, %v7758
    %v7782 = vadd.f32 %v7734, %v7758
    %v7783 = vadd.f32 %v7735, %v7763
    %v7784 = vadd.f32 %v7736, %v7763
    %v7785 = vadd.f32 %v7737, %v7763
    %v7786 = vadd.f32 %v7738, %v7763
    %v7787 = vadd.f32 %v7739, %v7763
    %v7788 = vadd.f32 %v7740, %v7763
    %vm7789 = vcmp.gt.f32.partialorder %v7765, 0.0
    %vm7790 = vcmp.gt.f32.partialorder %v7766, 0.0
    %vm7791 = vcmp.gt.f32.partialorder %v7767, 0.0
    %vm7792 = vcmp.gt.f32.partialorder %v7768, 0.0
    %vm7793 = vcmp.gt.f32.partialorder %v7769, 0.0
    %vm7794 = vcmp.gt.f32.partialorder %v7770, 0.0
    %vm7795 = vcmp.gt.f32.partialorder %v7771, 0.0
    %vm7796 = vcmp.gt.f32.partialorder %v7772, 0.0
    %vm7797 = vcmp.gt.f32.partialorder %v7773, 0.0
    %vm7798 = vcmp.gt.f32.partialorder %v7774, 0.0
    %vm7799 = vcmp.gt.f32.partialorder %v7775, 0.0
    %vm7800 = vcmp.gt.f32.partialorder %v7776, 0.0
    %vm7801 = vcmp.gt.f32.partialorder %v7777, 0.0
    %vm7802 = vcmp.gt.f32.partialorder %v7778, 0.0
    %vm7803 = vcmp.gt.f32.partialorder %v7779, 0.0
    %vm7804 = vcmp.gt.f32.partialorder %v7780, 0.0
    %vm7805 = vcmp.gt.f32.partialorder %v7781, 0.0
    %vm7806 = vcmp.gt.f32.partialorder %v7782, 0.0
    %vm7807 = vcmp.gt.f32.partialorder %v7783, 0.0
    %vm7808 = vcmp.gt.f32.partialorder %v7784, 0.0
    %vm7809 = vcmp.gt.f32.partialorder %v7785, 0.0
    %vm7810 = vcmp.gt.f32.partialorder %v7786, 0.0
    %vm7811 = vcmp.gt.f32.partialorder %v7787, 0.0
    %vm7812 = vcmp.gt.f32.partialorder %v7788, 0.0
    %v7813 = vmul.f32 %v7765, 0.2
    %v7814 = vmul.f32 %v7766, 0.2
    %v7815 = vmul.f32 %v7767, 0.2
    %v7816 = vmul.f32 %v7768, 0.2
    %v7817 = vmul.f32 %v7769, 0.2
    %v7818 = vmul.f32 %v7770, 0.2
    %v7819 = vmul.f32 %v7771, 0.2
    %v7820 = vmul.f32 %v7772, 0.2
    %v7821 = vmul.f32 %v7773, 0.2
    %v7822 = vmul.f32 %v7774, 0.2
    %v7823 = vmul.f32 %v7775, 0.2
    %v7824 = vmul.f32 %v7776, 0.2
    %v7825 = vmul.f32 %v7777, 0.2
    %v7826 = vmul.f32 %v7778, 0.2
    %v7827 = vmul.f32 %v7779, 0.2
    %v7828 = vmul.f32 %v7780, 0.2
    %v7829 = vmul.f32 %v7781, 0.2
    %v7830 = vmul.f32 %v7782, 0.2
    %v7831 = vmul.f32 %v7783, 0.2
    %v7832 = vmul.f32 %v7784, 0.2
    %v7833 = vmul.f32 %v7785, 0.2
    %v7834 = vmul.f32 %v7786, 0.2
    %v7835 = vmul.f32 %v7787, 0.2
    %v7836 = vmul.f32 %v7788, 0.2
    %v7837 = vsel %vm7789, %v7765, %v7813
    %v7838 = vsel %vm7790, %v7766, %v7814
    %v7839 = vsel %vm7791, %v7767, %v7815
    %v7840 = vsel %vm7792, %v7768, %v7816
    %v7841 = vsel %vm7793, %v7769, %v7817
    %v7842 = vsel %vm7794, %v7770, %v7818
    %v7843 = vsel %vm7795, %v7771, %v7819
    %v7844 = vsel %vm7796, %v7772, %v7820
    %v7845 = vsel %vm7797, %v7773, %v7821
    %v7846 = vsel %vm7798, %v7774, %v7822
    %v7847 = vsel %vm7799, %v7775, %v7823
    %v7848 = vsel %vm7800, %v7776, %v7824
    %v7849 = vsel %vm7801, %v7777, %v7825
    %v7850 = vsel %vm7802, %v7778, %v7826
    %v7851 = vsel %vm7803, %v7779, %v7827
    %v7852 = vsel %vm7804, %v7780, %v7828
    %v7853 = vsel %vm7805, %v7781, %v7829
    %v7854 = vsel %vm7806, %v7782, %v7830
    %v7855 = vsel %vm7807, %v7783, %v7831
    %v7856 = vsel %vm7808, %v7784, %v7832
    %v7857 = vsel %vm7809, %v7785, %v7833
    %v7858 = vsel %vm7810, %v7786, %v7834
    %v7859 = vsel %vm7811, %v7787, %v7835
    %v7860 = vsel %vm7812, %v7788, %v7836
    %v7861 = vmul.f32 %v7837, %v2316
    %v7862 = vmul.f32 %v7838, %v2320
    %v7863 = vmul.f32 %v7839, %v2324
    %v7864 = vmul.f32 %v7840, %v2328
    %v7865 = vmul.f32 %v7841, %v2332
    %v7866 = vmul.f32 %v7842, %v2336
    %v7867 = vmul.f32 %v7843, %v2316
    %v7868 = vmul.f32 %v7844, %v2320
    %v7869 = vmul.f32 %v7845, %v2324
    %v7870 = vmul.f32 %v7846, %v2328
    %v7871 = vmul.f32 %v7847, %v2332
    %v7872 = vmul.f32 %v7848, %v2336
    %v7873 = vmul.f32 %v7849, %v2316
    %v7874 = vmul.f32 %v7850, %v2320
    %v7875 = vmul.f32 %v7851, %v2324
    %v7876 = vmul.f32 %v7852, %v2328
    %v7877 = vmul.f32 %v7853, %v2332
    %v7878 = vmul.f32 %v7854, %v2336
    %v7879 = vmul.f32 %v7855, %v2316
    %v7880 = vmul.f32 %v7856, %v2320
    %v7881 = vmul.f32 %v7857, %v2324
    %v7882 = vmul.f32 %v7858, %v2328
    %v7883 = vmul.f32 %v7859, %v2332
    %v7884 = vmul.f32 %v7860, %v2336
    %v7885 = vadd.f32 %v7861, %v7862
    %v7886 = vadd.f32 %v7885, %v7863
    %v7887 = vadd.f32 %v7886, %v7864
    %v7888 = vadd.f32 %v7887, %v7865
    %v7889 = vsel %vm134, %v7866, 0.0
    %v7890 = vadd.f32 %v7888, %v7889
    %7891 = vadd.xlane.f32.xlu0 %v7890
    %v7892 = vpop.xlane.xlu0 %7891
    %v7893 = vadd.f32 %v7867, %v7868
    %v7894 = vadd.f32 %v7893, %v7869
    %v7895 = vadd.f32 %v7894, %v7870
    %v7896 = vadd.f32 %v7895, %v7871
    %v7897 = vsel %vm134, %v7872, 0.0
    %v7898 = vadd.f32 %v7896, %v7897
    %7899 = vadd.xlane.f32.xlu0 %v7898
    %v7900 = vpop.xlane.xlu0 %7899
    %v7901 = vadd.f32 %v7873, %v7874
    %v7902 = vadd.f32 %v7901, %v7875
    %v7903 = vadd.f32 %v7902, %v7876
    %v7904 = vadd.f32 %v7903, %v7877
    %v7905 = vsel %vm134, %v7878, 0.0
    %v7906 = vadd.f32 %v7904, %v7905
    %7907 = vadd.xlane.f32.xlu0 %v7906
    %v7908 = vpop.xlane.xlu0 %7907
    %v7909 = vadd.f32 %v7879, %v7880
    %v7910 = vadd.f32 %v7909, %v7881
    %v7911 = vadd.f32 %v7910, %v7882
    %v7912 = vadd.f32 %v7911, %v7883
    %v7913 = vsel %vm134, %v7884, 0.0
    %v7914 = vadd.f32 %v7912, %v7913
    %7915 = vadd.xlane.f32.xlu0 %v7914
    %v7916 = vpop.xlane.xlu0 %7915
    %v7917 = vmul.f32 %v7861, %v7861
    %v7918 = vmul.f32 %v7862, %v7862
    %v7919 = vmul.f32 %v7863, %v7863
    %v7920 = vmul.f32 %v7864, %v7864
    %v7921 = vmul.f32 %v7865, %v7865
    %v7922 = vmul.f32 %v7866, %v7866
    %v7923 = vmul.f32 %v7867, %v7867
    %v7924 = vmul.f32 %v7868, %v7868
    %v7925 = vmul.f32 %v7869, %v7869
    %v7926 = vmul.f32 %v7870, %v7870
    %v7927 = vmul.f32 %v7871, %v7871
    %v7928 = vmul.f32 %v7872, %v7872
    %v7929 = vmul.f32 %v7873, %v7873
    %v7930 = vmul.f32 %v7874, %v7874
    %v7931 = vmul.f32 %v7875, %v7875
    %v7932 = vmul.f32 %v7876, %v7876
    %v7933 = vmul.f32 %v7877, %v7877
    %v7934 = vmul.f32 %v7878, %v7878
    %v7935 = vmul.f32 %v7879, %v7879
    %v7936 = vmul.f32 %v7880, %v7880
    %v7937 = vmul.f32 %v7881, %v7881
    %v7938 = vmul.f32 %v7882, %v7882
    %v7939 = vmul.f32 %v7883, %v7883
    %v7940 = vmul.f32 %v7884, %v7884
    %v7941 = vadd.f32 %v7917, %v7918
    %v7942 = vadd.f32 %v7941, %v7919
    %v7943 = vadd.f32 %v7942, %v7920
    %v7944 = vadd.f32 %v7943, %v7921
    %v7945 = vsel %vm134, %v7922, 0.0
    %v7946 = vadd.f32 %v7944, %v7945
    %7947 = vadd.xlane.f32.xlu0 %v7946
    %v7948 = vpop.xlane.xlu0 %7947
    %v7949 = vadd.f32 %v7923, %v7924
    %v7950 = vadd.f32 %v7949, %v7925
    %v7951 = vadd.f32 %v7950, %v7926
    %v7952 = vadd.f32 %v7951, %v7927
    %v7953 = vsel %vm134, %v7928, 0.0
    %v7954 = vadd.f32 %v7952, %v7953
    %7955 = vadd.xlane.f32.xlu0 %v7954
    %v7956 = vpop.xlane.xlu0 %7955
    %v7957 = vadd.f32 %v7929, %v7930
    %v7958 = vadd.f32 %v7957, %v7931
    %v7959 = vadd.f32 %v7958, %v7932
    %v7960 = vadd.f32 %v7959, %v7933
    %v7961 = vsel %vm134, %v7934, 0.0
    %v7962 = vadd.f32 %v7960, %v7961
    %7963 = vadd.xlane.f32.xlu0 %v7962
    %v7964 = vpop.xlane.xlu0 %7963
    %v7965 = vadd.f32 %v7935, %v7936
    %v7966 = vadd.f32 %v7965, %v7937
    %v7967 = vadd.f32 %v7966, %v7938
    %v7968 = vadd.f32 %v7967, %v7939
    %v7969 = vsel %vm134, %v7940, 0.0
    %v7970 = vadd.f32 %v7968, %v7969
    %7971 = vadd.xlane.f32.xlu0 %v7970
    %v7972 = vpop.xlane.xlu0 %7971
    %v7973 = vmul.f32 %v7892, 0.001953125
    %v7974 = vmul.f32 %v7900, 0.001953125
    %v7975 = vmul.f32 %v7908, 0.001953125
    %v7976 = vmul.f32 %v7916, 0.001953125
    %v7977 = vmul.f32 %v7948, 0.001953125
    %v7978 = vmul.f32 %v7956, 0.001953125
    %v7979 = vmul.f32 %v7964, 0.001953125
    %v7980 = vmul.f32 %v7972, 0.001953125
    %v7981 = vmul.f32 %v7973, %v7973
    %v7982 = vmul.f32 %v7974, %v7974
    %v7983 = vmul.f32 %v7975, %v7975
    %v7984 = vmul.f32 %v7976, %v7976
    %v7985 = vsub.f32 %v7977, %v7981
    %v7986 = vsub.f32 %v7978, %v7982
    %v7987 = vsub.f32 %v7979, %v7983
    %v7988 = vsub.f32 %v7980, %v7984
    %v7989 = vld [vmem:[%s11] sm:$0xff]
    %v7990 = vld [vmem:[%s11 + $0x8] sm:$0xff]
    %v7991 = vld [vmem:[%s11 + $0x10] sm:$0xff]
    %v7992 = vld [vmem:[%s11 + $0x18] sm:$0xff]
    %v7993 = vadd.f32 %v7985, 1e-05
    %v7994 = vadd.f32 %v7986, 1e-05
    %v7995 = vadd.f32 %v7987, 1e-05
    %v7996 = vadd.f32 %v7988, 1e-05
    %v7997 = vrsqrt.pop %v7993
    %v7998 = vrsqrt.pop %v7994
    %v7999 = vrsqrt.pop %v7995
    %v8000 = vrsqrt.pop %v7996
    %v8001 = vmul.f32 %v7989, %v7997
    %v8002 = vmul.f32 %v7990, %v7998
    %v8003 = vmul.f32 %v7991, %v7999
    %v8004 = vmul.f32 %v7992, %v8000
    %v8005 = vld [vmem:[%s12] sm:$0xff]
    %v8006 = vld [vmem:[%s12 + $0x8] sm:$0xff]
    %v8007 = vld [vmem:[%s12 + $0x10] sm:$0xff]
    %v8008 = vld [vmem:[%s12 + $0x18] sm:$0xff]
    %v8009 = vmul.f32 %v7973, %v8001
    %v8010 = vmul.f32 %v7974, %v8002
    %v8011 = vmul.f32 %v7975, %v8003
    %v8012 = vmul.f32 %v7976, %v8004
    %v8013 = vsub.f32 %v8005, %v8009
    %v8014 = vsub.f32 %v8006, %v8010
    %v8015 = vsub.f32 %v8007, %v8011
    %v8016 = vsub.f32 %v8008, %v8012
    %8018 = vset.pattern.permute.xlu0 0
    %8019 = vperm.xlu0 %8018, %v8001
    %v8020 = vpop.permute.xlu0 %8019
    %8023 = vset.pattern.permute.xlu0 0
    %8024 = vperm.xlu0 %8023, %v8002
    %v8025 = vpop.permute.xlu0 %8024
    %8028 = vset.pattern.permute.xlu0 0
    %8029 = vperm.xlu0 %8028, %v8003
    %v8030 = vpop.permute.xlu0 %8029
    %8033 = vset.pattern.permute.xlu0 0
    %8034 = vperm.xlu0 %8033, %v8004
    %v8035 = vpop.permute.xlu0 %8034
    %v8037 = vmul.f32 %v7861, %v8020
    %v8038 = vmul.f32 %v7862, %v8020
    %v8039 = vmul.f32 %v7863, %v8020
    %v8040 = vmul.f32 %v7864, %v8020
    %v8041 = vmul.f32 %v7865, %v8020
    %v8042 = vmul.f32 %v7866, %v8020
    %v8043 = vmul.f32 %v7867, %v8025
    %v8044 = vmul.f32 %v7868, %v8025
    %v8045 = vmul.f32 %v7869, %v8025
    %v8046 = vmul.f32 %v7870, %v8025
    %v8047 = vmul.f32 %v7871, %v8025
    %v8048 = vmul.f32 %v7872, %v8025
    %v8049 = vmul.f32 %v7873, %v8030
    %v8050 = vmul.f32 %v7874, %v8030
    %v8051 = vmul.f32 %v7875, %v8030
    %v8052 = vmul.f32 %v7876, %v8030
    %v8053 = vmul.f32 %v7877, %v8030
    %v8054 = vmul.f32 %v7878, %v8030
    %v8055 = vmul.f32 %v7879, %v8035
    %v8056 = vmul.f32 %v7880, %v8035
    %v8057 = vmul.f32 %v7881, %v8035
    %v8058 = vmul.f32 %v7882, %v8035
    %v8059 = vmul.f32 %v7883, %v8035
    %v8060 = vmul.f32 %v7884, %v8035
    %8062 = vset.pattern.permute.xlu0 0
    %8063 = vperm.xlu0 %8062, %v8013
    %v8064 = vpop.permute.xlu0 %8063
    %8067 = vset.pattern.permute.xlu0 0
    %8068 = vperm.xlu0 %8067, %v8014
    %v8069 = vpop.permute.xlu0 %8068
    %8072 = vset.pattern.permute.xlu0 0
    %8073 = vperm.xlu0 %8072, %v8015
    %v8074 = vpop.permute.xlu0 %8073
    %8077 = vset.pattern.permute.xlu0 0
    %8078 = vperm.xlu0 %8077, %v8016
    %v8079 = vpop.permute.xlu0 %8078
    %v8081 = vadd.f32 %v8037, %v8064
    %v8082 = vadd.f32 %v8038, %v8064
    %v8083 = vadd.f32 %v8039, %v8064
    %v8084 = vadd.f32 %v8040, %v8064
    %v8085 = vadd.f32 %v8041, %v8064
    %v8086 = vadd.f32 %v8042, %v8064
    %v8087 = vadd.f32 %v8043, %v8069
    %v8088 = vadd.f32 %v8044, %v8069
    %v8089 = vadd.f32 %v8045, %v8069
    %v8090 = vadd.f32 %v8046, %v8069
    %v8091 = vadd.f32 %v8047, %v8069
    %v8092 = vadd.f32 %v8048, %v8069
    %v8093 = vadd.f32 %v8049, %v8074
    %v8094 = vadd.f32 %v8050, %v8074
    %v8095 = vadd.f32 %v8051, %v8074
    %v8096 = vadd.f32 %v8052, %v8074
    %v8097 = vadd.f32 %v8053, %v8074
    %v8098 = vadd.f32 %v8054, %v8074
    %v8099 = vadd.f32 %v8055, %v8079
    %v8100 = vadd.f32 %v8056, %v8079
    %v8101 = vadd.f32 %v8057, %v8079
    %v8102 = vadd.f32 %v8058, %v8079
    %v8103 = vadd.f32 %v8059, %v8079
    %v8104 = vadd.f32 %v8060, %v8079
    %v8105 = vmul.f32 %v8081, %v2316
    %v8106 = vmul.f32 %v8082, %v2320
    %v8107 = vmul.f32 %v8083, %v2324
    %v8108 = vmul.f32 %v8084, %v2328
    %v8109 = vmul.f32 %v8085, %v2332
    %v8110 = vmul.f32 %v8086, %v2336
    %v8111 = vmul.f32 %v8087, %v2316
    %v8112 = vmul.f32 %v8088, %v2320
    %v8113 = vmul.f32 %v8089, %v2324
    %v8114 = vmul.f32 %v8090, %v2328
    %v8115 = vmul.f32 %v8091, %v2332
    %v8116 = vmul.f32 %v8092, %v2336
    %v8117 = vmul.f32 %v8093, %v2316
    %v8118 = vmul.f32 %v8094, %v2320
    %v8119 = vmul.f32 %v8095, %v2324
    %v8120 = vmul.f32 %v8096, %v2328
    %v8121 = vmul.f32 %v8097, %v2332
    %v8122 = vmul.f32 %v8098, %v2336
    %v8123 = vmul.f32 %v8099, %v2316
    %v8124 = vmul.f32 %v8100, %v2320
    %v8125 = vmul.f32 %v8101, %v2324
    %v8126 = vmul.f32 %v8102, %v2328
    %v8127 = vmul.f32 %v8103, %v2332
    %v8128 = vmul.f32 %v8104, %v2336
    %v8129 = vpack.c.bf16 %v8111, %v8105
    %v8130 = vpack.c.bf16 %v8112, %v8106
    %v8131 = vpack.c.bf16 %v8113, %v8107
    %v8132 = vpack.c.bf16 %v8114, %v8108
    %v8133 = vpack.c.bf16 %v8115, %v8109
    %v8134 = vpack.c.bf16 %v8116, %v8110
    %v8135 = vpack.c.bf16 %v8123, %v8117
    %v8136 = vpack.c.bf16 %v8124, %v8118
    %v8137 = vpack.c.bf16 %v8125, %v8119
    %v8138 = vpack.c.bf16 %v8126, %v8120
    %v8139 = vpack.c.bf16 %v8127, %v8121
    %v8140 = vpack.c.bf16 %v8128, %v8122
    %v8153 = vunpack.c.l.b16 %v8129
    %v8154 = vunpack.c.l.b16 %v8130
    %v8155 = vunpack.c.l.b16 %v8131
    %v8156 = vunpack.c.l.b16 %v8132
    %v8157 = vunpack.c.l.b16 %v8133
    %v8158 = vunpack.c.l.b16 %v8134
    %v8159 = vunpack.c.h.b16 %v8129
    %v8160 = vunpack.c.h.b16 %v8130
    %v8161 = vunpack.c.h.b16 %v8131
    %v8162 = vunpack.c.h.b16 %v8132
    %v8163 = vunpack.c.h.b16 %v8133
    %v8164 = vunpack.c.h.b16 %v8134
    %v8165 = vunpack.c.l.b16 %v8135
    %v8166 = vunpack.c.l.b16 %v8136
    %v8167 = vunpack.c.l.b16 %v8137
    %v8168 = vunpack.c.l.b16 %v8138
    %v8169 = vunpack.c.l.b16 %v8139
    %v8170 = vunpack.c.l.b16 %v8140
    %v8171 = vunpack.c.h.b16 %v8135
    %v8172 = vunpack.c.h.b16 %v8136
    %v8173 = vunpack.c.h.b16 %v8137
    %v8174 = vunpack.c.h.b16 %v8138
    %v8175 = vunpack.c.h.b16 %v8139
    %v8176 = vunpack.c.h.b16 %v8140
    %v8177 = vpack.c.b16 %v8154, %v8153
    %v8178 = vpack.c.b16 %v8156, %v8155
    %v8179 = vpack.c.b16 %v8158, %v8157
    %v8180 = vpack.c.b16 %v8160, %v8159
    %v8181 = vpack.c.b16 %v8162, %v8161
    %v8182 = vpack.c.b16 %v8164, %v8163
    %v8183 = vpack.c.b16 %v8166, %v8165
    %v8184 = vpack.c.b16 %v8168, %v8167
    %v8185 = vpack.c.b16 %v8170, %v8169
    %v8186 = vpack.c.b16 %v8172, %v8171
    %v8187 = vpack.c.b16 %v8174, %v8173
    %v8188 = vpack.c.b16 %v8176, %v8175
    %8189 = vrot.lane.b32.xlu0 %v8177, 19
    %v8190 = vpop.permute.xlu0 %8189
    %8191 = vrot.lane.b32.xlu0 %v8178, 19
    %v8192 = vpop.permute.xlu0 %8191
    %8193 = vrot.lane.b32.xlu0 %v8179, 19
    %v8194 = vpop.permute.xlu0 %8193
    %8195 = vrot.lane.b32.xlu0 %v8180, 19
    %v8196 = vpop.permute.xlu0 %8195
    %8197 = vrot.lane.b32.xlu0 %v8181, 19
    %v8198 = vpop.permute.xlu0 %8197
    %8199 = vrot.lane.b32.xlu0 %v8182, 19
    %v8200 = vpop.permute.xlu0 %8199
    %8201 = vrot.lane.b32.xlu0 %v8183, 19
    %v8202 = vpop.permute.xlu0 %8201
    %8203 = vrot.lane.b32.xlu0 %v8184, 19
    %v8204 = vpop.permute.xlu0 %8203
    %8205 = vrot.lane.b32.xlu0 %v8185, 19
    %v8206 = vpop.permute.xlu0 %8205
    %8207 = vrot.lane.b32.xlu0 %v8186, 19
    %v8208 = vpop.permute.xlu0 %8207
    %8209 = vrot.lane.b32.xlu0 %v8187, 19
    %v8210 = vpop.permute.xlu0 %8209
    %8211 = vrot.lane.b32.xlu0 %v8188, 19
    %v8212 = vpop.permute.xlu0 %8211
    %v8213 = vrot.slane %v8190, 4
    %v8214 = vrot.slane %v8192, 4
    %v8215 = vrot.slane %v8194, 4
    %v8216 = vrot.slane %v8196, 4
    %v8217 = vrot.slane %v8198, 4
    %v8218 = vrot.slane %v8200, 4
    %v8219 = vrot.slane %v8202, 4
    %v8220 = vrot.slane %v8204, 4
    %v8221 = vrot.slane %v8206, 4
    %v8222 = vrot.slane %v8208, 4
    %v8223 = vrot.slane %v8210, 4
    %v8224 = vrot.slane %v8212, 4
    %v8225 = vsel %vm2707, %v8213, %v8190
    %v8226 = vsel %vm2709, %v8213, %v8214
    %v8227 = vsel %vm2707, %v8226, %v8192
    %v8228 = vsel %vm2709, %v8214, %v8215
    %v8229 = vsel %vm2707, %v8228, %v8194
    %v8230 = vsel %vm2707, %v8216, %v8196
    %v8231 = vsel %vm2709, %v8216, %v8217
    %v8232 = vsel %vm2707, %v8231, %v8198
    %v8233 = vsel %vm2709, %v8217, %v8218
    %v8234 = vsel %vm2707, %v8233, %v8200
    %v8235 = vsel %vm2707, %v8219, %v8202
    %v8236 = vsel %vm2709, %v8219, %v8220
    %v8237 = vsel %vm2707, %v8236, %v8204
    %v8238 = vsel %vm2709, %v8220, %v8221
    %v8239 = vsel %vm2707, %v8238, %v8206
    %v8240 = vsel %vm2707, %v8222, %v8208
    %v8241 = vsel %vm2709, %v8222, %v8223
    %v8242 = vsel %vm2707, %v8241, %v8210
    %v8243 = vsel %vm2709, %v8223, %v8224
    %v8244 = vsel %vm2707, %v8243, %v8212
    %8257 = vst.msk [vmem:[#allocation2] sm:$0xff] %vm2743, %v8225
    %8258 = vst [vmem:[#allocation2 + $0x8] sm:$0xff] %v8227
    %8259 = vst.msk [vmem:[#allocation2 + $0x10] sm:$0xff] %vm2747, %v8229
    %8260 = vst.msk [vmem:[#allocation2 + $0x18] sm:$0xff] %vm2743, %v8230
    %8261 = vst [vmem:[#allocation2 + $0x20] sm:$0xff] %v8232
    %8262 = vst.msk [vmem:[#allocation2 + $0x28] sm:$0xff] %vm2747, %v8234
    %8263 = vst.msk [vmem:[#allocation2 + $0x30] sm:$0xff] %vm2743, %v8235
    %8264 = vst [vmem:[#allocation2 + $0x38] sm:$0xff] %v8237
    %8265 = vst.msk [vmem:[#allocation2 + $0x40] sm:$0xff] %vm2747, %v8239
    %8266 = vst.msk [vmem:[#allocation2 + $0x48] sm:$0xff] %vm2743, %v8240
    %8267 = vst [vmem:[#allocation2 + $0x50] sm:$0xff] %v8242
    %8268 = vst.msk [vmem:[#allocation2 + $0x58] sm:$0xff] %vm2747, %v8244
    %v8269 = vld [vmem:[%s13] sm:$0x1]
    %v8270 = vld [vmem:[#allocation2] sm:$0xff]
    %v8271 = vld [vmem:[#allocation2 + $0x8] sm:$0xff]
    %v8272 = vld [vmem:[#allocation2 + $0x10] sm:$0xff]
    %v8273 = vld [vmem:[#allocation2 + $0x18] sm:$0xff]
    %v8274 = vld [vmem:[#allocation2 + $0x20] sm:$0xff]
    %v8275 = vld [vmem:[#allocation2 + $0x28] sm:$0xff]
    %v8276 = vld [vmem:[#allocation2 + $0x30] sm:$0xff]
    %v8277 = vld [vmem:[#allocation2 + $0x38] sm:$0xff]
    %v8278 = vld [vmem:[#allocation2 + $0x40] sm:$0xff]
    %v8279 = vld [vmem:[#allocation2 + $0x48] sm:$0xff]
    %v8280 = vld [vmem:[#allocation2 + $0x50] sm:$0xff]
    %v8281 = vld [vmem:[#allocation2 + $0x58] sm:$0xff]
    %s8282 = scalar_lea.vmem %s13, 1
    %v8283 = vld [vmem:[%s8282] sm:$0x1]
    %v8296 = vunpack.c.l.b16 %v8270
    %v8297 = vunpack.c.h.b16 %v8270
    %v8298 = vunpack.c.l.b16 %v8271
    %v8299 = vunpack.c.h.b16 %v8271
    %v8300 = vunpack.c.l.b16 %v8272
    %v8301 = vunpack.c.h.b16 %v8272
    %v8302 = vunpack.c.l.b16 %v8273
    %v8303 = vunpack.c.h.b16 %v8273
    %v8304 = vunpack.c.l.b16 %v8274
    %v8305 = vunpack.c.h.b16 %v8274
    %v8306 = vunpack.c.l.b16 %v8275
    %v8307 = vunpack.c.h.b16 %v8275
    %v8308 = vunpack.c.l.b16 %v8276
    %v8309 = vunpack.c.h.b16 %v8276
    %v8310 = vunpack.c.l.b16 %v8277
    %v8311 = vunpack.c.h.b16 %v8277
    %v8312 = vunpack.c.l.b16 %v8278
    %v8313 = vunpack.c.h.b16 %v8278
    %v8314 = vunpack.c.l.b16 %v8279
    %v8315 = vunpack.c.h.b16 %v8279
    %v8316 = vunpack.c.l.b16 %v8280
    %v8317 = vunpack.c.h.b16 %v8280
    %v8318 = vunpack.c.l.b16 %v8281
    %v8319 = vunpack.c.h.b16 %v8281
    %v8320 = vpack.c.b16 %v8302, %v8296
    %v8321 = vpack.c.b16 %v8303, %v8297
    %v8322 = vpack.c.b16 %v8304, %v8298
    %v8323 = vpack.c.b16 %v8305, %v8299
    %v8324 = vpack.c.b16 %v8306, %v8300
    %v8325 = vpack.c.b16 %v8307, %v8301
    %v8326 = vpack.c.b16 %v8314, %v8308
    %v8327 = vpack.c.b16 %v8315, %v8309
    %v8328 = vpack.c.b16 %v8316, %v8310
    %v8329 = vpack.c.b16 %v8317, %v8311
    %v8330 = vpack.c.b16 %v8318, %v8312
    %v8331 = vpack.c.b16 %v8319, %v8313
    %8332 = vrot.lane.b32.xlu0 %v8320, 127
    %v8333 = vpop.permute.xlu0 %8332
    %8334 = vrot.lane.b32.xlu0 %v8321, 127
    %v8335 = vpop.permute.xlu0 %8334
    %8336 = vrot.lane.b32.xlu0 %v8322, 127
    %v8337 = vpop.permute.xlu0 %8336
    %8338 = vrot.lane.b32.xlu0 %v8323, 127
    %v8339 = vpop.permute.xlu0 %8338
    %8340 = vrot.lane.b32.xlu0 %v8324, 127
    %v8341 = vpop.permute.xlu0 %8340
    %8342 = vrot.lane.b32.xlu0 %v8325, 127
    %v8343 = vpop.permute.xlu0 %8342
    %8344 = vrot.lane.b32.xlu0 %v8326, 127
    %v8345 = vpop.permute.xlu0 %8344
    %8346 = vrot.lane.b32.xlu0 %v8327, 127
    %v8347 = vpop.permute.xlu0 %8346
    %8348 = vrot.lane.b32.xlu0 %v8328, 127
    %v8349 = vpop.permute.xlu0 %8348
    %8350 = vrot.lane.b32.xlu0 %v8329, 127
    %v8351 = vpop.permute.xlu0 %8350
    %8352 = vrot.lane.b32.xlu0 %v8330, 127
    %v8353 = vpop.permute.xlu0 %8352
    %8354 = vrot.lane.b32.xlu0 %v8331, 127
    %v8355 = vpop.permute.xlu0 %8354
    %v8356 = vsel %vm128, %v8333, %v8335
    %v8357 = vsel %vm128, %v8335, %v8337
    %v8358 = vsel %vm128, %v8337, %v8339
    %v8359 = vsel %vm128, %v8339, %v8341
    %v8360 = vsel %vm128, %v8341, %v8343
    %v8361 = vsel %vm128, %v8345, %v8347
    %v8362 = vsel %vm128, %v8347, %v8349
    %v8363 = vsel %vm128, %v8349, %v8351
    %v8364 = vsel %vm128, %v8351, %v8353
    %v8365 = vsel %vm128, %v8353, %v8355
    %v8379 = vsel %vm2883, %v8283, 0
    %8381 = vmatprep.subr.bf16.mxu0 0
    %8382 = vmatpush1.bf16.msra.mxu0 0
    %8383 = vmatprep.subr.bf16.mxu0 0
    %8384 = vmatpush1.bf16.msra.mxu0 0
    %8385 = vmatprep.subr.bf16.mxu0 0
    %8386 = vmatpush1.bf16.msra.mxu0 0
    %8387 = vmatprep.subr.bf16.mxu0 0
    %8388 = vmatpush1.bf16.msra.mxu0 0
    %8389 = vmatprep.subr.bf16.mxu0 0
    %8390 = vmatpush1.bf16.msra.mxu0 0
    %8391 = vmatprep.subr.bf16.mxu0 0
    %8392 = vmatpush1.bf16.msra.mxu0 0
    %8393 = vmatprep.subr.bf16.mxu0 %v8362
    %8394 = vmatpush1.bf16.msra.mxu0 %v8361
    %8395 = vmatprep.subr.bf16.mxu0 %v8357
    %8396 = vmatpush1.bf16.msra.mxu0 %v8356
    %8397 = vmatprep.subr.bf16.mxu0 0
    %8398 = vmatpush2.bf16.msra.mxu0 0
    %8399 = vmatprep.subr.bf16.mxu0 0
    %8400 = vmatpush2.bf16.msra.mxu0 0
    %8401 = vmatprep.subr.bf16.mxu0 0
    %8402 = vmatpush2.bf16.msra.mxu0 0
    %8403 = vmatprep.subr.bf16.mxu0 0
    %8404 = vmatpush2.bf16.msra.mxu0 0
    %8405 = vmatprep.subr.bf16.mxu0 0
    %8406 = vmatpush2.bf16.msra.mxu0 0
    %8407 = vmatprep.subr.bf16.mxu0 0
    %8408 = vmatpush2.bf16.msra.mxu0 0
    %8409 = vmatprep.subr.bf16.mxu0 0
    %8410 = vmatpush2.bf16.msra.mxu0 0
    %8411 = vmatprep.subr.bf16.mxu0 0
    %8412 = vmatpush2.bf16.msra.mxu0 0
    %8413 = vmatprep.mubr.bf16.mxu0 0
    %8414 = vmatmul.mubr.bf16.gmra.mxu0 %v8379
    %v8415 = vpop.f32.mrf.mxu0
    %v8416 = vadd.f32 0.0, %v8415
    %v8417 = vpop.f32.mrf.mxu0
    %v8418 = vadd.f32 0.0, %v8417
    %v8419 = vpop.f32.mrf.mxu0
    %v8420 = vpop.f32.mrf.mxu0
    %8421 = vdwg.mxu0
    %8422 = vmatprep.subr.bf16.mxu0 0
    %8423 = vmatpush1.bf16.msra.mxu0 0
    %8424 = vmatprep.subr.bf16.mxu0 0
    %8425 = vmatpush1.bf16.msra.mxu0 0
    %8426 = vmatprep.subr.bf16.mxu0 0
    %8427 = vmatpush1.bf16.msra.mxu0 0
    %8428 = vmatprep.subr.bf16.mxu0 0
    %8429 = vmatpush1.bf16.msra.mxu0 0
    %8430 = vmatprep.subr.bf16.mxu0 0
    %8431 = vmatpush1.bf16.msra.mxu0 0
    %8432 = vmatprep.subr.bf16.mxu0 0
    %8433 = vmatpush1.bf16.msra.mxu0 0
    %8434 = vmatprep.subr.bf16.mxu0 %v8364
    %8435 = vmatpush1.bf16.msra.mxu0 %v8363
    %8436 = vmatprep.subr.bf16.mxu0 %v8359
    %8437 = vmatpush1.bf16.msra.mxu0 %v8358
    %8438 = vmatprep.subr.bf16.mxu0 0
    %8439 = vmatpush2.bf16.msra.mxu0 0
    %8440 = vmatprep.subr.bf16.mxu0 0
    %8441 = vmatpush2.bf16.msra.mxu0 0
    %8442 = vmatprep.subr.bf16.mxu0 0
    %8443 = vmatpush2.bf16.msra.mxu0 0
    %8444 = vmatprep.subr.bf16.mxu0 0
    %8445 = vmatpush2.bf16.msra.mxu0 0
    %8446 = vmatprep.subr.bf16.mxu0 0
    %8447 = vmatpush2.bf16.msra.mxu0 0
    %8448 = vmatprep.subr.bf16.mxu0 0
    %8449 = vmatpush2.bf16.msra.mxu0 0
    %8450 = vmatprep.subr.bf16.mxu0 0
    %8451 = vmatpush2.bf16.msra.mxu0 0
    %8452 = vmatprep.subr.bf16.mxu0 0
    %8453 = vmatpush2.bf16.msra.mxu0 0
    %8454 = vmatprep.mubr.bf16.mxu0 0
    %8455 = vmatmul.mubr.bf16.gmra.mxu0 %v8379
    %v8456 = vpop.f32.mrf.mxu0
    %v8457 = vadd.f32 0.0, %v8456
    %v8458 = vpop.f32.mrf.mxu0
    %v8459 = vadd.f32 0.0, %v8458
    %v8460 = vpop.f32.mrf.mxu0
    %v8461 = vpop.f32.mrf.mxu0
    %8462 = vdwg.mxu0
    %8463 = vmatprep.subr.bf16.mxu0 0
    %8464 = vmatpush1.bf16.msra.mxu0 0
    %8465 = vmatprep.subr.bf16.mxu0 0
    %8466 = vmatpush1.bf16.msra.mxu0 0
    %8467 = vmatprep.subr.bf16.mxu0 0
    %8468 = vmatpush1.bf16.msra.mxu0 0
    %8469 = vmatprep.subr.bf16.mxu0 0
    %8470 = vmatpush1.bf16.msra.mxu0 0
    %8471 = vmatprep.subr.bf16.mxu0 0
    %8472 = vmatpush1.bf16.msra.mxu0 0
    %8473 = vmatprep.subr.bf16.mxu0 0
    %8474 = vmatpush1.bf16.msra.mxu0 0
    %8475 = vmatprep.subr.bf16.mxu0 %v8355
    %8476 = vmatpush1.bf16.msra.mxu0 %v8365
    %8477 = vmatprep.subr.bf16.mxu0 %v8343
    %8478 = vmatpush1.bf16.msra.mxu0 %v8360
    %8479 = vmatprep.subr.bf16.mxu0 0
    %8480 = vmatpush2.bf16.msra.mxu0 0
    %8481 = vmatprep.subr.bf16.mxu0 0
    %8482 = vmatpush2.bf16.msra.mxu0 0
    %8483 = vmatprep.subr.bf16.mxu0 0
    %8484 = vmatpush2.bf16.msra.mxu0 0
    %8485 = vmatprep.subr.bf16.mxu0 0
    %8486 = vmatpush2.bf16.msra.mxu0 0
    %8487 = vmatprep.subr.bf16.mxu0 0
    %8488 = vmatpush2.bf16.msra.mxu0 0
    %8489 = vmatprep.subr.bf16.mxu0 0
    %8490 = vmatpush2.bf16.msra.mxu0 0
    %8491 = vmatprep.subr.bf16.mxu0 0
    %8492 = vmatpush2.bf16.msra.mxu0 0
    %8493 = vmatprep.subr.bf16.mxu0 0
    %8494 = vmatpush2.bf16.msra.mxu0 0
    %8495 = vmatprep.mubr.bf16.mxu0 0
    %8496 = vmatmul.mubr.bf16.gmra.mxu0 %v8379
    %v8497 = vpop.f32.mrf.mxu0
    %v8498 = vadd.f32 0.0, %v8497
    %v8499 = vpop.f32.mrf.mxu0
    %v8500 = vadd.f32 0.0, %v8499
    %v8501 = vpop.f32.mrf.mxu0
    %v8502 = vpop.f32.mrf.mxu0
    %8503 = vdwg.mxu0
    %v8517 = vsel %vm2883, %v8269, 0
    %8519 = vmatprep.subr.bf16.mxu0 0
    %8520 = vmatpush1.bf16.msra.mxu0 0
    %8521 = vmatprep.subr.bf16.mxu0 0
    %8522 = vmatpush1.bf16.msra.mxu0 0
    %8523 = vmatprep.subr.bf16.mxu0 0
    %8524 = vmatpush1.bf16.msra.mxu0 0
    %8525 = vmatprep.subr.bf16.mxu0 0
    %8526 = vmatpush1.bf16.msra.mxu0 0
    %8527 = vmatprep.subr.bf16.mxu0 0
    %8528 = vmatpush1.bf16.msra.mxu0 0
    %8529 = vmatprep.subr.bf16.mxu0 0
    %8530 = vmatpush1.bf16.msra.mxu0 0
    %8531 = vmatprep.subr.bf16.mxu0 %v8327
    %8532 = vmatpush1.bf16.msra.mxu0 %v8326
    %8533 = vmatprep.subr.bf16.mxu0 %v8321
    %8534 = vmatpush1.bf16.msra.mxu0 %v8320
    %8535 = vmatprep.subr.bf16.mxu0 0
    %8536 = vmatpush2.bf16.msra.mxu0 0
    %8537 = vmatprep.subr.bf16.mxu0 0
    %8538 = vmatpush2.bf16.msra.mxu0 0
    %8539 = vmatprep.subr.bf16.mxu0 0
    %8540 = vmatpush2.bf16.msra.mxu0 0
    %8541 = vmatprep.subr.bf16.mxu0 0
    %8542 = vmatpush2.bf16.msra.mxu0 0
    %8543 = vmatprep.subr.bf16.mxu0 0
    %8544 = vmatpush2.bf16.msra.mxu0 0
    %8545 = vmatprep.subr.bf16.mxu0 0
    %8546 = vmatpush2.bf16.msra.mxu0 0
    %8547 = vmatprep.subr.bf16.mxu0 0
    %8548 = vmatpush2.bf16.msra.mxu0 0
    %8549 = vmatprep.subr.bf16.mxu0 0
    %8550 = vmatpush2.bf16.msra.mxu0 0
    %8551 = vmatprep.mubr.bf16.mxu0 0
    %8552 = vmatmul.mubr.bf16.gmra.mxu0 %v8517
    %v8553 = vpop.f32.mrf.mxu0
    %v8554 = vadd.f32 %v8416, %v8553
    %v8555 = vpop.f32.mrf.mxu0
    %v8556 = vadd.f32 %v8418, %v8555
    %v8557 = vpop.f32.mrf.mxu0
    %v8558 = vpop.f32.mrf.mxu0
    %8559 = vdwg.mxu0
    %8560 = vmatprep.subr.bf16.mxu0 0
    %8561 = vmatpush1.bf16.msra.mxu0 0
    %8562 = vmatprep.subr.bf16.mxu0 0
    %8563 = vmatpush1.bf16.msra.mxu0 0
    %8564 = vmatprep.subr.bf16.mxu0 0
    %8565 = vmatpush1.bf16.msra.mxu0 0
    %8566 = vmatprep.subr.bf16.mxu0 0
    %8567 = vmatpush1.bf16.msra.mxu0 0
    %8568 = vmatprep.subr.bf16.mxu0 0
    %8569 = vmatpush1.bf16.msra.mxu0 0
    %8570 = vmatprep.subr.bf16.mxu0 0
    %8571 = vmatpush1.bf16.msra.mxu0 0
    %8572 = vmatprep.subr.bf16.mxu0 %v8329
    %8573 = vmatpush1.bf16.msra.mxu0 %v8328
    %8574 = vmatprep.subr.bf16.mxu0 %v8323
    %8575 = vmatpush1.bf16.msra.mxu0 %v8322
    %8576 = vmatprep.subr.bf16.mxu0 0
    %8577 = vmatpush2.bf16.msra.mxu0 0
    %8578 = vmatprep.subr.bf16.mxu0 0
    %8579 = vmatpush2.bf16.msra.mxu0 0
    %8580 = vmatprep.subr.bf16.mxu0 0
    %8581 = vmatpush2.bf16.msra.mxu0 0
    %8582 = vmatprep.subr.bf16.mxu0 0
    %8583 = vmatpush2.bf16.msra.mxu0 0
    %8584 = vmatprep.subr.bf16.mxu0 0
    %8585 = vmatpush2.bf16.msra.mxu0 0
    %8586 = vmatprep.subr.bf16.mxu0 0
    %8587 = vmatpush2.bf16.msra.mxu0 0
    %8588 = vmatprep.subr.bf16.mxu0 0
    %8589 = vmatpush2.bf16.msra.mxu0 0
    %8590 = vmatprep.subr.bf16.mxu0 0
    %8591 = vmatpush2.bf16.msra.mxu0 0
    %8592 = vmatprep.mubr.bf16.mxu0 0
    %8593 = vmatmul.mubr.bf16.gmra.mxu0 %v8517
    %v8594 = vpop.f32.mrf.mxu0
    %v8595 = vadd.f32 %v8457, %v8594
    %v8596 = vpop.f32.mrf.mxu0
    %v8597 = vadd.f32 %v8459, %v8596
    %v8598 = vpop.f32.mrf.mxu0
    %v8599 = vpop.f32.mrf.mxu0
    %8600 = vdwg.mxu0
    %8601 = vmatprep.subr.bf16.mxu0 0
    %8602 = vmatpush1.bf16.msra.mxu0 0
    %8603 = vmatprep.subr.bf16.mxu0 0
    %8604 = vmatpush1.bf16.msra.mxu0 0
    %8605 = vmatprep.subr.bf16.mxu0 0
    %8606 = vmatpush1.bf16.msra.mxu0 0
    %8607 = vmatprep.subr.bf16.mxu0 0
    %8608 = vmatpush1.bf16.msra.mxu0 0
    %8609 = vmatprep.subr.bf16.mxu0 0
    %8610 = vmatpush1.bf16.msra.mxu0 0
    %8611 = vmatprep.subr.bf16.mxu0 0
    %8612 = vmatpush1.bf16.msra.mxu0 0
    %8613 = vmatprep.subr.bf16.mxu0 %v8331
    %8614 = vmatpush1.bf16.msra.mxu0 %v8330
    %8615 = vmatprep.subr.bf16.mxu0 %v8325
    %8616 = vmatpush1.bf16.msra.mxu0 %v8324
    %8617 = vmatprep.subr.bf16.mxu0 0
    %8618 = vmatpush2.bf16.msra.mxu0 0
    %8619 = vmatprep.subr.bf16.mxu0 0
    %8620 = vmatpush2.bf16.msra.mxu0 0
    %8621 = vmatprep.subr.bf16.mxu0 0
    %8622 = vmatpush2.bf16.msra.mxu0 0
    %8623 = vmatprep.subr.bf16.mxu0 0
    %8624 = vmatpush2.bf16.msra.mxu0 0
    %8625 = vmatprep.subr.bf16.mxu0 0
    %8626 = vmatpush2.bf16.msra.mxu0 0
    %8627 = vmatprep.subr.bf16.mxu0 0
    %8628 = vmatpush2.bf16.msra.mxu0 0
    %8629 = vmatprep.subr.bf16.mxu0 0
    %8630 = vmatpush2.bf16.msra.mxu0 0
    %8631 = vmatprep.subr.bf16.mxu0 0
    %8632 = vmatpush2.bf16.msra.mxu0 0
    %8633 = vmatprep.mubr.bf16.mxu0 0
    %8634 = vmatmul.mubr.bf16.gmra.mxu0 %v8517
    %v8635 = vpop.f32.mrf.mxu0
    %v8636 = vadd.f32 %v8498, %v8635
    %v8637 = vpop.f32.mrf.mxu0
    %v8638 = vadd.f32 %v8500, %v8637
    %v8639 = vpop.f32.mrf.mxu0
    %v8640 = vpop.f32.mrf.mxu0
    %8641 = vdwg.mxu0
    %s8642 = scalar_lea.vmem %s13, 2
    %v8643 = vld [vmem:[%s8642] sm:$0x1]
    %8644 = vrot.lane.b32.xlu0 %v8320, 126
    %v8645 = vpop.permute.xlu0 %8644
    %8646 = vrot.lane.b32.xlu0 %v8321, 126
    %v8647 = vpop.permute.xlu0 %8646
    %8648 = vrot.lane.b32.xlu0 %v8322, 126
    %v8649 = vpop.permute.xlu0 %8648
    %8650 = vrot.lane.b32.xlu0 %v8323, 126
    %v8651 = vpop.permute.xlu0 %8650
    %8652 = vrot.lane.b32.xlu0 %v8324, 126
    %v8653 = vpop.permute.xlu0 %8652
    %8654 = vrot.lane.b32.xlu0 %v8325, 126
    %v8655 = vpop.permute.xlu0 %8654
    %8656 = vrot.lane.b32.xlu0 %v8326, 126
    %v8657 = vpop.permute.xlu0 %8656
    %8658 = vrot.lane.b32.xlu0 %v8327, 126
    %v8659 = vpop.permute.xlu0 %8658
    %8660 = vrot.lane.b32.xlu0 %v8328, 126
    %v8661 = vpop.permute.xlu0 %8660
    %8662 = vrot.lane.b32.xlu0 %v8329, 126
    %v8663 = vpop.permute.xlu0 %8662
    %8664 = vrot.lane.b32.xlu0 %v8330, 126
    %v8665 = vpop.permute.xlu0 %8664
    %8666 = vrot.lane.b32.xlu0 %v8331, 126
    %v8667 = vpop.permute.xlu0 %8666
    %v8668 = vsel %vm539, %v8645, %v8647
    %v8669 = vsel %vm539, %v8647, %v8649
    %v8670 = vsel %vm539, %v8649, %v8651
    %v8671 = vsel %vm539, %v8651, %v8653
    %v8672 = vsel %vm539, %v8653, %v8655
    %v8673 = vsel %vm539, %v8657, %v8659
    %v8674 = vsel %vm539, %v8659, %v8661
    %v8675 = vsel %vm539, %v8661, %v8663
    %v8676 = vsel %vm539, %v8663, %v8665
    %v8677 = vsel %vm539, %v8665, %v8667
    %v8691 = vsel %vm2883, %v8643, 0
    %8693 = vmatprep.subr.bf16.mxu0 0
    %8694 = vmatpush1.bf16.msra.mxu0 0
    %8695 = vmatprep.subr.bf16.mxu0 0
    %8696 = vmatpush1.bf16.msra.mxu0 0
    %8697 = vmatprep.subr.bf16.mxu0 0
    %8698 = vmatpush1.bf16.msra.mxu0 0
    %8699 = vmatprep.subr.bf16.mxu0 0
    %8700 = vmatpush1.bf16.msra.mxu0 0
    %8701 = vmatprep.subr.bf16.mxu0 0
    %8702 = vmatpush1.bf16.msra.mxu0 0
    %8703 = vmatprep.subr.bf16.mxu0 0
    %8704 = vmatpush1.bf16.msra.mxu0 0
    %8705 = vmatprep.subr.bf16.mxu0 %v8674
    %8706 = vmatpush1.bf16.msra.mxu0 %v8673
    %8707 = vmatprep.subr.bf16.mxu0 %v8669
    %8708 = vmatpush1.bf16.msra.mxu0 %v8668
    %8709 = vmatprep.subr.bf16.mxu0 0
    %8710 = vmatpush2.bf16.msra.mxu0 0
    %8711 = vmatprep.subr.bf16.mxu0 0
    %8712 = vmatpush2.bf16.msra.mxu0 0
    %8713 = vmatprep.subr.bf16.mxu0 0
    %8714 = vmatpush2.bf16.msra.mxu0 0
    %8715 = vmatprep.subr.bf16.mxu0 0
    %8716 = vmatpush2.bf16.msra.mxu0 0
    %8717 = vmatprep.subr.bf16.mxu0 0
    %8718 = vmatpush2.bf16.msra.mxu0 0
    %8719 = vmatprep.subr.bf16.mxu0 0
    %8720 = vmatpush2.bf16.msra.mxu0 0
    %8721 = vmatprep.subr.bf16.mxu0 0
    %8722 = vmatpush2.bf16.msra.mxu0 0
    %8723 = vmatprep.subr.bf16.mxu0 0
    %8724 = vmatpush2.bf16.msra.mxu0 0
    %8725 = vmatprep.mubr.bf16.mxu0 0
    %8726 = vmatmul.mubr.bf16.gmra.mxu0 %v8691
    %v8727 = vpop.f32.mrf.mxu0
    %v8728 = vadd.f32 0.0, %v8727
    %v8729 = vpop.f32.mrf.mxu0
    %v8730 = vadd.f32 0.0, %v8729
    %v8731 = vpop.f32.mrf.mxu0
    %v8732 = vpop.f32.mrf.mxu0
    %8733 = vdwg.mxu0
    %8734 = vmatprep.subr.bf16.mxu0 0
    %8735 = vmatpush1.bf16.msra.mxu0 0
    %8736 = vmatprep.subr.bf16.mxu0 0
    %8737 = vmatpush1.bf16.msra.mxu0 0
    %8738 = vmatprep.subr.bf16.mxu0 0
    %8739 = vmatpush1.bf16.msra.mxu0 0
    %8740 = vmatprep.subr.bf16.mxu0 0
    %8741 = vmatpush1.bf16.msra.mxu0 0
    %8742 = vmatprep.subr.bf16.mxu0 0
    %8743 = vmatpush1.bf16.msra.mxu0 0
    %8744 = vmatprep.subr.bf16.mxu0 0
    %8745 = vmatpush1.bf16.msra.mxu0 0
    %8746 = vmatprep.subr.bf16.mxu0 %v8676
    %8747 = vmatpush1.bf16.msra.mxu0 %v8675
    %8748 = vmatprep.subr.bf16.mxu0 %v8671
    %8749 = vmatpush1.bf16.msra.mxu0 %v8670
    %8750 = vmatprep.subr.bf16.mxu0 0
    %8751 = vmatpush2.bf16.msra.mxu0 0
    %8752 = vmatprep.subr.bf16.mxu0 0
    %8753 = vmatpush2.bf16.msra.mxu0 0
    %8754 = vmatprep.subr.bf16.mxu0 0
    %8755 = vmatpush2.bf16.msra.mxu0 0
    %8756 = vmatprep.subr.bf16.mxu0 0
    %8757 = vmatpush2.bf16.msra.mxu0 0
    %8758 = vmatprep.subr.bf16.mxu0 0
    %8759 = vmatpush2.bf16.msra.mxu0 0
    %8760 = vmatprep.subr.bf16.mxu0 0
    %8761 = vmatpush2.bf16.msra.mxu0 0
    %8762 = vmatprep.subr.bf16.mxu0 0
    %8763 = vmatpush2.bf16.msra.mxu0 0
    %8764 = vmatprep.subr.bf16.mxu0 0
    %8765 = vmatpush2.bf16.msra.mxu0 0
    %8766 = vmatprep.mubr.bf16.mxu0 0
    %8767 = vmatmul.mubr.bf16.gmra.mxu0 %v8691
    %v8768 = vpop.f32.mrf.mxu0
    %v8769 = vadd.f32 0.0, %v8768
    %v8770 = vpop.f32.mrf.mxu0
    %v8771 = vadd.f32 0.0, %v8770
    %v8772 = vpop.f32.mrf.mxu0
    %v8773 = vpop.f32.mrf.mxu0
    %8774 = vdwg.mxu0
    %8775 = vmatprep.subr.bf16.mxu0 0
    %8776 = vmatpush1.bf16.msra.mxu0 0
    %8777 = vmatprep.subr.bf16.mxu0 0
    %8778 = vmatpush1.bf16.msra.mxu0 0
    %8779 = vmatprep.subr.bf16.mxu0 0
    %8780 = vmatpush1.bf16.msra.mxu0 0
    %8781 = vmatprep.subr.bf16.mxu0 0
    %8782 = vmatpush1.bf16.msra.mxu0 0
    %8783 = vmatprep.subr.bf16.mxu0 0
    %8784 = vmatpush1.bf16.msra.mxu0 0
    %8785 = vmatprep.subr.bf16.mxu0 0
    %8786 = vmatpush1.bf16.msra.mxu0 0
    %8787 = vmatprep.subr.bf16.mxu0 %v8667
    %8788 = vmatpush1.bf16.msra.mxu0 %v8677
    %8789 = vmatprep.subr.bf16.mxu0 %v8655
    %8790 = vmatpush1.bf16.msra.mxu0 %v8672
    %8791 = vmatprep.subr.bf16.mxu0 0
    %8792 = vmatpush2.bf16.msra.mxu0 0
    %8793 = vmatprep.subr.bf16.mxu0 0
    %8794 = vmatpush2.bf16.msra.mxu0 0
    %8795 = vmatprep.subr.bf16.mxu0 0
    %8796 = vmatpush2.bf16.msra.mxu0 0
    %8797 = vmatprep.subr.bf16.mxu0 0
    %8798 = vmatpush2.bf16.msra.mxu0 0
    %8799 = vmatprep.subr.bf16.mxu0 0
    %8800 = vmatpush2.bf16.msra.mxu0 0
    %8801 = vmatprep.subr.bf16.mxu0 0
    %8802 = vmatpush2.bf16.msra.mxu0 0
    %8803 = vmatprep.subr.bf16.mxu0 0
    %8804 = vmatpush2.bf16.msra.mxu0 0
    %8805 = vmatprep.subr.bf16.mxu0 0
    %8806 = vmatpush2.bf16.msra.mxu0 0
    %8807 = vmatprep.mubr.bf16.mxu0 0
    %8808 = vmatmul.mubr.bf16.gmra.mxu0 %v8691
    %v8809 = vpop.f32.mrf.mxu0
    %v8810 = vadd.f32 0.0, %v8809
    %v8811 = vpop.f32.mrf.mxu0
    %v8812 = vadd.f32 0.0, %v8811
    %v8813 = vpop.f32.mrf.mxu0
    %v8814 = vpop.f32.mrf.mxu0
    %8815 = vdwg.mxu0
    %v8816 = vadd.f32 %v8554, %v8728
    %v8817 = vadd.f32 %v8556, %v8730
    %v8818 = vadd.f32 %v8595, %v8769
    %v8819 = vadd.f32 %v8597, %v8771
    %v8820 = vadd.f32 %v8636, %v8810
    %v8821 = vadd.f32 %v8638, %v8812
    %s8822 = scalar_lea.vmem %s13, 3
    %v8823 = vld [vmem:[%s8822] sm:$0x1]
    %8824 = vrot.lane.b32.xlu0 %v8320, 110
    %v8825 = vpop.permute.xlu0 %8824
    %8826 = vrot.lane.b32.xlu0 %v8321, 110
    %v8827 = vpop.permute.xlu0 %8826
    %8828 = vrot.lane.b32.xlu0 %v8322, 110
    %v8829 = vpop.permute.xlu0 %8828
    %8830 = vrot.lane.b32.xlu0 %v8323, 110
    %v8831 = vpop.permute.xlu0 %8830
    %8832 = vrot.lane.b32.xlu0 %v8324, 110
    %v8833 = vpop.permute.xlu0 %8832
    %8834 = vrot.lane.b32.xlu0 %v8325, 110
    %v8835 = vpop.permute.xlu0 %8834
    %8836 = vrot.lane.b32.xlu0 %v8326, 110
    %v8837 = vpop.permute.xlu0 %8836
    %8838 = vrot.lane.b32.xlu0 %v8327, 110
    %v8839 = vpop.permute.xlu0 %8838
    %8840 = vrot.lane.b32.xlu0 %v8328, 110
    %v8841 = vpop.permute.xlu0 %8840
    %8842 = vrot.lane.b32.xlu0 %v8329, 110
    %v8843 = vpop.permute.xlu0 %8842
    %8844 = vrot.lane.b32.xlu0 %v8330, 110
    %v8845 = vpop.permute.xlu0 %8844
    %8846 = vrot.lane.b32.xlu0 %v8331, 110
    %v8847 = vpop.permute.xlu0 %8846
    %v8848 = vsel %vm779, %v8825, %v8827
    %v8849 = vsel %vm779, %v8827, %v8829
    %v8850 = vsel %vm779, %v8829, %v8831
    %v8851 = vsel %vm779, %v8831, %v8833
    %v8852 = vsel %vm779, %v8833, %v8835
    %v8853 = vsel %vm779, %v8837, %v8839
    %v8854 = vsel %vm779, %v8839, %v8841
    %v8855 = vsel %vm779, %v8841, %v8843
    %v8856 = vsel %vm779, %v8843, %v8845
    %v8857 = vsel %vm779, %v8845, %v8847
    %v8871 = vsel %vm2883, %v8823, 0
    %8873 = vmatprep.subr.bf16.mxu0 0
    %8874 = vmatpush1.bf16.msra.mxu0 0
    %8875 = vmatprep.subr.bf16.mxu0 0
    %8876 = vmatpush1.bf16.msra.mxu0 0
    %8877 = vmatprep.subr.bf16.mxu0 0
    %8878 = vmatpush1.bf16.msra.mxu0 0
    %8879 = vmatprep.subr.bf16.mxu0 0
    %8880 = vmatpush1.bf16.msra.mxu0 0
    %8881 = vmatprep.subr.bf16.mxu0 0
    %8882 = vmatpush1.bf16.msra.mxu0 0
    %8883 = vmatprep.subr.bf16.mxu0 0
    %8884 = vmatpush1.bf16.msra.mxu0 0
    %8885 = vmatprep.subr.bf16.mxu0 %v8854
    %8886 = vmatpush1.bf16.msra.mxu0 %v8853
    %8887 = vmatprep.subr.bf16.mxu0 %v8849
    %8888 = vmatpush1.bf16.msra.mxu0 %v8848
    %8889 = vmatprep.subr.bf16.mxu0 0
    %8890 = vmatpush2.bf16.msra.mxu0 0
    %8891 = vmatprep.subr.bf16.mxu0 0
    %8892 = vmatpush2.bf16.msra.mxu0 0
    %8893 = vmatprep.subr.bf16.mxu0 0
    %8894 = vmatpush2.bf16.msra.mxu0 0
    %8895 = vmatprep.subr.bf16.mxu0 0
    %8896 = vmatpush2.bf16.msra.mxu0 0
    %8897 = vmatprep.subr.bf16.mxu0 0
    %8898 = vmatpush2.bf16.msra.mxu0 0
    %8899 = vmatprep.subr.bf16.mxu0 0
    %8900 = vmatpush2.bf16.msra.mxu0 0
    %8901 = vmatprep.subr.bf16.mxu0 0
    %8902 = vmatpush2.bf16.msra.mxu0 0
    %8903 = vmatprep.subr.bf16.mxu0 0
    %8904 = vmatpush2.bf16.msra.mxu0 0
    %8905 = vmatprep.mubr.bf16.mxu0 0
    %8906 = vmatmul.mubr.bf16.gmra.mxu0 %v8871
    %v8907 = vpop.f32.mrf.mxu0
    %v8908 = vadd.f32 0.0, %v8907
    %v8909 = vpop.f32.mrf.mxu0
    %v8910 = vadd.f32 0.0, %v8909
    %v8911 = vpop.f32.mrf.mxu0
    %v8912 = vpop.f32.mrf.mxu0
    %8913 = vdwg.mxu0
    %8914 = vmatprep.subr.bf16.mxu0 0
    %8915 = vmatpush1.bf16.msra.mxu0 0
    %8916 = vmatprep.subr.bf16.mxu0 0
    %8917 = vmatpush1.bf16.msra.mxu0 0
    %8918 = vmatprep.subr.bf16.mxu0 0
    %8919 = vmatpush1.bf16.msra.mxu0 0
    %8920 = vmatprep.subr.bf16.mxu0 0
    %8921 = vmatpush1.bf16.msra.mxu0 0
    %8922 = vmatprep.subr.bf16.mxu0 0
    %8923 = vmatpush1.bf16.msra.mxu0 0
    %8924 = vmatprep.subr.bf16.mxu0 0
    %8925 = vmatpush1.bf16.msra.mxu0 0
    %8926 = vmatprep.subr.bf16.mxu0 %v8856
    %8927 = vmatpush1.bf16.msra.mxu0 %v8855
    %8928 = vmatprep.subr.bf16.mxu0 %v8851
    %8929 = vmatpush1.bf16.msra.mxu0 %v8850
    %8930 = vmatprep.subr.bf16.mxu0 0
    %8931 = vmatpush2.bf16.msra.mxu0 0
    %8932 = vmatprep.subr.bf16.mxu0 0
    %8933 = vmatpush2.bf16.msra.mxu0 0
    %8934 = vmatprep.subr.bf16.mxu0 0
    %8935 = vmatpush2.bf16.msra.mxu0 0
    %8936 = vmatprep.subr.bf16.mxu0 0
    %8937 = vmatpush2.bf16.msra.mxu0 0
    %8938 = vmatprep.subr.bf16.mxu0 0
    %8939 = vmatpush2.bf16.msra.mxu0 0
    %8940 = vmatprep.subr.bf16.mxu0 0
    %8941 = vmatpush2.bf16.msra.mxu0 0
    %8942 = vmatprep.subr.bf16.mxu0 0
    %8943 = vmatpush2.bf16.msra.mxu0 0
    %8944 = vmatprep.subr.bf16.mxu0 0
    %8945 = vmatpush2.bf16.msra.mxu0 0
    %8946 = vmatprep.mubr.bf16.mxu0 0
    %8947 = vmatmul.mubr.bf16.gmra.mxu0 %v8871
    %v8948 = vpop.f32.mrf.mxu0
    %v8949 = vadd.f32 0.0, %v8948
    %v8950 = vpop.f32.mrf.mxu0
    %v8951 = vadd.f32 0.0, %v8950
    %v8952 = vpop.f32.mrf.mxu0
    %v8953 = vpop.f32.mrf.mxu0
    %8954 = vdwg.mxu0
    %8955 = vmatprep.subr.bf16.mxu0 0
    %8956 = vmatpush1.bf16.msra.mxu0 0
    %8957 = vmatprep.subr.bf16.mxu0 0
    %8958 = vmatpush1.bf16.msra.mxu0 0
    %8959 = vmatprep.subr.bf16.mxu0 0
    %8960 = vmatpush1.bf16.msra.mxu0 0
    %8961 = vmatprep.subr.bf16.mxu0 0
    %8962 = vmatpush1.bf16.msra.mxu0 0
    %8963 = vmatprep.subr.bf16.mxu0 0
    %8964 = vmatpush1.bf16.msra.mxu0 0
    %8965 = vmatprep.subr.bf16.mxu0 0
    %8966 = vmatpush1.bf16.msra.mxu0 0
    %8967 = vmatprep.subr.bf16.mxu0 %v8847
    %8968 = vmatpush1.bf16.msra.mxu0 %v8857
    %8969 = vmatprep.subr.bf16.mxu0 %v8835
    %8970 = vmatpush1.bf16.msra.mxu0 %v8852
    %8971 = vmatprep.subr.bf16.mxu0 0
    %8972 = vmatpush2.bf16.msra.mxu0 0
    %8973 = vmatprep.subr.bf16.mxu0 0
    %8974 = vmatpush2.bf16.msra.mxu0 0
    %8975 = vmatprep.subr.bf16.mxu0 0
    %8976 = vmatpush2.bf16.msra.mxu0 0
    %8977 = vmatprep.subr.bf16.mxu0 0
    %8978 = vmatpush2.bf16.msra.mxu0 0
    %8979 = vmatprep.subr.bf16.mxu0 0
    %8980 = vmatpush2.bf16.msra.mxu0 0
    %8981 = vmatprep.subr.bf16.mxu0 0
    %8982 = vmatpush2.bf16.msra.mxu0 0
    %8983 = vmatprep.subr.bf16.mxu0 0
    %8984 = vmatpush2.bf16.msra.mxu0 0
    %8985 = vmatprep.subr.bf16.mxu0 0
    %8986 = vmatpush2.bf16.msra.mxu0 0
    %8987 = vmatprep.mubr.bf16.mxu0 0
    %8988 = vmatmul.mubr.bf16.gmra.mxu0 %v8871
    %v8989 = vpop.f32.mrf.mxu0
    %v8990 = vadd.f32 0.0, %v8989
    %v8991 = vpop.f32.mrf.mxu0
    %v8992 = vadd.f32 0.0, %v8991
    %v8993 = vpop.f32.mrf.mxu0
    %v8994 = vpop.f32.mrf.mxu0
    %8995 = vdwg.mxu0
    %v8996 = vadd.f32 %v8816, %v8908
    %v8997 = vadd.f32 %v8817, %v8910
    %v8998 = vadd.f32 %v8818, %v8949
    %v8999 = vadd.f32 %v8819, %v8951
    %v9000 = vadd.f32 %v8820, %v8990
    %v9001 = vadd.f32 %v8821, %v8992
    %s9002 = scalar_lea.vmem %s13, 4
    %v9003 = vld [vmem:[%s9002] sm:$0x1]
    %9004 = vrot.lane.b32.xlu0 %v8320, 109
    %v9005 = vpop.permute.xlu0 %9004
    %9006 = vrot.lane.b32.xlu0 %v8321, 109
    %v9007 = vpop.permute.xlu0 %9006
    %9008 = vrot.lane.b32.xlu0 %v8322, 109
    %v9009 = vpop.permute.xlu0 %9008
    %9010 = vrot.lane.b32.xlu0 %v8323, 109
    %v9011 = vpop.permute.xlu0 %9010
    %9012 = vrot.lane.b32.xlu0 %v8324, 109
    %v9013 = vpop.permute.xlu0 %9012
    %9014 = vrot.lane.b32.xlu0 %v8325, 109
    %v9015 = vpop.permute.xlu0 %9014
    %9016 = vrot.lane.b32.xlu0 %v8326, 109
    %v9017 = vpop.permute.xlu0 %9016
    %9018 = vrot.lane.b32.xlu0 %v8327, 109
    %v9019 = vpop.permute.xlu0 %9018
    %9020 = vrot.lane.b32.xlu0 %v8328, 109
    %v9021 = vpop.permute.xlu0 %9020
    %9022 = vrot.lane.b32.xlu0 %v8329, 109
    %v9023 = vpop.permute.xlu0 %9022
    %9024 = vrot.lane.b32.xlu0 %v8330, 109
    %v9025 = vpop.permute.xlu0 %9024
    %9026 = vrot.lane.b32.xlu0 %v8331, 109
    %v9027 = vpop.permute.xlu0 %9026
    %v9028 = vsel %vm1019, %v9005, %v9007
    %v9029 = vsel %vm1019, %v9007, %v9009
    %v9030 = vsel %vm1019, %v9009, %v9011
    %v9031 = vsel %vm1019, %v9011, %v9013
    %v9032 = vsel %vm1019, %v9013, %v9015
    %v9033 = vsel %vm1019, %v9017, %v9019
    %v9034 = vsel %vm1019, %v9019, %v9021
    %v9035 = vsel %vm1019, %v9021, %v9023
    %v9036 = vsel %vm1019, %v9023, %v9025
    %v9037 = vsel %vm1019, %v9025, %v9027
    %v9051 = vsel %vm2883, %v9003, 0
    %9053 = vmatprep.subr.bf16.mxu0 0
    %9054 = vmatpush1.bf16.msra.mxu0 0
    %9055 = vmatprep.subr.bf16.mxu0 0
    %9056 = vmatpush1.bf16.msra.mxu0 0
    %9057 = vmatprep.subr.bf16.mxu0 0
    %9058 = vmatpush1.bf16.msra.mxu0 0
    %9059 = vmatprep.subr.bf16.mxu0 0
    %9060 = vmatpush1.bf16.msra.mxu0 0
    %9061 = vmatprep.subr.bf16.mxu0 0
    %9062 = vmatpush1.bf16.msra.mxu0 0
    %9063 = vmatprep.subr.bf16.mxu0 0
    %9064 = vmatpush1.bf16.msra.mxu0 0
    %9065 = vmatprep.subr.bf16.mxu0 %v9034
    %9066 = vmatpush1.bf16.msra.mxu0 %v9033
    %9067 = vmatprep.subr.bf16.mxu0 %v9029
    %9068 = vmatpush1.bf16.msra.mxu0 %v9028
    %9069 = vmatprep.subr.bf16.mxu0 0
    %9070 = vmatpush2.bf16.msra.mxu0 0
    %9071 = vmatprep.subr.bf16.mxu0 0
    %9072 = vmatpush2.bf16.msra.mxu0 0
    %9073 = vmatprep.subr.bf16.mxu0 0
    %9074 = vmatpush2.bf16.msra.mxu0 0
    %9075 = vmatprep.subr.bf16.mxu0 0
    %9076 = vmatpush2.bf16.msra.mxu0 0
    %9077 = vmatprep.subr.bf16.mxu0 0
    %9078 = vmatpush2.bf16.msra.mxu0 0
    %9079 = vmatprep.subr.bf16.mxu0 0
    %9080 = vmatpush2.bf16.msra.mxu0 0
    %9081 = vmatprep.subr.bf16.mxu0 0
    %9082 = vmatpush2.bf16.msra.mxu0 0
    %9083 = vmatprep.subr.bf16.mxu0 0
    %9084 = vmatpush2.bf16.msra.mxu0 0
    %9085 = vmatprep.mubr.bf16.mxu0 0
    %9086 = vmatmul.mubr.bf16.gmra.mxu0 %v9051
    %v9087 = vpop.f32.mrf.mxu0
    %v9088 = vadd.f32 0.0, %v9087
    %v9089 = vpop.f32.mrf.mxu0
    %v9090 = vadd.f32 0.0, %v9089
    %v9091 = vpop.f32.mrf.mxu0
    %v9092 = vpop.f32.mrf.mxu0
    %9093 = vdwg.mxu0
    %9094 = vmatprep.subr.bf16.mxu0 0
    %9095 = vmatpush1.bf16.msra.mxu0 0
    %9096 = vmatprep.subr.bf16.mxu0 0
    %9097 = vmatpush1.bf16.msra.mxu0 0
    %9098 = vmatprep.subr.bf16.mxu0 0
    %9099 = vmatpush1.bf16.msra.mxu0 0
    %9100 = vmatprep.subr.bf16.mxu0 0
    %9101 = vmatpush1.bf16.msra.mxu0 0
    %9102 = vmatprep.subr.bf16.mxu0 0
    %9103 = vmatpush1.bf16.msra.mxu0 0
    %9104 = vmatprep.subr.bf16.mxu0 0
    %9105 = vmatpush1.bf16.msra.mxu0 0
    %9106 = vmatprep.subr.bf16.mxu0 %v9036
    %9107 = vmatpush1.bf16.msra.mxu0 %v9035
    %9108 = vmatprep.subr.bf16.mxu0 %v9031
    %9109 = vmatpush1.bf16.msra.mxu0 %v9030
    %9110 = vmatprep.subr.bf16.mxu0 0
    %9111 = vmatpush2.bf16.msra.mxu0 0
    %9112 = vmatprep.subr.bf16.mxu0 0
    %9113 = vmatpush2.bf16.msra.mxu0 0
    %9114 = vmatprep.subr.bf16.mxu0 0
    %9115 = vmatpush2.bf16.msra.mxu0 0
    %9116 = vmatprep.subr.bf16.mxu0 0
    %9117 = vmatpush2.bf16.msra.mxu0 0
    %9118 = vmatprep.subr.bf16.mxu0 0
    %9119 = vmatpush2.bf16.msra.mxu0 0
    %9120 = vmatprep.subr.bf16.mxu0 0
    %9121 = vmatpush2.bf16.msra.mxu0 0
    %9122 = vmatprep.subr.bf16.mxu0 0
    %9123 = vmatpush2.bf16.msra.mxu0 0
    %9124 = vmatprep.subr.bf16.mxu0 0
    %9125 = vmatpush2.bf16.msra.mxu0 0
    %9126 = vmatprep.mubr.bf16.mxu0 0
    %9127 = vmatmul.mubr.bf16.gmra.mxu0 %v9051
    %v9128 = vpop.f32.mrf.mxu0
    %v9129 = vadd.f32 0.0, %v9128
    %v9130 = vpop.f32.mrf.mxu0
    %v9131 = vadd.f32 0.0, %v9130
    %v9132 = vpop.f32.mrf.mxu0
    %v9133 = vpop.f32.mrf.mxu0
    %9134 = vdwg.mxu0
    %9135 = vmatprep.subr.bf16.mxu0 0
    %9136 = vmatpush1.bf16.msra.mxu0 0
    %9137 = vmatprep.subr.bf16.mxu0 0
    %9138 = vmatpush1.bf16.msra.mxu0 0
    %9139 = vmatprep.subr.bf16.mxu0 0
    %9140 = vmatpush1.bf16.msra.mxu0 0
    %9141 = vmatprep.subr.bf16.mxu0 0
    %9142 = vmatpush1.bf16.msra.mxu0 0
    %9143 = vmatprep.subr.bf16.mxu0 0
    %9144 = vmatpush1.bf16.msra.mxu0 0
    %9145 = vmatprep.subr.bf16.mxu0 0
    %9146 = vmatpush1.bf16.msra.mxu0 0
    %9147 = vmatprep.subr.bf16.mxu0 %v9027
    %9148 = vmatpush1.bf16.msra.mxu0 %v9037
    %9149 = vmatprep.subr.bf16.mxu0 %v9015
    %9150 = vmatpush1.bf16.msra.mxu0 %v9032
    %9151 = vmatprep.subr.bf16.mxu0 0
    %9152 = vmatpush2.bf16.msra.mxu0 0
    %9153 = vmatprep.subr.bf16.mxu0 0
    %9154 = vmatpush2.bf16.msra.mxu0 0
    %9155 = vmatprep.subr.bf16.mxu0 0
    %9156 = vmatpush2.bf16.msra.mxu0 0
    %9157 = vmatprep.subr.bf16.mxu0 0
    %9158 = vmatpush2.bf16.msra.mxu0 0
    %9159 = vmatprep.subr.bf16.mxu0 0
    %9160 = vmatpush2.bf16.msra.mxu0 0
    %9161 = vmatprep.subr.bf16.mxu0 0
    %9162 = vmatpush2.bf16.msra.mxu0 0
    %9163 = vmatprep.subr.bf16.mxu0 0
    %9164 = vmatpush2.bf16.msra.mxu0 0
    %9165 = vmatprep.subr.bf16.mxu0 0
    %9166 = vmatpush2.bf16.msra.mxu0 0
    %9167 = vmatprep.mubr.bf16.mxu0 0
    %9168 = vmatmul.mubr.bf16.gmra.mxu0 %v9051
    %v9169 = vpop.f32.mrf.mxu0
    %v9170 = vadd.f32 0.0, %v9169
    %v9171 = vpop.f32.mrf.mxu0
    %v9172 = vadd.f32 0.0, %v9171
    %v9173 = vpop.f32.mrf.mxu0
    %v9174 = vpop.f32.mrf.mxu0
    %9175 = vdwg.mxu0
    %v9176 = vadd.f32 %v8996, %v9088
    %v9177 = vadd.f32 %v8997, %v9090
    %v9178 = vadd.f32 %v8998, %v9129
    %v9179 = vadd.f32 %v8999, %v9131
    %v9180 = vadd.f32 %v9000, %v9170
    %v9181 = vadd.f32 %v9001, %v9172
    %s9182 = scalar_lea.vmem %s13, 5
    %v9183 = vld [vmem:[%s9182] sm:$0x1]
    %9184 = vrot.lane.b32.xlu0 %v8320, 108
    %v9185 = vpop.permute.xlu0 %9184
    %9186 = vrot.lane.b32.xlu0 %v8321, 108
    %v9187 = vpop.permute.xlu0 %9186
    %9188 = vrot.lane.b32.xlu0 %v8322, 108
    %v9189 = vpop.permute.xlu0 %9188
    %9190 = vrot.lane.b32.xlu0 %v8323, 108
    %v9191 = vpop.permute.xlu0 %9190
    %9192 = vrot.lane.b32.xlu0 %v8324, 108
    %v9193 = vpop.permute.xlu0 %9192
    %9194 = vrot.lane.b32.xlu0 %v8325, 108
    %v9195 = vpop.permute.xlu0 %9194
    %9196 = vrot.lane.b32.xlu0 %v8326, 108
    %v9197 = vpop.permute.xlu0 %9196
    %9198 = vrot.lane.b32.xlu0 %v8327, 108
    %v9199 = vpop.permute.xlu0 %9198
    %9200 = vrot.lane.b32.xlu0 %v8328, 108
    %v9201 = vpop.permute.xlu0 %9200
    %9202 = vrot.lane.b32.xlu0 %v8329, 108
    %v9203 = vpop.permute.xlu0 %9202
    %9204 = vrot.lane.b32.xlu0 %v8330, 108
    %v9205 = vpop.permute.xlu0 %9204
    %9206 = vrot.lane.b32.xlu0 %v8331, 108
    %v9207 = vpop.permute.xlu0 %9206
    %v9208 = vsel %vm1259, %v9185, %v9187
    %v9209 = vsel %vm1259, %v9187, %v9189
    %v9210 = vsel %vm1259, %v9189, %v9191
    %v9211 = vsel %vm1259, %v9191, %v9193
    %v9212 = vsel %vm1259, %v9193, %v9195
    %v9213 = vsel %vm1259, %v9197, %v9199
    %v9214 = vsel %vm1259, %v9199, %v9201
    %v9215 = vsel %vm1259, %v9201, %v9203
    %v9216 = vsel %vm1259, %v9203, %v9205
    %v9217 = vsel %vm1259, %v9205, %v9207
    %v9231 = vsel %vm2883, %v9183, 0
    %9233 = vmatprep.subr.bf16.mxu0 0
    %9234 = vmatpush1.bf16.msra.mxu0 0
    %9235 = vmatprep.subr.bf16.mxu0 0
    %9236 = vmatpush1.bf16.msra.mxu0 0
    %9237 = vmatprep.subr.bf16.mxu0 0
    %9238 = vmatpush1.bf16.msra.mxu0 0
    %9239 = vmatprep.subr.bf16.mxu0 0
    %9240 = vmatpush1.bf16.msra.mxu0 0
    %9241 = vmatprep.subr.bf16.mxu0 0
    %9242 = vmatpush1.bf16.msra.mxu0 0
    %9243 = vmatprep.subr.bf16.mxu0 0
    %9244 = vmatpush1.bf16.msra.mxu0 0
    %9245 = vmatprep.subr.bf16.mxu0 %v9214
    %9246 = vmatpush1.bf16.msra.mxu0 %v9213
    %9247 = vmatprep.subr.bf16.mxu0 %v9209
    %9248 = vmatpush1.bf16.msra.mxu0 %v9208
    %9249 = vmatprep.subr.bf16.mxu0 0
    %9250 = vmatpush2.bf16.msra.mxu0 0
    %9251 = vmatprep.subr.bf16.mxu0 0
    %9252 = vmatpush2.bf16.msra.mxu0 0
    %9253 = vmatprep.subr.bf16.mxu0 0
    %9254 = vmatpush2.bf16.msra.mxu0 0
    %9255 = vmatprep.subr.bf16.mxu0 0
    %9256 = vmatpush2.bf16.msra.mxu0 0
    %9257 = vmatprep.subr.bf16.mxu0 0
    %9258 = vmatpush2.bf16.msra.mxu0 0
    %9259 = vmatprep.subr.bf16.mxu0 0
    %9260 = vmatpush2.bf16.msra.mxu0 0
    %9261 = vmatprep.subr.bf16.mxu0 0
    %9262 = vmatpush2.bf16.msra.mxu0 0
    %9263 = vmatprep.subr.bf16.mxu0 0
    %9264 = vmatpush2.bf16.msra.mxu0 0
    %9265 = vmatprep.mubr.bf16.mxu0 0
    %9266 = vmatmul.mubr.bf16.gmra.mxu0 %v9231
    %v9267 = vpop.f32.mrf.mxu0
    %v9268 = vadd.f32 0.0, %v9267
    %v9269 = vpop.f32.mrf.mxu0
    %v9270 = vadd.f32 0.0, %v9269
    %v9271 = vpop.f32.mrf.mxu0
    %v9272 = vpop.f32.mrf.mxu0
    %9273 = vdwg.mxu0
    %9274 = vmatprep.subr.bf16.mxu0 0
    %9275 = vmatpush1.bf16.msra.mxu0 0
    %9276 = vmatprep.subr.bf16.mxu0 0
    %9277 = vmatpush1.bf16.msra.mxu0 0
    %9278 = vmatprep.subr.bf16.mxu0 0
    %9279 = vmatpush1.bf16.msra.mxu0 0
    %9280 = vmatprep.subr.bf16.mxu0 0
    %9281 = vmatpush1.bf16.msra.mxu0 0
    %9282 = vmatprep.subr.bf16.mxu0 0
    %9283 = vmatpush1.bf16.msra.mxu0 0
    %9284 = vmatprep.subr.bf16.mxu0 0
    %9285 = vmatpush1.bf16.msra.mxu0 0
    %9286 = vmatprep.subr.bf16.mxu0 %v9216
    %9287 = vmatpush1.bf16.msra.mxu0 %v9215
    %9288 = vmatprep.subr.bf16.mxu0 %v9211
    %9289 = vmatpush1.bf16.msra.mxu0 %v9210
    %9290 = vmatprep.subr.bf16.mxu0 0
    %9291 = vmatpush2.bf16.msra.mxu0 0
    %9292 = vmatprep.subr.bf16.mxu0 0
    %9293 = vmatpush2.bf16.msra.mxu0 0
    %9294 = vmatprep.subr.bf16.mxu0 0
    %9295 = vmatpush2.bf16.msra.mxu0 0
    %9296 = vmatprep.subr.bf16.mxu0 0
    %9297 = vmatpush2.bf16.msra.mxu0 0
    %9298 = vmatprep.subr.bf16.mxu0 0
    %9299 = vmatpush2.bf16.msra.mxu0 0
    %9300 = vmatprep.subr.bf16.mxu0 0
    %9301 = vmatpush2.bf16.msra.mxu0 0
    %9302 = vmatprep.subr.bf16.mxu0 0
    %9303 = vmatpush2.bf16.msra.mxu0 0
    %9304 = vmatprep.subr.bf16.mxu0 0
    %9305 = vmatpush2.bf16.msra.mxu0 0
    %9306 = vmatprep.mubr.bf16.mxu0 0
    %9307 = vmatmul.mubr.bf16.gmra.mxu0 %v9231
    %v9308 = vpop.f32.mrf.mxu0
    %v9309 = vadd.f32 0.0, %v9308
    %v9310 = vpop.f32.mrf.mxu0
    %v9311 = vadd.f32 0.0, %v9310
    %v9312 = vpop.f32.mrf.mxu0
    %v9313 = vpop.f32.mrf.mxu0
    %9314 = vdwg.mxu0
    %9315 = vmatprep.subr.bf16.mxu0 0
    %9316 = vmatpush1.bf16.msra.mxu0 0
    %9317 = vmatprep.subr.bf16.mxu0 0
    %9318 = vmatpush1.bf16.msra.mxu0 0
    %9319 = vmatprep.subr.bf16.mxu0 0
    %9320 = vmatpush1.bf16.msra.mxu0 0
    %9321 = vmatprep.subr.bf16.mxu0 0
    %9322 = vmatpush1.bf16.msra.mxu0 0
    %9323 = vmatprep.subr.bf16.mxu0 0
    %9324 = vmatpush1.bf16.msra.mxu0 0
    %9325 = vmatprep.subr.bf16.mxu0 0
    %9326 = vmatpush1.bf16.msra.mxu0 0
    %9327 = vmatprep.subr.bf16.mxu0 %v9207
    %9328 = vmatpush1.bf16.msra.mxu0 %v9217
    %9329 = vmatprep.subr.bf16.mxu0 %v9195
    %9330 = vmatpush1.bf16.msra.mxu0 %v9212
    %9331 = vmatprep.subr.bf16.mxu0 0
    %9332 = vmatpush2.bf16.msra.mxu0 0
    %9333 = vmatprep.subr.bf16.mxu0 0
    %9334 = vmatpush2.bf16.msra.mxu0 0
    %9335 = vmatprep.subr.bf16.mxu0 0
    %9336 = vmatpush2.bf16.msra.mxu0 0
    %9337 = vmatprep.subr.bf16.mxu0 0
    %9338 = vmatpush2.bf16.msra.mxu0 0
    %9339 = vmatprep.subr.bf16.mxu0 0
    %9340 = vmatpush2.bf16.msra.mxu0 0
    %9341 = vmatprep.subr.bf16.mxu0 0
    %9342 = vmatpush2.bf16.msra.mxu0 0
    %9343 = vmatprep.subr.bf16.mxu0 0
    %9344 = vmatpush2.bf16.msra.mxu0 0
    %9345 = vmatprep.subr.bf16.mxu0 0
    %9346 = vmatpush2.bf16.msra.mxu0 0
    %9347 = vmatprep.mubr.bf16.mxu0 0
    %9348 = vmatmul.mubr.bf16.gmra.mxu0 %v9231
    %v9349 = vpop.f32.mrf.mxu0
    %v9350 = vadd.f32 0.0, %v9349
    %v9351 = vpop.f32.mrf.mxu0
    %v9352 = vadd.f32 0.0, %v9351
    %v9353 = vpop.f32.mrf.mxu0
    %v9354 = vpop.f32.mrf.mxu0
    %9355 = vdwg.mxu0
    %v9356 = vadd.f32 %v9176, %v9268
    %v9357 = vadd.f32 %v9177, %v9270
    %v9358 = vadd.f32 %v9178, %v9309
    %v9359 = vadd.f32 %v9179, %v9311
    %v9360 = vadd.f32 %v9180, %v9350
    %v9361 = vadd.f32 %v9181, %v9352
    %s9362 = scalar_lea.vmem %s13, 6
    %v9363 = vld [vmem:[%s9362] sm:$0x1]
    %9364 = vrot.lane.b32.xlu0 %v8320, 92
    %v9365 = vpop.permute.xlu0 %9364
    %9366 = vrot.lane.b32.xlu0 %v8321, 92
    %v9367 = vpop.permute.xlu0 %9366
    %9368 = vrot.lane.b32.xlu0 %v8322, 92
    %v9369 = vpop.permute.xlu0 %9368
    %9370 = vrot.lane.b32.xlu0 %v8323, 92
    %v9371 = vpop.permute.xlu0 %9370
    %9372 = vrot.lane.b32.xlu0 %v8324, 92
    %v9373 = vpop.permute.xlu0 %9372
    %9374 = vrot.lane.b32.xlu0 %v8325, 92
    %v9375 = vpop.permute.xlu0 %9374
    %9376 = vrot.lane.b32.xlu0 %v8326, 92
    %v9377 = vpop.permute.xlu0 %9376
    %9378 = vrot.lane.b32.xlu0 %v8327, 92
    %v9379 = vpop.permute.xlu0 %9378
    %9380 = vrot.lane.b32.xlu0 %v8328, 92
    %v9381 = vpop.permute.xlu0 %9380
    %9382 = vrot.lane.b32.xlu0 %v8329, 92
    %v9383 = vpop.permute.xlu0 %9382
    %9384 = vrot.lane.b32.xlu0 %v8330, 92
    %v9385 = vpop.permute.xlu0 %9384
    %9386 = vrot.lane.b32.xlu0 %v8331, 92
    %v9387 = vpop.permute.xlu0 %9386
    %v9388 = vsel %vm1499, %v9365, %v9367
    %v9389 = vsel %vm1499, %v9367, %v9369
    %v9390 = vsel %vm1499, %v9369, %v9371
    %v9391 = vsel %vm1499, %v9371, %v9373
    %v9392 = vsel %vm1499, %v9373, %v9375
    %v9393 = vsel %vm1499, %v9377, %v9379
    %v9394 = vsel %vm1499, %v9379, %v9381
    %v9395 = vsel %vm1499, %v9381, %v9383
    %v9396 = vsel %vm1499, %v9383, %v9385
    %v9397 = vsel %vm1499, %v9385, %v9387
    %v9411 = vsel %vm2883, %v9363, 0
    %9413 = vmatprep.subr.bf16.mxu0 0
    %9414 = vmatpush1.bf16.msra.mxu0 0
    %9415 = vmatprep.subr.bf16.mxu0 0
    %9416 = vmatpush1.bf16.msra.mxu0 0
    %9417 = vmatprep.subr.bf16.mxu0 0
    %9418 = vmatpush1.bf16.msra.mxu0 0
    %9419 = vmatprep.subr.bf16.mxu0 0
    %9420 = vmatpush1.bf16.msra.mxu0 0
    %9421 = vmatprep.subr.bf16.mxu0 0
    %9422 = vmatpush1.bf16.msra.mxu0 0
    %9423 = vmatprep.subr.bf16.mxu0 0
    %9424 = vmatpush1.bf16.msra.mxu0 0
    %9425 = vmatprep.subr.bf16.mxu0 %v9394
    %9426 = vmatpush1.bf16.msra.mxu0 %v9393
    %9427 = vmatprep.subr.bf16.mxu0 %v9389
    %9428 = vmatpush1.bf16.msra.mxu0 %v9388
    %9429 = vmatprep.subr.bf16.mxu0 0
    %9430 = vmatpush2.bf16.msra.mxu0 0
    %9431 = vmatprep.subr.bf16.mxu0 0
    %9432 = vmatpush2.bf16.msra.mxu0 0
    %9433 = vmatprep.subr.bf16.mxu0 0
    %9434 = vmatpush2.bf16.msra.mxu0 0
    %9435 = vmatprep.subr.bf16.mxu0 0
    %9436 = vmatpush2.bf16.msra.mxu0 0
    %9437 = vmatprep.subr.bf16.mxu0 0
    %9438 = vmatpush2.bf16.msra.mxu0 0
    %9439 = vmatprep.subr.bf16.mxu0 0
    %9440 = vmatpush2.bf16.msra.mxu0 0
    %9441 = vmatprep.subr.bf16.mxu0 0
    %9442 = vmatpush2.bf16.msra.mxu0 0
    %9443 = vmatprep.subr.bf16.mxu0 0
    %9444 = vmatpush2.bf16.msra.mxu0 0
    %9445 = vmatprep.mubr.bf16.mxu0 0
    %9446 = vmatmul.mubr.bf16.gmra.mxu0 %v9411
    %v9447 = vpop.f32.mrf.mxu0
    %v9448 = vadd.f32 0.0, %v9447
    %v9449 = vpop.f32.mrf.mxu0
    %v9450 = vadd.f32 0.0, %v9449
    %v9451 = vpop.f32.mrf.mxu0
    %v9452 = vpop.f32.mrf.mxu0
    %9453 = vdwg.mxu0
    %9454 = vmatprep.subr.bf16.mxu0 0
    %9455 = vmatpush1.bf16.msra.mxu0 0
    %9456 = vmatprep.subr.bf16.mxu0 0
    %9457 = vmatpush1.bf16.msra.mxu0 0
    %9458 = vmatprep.subr.bf16.mxu0 0
    %9459 = vmatpush1.bf16.msra.mxu0 0
    %9460 = vmatprep.subr.bf16.mxu0 0
    %9461 = vmatpush1.bf16.msra.mxu0 0
    %9462 = vmatprep.subr.bf16.mxu0 0
    %9463 = vmatpush1.bf16.msra.mxu0 0
    %9464 = vmatprep.subr.bf16.mxu0 0
    %9465 = vmatpush1.bf16.msra.mxu0 0
    %9466 = vmatprep.subr.bf16.mxu0 %v9396
    %9467 = vmatpush1.bf16.msra.mxu0 %v9395
    %9468 = vmatprep.subr.bf16.mxu0 %v9391
    %9469 = vmatpush1.bf16.msra.mxu0 %v9390
    %9470 = vmatprep.subr.bf16.mxu0 0
    %9471 = vmatpush2.bf16.msra.mxu0 0
    %9472 = vmatprep.subr.bf16.mxu0 0
    %9473 = vmatpush2.bf16.msra.mxu0 0
    %9474 = vmatprep.subr.bf16.mxu0 0
    %9475 = vmatpush2.bf16.msra.mxu0 0
    %9476 = vmatprep.subr.bf16.mxu0 0
    %9477 = vmatpush2.bf16.msra.mxu0 0
    %9478 = vmatprep.subr.bf16.mxu0 0
    %9479 = vmatpush2.bf16.msra.mxu0 0
    %9480 = vmatprep.subr.bf16.mxu0 0
    %9481 = vmatpush2.bf16.msra.mxu0 0
    %9482 = vmatprep.subr.bf16.mxu0 0
    %9483 = vmatpush2.bf16.msra.mxu0 0
    %9484 = vmatprep.subr.bf16.mxu0 0
    %9485 = vmatpush2.bf16.msra.mxu0 0
    %9486 = vmatprep.mubr.bf16.mxu0 0
    %9487 = vmatmul.mubr.bf16.gmra.mxu0 %v9411
    %v9488 = vpop.f32.mrf.mxu0
    %v9489 = vadd.f32 0.0, %v9488
    %v9490 = vpop.f32.mrf.mxu0
    %v9491 = vadd.f32 0.0, %v9490
    %v9492 = vpop.f32.mrf.mxu0
    %v9493 = vpop.f32.mrf.mxu0
    %9494 = vdwg.mxu0
    %9495 = vmatprep.subr.bf16.mxu0 0
    %9496 = vmatpush1.bf16.msra.mxu0 0
    %9497 = vmatprep.subr.bf16.mxu0 0
    %9498 = vmatpush1.bf16.msra.mxu0 0
    %9499 = vmatprep.subr.bf16.mxu0 0
    %9500 = vmatpush1.bf16.msra.mxu0 0
    %9501 = vmatprep.subr.bf16.mxu0 0
    %9502 = vmatpush1.bf16.msra.mxu0 0
    %9503 = vmatprep.subr.bf16.mxu0 0
    %9504 = vmatpush1.bf16.msra.mxu0 0
    %9505 = vmatprep.subr.bf16.mxu0 0
    %9506 = vmatpush1.bf16.msra.mxu0 0
    %9507 = vmatprep.subr.bf16.mxu0 %v9387
    %9508 = vmatpush1.bf16.msra.mxu0 %v9397
    %9509 = vmatprep.subr.bf16.mxu0 %v9375
    %9510 = vmatpush1.bf16.msra.mxu0 %v9392
    %9511 = vmatprep.subr.bf16.mxu0 0
    %9512 = vmatpush2.bf16.msra.mxu0 0
    %9513 = vmatprep.subr.bf16.mxu0 0
    %9514 = vmatpush2.bf16.msra.mxu0 0
    %9515 = vmatprep.subr.bf16.mxu0 0
    %9516 = vmatpush2.bf16.msra.mxu0 0
    %9517 = vmatprep.subr.bf16.mxu0 0
    %9518 = vmatpush2.bf16.msra.mxu0 0
    %9519 = vmatprep.subr.bf16.mxu0 0
    %9520 = vmatpush2.bf16.msra.mxu0 0
    %9521 = vmatprep.subr.bf16.mxu0 0
    %9522 = vmatpush2.bf16.msra.mxu0 0
    %9523 = vmatprep.subr.bf16.mxu0 0
    %9524 = vmatpush2.bf16.msra.mxu0 0
    %9525 = vmatprep.subr.bf16.mxu0 0
    %9526 = vmatpush2.bf16.msra.mxu0 0
    %9527 = vmatprep.mubr.bf16.mxu0 0
    %9528 = vmatmul.mubr.bf16.gmra.mxu0 %v9411
    %v9529 = vpop.f32.mrf.mxu0
    %v9530 = vadd.f32 0.0, %v9529
    %v9531 = vpop.f32.mrf.mxu0
    %v9532 = vadd.f32 0.0, %v9531
    %v9533 = vpop.f32.mrf.mxu0
    %v9534 = vpop.f32.mrf.mxu0
    %9535 = vdwg.mxu0
    %v9536 = vadd.f32 %v9356, %v9448
    %v9537 = vadd.f32 %v9357, %v9450
    %v9538 = vadd.f32 %v9358, %v9489
    %v9539 = vadd.f32 %v9359, %v9491
    %v9540 = vadd.f32 %v9360, %v9530
    %v9541 = vadd.f32 %v9361, %v9532
    %s9542 = scalar_lea.vmem %s13, 7
    %v9543 = vld [vmem:[%s9542] sm:$0x1]
    %9544 = vrot.lane.b32.xlu0 %v8320, 91
    %v9545 = vpop.permute.xlu0 %9544
    %9546 = vrot.lane.b32.xlu0 %v8321, 91
    %v9547 = vpop.permute.xlu0 %9546
    %9548 = vrot.lane.b32.xlu0 %v8322, 91
    %v9549 = vpop.permute.xlu0 %9548
    %9550 = vrot.lane.b32.xlu0 %v8323, 91
    %v9551 = vpop.permute.xlu0 %9550
    %9552 = vrot.lane.b32.xlu0 %v8324, 91
    %v9553 = vpop.permute.xlu0 %9552
    %9554 = vrot.lane.b32.xlu0 %v8325, 91
    %v9555 = vpop.permute.xlu0 %9554
    %9556 = vrot.lane.b32.xlu0 %v8326, 91
    %v9557 = vpop.permute.xlu0 %9556
    %9558 = vrot.lane.b32.xlu0 %v8327, 91
    %v9559 = vpop.permute.xlu0 %9558
    %9560 = vrot.lane.b32.xlu0 %v8328, 91
    %v9561 = vpop.permute.xlu0 %9560
    %9562 = vrot.lane.b32.xlu0 %v8329, 91
    %v9563 = vpop.permute.xlu0 %9562
    %9564 = vrot.lane.b32.xlu0 %v8330, 91
    %v9565 = vpop.permute.xlu0 %9564
    %9566 = vrot.lane.b32.xlu0 %v8331, 91
    %v9567 = vpop.permute.xlu0 %9566
    %v9568 = vsel %vm1739, %v9545, %v9547
    %v9569 = vsel %vm1739, %v9547, %v9549
    %v9570 = vsel %vm1739, %v9549, %v9551
    %v9571 = vsel %vm1739, %v9551, %v9553
    %v9572 = vsel %vm1739, %v9553, %v9555
    %v9573 = vsel %vm1739, %v9557, %v9559
    %v9574 = vsel %vm1739, %v9559, %v9561
    %v9575 = vsel %vm1739, %v9561, %v9563
    %v9576 = vsel %vm1739, %v9563, %v9565
    %v9577 = vsel %vm1739, %v9565, %v9567
    %v9591 = vsel %vm2883, %v9543, 0
    %9593 = vmatprep.subr.bf16.mxu0 0
    %9594 = vmatpush1.bf16.msra.mxu0 0
    %9595 = vmatprep.subr.bf16.mxu0 0
    %9596 = vmatpush1.bf16.msra.mxu0 0
    %9597 = vmatprep.subr.bf16.mxu0 0
    %9598 = vmatpush1.bf16.msra.mxu0 0
    %9599 = vmatprep.subr.bf16.mxu0 0
    %9600 = vmatpush1.bf16.msra.mxu0 0
    %9601 = vmatprep.subr.bf16.mxu0 0
    %9602 = vmatpush1.bf16.msra.mxu0 0
    %9603 = vmatprep.subr.bf16.mxu0 0
    %9604 = vmatpush1.bf16.msra.mxu0 0
    %9605 = vmatprep.subr.bf16.mxu0 %v9574
    %9606 = vmatpush1.bf16.msra.mxu0 %v9573
    %9607 = vmatprep.subr.bf16.mxu0 %v9569
    %9608 = vmatpush1.bf16.msra.mxu0 %v9568
    %9609 = vmatprep.subr.bf16.mxu0 0
    %9610 = vmatpush2.bf16.msra.mxu0 0
    %9611 = vmatprep.subr.bf16.mxu0 0
    %9612 = vmatpush2.bf16.msra.mxu0 0
    %9613 = vmatprep.subr.bf16.mxu0 0
    %9614 = vmatpush2.bf16.msra.mxu0 0
    %9615 = vmatprep.subr.bf16.mxu0 0
    %9616 = vmatpush2.bf16.msra.mxu0 0
    %9617 = vmatprep.subr.bf16.mxu0 0
    %9618 = vmatpush2.bf16.msra.mxu0 0
    %9619 = vmatprep.subr.bf16.mxu0 0
    %9620 = vmatpush2.bf16.msra.mxu0 0
    %9621 = vmatprep.subr.bf16.mxu0 0
    %9622 = vmatpush2.bf16.msra.mxu0 0
    %9623 = vmatprep.subr.bf16.mxu0 0
    %9624 = vmatpush2.bf16.msra.mxu0 0
    %9625 = vmatprep.mubr.bf16.mxu0 0
    %9626 = vmatmul.mubr.bf16.gmra.mxu0 %v9591
    %v9627 = vpop.f32.mrf.mxu0
    %v9628 = vadd.f32 0.0, %v9627
    %v9629 = vpop.f32.mrf.mxu0
    %v9630 = vadd.f32 0.0, %v9629
    %v9631 = vpop.f32.mrf.mxu0
    %v9632 = vpop.f32.mrf.mxu0
    %9633 = vdwg.mxu0
    %9634 = vmatprep.subr.bf16.mxu0 0
    %9635 = vmatpush1.bf16.msra.mxu0 0
    %9636 = vmatprep.subr.bf16.mxu0 0
    %9637 = vmatpush1.bf16.msra.mxu0 0
    %9638 = vmatprep.subr.bf16.mxu0 0
    %9639 = vmatpush1.bf16.msra.mxu0 0
    %9640 = vmatprep.subr.bf16.mxu0 0
    %9641 = vmatpush1.bf16.msra.mxu0 0
    %9642 = vmatprep.subr.bf16.mxu0 0
    %9643 = vmatpush1.bf16.msra.mxu0 0
    %9644 = vmatprep.subr.bf16.mxu0 0
    %9645 = vmatpush1.bf16.msra.mxu0 0
    %9646 = vmatprep.subr.bf16.mxu0 %v9576
    %9647 = vmatpush1.bf16.msra.mxu0 %v9575
    %9648 = vmatprep.subr.bf16.mxu0 %v9571
    %9649 = vmatpush1.bf16.msra.mxu0 %v9570
    %9650 = vmatprep.subr.bf16.mxu0 0
    %9651 = vmatpush2.bf16.msra.mxu0 0
    %9652 = vmatprep.subr.bf16.mxu0 0
    %9653 = vmatpush2.bf16.msra.mxu0 0
    %9654 = vmatprep.subr.bf16.mxu0 0
    %9655 = vmatpush2.bf16.msra.mxu0 0
    %9656 = vmatprep.subr.bf16.mxu0 0
    %9657 = vmatpush2.bf16.msra.mxu0 0
    %9658 = vmatprep.subr.bf16.mxu0 0
    %9659 = vmatpush2.bf16.msra.mxu0 0
    %9660 = vmatprep.subr.bf16.mxu0 0
    %9661 = vmatpush2.bf16.msra.mxu0 0
    %9662 = vmatprep.subr.bf16.mxu0 0
    %9663 = vmatpush2.bf16.msra.mxu0 0
    %9664 = vmatprep.subr.bf16.mxu0 0
    %9665 = vmatpush2.bf16.msra.mxu0 0
    %9666 = vmatprep.mubr.bf16.mxu0 0
    %9667 = vmatmul.mubr.bf16.gmra.mxu0 %v9591
    %v9668 = vpop.f32.mrf.mxu0
    %v9669 = vadd.f32 0.0, %v9668
    %v9670 = vpop.f32.mrf.mxu0
    %v9671 = vadd.f32 0.0, %v9670
    %v9672 = vpop.f32.mrf.mxu0
    %v9673 = vpop.f32.mrf.mxu0
    %9674 = vdwg.mxu0
    %9675 = vmatprep.subr.bf16.mxu0 0
    %9676 = vmatpush1.bf16.msra.mxu0 0
    %9677 = vmatprep.subr.bf16.mxu0 0
    %9678 = vmatpush1.bf16.msra.mxu0 0
    %9679 = vmatprep.subr.bf16.mxu0 0
    %9680 = vmatpush1.bf16.msra.mxu0 0
    %9681 = vmatprep.subr.bf16.mxu0 0
    %9682 = vmatpush1.bf16.msra.mxu0 0
    %9683 = vmatprep.subr.bf16.mxu0 0
    %9684 = vmatpush1.bf16.msra.mxu0 0
    %9685 = vmatprep.subr.bf16.mxu0 0
    %9686 = vmatpush1.bf16.msra.mxu0 0
    %9687 = vmatprep.subr.bf16.mxu0 %v9567
    %9688 = vmatpush1.bf16.msra.mxu0 %v9577
    %9689 = vmatprep.subr.bf16.mxu0 %v9555
    %9690 = vmatpush1.bf16.msra.mxu0 %v9572
    %9691 = vmatprep.subr.bf16.mxu0 0
    %9692 = vmatpush2.bf16.msra.mxu0 0
    %9693 = vmatprep.subr.bf16.mxu0 0
    %9694 = vmatpush2.bf16.msra.mxu0 0
    %9695 = vmatprep.subr.bf16.mxu0 0
    %9696 = vmatpush2.bf16.msra.mxu0 0
    %9697 = vmatprep.subr.bf16.mxu0 0
    %9698 = vmatpush2.bf16.msra.mxu0 0
    %9699 = vmatprep.subr.bf16.mxu0 0
    %9700 = vmatpush2.bf16.msra.mxu0 0
    %9701 = vmatprep.subr.bf16.mxu0 0
    %9702 = vmatpush2.bf16.msra.mxu0 0
    %9703 = vmatprep.subr.bf16.mxu0 0
    %9704 = vmatpush2.bf16.msra.mxu0 0
    %9705 = vmatprep.subr.bf16.mxu0 0
    %9706 = vmatpush2.bf16.msra.mxu0 0
    %9707 = vmatprep.mubr.bf16.mxu0 0
    %9708 = vmatmul.mubr.bf16.gmra.mxu0 %v9591
    %v9709 = vpop.f32.mrf.mxu0
    %v9710 = vadd.f32 0.0, %v9709
    %v9711 = vpop.f32.mrf.mxu0
    %v9712 = vadd.f32 0.0, %v9711
    %v9713 = vpop.f32.mrf.mxu0
    %v9714 = vpop.f32.mrf.mxu0
    %9715 = vdwg.mxu0
    %v9716 = vadd.f32 %v9536, %v9628
    %v9717 = vadd.f32 %v9537, %v9630
    %v9718 = vadd.f32 %v9538, %v9669
    %v9719 = vadd.f32 %v9539, %v9671
    %v9720 = vadd.f32 %v9540, %v9710
    %v9721 = vadd.f32 %v9541, %v9712
    %s9722 = scalar_lea.vmem %s13, 8
    %v9723 = vld [vmem:[%s9722] sm:$0x1]
    %9724 = vrot.lane.b32.xlu0 %v8320, 90
    %v9725 = vpop.permute.xlu0 %9724
    %9726 = vrot.lane.b32.xlu0 %v8321, 90
    %v9727 = vpop.permute.xlu0 %9726
    %9728 = vrot.lane.b32.xlu0 %v8322, 90
    %v9729 = vpop.permute.xlu0 %9728
    %9730 = vrot.lane.b32.xlu0 %v8323, 90
    %v9731 = vpop.permute.xlu0 %9730
    %9732 = vrot.lane.b32.xlu0 %v8324, 90
    %v9733 = vpop.permute.xlu0 %9732
    %9734 = vrot.lane.b32.xlu0 %v8325, 90
    %v9735 = vpop.permute.xlu0 %9734
    %9736 = vrot.lane.b32.xlu0 %v8326, 90
    %v9737 = vpop.permute.xlu0 %9736
    %9738 = vrot.lane.b32.xlu0 %v8327, 90
    %v9739 = vpop.permute.xlu0 %9738
    %9740 = vrot.lane.b32.xlu0 %v8328, 90
    %v9741 = vpop.permute.xlu0 %9740
    %9742 = vrot.lane.b32.xlu0 %v8329, 90
    %v9743 = vpop.permute.xlu0 %9742
    %9744 = vrot.lane.b32.xlu0 %v8330, 90
    %v9745 = vpop.permute.xlu0 %9744
    %9746 = vrot.lane.b32.xlu0 %v8331, 90
    %v9747 = vpop.permute.xlu0 %9746
    %v9748 = vsel %vm1979, %v9725, %v9727
    %v9749 = vsel %vm1979, %v9727, %v9729
    %v9750 = vsel %vm1979, %v9729, %v9731
    %v9751 = vsel %vm1979, %v9731, %v9733
    %v9752 = vsel %vm1979, %v9733, %v9735
    %v9753 = vsel %vm1979, %v9737, %v9739
    %v9754 = vsel %vm1979, %v9739, %v9741
    %v9755 = vsel %vm1979, %v9741, %v9743
    %v9756 = vsel %vm1979, %v9743, %v9745
    %v9757 = vsel %vm1979, %v9745, %v9747
    %v9771 = vsel %vm2883, %v9723, 0
    %9773 = vmatprep.subr.bf16.mxu0 0
    %9774 = vmatpush1.bf16.msra.mxu0 0
    %9775 = vmatprep.subr.bf16.mxu0 0
    %9776 = vmatpush1.bf16.msra.mxu0 0
    %9777 = vmatprep.subr.bf16.mxu0 0
    %9778 = vmatpush1.bf16.msra.mxu0 0
    %9779 = vmatprep.subr.bf16.mxu0 0
    %9780 = vmatpush1.bf16.msra.mxu0 0
    %9781 = vmatprep.subr.bf16.mxu0 0
    %9782 = vmatpush1.bf16.msra.mxu0 0
    %9783 = vmatprep.subr.bf16.mxu0 0
    %9784 = vmatpush1.bf16.msra.mxu0 0
    %9785 = vmatprep.subr.bf16.mxu0 %v9754
    %9786 = vmatpush1.bf16.msra.mxu0 %v9753
    %9787 = vmatprep.subr.bf16.mxu0 %v9749
    %9788 = vmatpush1.bf16.msra.mxu0 %v9748
    %9789 = vmatprep.subr.bf16.mxu0 0
    %9790 = vmatpush2.bf16.msra.mxu0 0
    %9791 = vmatprep.subr.bf16.mxu0 0
    %9792 = vmatpush2.bf16.msra.mxu0 0
    %9793 = vmatprep.subr.bf16.mxu0 0
    %9794 = vmatpush2.bf16.msra.mxu0 0
    %9795 = vmatprep.subr.bf16.mxu0 0
    %9796 = vmatpush2.bf16.msra.mxu0 0
    %9797 = vmatprep.subr.bf16.mxu0 0
    %9798 = vmatpush2.bf16.msra.mxu0 0
    %9799 = vmatprep.subr.bf16.mxu0 0
    %9800 = vmatpush2.bf16.msra.mxu0 0
    %9801 = vmatprep.subr.bf16.mxu0 0
    %9802 = vmatpush2.bf16.msra.mxu0 0
    %9803 = vmatprep.subr.bf16.mxu0 0
    %9804 = vmatpush2.bf16.msra.mxu0 0
    %9805 = vmatprep.mubr.bf16.mxu0 0
    %9806 = vmatmul.mubr.bf16.gmra.mxu0 %v9771
    %v9807 = vpop.f32.mrf.mxu0
    %v9808 = vadd.f32 0.0, %v9807
    %v9809 = vpop.f32.mrf.mxu0
    %v9810 = vadd.f32 0.0, %v9809
    %v9811 = vpop.f32.mrf.mxu0
    %v9812 = vpop.f32.mrf.mxu0
    %9813 = vdwg.mxu0
    %9814 = vmatprep.subr.bf16.mxu0 0
    %9815 = vmatpush1.bf16.msra.mxu0 0
    %9816 = vmatprep.subr.bf16.mxu0 0
    %9817 = vmatpush1.bf16.msra.mxu0 0
    %9818 = vmatprep.subr.bf16.mxu0 0
    %9819 = vmatpush1.bf16.msra.mxu0 0
    %9820 = vmatprep.subr.bf16.mxu0 0
    %9821 = vmatpush1.bf16.msra.mxu0 0
    %9822 = vmatprep.subr.bf16.mxu0 0
    %9823 = vmatpush1.bf16.msra.mxu0 0
    %9824 = vmatprep.subr.bf16.mxu0 0
    %9825 = vmatpush1.bf16.msra.mxu0 0
    %9826 = vmatprep.subr.bf16.mxu0 %v9756
    %9827 = vmatpush1.bf16.msra.mxu0 %v9755
    %9828 = vmatprep.subr.bf16.mxu0 %v9751
    %9829 = vmatpush1.bf16.msra.mxu0 %v9750
    %9830 = vmatprep.subr.bf16.mxu0 0
    %9831 = vmatpush2.bf16.msra.mxu0 0
    %9832 = vmatprep.subr.bf16.mxu0 0
    %9833 = vmatpush2.bf16.msra.mxu0 0
    %9834 = vmatprep.subr.bf16.mxu0 0
    %9835 = vmatpush2.bf16.msra.mxu0 0
    %9836 = vmatprep.subr.bf16.mxu0 0
    %9837 = vmatpush2.bf16.msra.mxu0 0
    %9838 = vmatprep.subr.bf16.mxu0 0
    %9839 = vmatpush2.bf16.msra.mxu0 0
    %9840 = vmatprep.subr.bf16.mxu0 0
    %9841 = vmatpush2.bf16.msra.mxu0 0
    %9842 = vmatprep.subr.bf16.mxu0 0
    %9843 = vmatpush2.bf16.msra.mxu0 0
    %9844 = vmatprep.subr.bf16.mxu0 0
    %9845 = vmatpush2.bf16.msra.mxu0 0
    %9846 = vmatprep.mubr.bf16.mxu0 0
    %9847 = vmatmul.mubr.bf16.gmra.mxu0 %v9771
    %v9848 = vpop.f32.mrf.mxu0
    %v9849 = vadd.f32 0.0, %v9848
    %v9850 = vpop.f32.mrf.mxu0
    %v9851 = vadd.f32 0.0, %v9850
    %v9852 = vpop.f32.mrf.mxu0
    %v9853 = vpop.f32.mrf.mxu0
    %9854 = vdwg.mxu0
    %9855 = vmatprep.subr.bf16.mxu0 0
    %9856 = vmatpush1.bf16.msra.mxu0 0
    %9857 = vmatprep.subr.bf16.mxu0 0
    %9858 = vmatpush1.bf16.msra.mxu0 0
    %9859 = vmatprep.subr.bf16.mxu0 0
    %9860 = vmatpush1.bf16.msra.mxu0 0
    %9861 = vmatprep.subr.bf16.mxu0 0
    %9862 = vmatpush1.bf16.msra.mxu0 0
    %9863 = vmatprep.subr.bf16.mxu0 0
    %9864 = vmatpush1.bf16.msra.mxu0 0
    %9865 = vmatprep.subr.bf16.mxu0 0
    %9866 = vmatpush1.bf16.msra.mxu0 0
    %9867 = vmatprep.subr.bf16.mxu0 %v9747
    %9868 = vmatpush1.bf16.msra.mxu0 %v9757
    %9869 = vmatprep.subr.bf16.mxu0 %v9735
    %9870 = vmatpush1.bf16.msra.mxu0 %v9752
    %9871 = vmatprep.subr.bf16.mxu0 0
    %9872 = vmatpush2.bf16.msra.mxu0 0
    %9873 = vmatprep.subr.bf16.mxu0 0
    %9874 = vmatpush2.bf16.msra.mxu0 0
    %9875 = vmatprep.subr.bf16.mxu0 0
    %9876 = vmatpush2.bf16.msra.mxu0 0
    %9877 = vmatprep.subr.bf16.mxu0 0
    %9878 = vmatpush2.bf16.msra.mxu0 0
    %9879 = vmatprep.subr.bf16.mxu0 0
    %9880 = vmatpush2.bf16.msra.mxu0 0
    %9881 = vmatprep.subr.bf16.mxu0 0
    %9882 = vmatpush2.bf16.msra.mxu0 0
    %9883 = vmatprep.subr.bf16.mxu0 0
    %9884 = vmatpush2.bf16.msra.mxu0 0
    %9885 = vmatprep.subr.bf16.mxu0 0
    %9886 = vmatpush2.bf16.msra.mxu0 0
    %9887 = vmatprep.mubr.bf16.mxu0 0
    %9888 = vmatmul.mubr.bf16.gmra.mxu0 %v9771
    %v9889 = vpop.f32.mrf.mxu0
    %v9890 = vadd.f32 0.0, %v9889
    %v9891 = vpop.f32.mrf.mxu0
    %v9892 = vadd.f32 0.0, %v9891
    %v9893 = vpop.f32.mrf.mxu0
    %v9894 = vpop.f32.mrf.mxu0
    %9895 = vdwg.mxu0
    %v9896 = vadd.f32 %v9716, %v9808
    %v9897 = vadd.f32 %v9717, %v9810
    %v9898 = vadd.f32 %v9718, %v9849
    %v9899 = vadd.f32 %v9719, %v9851
    %v9900 = vadd.f32 %v9720, %v9890
    %v9901 = vadd.f32 %v9721, %v9892
    %v9902 = vld [vmem:[%s16] sm:$0xff]
    %v9903 = vld [vmem:[%s16 + $0x8] sm:$0xff]
    %v9904 = vld [vmem:[%s16 + $0x10] sm:$0xff]
    %v9905 = vld [vmem:[%s16 + $0x18] sm:$0xff]
    %v9906 = vld [vmem:[%s16 + $0x20] sm:$0xff]
    %v9907 = vld [vmem:[%s16 + $0x28] sm:$0xff]
    %v9908 = vld [vmem:[%s16 + $0x30] sm:$0xff]
    %v9909 = vld [vmem:[%s16 + $0x38] sm:$0xff]
    %v9910 = vld [vmem:[%s16 + $0x40] sm:$0xff]
    %v9911 = vld [vmem:[%s16 + $0x48] sm:$0xff]
    %v9912 = vld [vmem:[%s16 + $0x50] sm:$0xff]
    %v9913 = vld [vmem:[%s16 + $0x58] sm:$0xff]
    %v9914 = vld [vmem:[%s16 + $0x60] sm:$0xff]
    %v9915 = vld [vmem:[%s16 + $0x68] sm:$0xff]
    %v9916 = vld [vmem:[%s16 + $0x70] sm:$0xff]
    %v9917 = vld [vmem:[%s16 + $0x78] sm:$0xff]
    %v9918 = vld [vmem:[%s16 + $0x80] sm:$0xff]
    %v9919 = vld [vmem:[%s16 + $0x88] sm:$0xff]
    %v9920 = vld [vmem:[%s16 + $0x90] sm:$0xff]
    %v9921 = vld [vmem:[%s16 + $0x98] sm:$0xff]
    %v9922 = vld [vmem:[%s16 + $0xa0] sm:$0xff]
    %v9923 = vld [vmem:[%s16 + $0xa8] sm:$0xff]
    %v9924 = vld [vmem:[%s16 + $0xb0] sm:$0xff]
    %v9925 = vld [vmem:[%s16 + $0xb8] sm:$0xff]
    %v9926 = vld [vmem:[%s16 + $0xc0] sm:$0xff]
    %v9927 = vld [vmem:[%s16 + $0xc8] sm:$0xff]
    %v9928 = vld [vmem:[%s16 + $0xd0] sm:$0xff]
    %v9929 = vld [vmem:[%s16 + $0xd8] sm:$0xff]
    %v9930 = vld [vmem:[%s16 + $0xe0] sm:$0xff]
    %v9931 = vld [vmem:[%s16 + $0xe8] sm:$0xff]
    %v9932 = vld [vmem:[%s16 + $0xf0] sm:$0xff]
    %v9933 = vld [vmem:[%s16 + $0xf8] sm:$0xff]
    %v9934 = vld [vmem:[%s16 + $0x100] sm:$0xff]
    %v9935 = vld [vmem:[%s16 + $0x108] sm:$0xff]
    %v9936 = vld [vmem:[%s16 + $0x110] sm:$0xff]
    %v9937 = vld [vmem:[%s16 + $0x118] sm:$0xff]
    %v9938 = vld [vmem:[%s16 + $0x120] sm:$0xff]
    %v9939 = vld [vmem:[%s16 + $0x128] sm:$0xff]
    %v9940 = vld [vmem:[%s16 + $0x130] sm:$0xff]
    %v9941 = vld [vmem:[%s16 + $0x138] sm:$0xff]
    %v9942 = vld [vmem:[%s16 + $0x140] sm:$0xff]
    %v9943 = vld [vmem:[%s16 + $0x148] sm:$0xff]
    %v9944 = vld [vmem:[%s16 + $0x150] sm:$0xff]
    %v9945 = vld [vmem:[%s16 + $0x158] sm:$0xff]
    %v9946 = vld [vmem:[%s16 + $0x160] sm:$0xff]
    %v9947 = vld [vmem:[%s16 + $0x168] sm:$0xff]
    %v9948 = vld [vmem:[%s16 + $0x170] sm:$0xff]
    %v9949 = vld [vmem:[%s16 + $0x178] sm:$0xff]
    %v9950 = vld [vmem:[%s16 + $0x180] sm:$0xff]
    %v9951 = vld [vmem:[%s16 + $0x188] sm:$0xff]
    %v9952 = vld [vmem:[%s16 + $0x190] sm:$0xff]
    %v9953 = vld [vmem:[%s16 + $0x198] sm:$0xff]
    %v9954 = vld [vmem:[%s16 + $0x1a0] sm:$0xff]
    %v9955 = vld [vmem:[%s16 + $0x1a8] sm:$0xff]
    %v9956 = vld [vmem:[%s16 + $0x1b0] sm:$0xff]
    %v9957 = vld [vmem:[%s16 + $0x1b8] sm:$0xff]
    %v9958 = vld [vmem:[%s16 + $0x1c0] sm:$0xff]
    %v9959 = vld [vmem:[%s16 + $0x1c8] sm:$0xff]
    %v9960 = vld [vmem:[%s16 + $0x1d0] sm:$0xff]
    %v9961 = vld [vmem:[%s16 + $0x1d8] sm:$0xff]
    %v9962 = vld [vmem:[%s16 + $0x1e0] sm:$0xff]
    %v9963 = vld [vmem:[%s16 + $0x1e8] sm:$0xff]
    %v9964 = vld [vmem:[%s16 + $0x1f0] sm:$0xff]
    %v9965 = vld [vmem:[%s16 + $0x1f8] sm:$0xff]
    %v9966 = vld [vmem:[%s16 + $0x200] sm:$0xff]
    %v9967 = vld [vmem:[%s16 + $0x208] sm:$0xff]
    %v9968 = vld [vmem:[%s16 + $0x210] sm:$0xff]
    %v9969 = vld [vmem:[%s16 + $0x218] sm:$0xff]
    %v9970 = vld [vmem:[%s16 + $0x220] sm:$0xff]
    %v9971 = vld [vmem:[%s16 + $0x228] sm:$0xff]
    %v9972 = vld [vmem:[%s16 + $0x230] sm:$0xff]
    %v9973 = vld [vmem:[%s16 + $0x238] sm:$0xff]
    %v9974 = vld [vmem:[%s16 + $0x240] sm:$0xff]
    %v9975 = vld [vmem:[%s16 + $0x248] sm:$0xff]
    %v9976 = vld [vmem:[%s16 + $0x250] sm:$0xff]
    %v9977 = vld [vmem:[%s16 + $0x258] sm:$0xff]
    %v9978 = vld [vmem:[%s16 + $0x260] sm:$0xff]
    %v9979 = vld [vmem:[%s16 + $0x268] sm:$0xff]
    %v9980 = vld [vmem:[%s16 + $0x270] sm:$0xff]
    %v9981 = vld [vmem:[%s16 + $0x278] sm:$0xff]
    %v9982 = vld [vmem:[%s16 + $0x280] sm:$0xff]
    %v9983 = vld [vmem:[#allocation4] sm:$0x1]
    %9985 = vset.pattern.permute.xlu0 0
    %9986 = vperm.xlu0 %9985, %v9983
    %v9987 = vpop.permute.xlu0 %9986
    %v9989 = vlaneseq
    %v9990 = vshrl.u32 %v9989, 7
    %v9991 = vsub.s32 0, %v9990
    %v9992 = vrot.slane %v9987, %v9991
    %v9994 = vsel %vm134, %v9901, 0
    %9996 = vmatprep.subr.mxu0 0.0
    %9997 = vmatpush1.msra.mxu0 %v9917
    %9998 = vmatprep.subr.mxu0 0.0
    %9999 = vmatpush1.msra.mxu0 %v9916
    %10000 = vmatprep.subr.mxu0 0.0
    %10001 = vmatpush1.msra.mxu0 %v9915
    %10002 = vmatprep.subr.mxu0 0.0
    %10003 = vmatpush1.msra.mxu0 %v9914
    %10004 = vmatprep.subr.mxu0 0.0
    %10005 = vmatpush1.msra.mxu0 %v9913
    %10006 = vmatprep.subr.mxu0 0.0
    %10007 = vmatpush1.msra.mxu0 %v9912
    %10008 = vmatprep.subr.mxu0 0.0
    %10009 = vmatpush1.msra.mxu0 %v9911
    %10010 = vmatprep.subr.mxu0 0.0
    %10011 = vmatpush1.msra.mxu0 %v9910
    %10012 = vmatprep.subr.mxu0 0.0
    %10013 = vmatpush1.msra.mxu0 %v9909
    %10014 = vmatprep.subr.mxu0 0.0
    %10015 = vmatpush1.msra.mxu0 %v9908
    %10016 = vmatprep.subr.mxu0 0.0
    %10017 = vmatpush1.msra.mxu0 %v9907
    %10018 = vmatprep.subr.mxu0 0.0
    %10019 = vmatpush1.msra.mxu0 %v9906
    %10020 = vmatprep.subr.mxu0 0.0
    %10021 = vmatpush1.msra.mxu0 %v9905
    %10022 = vmatprep.subr.mxu0 0.0
    %10023 = vmatpush1.msra.mxu0 %v9904
    %10024 = vmatprep.subr.mxu0 0.0
    %10025 = vmatpush1.msra.mxu0 %v9903
    %10026 = vmatprep.subr.mxu0 0.0
    %10027 = vmatpush1.msra.mxu0 %v9902
    %10028 = vmatprep.subr.mxu0 0.0
    %10029 = vmatpush2.msra.mxu0 %v9933
    %10030 = vmatprep.subr.mxu0 0.0
    %10031 = vmatpush2.msra.mxu0 %v9932
    %10032 = vmatprep.subr.mxu0 0.0
    %10033 = vmatpush2.msra.mxu0 %v9931
    %10034 = vmatprep.subr.mxu0 0.0
    %10035 = vmatpush2.msra.mxu0 %v9930
    %10036 = vmatprep.subr.mxu0 0.0
    %10037 = vmatpush2.msra.mxu0 %v9929
    %10038 = vmatprep.subr.mxu0 0.0
    %10039 = vmatpush2.msra.mxu0 %v9928
    %10040 = vmatprep.subr.mxu0 0.0
    %10041 = vmatpush2.msra.mxu0 %v9927
    %10042 = vmatprep.subr.mxu0 0.0
    %10043 = vmatpush2.msra.mxu0 %v9926
    %10044 = vmatprep.subr.mxu0 0.0
    %10045 = vmatpush2.msra.mxu0 %v9925
    %10046 = vmatprep.subr.mxu0 0.0
    %10047 = vmatpush2.msra.mxu0 %v9924
    %10048 = vmatprep.subr.mxu0 0.0
    %10049 = vmatpush2.msra.mxu0 %v9923
    %10050 = vmatprep.subr.mxu0 0.0
    %10051 = vmatpush2.msra.mxu0 %v9922
    %10052 = vmatprep.subr.mxu0 0.0
    %10053 = vmatpush2.msra.mxu0 %v9921
    %10054 = vmatprep.subr.mxu0 0.0
    %10055 = vmatpush2.msra.mxu0 %v9920
    %10056 = vmatprep.subr.mxu0 0.0
    %10057 = vmatpush2.msra.mxu0 %v9919
    %10058 = vmatprep.subr.mxu0 0.0
    %10059 = vmatpush2.msra.mxu0 %v9918
    %10060 = vmatprep.mubr.f32.mxu0 %v9897
    %10061 = vmatmul.mubr.f32.gmra.mxu0 %v9896
    %v10062 = vpop.f32.mrf.mxu0
    %v10063 = vadd.f32 %v9992, %v10062
    %v10064 = vpop.f32.mrf.mxu0
    %10065 = vdwg.mxu0
    %10066 = vmatprep.subr.mxu0 0.0
    %10067 = vmatpush1.msra.mxu0 %v9949
    %10068 = vmatprep.subr.mxu0 0.0
    %10069 = vmatpush1.msra.mxu0 %v9948
    %10070 = vmatprep.subr.mxu0 0.0
    %10071 = vmatpush1.msra.mxu0 %v9947
    %10072 = vmatprep.subr.mxu0 0.0
    %10073 = vmatpush1.msra.mxu0 %v9946
    %10074 = vmatprep.subr.mxu0 0.0
    %10075 = vmatpush1.msra.mxu0 %v9945
    %10076 = vmatprep.subr.mxu0 0.0
    %10077 = vmatpush1.msra.mxu0 %v9944
    %10078 = vmatprep.subr.mxu0 0.0
    %10079 = vmatpush1.msra.mxu0 %v9943
    %10080 = vmatprep.subr.mxu0 0.0
    %10081 = vmatpush1.msra.mxu0 %v9942
    %10082 = vmatprep.subr.mxu0 0.0
    %10083 = vmatpush1.msra.mxu0 %v9941
    %10084 = vmatprep.subr.mxu0 0.0
    %10085 = vmatpush1.msra.mxu0 %v9940
    %10086 = vmatprep.subr.mxu0 0.0
    %10087 = vmatpush1.msra.mxu0 %v9939
    %10088 = vmatprep.subr.mxu0 0.0
    %10089 = vmatpush1.msra.mxu0 %v9938
    %10090 = vmatprep.subr.mxu0 0.0
    %10091 = vmatpush1.msra.mxu0 %v9937
    %10092 = vmatprep.subr.mxu0 0.0
    %10093 = vmatpush1.msra.mxu0 %v9936
    %10094 = vmatprep.subr.mxu0 0.0
    %10095 = vmatpush1.msra.mxu0 %v9935
    %10096 = vmatprep.subr.mxu0 0.0
    %10097 = vmatpush1.msra.mxu0 %v9934
    %10098 = vmatprep.subr.mxu0 0.0
    %10099 = vmatpush2.msra.mxu0 %v9965
    %10100 = vmatprep.subr.mxu0 0.0
    %10101 = vmatpush2.msra.mxu0 %v9964
    %10102 = vmatprep.subr.mxu0 0.0
    %10103 = vmatpush2.msra.mxu0 %v9963
    %10104 = vmatprep.subr.mxu0 0.0
    %10105 = vmatpush2.msra.mxu0 %v9962
    %10106 = vmatprep.subr.mxu0 0.0
    %10107 = vmatpush2.msra.mxu0 %v9961
    %10108 = vmatprep.subr.mxu0 0.0
    %10109 = vmatpush2.msra.mxu0 %v9960
    %10110 = vmatprep.subr.mxu0 0.0
    %10111 = vmatpush2.msra.mxu0 %v9959
    %10112 = vmatprep.subr.mxu0 0.0
    %10113 = vmatpush2.msra.mxu0 %v9958
    %10114 = vmatprep.subr.mxu0 0.0
    %10115 = vmatpush2.msra.mxu0 %v9957
    %10116 = vmatprep.subr.mxu0 0.0
    %10117 = vmatpush2.msra.mxu0 %v9956
    %10118 = vmatprep.subr.mxu0 0.0
    %10119 = vmatpush2.msra.mxu0 %v9955
    %10120 = vmatprep.subr.mxu0 0.0
    %10121 = vmatpush2.msra.mxu0 %v9954
    %10122 = vmatprep.subr.mxu0 0.0
    %10123 = vmatpush2.msra.mxu0 %v9953
    %10124 = vmatprep.subr.mxu0 0.0
    %10125 = vmatpush2.msra.mxu0 %v9952
    %10126 = vmatprep.subr.mxu0 0.0
    %10127 = vmatpush2.msra.mxu0 %v9951
    %10128 = vmatprep.subr.mxu0 0.0
    %10129 = vmatpush2.msra.mxu0 %v9950
    %10130 = vmatprep.mubr.f32.mxu0 %v9899
    %10131 = vmatmul.mubr.f32.gmra.mxu0 %v9898
    %v10132 = vpop.f32.mrf.mxu0
    %v10133 = vadd.f32 %v10063, %v10132
    %v10134 = vpop.f32.mrf.mxu0
    %10135 = vdwg.mxu0
    %10136 = vmatprep.subr.mxu0 0.0
    %10137 = vmatpush1.msra.mxu0 %v9981
    %10138 = vmatprep.subr.mxu0 0.0
    %10139 = vmatpush1.msra.mxu0 %v9980
    %10140 = vmatprep.subr.mxu0 0.0
    %10141 = vmatpush1.msra.mxu0 %v9979
    %10142 = vmatprep.subr.mxu0 0.0
    %10143 = vmatpush1.msra.mxu0 %v9978
    %10144 = vmatprep.subr.mxu0 0.0
    %10145 = vmatpush1.msra.mxu0 %v9977
    %10146 = vmatprep.subr.mxu0 0.0
    %10147 = vmatpush1.msra.mxu0 %v9976
    %10148 = vmatprep.subr.mxu0 0.0
    %10149 = vmatpush1.msra.mxu0 %v9975
    %10150 = vmatprep.subr.mxu0 0.0
    %10151 = vmatpush1.msra.mxu0 %v9974
    %10152 = vmatprep.subr.mxu0 0.0
    %10153 = vmatpush1.msra.mxu0 %v9973
    %10154 = vmatprep.subr.mxu0 0.0
    %10155 = vmatpush1.msra.mxu0 %v9972
    %10156 = vmatprep.subr.mxu0 0.0
    %10157 = vmatpush1.msra.mxu0 %v9971
    %10158 = vmatprep.subr.mxu0 0.0
    %10159 = vmatpush1.msra.mxu0 %v9970
    %10160 = vmatprep.subr.mxu0 0.0
    %10161 = vmatpush1.msra.mxu0 %v9969
    %10162 = vmatprep.subr.mxu0 0.0
    %10163 = vmatpush1.msra.mxu0 %v9968
    %10164 = vmatprep.subr.mxu0 0.0
    %10165 = vmatpush1.msra.mxu0 %v9967
    %10166 = vmatprep.subr.mxu0 0.0
    %10167 = vmatpush1.msra.mxu0 %v9966
    %10168 = vmatprep.subr.mxu0 0.0
    %10169 = vmatpush2.msra.mxu0 0.0
    %10170 = vmatprep.subr.mxu0 0.0
    %10171 = vmatpush2.msra.mxu0 0.0
    %10172 = vmatprep.subr.mxu0 0.0
    %10173 = vmatpush2.msra.mxu0 0.0
    %10174 = vmatprep.subr.mxu0 0.0
    %10175 = vmatpush2.msra.mxu0 0.0
    %10176 = vmatprep.subr.mxu0 0.0
    %10177 = vmatpush2.msra.mxu0 0.0
    %10178 = vmatprep.subr.mxu0 0.0
    %10179 = vmatpush2.msra.mxu0 0.0
    %10180 = vmatprep.subr.mxu0 0.0
    %10181 = vmatpush2.msra.mxu0 0.0
    %10182 = vmatprep.subr.mxu0 0.0
    %10183 = vmatpush2.msra.mxu0 0.0
    %10184 = vmatprep.subr.mxu0 0.0
    %10185 = vmatpush2.msra.mxu0 0.0
    %10186 = vmatprep.subr.mxu0 0.0
    %10187 = vmatpush2.msra.mxu0 0.0
    %10188 = vmatprep.subr.mxu0 0.0
    %10189 = vmatpush2.msra.mxu0 0.0
    %10190 = vmatprep.subr.mxu0 0.0
    %10191 = vmatpush2.msra.mxu0 0.0
    %10192 = vmatprep.subr.mxu0 0.0
    %10193 = vmatpush2.msra.mxu0 0.0
    %10194 = vmatprep.subr.mxu0 0.0
    %10195 = vmatpush2.msra.mxu0 0.0
    %10196 = vmatprep.subr.mxu0 0.0
    %10197 = vmatpush2.msra.mxu0 0.0
    %10198 = vmatprep.subr.mxu0 0.0
    %10199 = vmatpush2.msra.mxu0 %v9982
    %10200 = vmatprep.mubr.f32.mxu0 %v9994
    %10201 = vmatmul.mubr.f32.gmra.mxu0 %v9900
    %v10202 = vpop.f32.mrf.mxu0
    %v10203 = vadd.f32 %v10133, %v10202
    %v10204 = vpop.f32.mrf.mxu0
    %10205 = vdwg.mxu0
    %vm10206 = vcmask 8192
    %10207 = vst.msk [vmem:[#allocation5] sm:$0x1] %vm10206, %v10203
    // Predicated region
    $region70: #{basic_critic_forward.1} parent=1 // pred_check
      _
    $region71: #{basic_critic_forward.1} parent=1 // pred_check_branch
      %10209 = sbr.rel (0) target = $region73
    $region72: #{basic_critic_forward.1} parent=1 // pred_region
      %s10211 = ssub.s32 16, 16
      %10212 = vsyncadd [#allocation6], %s10211
      %s10214 = sshll.u32 [#allocation5], 4
      %s10215 = int_to_ptr.vmem [resolvable:$true] %s10214
      %10217 = dma.vmem_to_hbm [thread:$0]  %s10215, 16, %s17, [#allocation6]
    $region73: #{basic_critic_forward.1} parent=1 // pred_fallthru
      _
    // Predicated region
    $region74: #{basic_critic_forward.1} parent=1 // pred_check
      _
    $region75: #{basic_critic_forward.1} parent=1 // pred_check_branch
      %10219 = sbr.rel (0) target = $region77
    $region76: #{basic_critic_forward.1} parent=1 // pred_region
      %10220 = dma.done [#allocation6], 16
    $region77: #{basic_critic_forward.1} parent=1 // pred_fallthru
      _
    %10221 = vsyncpa [#allocation6], 1

</llo_original>
